<compile_context>
chip_gen: v5e
topology: v5e:2x2
jax: 0.10.0
libtpu: 0.0.40
codegen_flags: <defaults>
</compile_context>

<pallas_src>
import jax
import jax.numpy as jnp
import numpy as np
from jax.experimental import pallas as pl
from jax.experimental.pallas import tpu as pltpu

IN_CHANNEL = 1024
CHA_RATIO = 8
INTER = IN_CHANNEL // CHA_RATIO            # 128
H = W = 12                                 # divisible by all pool sizes below
HW = H * W                                 # 144
K1, K2, K3 = 4, 3, 2                       # round(18/4), round(12/4), round(8/4)
INCHAN = K1 * K1 + K2 * K2 + K3 * K3       # 29
NUM_S = 1 + INCHAN                         # 30
O1 = K1 * K1                               # 16
O2 = K1 * K1 + K2 * K2                     # 25
BN_EPS = 1e-5


# --------------------------------------------------------------------------
# Pallas kernel: one grid step == one batch element, channels-first layout.
#   x      : (1, C, HW) f32   (HW=144 on lanes, C=1024 on sublanes)
#   wpg    : (2*INTER, C) bf16 = [W_phi; W_gx] fused 1x1-conv weight
#   pgs/pgb: (2*INTER, 1) f32  eval-BN affine for the fused conv
#   poolT  : (HW, INCHAN) bf16 constant pooling matrix (3 adaptive avg pools)
#   wth    : (3*INTER, C) bf16 stacked theta_spatial{,1,2} weights
#   ths/thb: (3*INTER, 1) f32  stacked theta eval-BN affine
#   wspb   : (3*INTER, INCHAN) f32 per-branch masked W_spatial[1:] rows
#   w0g    : (1, 1) f32 = W_spatial[0] (BN-scaled) / INTER  (g channel-mean fold)
#   bw     : (1, 1) f32 W_spatial BN shift
# --------------------------------------------------------------------------
def rga_kernel(x_ref, wpg_ref, pgs_ref, pgb_ref, poolT_ref,
               wth_ref, ths_ref, thb_ref, wspb_ref, w0g_ref, bw_ref,
               out_ref, att_ref):
    xb = x_ref[0].astype(jnp.bfloat16)                                  # (C, HW)

    # fused phi_spatial + gx_spatial 1x1 convs: one bf16 MXU matmul, f32 acc,
    # then eval-BN affine + ReLU.
    pg = jnp.dot(wpg_ref[...], xb, preferred_element_type=jnp.float32)  # (2*INTER, HW)
    pg = jnp.maximum(pg * pgs_ref[...] + pgb_ref[...], 0.0)
    phi = pg[:INTER]                                                    # (INTER, HW)
    g = pg[INTER:]                                                      # (INTER, HW)

    # three adaptive avg pools as a constant matmul while x is in VMEM, then
    # the stacked theta 1x1 convs + eval-BN + ReLU.
    pooled = jnp.dot(xb, poolT_ref[...],
                     preferred_element_type=jnp.float32)                # (C, INCHAN)
    th = jnp.dot(wth_ref[...], pooled.astype(jnp.bfloat16),
                 preferred_element_type=jnp.float32)                    # (3*INTER, INCHAN)
    th = jnp.maximum(th * ths_ref[...] + thb_ref[...], 0.0)

    # W_spatial fold (Gs is never materialized):
    #   v[c] = sum_j w_spatial[1+j] * theta_cat[j, c]   (branch-masked rows)
    vv = jnp.sum(th * wspb_ref[...], axis=1, keepdims=True)             # (3*INTER, 1)
    v = vv[:INTER] + vv[INTER:2 * INTER] + vv[2 * INTER:]               # (INTER, 1)

    #   wy = v . phi + (w0/INTER) * sum_c g + bw        (all f32)
    contrib = phi * v + g * w0g_ref[...]                                # (INTER, HW)
    wy = jnp.sum(contrib, axis=0, keepdims=True) + bw_ref[...]          # (1, HW)

    att = jax.nn.sigmoid(wy)                                            # (1, HW)
    att_ref[0] = att                                                    # lane-dense
    out_ref[0] = att * x_ref[0]          # re-read x from VMEM at the store


# --------------------------------------------------------------------------
# Constant pooling matrix: column j averages pooled cell j (row-major cells
# for pools 4x4, 3x3, 2x2) — identical to adaptive_avg_pool2d for divisible
# spatial sizes.
# --------------------------------------------------------------------------
def make_pool_matrix(h, w):
    cols = []
    for k in (K1, K2, K3):
        bh, bw = h // k, w // k
        for i in range(k):
            for j in range(k):
                m = np.zeros((h, w), np.float32)
                m[i * bh:(i + 1) * bh, j * bw:(j + 1) * bw] = 1.0 / (bh * bw)
                cols.append(m.reshape(h * w))
    return np.stack(cols, axis=1)                                       # (h*w, INCHAN)


def rga_forward(x, p):
    B, C, h, w = x.shape
    hw = h * w
    x_flat = x.reshape(B, C, hw)                      # free reshape, no transpose

    # fused phi|gx weight + eval-BN affines (rows = output channels)
    w_pg = jnp.concatenate([p["w_phi"], p["w_gx"]], axis=0).astype(jnp.bfloat16)
    pg_scale = jnp.concatenate([p["a_phi"], p["a_gx"]]).reshape(2 * INTER, 1)
    pg_shift = jnp.concatenate([p["b_phi"], p["b_gx"]]).reshape(2 * INTER, 1)

    # stacked theta weights / BN affines
    w_th = jnp.concatenate([p["w_t1"], p["w_t2"], p["w_t3"]],
                           axis=0).astype(jnp.bfloat16)
    th_scale = jnp.concatenate([p["a_t1"], p["a_t2"], p["a_t3"]]).reshape(3 * INTER, 1)
    th_shift = jnp.concatenate([p["b_t1"], p["b_t2"], p["b_t3"]]).reshape(3 * INTER, 1)

    poolT = jnp.asarray(make_pool_matrix(h, w), jnp.bfloat16)           # (hw, INCHAN)

    # W_spatial (BN scale already folded into p["w_w"]): per-branch masked rows
    # broadcast over the INTER rows of each theta branch.
    wrow = p["w_w"][0, 1:]                                              # (INCHAN,)
    bmask = np.zeros((3, INCHAN), np.float32)
    bmask[0, :O1] = 1.0
    bmask[1, O1:O2] = 1.0
    bmask[2, O2:] = 1.0
    wspb = jnp.repeat(wrow[None, :] * jnp.asarray(bmask), INTER, axis=0)  # (3*INTER, INCHAN)
    w0g = p["w_w"][0:1, 0:1] / INTER                                    # (1, 1)
    bw = p["b_w"]                                                       # (1, 1)

    out_flat, att = pl.pallas_call(
        rga_kernel,
        out_shape=(jax.ShapeDtypeStruct((B, C, hw), jnp.float32),
                   jax.ShapeDtypeStruct((B, 1, hw), jnp.float32)),
        grid=(B,),
        in_specs=[
            pl.BlockSpec((1, C, hw), lambda b: (b, 0, 0)),              # x (channels-first)
            pl.BlockSpec((2 * INTER, C), lambda b: (0, 0)),             # fused W_phi|W_gx
            pl.BlockSpec((2 * INTER, 1), lambda b: (0, 0)),             # fused BN scale
            pl.BlockSpec((2 * INTER, 1), lambda b: (0, 0)),             # fused BN shift
            pl.BlockSpec((hw, INCHAN), lambda b: (0, 0)),               # pooling matrix
            pl.BlockSpec((3 * INTER, C), lambda b: (0, 0)),             # stacked theta W
            pl.BlockSpec((3 * INTER, 1), lambda b: (0, 0)),             # theta BN scale
            pl.BlockSpec((3 * INTER, 1), lambda b: (0, 0)),             # theta BN shift
            pl.BlockSpec((3 * INTER, INCHAN), lambda b: (0, 0)),        # masked W_spatial rows
            pl.BlockSpec((1, 1), lambda b: (0, 0)),                     # w_spatial[0]/INTER
            pl.BlockSpec((1, 1), lambda b: (0, 0)),                     # W_spatial BN shift
        ],
        out_specs=(pl.BlockSpec((1, C, hw), lambda b: (b, 0, 0)),
                   pl.BlockSpec((1, 1, hw), lambda b: (b, 0, 0))),
        compiler_params=pltpu.CompilerParams(
            dimension_semantics=("parallel",)),                          # megacore on v7x
    )(x_flat, w_pg, pg_scale, pg_shift, poolT, w_th, th_scale, th_shift,
      wspb, w0g, bw)

    out = out_flat.reshape(B, C, h, w)                # free reshape, no transpose
    haha = att.reshape(B, h, w)
    return out, haha


# --------------------------------------------------------------------------
# Reference in the original module formulation (explicit pools, per-branch
# theta convs, Gs, channel-mean, W_spatial conv).  Matmul operands cast to
# bf16 with f32 accumulation to mirror the kernel's MXU precision; everything
# downstream of the convs stays f32 (precision=HIGHEST on the f32 einsums).
# --------------------------------------------------------------------------
def rga_reference(x, p):
    B, C, h, w = x.shape
    hw = h * w
    xf = x.reshape(B, C, hw)
    xb = xf.astype(jnp.bfloat16)
    hp = jax.lax.Precision.HIGHEST

    def conv_bn_relu(w_, a_, b_, inp_bf):
        y = jnp.einsum("oc,bcj->boj", w_.astype(jnp.bfloat16), inp_bf,
                       preferred_element_type=jnp.float32)
        return jnp.maximum(y * a_[None, :, None] + b_[None, :, None], 0.0)

    poolT = jnp.asarray(make_pool_matrix(h, w), jnp.bfloat16)
    pooled = jnp.einsum("bcp,pj->bcj", xb, poolT,
                        preferred_element_type=jnp.float32)             # (B, C, INCHAN)
    pooled_bf = pooled.astype(jnp.bfloat16)

    th1 = conv_bn_relu(p["w_t1"], p["a_t1"], p["b_t1"], pooled_bf[:, :, :O1])
    th2 = conv_bn_relu(p["w_t2"], p["a_t2"], p["b_t2"], pooled_bf[:, :, O1:O2])
    th3 = conv_bn_relu(p["w_t3"], p["a_t3"], p["b_t3"], pooled_bf[:, :, O2:])
    theta_cat = jnp.concatenate(
        [jnp.transpose(th1, (0, 2, 1)), jnp.transpose(th2, (0, 2, 1)),
         jnp.transpose(th3, (0, 2, 1))], axis=1)                        # (B, INCHAN, INTER)

    phi = conv_bn_relu(p["w_phi"], p["a_phi"], p["b_phi"], xb)           # (B, INTER, hw)
    g = conv_bn_relu(p["w_gx"], p["a_gx"], p["b_gx"], xb)                # (B, INTER, hw)
    g_mean = g.mean(axis=1, keepdims=True)                               # (B, 1, hw)

    gs = jnp.einsum("bjc,bcp->bjp", theta_cat, phi, precision=hp)        # (B, INCHAN, hw)
    ys = jnp.concatenate([g_mean, gs], axis=1)                           # (B, NUM_S, hw)
    wy = jnp.einsum("oj,bjp->bop", p["w_w"], ys, precision=hp) + p["b_w"][None, :, :]
    att = jax.nn.sigmoid(wy)                                             # (B, 1, hw)
    out = (att * xf).reshape(B, C, h, w)
    return out, att.reshape(B, h, w)


# --------------------------------------------------------------------------
# Deterministic synthetic parameters (conv: PyTorch-like uniform init,
# BatchNorm: eval-mode affine folded into scale/shift).
# --------------------------------------------------------------------------
def make_params(key):
    ks = jax.random.split(key, 12)

    def conv_w(k, oc, ic):
        bound = 1.0 / np.sqrt(ic)
        return jax.random.uniform(k, (oc, ic), jnp.float32, -bound, bound)

    def bn_fold(k, c):
        k1, k2, k3, k4 = jax.random.split(k, 4)
        gamma = 1.0 + 0.1 * jax.random.normal(k1, (c,), jnp.float32)
        beta = 0.1 * jax.random.normal(k2, (c,), jnp.float32)
        mean = 0.1 * jax.random.normal(k3, (c,), jnp.float32)
        var = 1.0 + 0.1 * jax.random.uniform(k4, (c,), jnp.float32)
        scale = gamma / jnp.sqrt(var + BN_EPS)
        shift = beta - mean * scale
        return scale, shift

    p = {}
    p["w_gx"] = conv_w(ks[0], INTER, IN_CHANNEL)
    p["a_gx"], p["b_gx"] = bn_fold(ks[1], INTER)
    p["w_phi"] = conv_w(ks[2], INTER, IN_CHANNEL)
    p["a_phi"], p["b_phi"] = bn_fold(ks[3], INTER)
    p["w_t1"] = conv_w(ks[4], INTER, IN_CHANNEL)
    p["a_t1"], p["b_t1"] = bn_fold(ks[5], INTER)
    p["w_t2"] = conv_w(ks[6], INTER, IN_CHANNEL)
    p["a_t2"], p["b_t2"] = bn_fold(ks[7], INTER)
    p["w_t3"] = conv_w(ks[8], INTER, IN_CHANNEL)
    p["a_t3"], p["b_t3"] = bn_fold(ks[9], INTER)
    w_sp = conv_w(ks[10], 1, NUM_S)                        # W_spatial conv (no bias)
    a_sp, b_sp = bn_fold(ks[11], 1)                        # BatchNorm2d(1)
    p["w_w"] = w_sp * a_sp[:, None]                        # fold BN scale into conv
    p["b_w"] = b_sp.reshape(1, 1)
    return p


if __name__ == "__main__":
    key = jax.random.PRNGKey(0)
    kx, kp = jax.random.split(key)
    x = jax.random.normal(kx, (2, IN_CHANNEL, H, W), jnp.float32)
    params = make_params(kp)

    out, haha = rga_forward(x, params)
    jax.block_until_ready((out, haha))

    out_ref, haha_ref = rga_reference(x, params)
    np.testing.assert_allclose(np.asarray(out), np.asarray(out_ref), rtol=5e-3, atol=5e-3)
    np.testing.assert_allclose(np.asarray(haha), np.asarray(haha_ref), rtol=5e-3, atol=5e-3)

    print("KERNEL_OK")
</pallas_src>

<mosaic_0001>
module attributes {stable_mosaic.version = 11 : i64} {
  func.func @rga_kernel(%arg0: i32, %arg1: memref<1x1024x144xf32, #tpu.memory_space<vmem>>, %arg2: memref<256x1024xbf16, #tpu.memory_space<vmem>>, %arg3: memref<256x1xf32, #tpu.memory_space<vmem>>, %arg4: memref<256x1xf32, #tpu.memory_space<vmem>>, %arg5: memref<144x29xbf16, #tpu.memory_space<vmem>>, %arg6: memref<384x1024xbf16, #tpu.memory_space<vmem>>, %arg7: memref<384x1xf32, #tpu.memory_space<vmem>>, %arg8: memref<384x1xf32, #tpu.memory_space<vmem>>, %arg9: memref<384x29xf32, #tpu.memory_space<vmem>>, %arg10: memref<1x1xf32, #tpu.memory_space<vmem>>, %arg11: memref<1x1xf32, #tpu.memory_space<vmem>>, %arg12: memref<1x1024x144xf32, #tpu.memory_space<vmem>>, %arg13: memref<1x1x144xf32, #tpu.memory_space<vmem>>) attributes {dimension_semantics = [#tpu.dimension_semantics<parallel>], iteration_bounds = array<i64: 2>, scalar_prefetch = 0 : i64, scratch_operands = 0 : i64, tpu.core_type = #tpu.core_type<tc>, window_params = [{transform_indices = @transform_0, window_bounds = array<i64: 1, 1024, 144>}, {pipeline_mode = #tpu.pipeline_mode<synchronous>, transform_indices = @transform_1, window_bounds = array<i64: 256, 1024>}, {pipeline_mode = #tpu.pipeline_mode<synchronous>, transform_indices = @transform_2, window_bounds = array<i64: 256, 1>}, {pipeline_mode = #tpu.pipeline_mode<synchronous>, transform_indices = @transform_3, window_bounds = array<i64: 256, 1>}, {pipeline_mode = #tpu.pipeline_mode<synchronous>, transform_indices = @transform_4, window_bounds = array<i64: 144, 29>}, {pipeline_mode = #tpu.pipeline_mode<synchronous>, transform_indices = @transform_5, window_bounds = array<i64: 384, 1024>}, {pipeline_mode = #tpu.pipeline_mode<synchronous>, transform_indices = @transform_6, window_bounds = array<i64: 384, 1>}, {pipeline_mode = #tpu.pipeline_mode<synchronous>, transform_indices = @transform_7, window_bounds = array<i64: 384, 1>}, {pipeline_mode = #tpu.pipeline_mode<synchronous>, transform_indices = @transform_8, window_bounds = array<i64: 384, 29>}, {pipeline_mode = #tpu.pipeline_mode<synchronous>, transform_indices = @transform_9, window_bounds = array<i64: 1, 1>}, {pipeline_mode = #tpu.pipeline_mode<synchronous>, transform_indices = @transform_10, window_bounds = array<i64: 1, 1>}, {transform_indices = @transform_11, window_bounds = array<i64: 1, 1024, 144>}, {transform_indices = @transform_12, window_bounds = array<i64: 1, 1, 144>}]} {
    %c0 = arith.constant 0 : index
    %c0_0 = arith.constant 0 : index
    %c0_1 = arith.constant 0 : index
    %0 = vector.load %arg1[%c0, %c0_0, %c0_1] : memref<1x1024x144xf32, #tpu.memory_space<vmem>>, vector<1x1024x144xf32>
    %1 = vector.shape_cast %0 : vector<1x1024x144xf32> to vector<1024x144xf32>
    %2 = arith.truncf %1 : vector<1024x144xf32> to vector<1024x144xbf16>
    %c0_2 = arith.constant 0 : index
    %c0_3 = arith.constant 0 : index
    %3 = vector.load %arg2[%c0_2, %c0_3] : memref<256x1024xbf16, #tpu.memory_space<vmem>>, vector<256x1024xbf16>
    %cst = arith.constant dense<0.000000e+00> : vector<256x144xf32>
    %4 = tpu.matmul %3, %2, %cst {dimension_numbers = #tpu.dot_dimension_numbers<[1], [0], [0], [1], [0, 0, 1, 1], [], []>} : vector<256x1024xbf16>, vector<1024x144xbf16>, vector<256x144xf32> -> vector<256x144xf32>
    %c0_4 = arith.constant 0 : index
    %c0_5 = arith.constant 0 : index
    %5 = vector.load %arg3[%c0_4, %c0_5] : memref<256x1xf32, #tpu.memory_space<vmem>>, vector<256x1xf32>
    %6 = vector.broadcast %5 : vector<256x1xf32> to vector<256x144xf32>
    %7 = arith.mulf %4, %6 : vector<256x144xf32>
    %c0_6 = arith.constant 0 : index
    %c0_7 = arith.constant 0 : index
    %8 = vector.load %arg4[%c0_6, %c0_7] : memref<256x1xf32, #tpu.memory_space<vmem>>, vector<256x1xf32>
    %9 = vector.broadcast %8 : vector<256x1xf32> to vector<256x144xf32>
    %10 = arith.addf %7, %9 : vector<256x144xf32>
    %cst_8 = arith.constant 0.000000e+00 : f32
    %11 = vector.broadcast %cst_8 : f32 to vector<256x144xf32>
    %12 = arith.maximumf %10, %11 : vector<256x144xf32>
    %13 = vector.extract_strided_slice %12 {offsets = [0, 0], sizes = [128, 144], strides = [1, 1]} : vector<256x144xf32> to vector<128x144xf32>
    %14 = vector.extract_strided_slice %12 {offsets = [128, 0], sizes = [128, 144], strides = [1, 1]} : vector<256x144xf32> to vector<128x144xf32>
    %c0_9 = arith.constant 0 : index
    %c0_10 = arith.constant 0 : index
    %15 = vector.load %arg5[%c0_9, %c0_10] : memref<144x29xbf16, #tpu.memory_space<vmem>>, vector<144x29xbf16>
    %cst_11 = arith.constant dense<0.000000e+00> : vector<1024x29xf32>
    %16 = tpu.matmul %2, %15, %cst_11 {dimension_numbers = #tpu.dot_dimension_numbers<[1], [0], [0], [1], [0, 0, 1, 1], [], []>} : vector<1024x144xbf16>, vector<144x29xbf16>, vector<1024x29xf32> -> vector<1024x29xf32>
    %c0_12 = arith.constant 0 : index
    %c0_13 = arith.constant 0 : index
    %17 = vector.load %arg6[%c0_12, %c0_13] : memref<384x1024xbf16, #tpu.memory_space<vmem>>, vector<384x1024xbf16>
    %18 = arith.truncf %16 : vector<1024x29xf32> to vector<1024x29xbf16>
    %cst_14 = arith.constant dense<0.000000e+00> : vector<384x29xf32>
    %19 = tpu.matmul %17, %18, %cst_14 {dimension_numbers = #tpu.dot_dimension_numbers<[1], [0], [0], [1], [0, 0, 1, 1], [], []>} : vector<384x1024xbf16>, vector<1024x29xbf16>, vector<384x29xf32> -> vector<384x29xf32>
    %c0_15 = arith.constant 0 : index
    %c0_16 = arith.constant 0 : index
    %20 = vector.load %arg7[%c0_15, %c0_16] : memref<384x1xf32, #tpu.memory_space<vmem>>, vector<384x1xf32>
    %21 = vector.broadcast %20 : vector<384x1xf32> to vector<384x29xf32>
    %22 = arith.mulf %19, %21 : vector<384x29xf32>
    %c0_17 = arith.constant 0 : index
    %c0_18 = arith.constant 0 : index
    %23 = vector.load %arg8[%c0_17, %c0_18] : memref<384x1xf32, #tpu.memory_space<vmem>>, vector<384x1xf32>
    %24 = vector.broadcast %23 : vector<384x1xf32> to vector<384x29xf32>
    %25 = arith.addf %22, %24 : vector<384x29xf32>
    %cst_19 = arith.constant 0.000000e+00 : f32
    %26 = vector.broadcast %cst_19 : f32 to vector<384x29xf32>
    %27 = arith.maximumf %25, %26 : vector<384x29xf32>
    %c0_20 = arith.constant 0 : index
    %c0_21 = arith.constant 0 : index
    %28 = vector.load %arg9[%c0_20, %c0_21] : memref<384x29xf32, #tpu.memory_space<vmem>>, vector<384x29xf32>
    %29 = arith.mulf %27, %28 : vector<384x29xf32>
    %cst_22 = arith.constant dense<0.000000e+00> : vector<384xf32>
    %30 = vector.multi_reduction <add>, %29, %cst_22 [1] : vector<384x29xf32> to vector<384xf32>
    %31 = vector.shape_cast %30 : vector<384xf32> to vector<384x1xf32>
    %32 = vector.extract_strided_slice %31 {offsets = [0, 0], sizes = [128, 1], strides = [1, 1]} : vector<384x1xf32> to vector<128x1xf32>
    %33 = vector.extract_strided_slice %31 {offsets = [128, 0], sizes = [128, 1], strides = [1, 1]} : vector<384x1xf32> to vector<128x1xf32>
    %34 = arith.addf %32, %33 : vector<128x1xf32>
    %35 = vector.extract_strided_slice %31 {offsets = [256, 0], sizes = [128, 1], strides = [1, 1]} : vector<384x1xf32> to vector<128x1xf32>
    %36 = arith.addf %34, %35 : vector<128x1xf32>
    %37 = vector.broadcast %36 : vector<128x1xf32> to vector<128x144xf32>
    %38 = arith.mulf %13, %37 : vector<128x144xf32>
    %c0_23 = arith.constant 0 : index
    %c0_24 = arith.constant 0 : index
    %39 = vector.load %arg10[%c0_23, %c0_24] : memref<1x1xf32, #tpu.memory_space<vmem>>, vector<1x1xf32>
    %40 = vector.broadcast %39 : vector<1x1xf32> to vector<128x144xf32>
    %41 = arith.mulf %14, %40 : vector<128x144xf32>
    %42 = arith.addf %38, %41 : vector<128x144xf32>
    %cst_25 = arith.constant dense<0.000000e+00> : vector<144xf32>
    %43 = vector.multi_reduction <add>, %42, %cst_25 [0] : vector<128x144xf32> to vector<144xf32>
    %44 = vector.shape_cast %43 : vector<144xf32> to vector<1x144xf32>
    %c0_26 = arith.constant 0 : index
    %c0_27 = arith.constant 0 : index
    %45 = vector.load %arg11[%c0_26, %c0_27] : memref<1x1xf32, #tpu.memory_space<vmem>>, vector<1x1xf32>
    %46 = vector.broadcast %45 : vector<1x1xf32> to vector<1x144xf32>
    %47 = arith.addf %44, %46 : vector<1x144xf32>
    %48 = arith.negf %47 : vector<1x144xf32>
    %49 = math.exp %48 : vector<1x144xf32>
    %cst_28 = arith.constant 1.000000e+00 : f32
    %50 = vector.broadcast %cst_28 : f32 to vector<1x144xf32>
    %51 = arith.addf %50, %49 : vector<1x144xf32>
    %52 = arith.divf %50, %51 : vector<1x144xf32>
    %c0_29 = arith.constant 0 : index
    %c0_30 = arith.constant 0 : index
    %c0_31 = arith.constant 0 : index
    %53 = vector.load %arg13[%c0_29, %c0_30, %c0_31] : memref<1x1x144xf32, #tpu.memory_space<vmem>>, vector<1x1x144xf32>
    %54 = vector.shape_cast %53 : vector<1x1x144xf32> to vector<1x144xf32>
    %55 = vector.shape_cast %52 : vector<1x144xf32> to vector<1x1x144xf32>
    tpu.vector_store %arg13[%c0_29, %c0_30, %c0_31], %55 {strides = array<i32>} : memref<1x1x144xf32, #tpu.memory_space<vmem>>, vector<1x1x144xf32>,
    %c0_32 = arith.constant 0 : index
    %c0_33 = arith.constant 0 : index
    %c0_34 = arith.constant 0 : index
    %56 = vector.load %arg1[%c0_32, %c0_33, %c0_34] : memref<1x1024x144xf32, #tpu.memory_space<vmem>>, vector<1x1024x144xf32>
    %57 = vector.shape_cast %56 : vector<1x1024x144xf32> to vector<1024x144xf32>
    %58 = vector.broadcast %52 : vector<1x144xf32> to vector<1024x144xf32>
    %59 = arith.mulf %58, %57 : vector<1024x144xf32>
    %c0_35 = arith.constant 0 : index
    %c0_36 = arith.constant 0 : index
    %c0_37 = arith.constant 0 : index
    %60 = vector.load %arg12[%c0_35, %c0_36, %c0_37] : memref<1x1024x144xf32, #tpu.memory_space<vmem>>, vector<1x1024x144xf32>
    %61 = vector.shape_cast %60 : vector<1x1024x144xf32> to vector<1024x144xf32>
    %62 = vector.shape_cast %59 : vector<1024x144xf32> to vector<1x1024x144xf32>
    tpu.vector_store %arg12[%c0_35, %c0_36, %c0_37], %62 {strides = array<i32>} : memref<1x1024x144xf32, #tpu.memory_space<vmem>>, vector<1x1024x144xf32>,
    return
  }
  func.func @transform_0(%arg0: i32) -> (i32, i32, i32) {
    %c0_i32 = arith.constant 0 : i32
    %c0_i32_0 = arith.constant 0 : i32
    %c0_i32_1 = arith.constant 0 : i32
    return %arg0, %c0_i32, %c0_i32_0 : i32, i32, i32
  }
  func.func @transform_1(%arg0: i32) -> (i32, i32) {
    %c0_i32 = arith.constant 0 : i32
    %c0_i32_0 = arith.constant 0 : i32
    %c0_i32_1 = arith.constant 0 : i32
    return %c0_i32, %c0_i32_0 : i32, i32
  }
  func.func @transform_2(%arg0: i32) -> (i32, i32) {
    %c0_i32 = arith.constant 0 : i32
    %c0_i32_0 = arith.constant 0 : i32
    %c0_i32_1 = arith.constant 0 : i32
    return %c0_i32, %c0_i32_0 : i32, i32
  }
  func.func @transform_3(%arg0: i32) -> (i32, i32) {
    %c0_i32 = arith.constant 0 : i32
    %c0_i32_0 = arith.constant 0 : i32
    %c0_i32_1 = arith.constant 0 : i32
    return %c0_i32, %c0_i32_0 : i32, i32
  }
  func.func @transform_4(%arg0: i32) -> (i32, i32) {
    %c0_i32 = arith.constant 0 : i32
    %c0_i32_0 = arith.constant 0 : i32
    %c0_i32_1 = arith.constant 0 : i32
    return %c0_i32, %c0_i32_0 : i32, i32
  }
  func.func @transform_5(%arg0: i32) -> (i32, i32) {
    %c0_i32 = arith.constant 0 : i32
    %c0_i32_0 = arith.constant 0 : i32
    %c0_i32_1 = arith.constant 0 : i32
    return %c0_i32, %c0_i32_0 : i32, i32
  }
  func.func @transform_6(%arg0: i32) -> (i32, i32) {
    %c0_i32 = arith.constant 0 : i32
    %c0_i32_0 = arith.constant 0 : i32
    %c0_i32_1 = arith.constant 0 : i32
    return %c0_i32, %c0_i32_0 : i32, i32
  }
  func.func @transform_7(%arg0: i32) -> (i32, i32) {
    %c0_i32 = arith.constant 0 : i32
    %c0_i32_0 = arith.constant 0 : i32
    %c0_i32_1 = arith.constant 0 : i32
    return %c0_i32, %c0_i32_0 : i32, i32
  }
  func.func @transform_8(%arg0: i32) -> (i32, i32) {
    %c0_i32 = arith.constant 0 : i32
    %c0_i32_0 = arith.constant 0 : i32
    %c0_i32_1 = arith.constant 0 : i32
    return %c0_i32, %c0_i32_0 : i32, i32
  }
  func.func @transform_9(%arg0: i32) -> (i32, i32) {
    %c0_i32 = arith.constant 0 : i32
    %c0_i32_0 = arith.constant 0 : i32
    %c0_i32_1 = arith.constant 0 : i32
    return %c0_i32, %c0_i32_0 : i32, i32
  }
  func.func @transform_10(%arg0: i32) -> (i32, i32) {
    %c0_i32 = arith.constant 0 : i32
    %c0_i32_0 = arith.constant 0 : i32
    %c0_i32_1 = arith.constant 0 : i32
    return %c0_i32, %c0_i32_0 : i32, i32
  }
  func.func @transform_11(%arg0: i32) -> (i32, i32, i32) {
    %c0_i32 = arith.constant 0 : i32
    %c0_i32_0 = arith.constant 0 : i32
    %c0_i32_1 = arith.constant 0 : i32
    return %arg0, %c0_i32, %c0_i32_0 : i32, i32, i32
  }
  func.func @transform_12(%arg0: i32) -> (i32, i32, i32) {
    %c0_i32 = arith.constant 0 : i32
    %c0_i32_0 = arith.constant 0 : i32
    %c0_i32_1 = arith.constant 0 : i32
    return %arg0, %c0_i32, %c0_i32_0 : i32, i32, i32
  }
}

</mosaic_0001>

<llo_original>
// kernel: tpu_custom_call.1
$region0: #{tpu_custom_call.1}
  #allocation0 [shape = 'u32[]', space=smem, size = 0x4, offset = 0x4, fixed_abs, tag = 'smem constant byte address 0x4 - core index']
  #allocation1 [shape = 'u32[72,128]{1,0:T(1,128)}', space=vmem, size = 0x9000, scoped, tag = 'internal scratch']
  #allocation2 [shape = 'f32[1,1]{1,0:T(1,128)S(1)}', space=vmem, size = 0x200, scoped, tag = 'scoped memory for tpu_custom_call.1']
  #allocation3 [shape = 'f32[1,1]{1,0:T(1,128)S(1)}', space=vmem, size = 0x200, scoped, tag = 'scoped memory for tpu_custom_call.1']
  %s0 = inlined_call_operand.vmem [shape: f32[2,1024,144], index: 0, kind: input, shape index: {}]
  %s1 = inlined_call_operand.vmem [shape: bf16[256,1024], index: 1, kind: input, shape index: {}]
  %s2 = inlined_call_operand.vmem [shape: f32[256,1], index: 2, kind: input, shape index: {}]
  %s3 = inlined_call_operand.vmem [shape: f32[256,1], index: 3, kind: input, shape index: {}]
  %s4 = inlined_call_operand.vmem [shape: bf16[144,29], index: 4, kind: input, shape index: {}]
  %s5 = inlined_call_operand.vmem [shape: bf16[384,1024], index: 5, kind: input, shape index: {}]
  %s6 = inlined_call_operand.vmem [shape: f32[384,1], index: 6, kind: input, shape index: {}]
  %s7 = inlined_call_operand.vmem [shape: f32[384,1], index: 7, kind: input, shape index: {}]
  %s8 = inlined_call_operand.vmem [shape: f32[384,29], index: 8, kind: input, shape index: {}]
  %s9 = inlined_call_operand.<no memory space> [shape: f32[1,1], index: 9, kind: input, shape index: {}]
  %s10 = inlined_call_operand.<no memory space> [shape: f32[1,1], index: 10, kind: input, shape index: {}]
  %s11 = inlined_call_operand.vmem [shape: f32[2,1024,144], index: 11, kind: output, shape index: {0}]
  %s12 = inlined_call_operand.hbm [shape: f32[2,1,144], index: 12, kind: output, shape index: {1}]
  %13 = xla_tuple %s11, %s12
  %s14 = sld [smem:[#allocation0]]
  $region85: #{tpu_custom_call.1} parent=0
    _
  %s16 = ssub.s32 1, %s14
  %s17 = scalar_select 0, %s16, %s14
  %v18 = vstv %s9
  %19 = vst [vmem:[#allocation2] sm:$0x1] %v18
  %v20 = vstv %s10
  %21 = vst [vmem:[#allocation3] sm:$0x1] %v20
  $region1: #{tpu_custom_call.1} parent=0
    #allocation4 [shape = 'u8[2048]{0}', space=vmem, size = 0x800, scoped, tag = 'output window, operand 1']
    #allocation5 [shape = 's32[2]{0}', space=sflag, size = 0x8, scoped, tag = 'scoped memory for tpu_custom_call.1']
    %22 = vsyncpa [#allocation5], 0
    %s23 = scalar_lea.sflag [#allocation5], 1
    %24 = vsyncpa %s23, 0
    loop: start=0, step=1, limit=4
    $region2: #{tpu_custom_call.1} parent=1 // loop_pre_header
      _
    $region3: #{tpu_custom_call.1} parent=1 // loop_header
      %s26 = sphi 0, %s30
      %p27 = scmp.ge.s32.totalorder %s26, 4
      %s36 = sphi 0, %s38
      %s39 = sphi 0, %s36
      %s40 = sphi 0, %s39
      %s56 = sphi 0, %s40
      %s60 = sphi 0, %s60
      %s62 = sphi 0, %s60
      %s63 = sphi 0, %s62
      %s77 = sphi 0, %s63
      %s81 = sphi 0, %s81
      %s83 = sphi 0, %s81
      %s84 = sphi 0, %s83
      %s98 = sphi 0, %s84
      %s102 = sphi 0, %s102
      %s104 = sphi 0, %s102
      %s105 = sphi 0, %s104
      %s119 = sphi 0, %s105
      %s123 = sphi 0, %s123
      %s125 = sphi 0, %s123
      %s126 = sphi 0, %s125
      %s140 = sphi 0, %s126
      %s144 = sphi 0, %s144
      %s146 = sphi 0, %s144
      %s147 = sphi 0, %s146
      %s161 = sphi 0, %s147
      %s165 = sphi 0, %s165
      %s167 = sphi 0, %s165
      %s168 = sphi 0, %s167
      %s182 = sphi 0, %s168
      %s186 = sphi 0, %s186
      %s188 = sphi 0, %s186
      %s189 = sphi 0, %s188
      %s203 = sphi 0, %s189
      %s207 = sphi 0, %s207
      %s209 = sphi 0, %s207
      %s210 = sphi 0, %s209
      %s224 = sphi 0, %s210
      %s228 = sphi 0, %s228
      %s230 = sphi 0, %s228
      %s231 = sphi 0, %s230
      %s245 = sphi 0, %s231
      %s249 = sphi 0, %s249
      %s251 = sphi 0, %s249
      %s252 = sphi 0, %s251
      %s266 = sphi 0, %s252
      %s272 = sphi 0, %s274
      %s275 = sphi 0, %s272
      %s276 = sphi 0, %s275
      %s292 = sphi 0, %s276
      %s298 = sphi 0, %s300
      %s301 = sphi 0, %s298
      %s302 = sphi 0, %s301
      %s318 = sphi 0, %s302
    $region4: #{tpu_custom_call.1} parent=1 // loop_header_branch
      %29 = sbr.rel (%p27) target = $region8
    $region5: #{tpu_custom_call.1} parent=1 // loop_body
      %s31 = ssub.s32 %s26, 1
      %s32 = ssub.s32 %s26, 2
      %s33 = sadd.s32 %s26, 1
      %s34 = ssub.s32 %s26, %s33
      %p35 = scmp.eq.s32.totalorder %s34, 0
      %s37 = sadd.s32 %s36, 1
      %s38 = scalar_select %p35, %s36, %s37
      %p41 = pneg %p35
      %p42 = scmp.eq.s32.totalorder %s26, 1
      %p43 = por %p41, %p42
      %p44 = scmp.ne.s32.totalorder %s36, %s39
      %p45 = scmp.eq.s32.totalorder %s26, 0
      %p46 = por %p44, %p45
      %p47 = scmp.ne.s32.totalorder %s36, %s39
      %p48 = scmp.eq.s32.totalorder %s31, 1
      %p49 = por %p47, %p48
      %p50 = scmp.ne.s32.totalorder %s39, %s40
      %p51 = scmp.eq.s32.totalorder %s31, 0
      %p52 = por %p50, %p51
      %p53 = scmp.ne.s32.totalorder %s39, %s40
      %p54 = scmp.eq.s32.totalorder %s32, 1
      %p55 = por %p53, %p54
      %p57 = scmp.ne.s32.totalorder %s40, %s56
      %p58 = scmp.eq.s32.totalorder %s32, 0
      %p59 = por %p57, %p58
      %s61 = sadd.s32 %s60, 1
      %p64 = scmp.eq.s32.totalorder %s26, 1
      %p65 = scmp.ne.s32.totalorder %s60, %s62
      %p66 = scmp.eq.s32.totalorder %s26, 0
      %p67 = por %p65, %p66
      %p68 = scmp.ne.s32.totalorder %s60, %s62
      %p69 = scmp.eq.s32.totalorder %s31, 1
      %p70 = por %p68, %p69
      %p71 = scmp.ne.s32.totalorder %s62, %s63
      %p72 = scmp.eq.s32.totalorder %s31, 0
      %p73 = por %p71, %p72
      %p74 = scmp.ne.s32.totalorder %s62, %s63
      %p75 = scmp.eq.s32.totalorder %s32, 1
      %p76 = por %p74, %p75
      %p78 = scmp.ne.s32.totalorder %s63, %s77
      %p79 = scmp.eq.s32.totalorder %s32, 0
      %p80 = por %p78, %p79
      %s82 = sadd.s32 %s81, 1
      %p85 = scmp.eq.s32.totalorder %s26, 1
      %p86 = scmp.ne.s32.totalorder %s81, %s83
      %p87 = scmp.eq.s32.totalorder %s26, 0
      %p88 = por %p86, %p87
      %p89 = scmp.ne.s32.totalorder %s81, %s83
      %p90 = scmp.eq.s32.totalorder %s31, 1
      %p91 = por %p89, %p90
      %p92 = scmp.ne.s32.totalorder %s83, %s84
      %p93 = scmp.eq.s32.totalorder %s31, 0
      %p94 = por %p92, %p93
      %p95 = scmp.ne.s32.totalorder %s83, %s84
      %p96 = scmp.eq.s32.totalorder %s32, 1
      %p97 = por %p95, %p96
      %p99 = scmp.ne.s32.totalorder %s84, %s98
      %p100 = scmp.eq.s32.totalorder %s32, 0
      %p101 = por %p99, %p100
      %s103 = sadd.s32 %s102, 1
      %p106 = scmp.eq.s32.totalorder %s26, 1
      %p107 = scmp.ne.s32.totalorder %s102, %s104
      %p108 = scmp.eq.s32.totalorder %s26, 0
      %p109 = por %p107, %p108
      %p110 = scmp.ne.s32.totalorder %s102, %s104
      %p111 = scmp.eq.s32.totalorder %s31, 1
      %p112 = por %p110, %p111
      %p113 = scmp.ne.s32.totalorder %s104, %s105
      %p114 = scmp.eq.s32.totalorder %s31, 0
      %p115 = por %p113, %p114
      %p116 = scmp.ne.s32.totalorder %s104, %s105
      %p117 = scmp.eq.s32.totalorder %s32, 1
      %p118 = por %p116, %p117
      %p120 = scmp.ne.s32.totalorder %s105, %s119
      %p121 = scmp.eq.s32.totalorder %s32, 0
      %p122 = por %p120, %p121
      %s124 = sadd.s32 %s123, 1
      %p127 = scmp.eq.s32.totalorder %s26, 1
      %p128 = scmp.ne.s32.totalorder %s123, %s125
      %p129 = scmp.eq.s32.totalorder %s26, 0
      %p130 = por %p128, %p129
      %p131 = scmp.ne.s32.totalorder %s123, %s125
      %p132 = scmp.eq.s32.totalorder %s31, 1
      %p133 = por %p131, %p132
      %p134 = scmp.ne.s32.totalorder %s125, %s126
      %p135 = scmp.eq.s32.totalorder %s31, 0
      %p136 = por %p134, %p135
      %p137 = scmp.ne.s32.totalorder %s125, %s126
      %p138 = scmp.eq.s32.totalorder %s32, 1
      %p139 = por %p137, %p138
      %p141 = scmp.ne.s32.totalorder %s126, %s140
      %p142 = scmp.eq.s32.totalorder %s32, 0
      %p143 = por %p141, %p142
      %s145 = sadd.s32 %s144, 1
      %p148 = scmp.eq.s32.totalorder %s26, 1
      %p149 = scmp.ne.s32.totalorder %s144, %s146
      %p150 = scmp.eq.s32.totalorder %s26, 0
      %p151 = por %p149, %p150
      %p152 = scmp.ne.s32.totalorder %s144, %s146
      %p153 = scmp.eq.s32.totalorder %s31, 1
      %p154 = por %p152, %p153
      %p155 = scmp.ne.s32.totalorder %s146, %s147
      %p156 = scmp.eq.s32.totalorder %s31, 0
      %p157 = por %p155, %p156
      %p158 = scmp.ne.s32.totalorder %s146, %s147
      %p159 = scmp.eq.s32.totalorder %s32, 1
      %p160 = por %p158, %p159
      %p162 = scmp.ne.s32.totalorder %s147, %s161
      %p163 = scmp.eq.s32.totalorder %s32, 0
      %p164 = por %p162, %p163
      %s166 = sadd.s32 %s165, 1
      %p169 = scmp.eq.s32.totalorder %s26, 1
      %p170 = scmp.ne.s32.totalorder %s165, %s167
      %p171 = scmp.eq.s32.totalorder %s26, 0
      %p172 = por %p170, %p171
      %p173 = scmp.ne.s32.totalorder %s165, %s167
      %p174 = scmp.eq.s32.totalorder %s31, 1
      %p175 = por %p173, %p174
      %p176 = scmp.ne.s32.totalorder %s167, %s168
      %p177 = scmp.eq.s32.totalorder %s31, 0
      %p178 = por %p176, %p177
      %p179 = scmp.ne.s32.totalorder %s167, %s168
      %p180 = scmp.eq.s32.totalorder %s32, 1
      %p181 = por %p179, %p180
      %p183 = scmp.ne.s32.totalorder %s168, %s182
      %p184 = scmp.eq.s32.totalorder %s32, 0
      %p185 = por %p183, %p184
      %s187 = sadd.s32 %s186, 1
      %p190 = scmp.eq.s32.totalorder %s26, 1
      %p191 = scmp.ne.s32.totalorder %s186, %s188
      %p192 = scmp.eq.s32.totalorder %s26, 0
      %p193 = por %p191, %p192
      %p194 = scmp.ne.s32.totalorder %s186, %s188
      %p195 = scmp.eq.s32.totalorder %s31, 1
      %p196 = por %p194, %p195
      %p197 = scmp.ne.s32.totalorder %s188, %s189
      %p198 = scmp.eq.s32.totalorder %s31, 0
      %p199 = por %p197, %p198
      %p200 = scmp.ne.s32.totalorder %s188, %s189
      %p201 = scmp.eq.s32.totalorder %s32, 1
      %p202 = por %p200, %p201
      %p204 = scmp.ne.s32.totalorder %s189, %s203
      %p205 = scmp.eq.s32.totalorder %s32, 0
      %p206 = por %p204, %p205
      %s208 = sadd.s32 %s207, 1
      %p211 = scmp.eq.s32.totalorder %s26, 1
      %p212 = scmp.ne.s32.totalorder %s207, %s209
      %p213 = scmp.eq.s32.totalorder %s26, 0
      %p214 = por %p212, %p213
      %p215 = scmp.ne.s32.totalorder %s207, %s209
      %p216 = scmp.eq.s32.totalorder %s31, 1
      %p217 = por %p215, %p216
      %p218 = scmp.ne.s32.totalorder %s209, %s210
      %p219 = scmp.eq.s32.totalorder %s31, 0
      %p220 = por %p218, %p219
      %p221 = scmp.ne.s32.totalorder %s209, %s210
      %p222 = scmp.eq.s32.totalorder %s32, 1
      %p223 = por %p221, %p222
      %p225 = scmp.ne.s32.totalorder %s210, %s224
      %p226 = scmp.eq.s32.totalorder %s32, 0
      %p227 = por %p225, %p226
      %s229 = sadd.s32 %s228, 1
      %p232 = scmp.eq.s32.totalorder %s26, 1
      %p233 = scmp.ne.s32.totalorder %s228, %s230
      %p234 = scmp.eq.s32.totalorder %s26, 0
      %p235 = por %p233, %p234
      %p236 = scmp.ne.s32.totalorder %s228, %s230
      %p237 = scmp.eq.s32.totalorder %s31, 1
      %p238 = por %p236, %p237
      %p239 = scmp.ne.s32.totalorder %s230, %s231
      %p240 = scmp.eq.s32.totalorder %s31, 0
      %p241 = por %p239, %p240
      %p242 = scmp.ne.s32.totalorder %s230, %s231
      %p243 = scmp.eq.s32.totalorder %s32, 1
      %p244 = por %p242, %p243
      %p246 = scmp.ne.s32.totalorder %s231, %s245
      %p247 = scmp.eq.s32.totalorder %s32, 0
      %p248 = por %p246, %p247
      %s250 = sadd.s32 %s249, 1
      %p253 = scmp.eq.s32.totalorder %s26, 1
      %p254 = scmp.ne.s32.totalorder %s249, %s251
      %p255 = scmp.eq.s32.totalorder %s26, 0
      %p256 = por %p254, %p255
      %p257 = scmp.ne.s32.totalorder %s249, %s251
      %p258 = scmp.eq.s32.totalorder %s31, 1
      %p259 = por %p257, %p258
      %p260 = scmp.ne.s32.totalorder %s251, %s252
      %p261 = scmp.eq.s32.totalorder %s31, 0
      %p262 = por %p260, %p261
      %p263 = scmp.ne.s32.totalorder %s251, %s252
      %p264 = scmp.eq.s32.totalorder %s32, 1
      %p265 = por %p263, %p264
      %p267 = scmp.ne.s32.totalorder %s252, %s266
      %p268 = scmp.eq.s32.totalorder %s32, 0
      %p269 = por %p267, %p268
      %s270 = ssub.s32 %s26, %s33
      %p271 = scmp.eq.s32.totalorder %s270, 0
      %s273 = sadd.s32 %s272, 1
      %s274 = scalar_select %p271, %s272, %s273
      %p277 = pneg %p271
      %p278 = scmp.eq.s32.totalorder %s26, 1
      %p279 = por %p277, %p278
      %p280 = scmp.ne.s32.totalorder %s272, %s275
      %p281 = scmp.eq.s32.totalorder %s26, 0
      %p282 = por %p280, %p281
      %p283 = scmp.ne.s32.totalorder %s272, %s275
      %p284 = scmp.eq.s32.totalorder %s31, 1
      %p285 = por %p283, %p284
      %p286 = scmp.ne.s32.totalorder %s275, %s276
      %p287 = scmp.eq.s32.totalorder %s31, 0
      %p288 = por %p286, %p287
      %p289 = scmp.ne.s32.totalorder %s275, %s276
      %p290 = scmp.eq.s32.totalorder %s32, 1
      %p291 = por %p289, %p290
      %p293 = scmp.ne.s32.totalorder %s276, %s292
      %p294 = scmp.eq.s32.totalorder %s32, 0
      %p295 = por %p293, %p294
      %s296 = ssub.s32 %s26, %s33
      %p297 = scmp.eq.s32.totalorder %s296, 0
      %s299 = sadd.s32 %s298, 1
      %s300 = scalar_select %p297, %s298, %s299
      %p303 = pneg %p297
      %p304 = scmp.eq.s32.totalorder %s26, 1
      %p305 = por %p303, %p304
      %p306 = scmp.ne.s32.totalorder %s298, %s301
      %p307 = scmp.eq.s32.totalorder %s26, 0
      %p308 = por %p306, %p307
      %p309 = scmp.ne.s32.totalorder %s298, %s301
      %p310 = scmp.eq.s32.totalorder %s31, 1
      %p311 = por %p309, %p310
      %p312 = scmp.ne.s32.totalorder %s301, %s302
      %p313 = scmp.eq.s32.totalorder %s31, 0
      %p314 = por %p312, %p313
      %p315 = scmp.ne.s32.totalorder %s301, %s302
      %p316 = scmp.eq.s32.totalorder %s32, 1
      %p317 = por %p315, %p316
      %p319 = scmp.ne.s32.totalorder %s302, %s318
      %p320 = scmp.eq.s32.totalorder %s32, 0
      %p321 = por %p319, %p320
      %p322 = scmp.le.s32.totalorder 1, %s26
      %p323 = scmp.lt.s32.totalorder %s26, 3
      %p324 = pnand %p322, %p323
      %p325 = pneg %p324
      // Predicated region
      $region9: #{tpu_custom_call.1} parent=5 // pred_check
        _
      $region10: #{tpu_custom_call.1} parent=5 // pred_check_branch
        %327 = sbr.rel (%p324) target = $region12
      $region11: #{tpu_custom_call.1} parent=5 // pred_region
        %s328 = ssub.s32 %s26, 1
        // Predicated region
        $region13: #{tpu_custom_call.1} parent=11 // pred_check
          %p329 = pneg %p73
        $region14: #{tpu_custom_call.1} parent=11 // pred_check_branch
          %331 = sbr.rel (%p329) target = $region16
        $region15: #{tpu_custom_call.1} parent=11 // pred_region
          _
        $region16: #{tpu_custom_call.1} parent=11 // pred_fallthru
          _
        // Predicated region
        $region17: #{tpu_custom_call.1} parent=11 // pred_check
          %p332 = pneg %p94
        $region18: #{tpu_custom_call.1} parent=11 // pred_check_branch
          %334 = sbr.rel (%p332) target = $region20
        $region19: #{tpu_custom_call.1} parent=11 // pred_region
          _
        $region20: #{tpu_custom_call.1} parent=11 // pred_fallthru
          _
        // Predicated region
        $region21: #{tpu_custom_call.1} parent=11 // pred_check
          %p335 = pneg %p115
        $region22: #{tpu_custom_call.1} parent=11 // pred_check_branch
          %337 = sbr.rel (%p335) target = $region24
        $region23: #{tpu_custom_call.1} parent=11 // pred_region
          _
        $region24: #{tpu_custom_call.1} parent=11 // pred_fallthru
          _
        // Predicated region
        $region25: #{tpu_custom_call.1} parent=11 // pred_check
          %p338 = pneg %p136
        $region26: #{tpu_custom_call.1} parent=11 // pred_check_branch
          %340 = sbr.rel (%p338) target = $region28
        $region27: #{tpu_custom_call.1} parent=11 // pred_region
          _
        $region28: #{tpu_custom_call.1} parent=11 // pred_fallthru
          _
        // Predicated region
        $region29: #{tpu_custom_call.1} parent=11 // pred_check
          %p341 = pneg %p157
        $region30: #{tpu_custom_call.1} parent=11 // pred_check_branch
          %343 = sbr.rel (%p341) target = $region32
        $region31: #{tpu_custom_call.1} parent=11 // pred_region
          _
        $region32: #{tpu_custom_call.1} parent=11 // pred_fallthru
          _
        // Predicated region
        $region33: #{tpu_custom_call.1} parent=11 // pred_check
          %p344 = pneg %p178
        $region34: #{tpu_custom_call.1} parent=11 // pred_check_branch
          %346 = sbr.rel (%p344) target = $region36
        $region35: #{tpu_custom_call.1} parent=11 // pred_region
          _
        $region36: #{tpu_custom_call.1} parent=11 // pred_fallthru
          _
        // Predicated region
        $region37: #{tpu_custom_call.1} parent=11 // pred_check
          %p347 = pneg %p199
        $region38: #{tpu_custom_call.1} parent=11 // pred_check_branch
          %349 = sbr.rel (%p347) target = $region40
        $region39: #{tpu_custom_call.1} parent=11 // pred_region
          _
        $region40: #{tpu_custom_call.1} parent=11 // pred_fallthru
          _
        // Predicated region
        $region41: #{tpu_custom_call.1} parent=11 // pred_check
          %p350 = pneg %p220
        $region42: #{tpu_custom_call.1} parent=11 // pred_check_branch
          %352 = sbr.rel (%p350) target = $region44
        $region43: #{tpu_custom_call.1} parent=11 // pred_region
          _
        $region44: #{tpu_custom_call.1} parent=11 // pred_fallthru
          _
        // Predicated region
        $region45: #{tpu_custom_call.1} parent=11 // pred_check
          %p353 = pneg %p241
        $region46: #{tpu_custom_call.1} parent=11 // pred_check_branch
          %355 = sbr.rel (%p353) target = $region48
        $region47: #{tpu_custom_call.1} parent=11 // pred_region
          _
        $region48: #{tpu_custom_call.1} parent=11 // pred_fallthru
          _
        // Predicated region
        $region49: #{tpu_custom_call.1} parent=11 // pred_check
          %p356 = pneg %p262
        $region50: #{tpu_custom_call.1} parent=11 // pred_check_branch
          %358 = sbr.rel (%p356) target = $region52
        $region51: #{tpu_custom_call.1} parent=11 // pred_region
          _
        $region52: #{tpu_custom_call.1} parent=11 // pred_fallthru
          _
      $region12: #{tpu_custom_call.1} parent=5 // pred_fallthru
        _
      %p359 = scmp.lt.s32.totalorder %s26, 2
      // Predicated region
      $region53: #{tpu_custom_call.1} parent=5 // pred_check
        %p360 = pneg %p359
      $region54: #{tpu_custom_call.1} parent=5 // pred_check_branch
        %362 = sbr.rel (%p360) target = $region56
      $region55: #{tpu_custom_call.1} parent=5 // pred_region
        // Predicated region
        $region57: #{tpu_custom_call.1} parent=55 // pred_check
          %p363 = pneg %p46
        $region58: #{tpu_custom_call.1} parent=55 // pred_check_branch
          %365 = sbr.rel (%p363) target = $region60
        $region59: #{tpu_custom_call.1} parent=55 // pred_region
          %p366 = scmp.lt.s32.totalorder %s26, 1
          %s367 = scalar_select %p366, %s26, 1
          %s368 = smul.addr %s367, 256
          %s369 = smul.addr %s368, 8
          %s370 = scalar_lea.vmem %s0, %s369
        $region60: #{tpu_custom_call.1} parent=55 // pred_fallthru
          _
      $region56: #{tpu_custom_call.1} parent=5 // pred_fallthru
        _
      %p371 = scmp.le.s32.totalorder 1, %s26
      %p372 = scmp.lt.s32.totalorder %s26, 3
      %p373 = pnand %p371, %p372
      %p374 = pneg %p373
      // Predicated region
      $region61: #{tpu_custom_call.1} parent=5 // pred_check
        _
      $region62: #{tpu_custom_call.1} parent=5 // pred_check_branch
        %376 = sbr.rel (%p373) target = $region64
      $region63: #{tpu_custom_call.1} parent=5 // pred_region
        %s377 = ssub.s32 %s26, 1
        %p378 = scmp.lt.s32.totalorder %s31, 1
        %s379 = scalar_select %p378, %s31, 1
        %s380 = smul.addr %s379, 256
        %s381 = smul.addr %s380, 8
        %s382 = scalar_lea.vmem %s0, %s381
        %p383 = pneg %p52
        %p384 = pneg %p49
        %p385 = pneg %p73
        %p386 = pneg %p70
        %p387 = pneg %p94
        %p388 = pneg %p91
        %p389 = pneg %p115
        %p390 = pneg %p112
        %p391 = pneg %p136
        %p392 = pneg %p133
        %p393 = pneg %p157
        %p394 = pneg %p154
        %p395 = pneg %p178
        %p396 = pneg %p175
        %p397 = pneg %p199
        %p398 = pneg %p196
        %p399 = pneg %p220
        %p400 = pneg %p217
        %p401 = pneg %p241
        %p402 = pneg %p238
        %p403 = pneg %p262
        %p404 = pneg %p259
        %p405 = pneg %p288
        %p406 = pneg %p285
        %p407 = scmp.lt.s32.totalorder %s31, 1
        %s408 = scalar_select %p407, %s31, 1
        %s409 = smul.addr %s408, 256
        %s410 = smul.addr %s409, 8
        %s411 = scalar_lea.vmem %s11, %s410
        %p412 = pneg %p314
        %p413 = pneg %p311
        %s414 = sand.u32 %s301, 1
        %s415 = scalar_lea.sflag [#allocation5], %s414
        %s416 = sand.u32 %s301, 1
        %s417 = smul.addr %s416, 2
        %s418 = scalar_lea.vmem [#allocation4], %s417
        %p419 = scmp.lt.s32.totalorder %s31, 1
        %s420 = scalar_select %p419, %s31, 1
        %s421 = smul.addr %s420, 256
        %s422 = smul.addr %s421, 8
        %s423 = scalar_lea.vmem %s0, %s422
        %p424 = scmp.lt.s32.totalorder %s31, 1
        %s425 = scalar_select %p424, %s31, 1
        %s426 = smul.addr %s425, 256
        %s427 = smul.addr %s426, 8
        %s428 = scalar_lea.vmem %s11, %s427
        %v430 = vld [vmem:[%s423] sm:$0xff]
        %v431 = vld [vmem:[%s423 + $0x8] sm:$0xff]
        %v432 = vld [vmem:[%s423 + $0x10] sm:$0xff]
        %v433 = vld [vmem:[%s423 + $0x18] sm:$0xff]
        %v434 = vld [vmem:[%s423 + $0x20] sm:$0xff]
        %v435 = vld [vmem:[%s423 + $0x28] sm:$0xff]
        %v436 = vld [vmem:[%s423 + $0x30] sm:$0xff]
        %v437 = vld [vmem:[%s423 + $0x38] sm:$0xff]
        %v438 = vld [vmem:[%s423 + $0x40] sm:$0xff]
        %v439 = vld [vmem:[%s423 + $0x48] sm:$0xff]
        %v440 = vld [vmem:[%s423 + $0x50] sm:$0xff]
        %v441 = vld [vmem:[%s423 + $0x58] sm:$0xff]
        %v442 = vld [vmem:[%s423 + $0x60] sm:$0xff]
        %v443 = vld [vmem:[%s423 + $0x68] sm:$0xff]
        %v444 = vld [vmem:[%s423 + $0x70] sm:$0xff]
        %v445 = vld [vmem:[%s423 + $0x78] sm:$0xff]
        %v446 = vld [vmem:[%s423 + $0x80] sm:$0xff]
        %v447 = vld [vmem:[%s423 + $0x88] sm:$0xff]
        %v448 = vld [vmem:[%s423 + $0x90] sm:$0xff]
        %v449 = vld [vmem:[%s423 + $0x98] sm:$0xff]
        %v450 = vld [vmem:[%s423 + $0xa0] sm:$0xff]
        %v451 = vld [vmem:[%s423 + $0xa8] sm:$0xff]
        %v452 = vld [vmem:[%s423 + $0xb0] sm:$0xff]
        %v453 = vld [vmem:[%s423 + $0xb8] sm:$0xff]
        %v454 = vld [vmem:[%s423 + $0xc0] sm:$0xff]
        %v455 = vld [vmem:[%s423 + $0xc8] sm:$0xff]
        %v456 = vld [vmem:[%s423 + $0xd0] sm:$0xff]
        %v457 = vld [vmem:[%s423 + $0xd8] sm:$0xff]
        %v458 = vld [vmem:[%s423 + $0xe0] sm:$0xff]
        %v459 = vld [vmem:[%s423 + $0xe8] sm:$0xff]
        %v460 = vld [vmem:[%s423 + $0xf0] sm:$0xff]
        %v461 = vld [vmem:[%s423 + $0xf8] sm:$0xff]
        %v462 = vld [vmem:[%s423 + $0x100] sm:$0xff]
        %v463 = vld [vmem:[%s423 + $0x108] sm:$0xff]
        %v464 = vld [vmem:[%s423 + $0x110] sm:$0xff]
        %v465 = vld [vmem:[%s423 + $0x118] sm:$0xff]
        %v466 = vld [vmem:[%s423 + $0x120] sm:$0xff]
        %v467 = vld [vmem:[%s423 + $0x128] sm:$0xff]
        %v468 = vld [vmem:[%s423 + $0x130] sm:$0xff]
        %v469 = vld [vmem:[%s423 + $0x138] sm:$0xff]
        %v470 = vld [vmem:[%s423 + $0x140] sm:$0xff]
        %v471 = vld [vmem:[%s423 + $0x148] sm:$0xff]
        %v472 = vld [vmem:[%s423 + $0x150] sm:$0xff]
        %v473 = vld [vmem:[%s423 + $0x158] sm:$0xff]
        %v474 = vld [vmem:[%s423 + $0x160] sm:$0xff]
        %v475 = vld [vmem:[%s423 + $0x168] sm:$0xff]
        %v476 = vld [vmem:[%s423 + $0x170] sm:$0xff]
        %v477 = vld [vmem:[%s423 + $0x178] sm:$0xff]
        %v478 = vld [vmem:[%s423 + $0x180] sm:$0xff]
        %v479 = vld [vmem:[%s423 + $0x188] sm:$0xff]
        %v480 = vld [vmem:[%s423 + $0x190] sm:$0xff]
        %v481 = vld [vmem:[%s423 + $0x198] sm:$0xff]
        %v482 = vld [vmem:[%s423 + $0x1a0] sm:$0xff]
        %v483 = vld [vmem:[%s423 + $0x1a8] sm:$0xff]
        %v484 = vld [vmem:[%s423 + $0x1b0] sm:$0xff]
        %v485 = vld [vmem:[%s423 + $0x1b8] sm:$0xff]
        %v486 = vld [vmem:[%s423 + $0x1c0] sm:$0xff]
        %v487 = vld [vmem:[%s423 + $0x1c8] sm:$0xff]
        %v488 = vld [vmem:[%s423 + $0x1d0] sm:$0xff]
        %v489 = vld [vmem:[%s423 + $0x1d8] sm:$0xff]
        %v490 = vld [vmem:[%s423 + $0x1e0] sm:$0xff]
        %v491 = vld [vmem:[%s423 + $0x1e8] sm:$0xff]
        %v492 = vld [vmem:[%s423 + $0x1f0] sm:$0xff]
        %v493 = vld [vmem:[%s423 + $0x1f8] sm:$0xff]
        %v494 = vld [vmem:[%s423 + $0x200] sm:$0xff]
        %v495 = vld [vmem:[%s423 + $0x208] sm:$0xff]
        %v496 = vld [vmem:[%s423 + $0x210] sm:$0xff]
        %v497 = vld [vmem:[%s423 + $0x218] sm:$0xff]
        %v498 = vld [vmem:[%s423 + $0x220] sm:$0xff]
        %v499 = vld [vmem:[%s423 + $0x228] sm:$0xff]
        %v500 = vld [vmem:[%s423 + $0x230] sm:$0xff]
        %v501 = vld [vmem:[%s423 + $0x238] sm:$0xff]
        %v502 = vld [vmem:[%s423 + $0x240] sm:$0xff]
        %v503 = vld [vmem:[%s423 + $0x248] sm:$0xff]
        %v504 = vld [vmem:[%s423 + $0x250] sm:$0xff]
        %v505 = vld [vmem:[%s423 + $0x258] sm:$0xff]
        %v506 = vld [vmem:[%s423 + $0x260] sm:$0xff]
        %v507 = vld [vmem:[%s423 + $0x268] sm:$0xff]
        %v508 = vld [vmem:[%s423 + $0x270] sm:$0xff]
        %v509 = vld [vmem:[%s423 + $0x278] sm:$0xff]
        %v510 = vld [vmem:[%s423 + $0x280] sm:$0xff]
        %v511 = vld [vmem:[%s423 + $0x288] sm:$0xff]
        %v512 = vld [vmem:[%s423 + $0x290] sm:$0xff]
        %v513 = vld [vmem:[%s423 + $0x298] sm:$0xff]
        %v514 = vld [vmem:[%s423 + $0x2a0] sm:$0xff]
        %v515 = vld [vmem:[%s423 + $0x2a8] sm:$0xff]
        %v516 = vld [vmem:[%s423 + $0x2b0] sm:$0xff]
        %v517 = vld [vmem:[%s423 + $0x2b8] sm:$0xff]
        %v518 = vld [vmem:[%s423 + $0x2c0] sm:$0xff]
        %v519 = vld [vmem:[%s423 + $0x2c8] sm:$0xff]
        %v520 = vld [vmem:[%s423 + $0x2d0] sm:$0xff]
        %v521 = vld [vmem:[%s423 + $0x2d8] sm:$0xff]
        %v522 = vld [vmem:[%s423 + $0x2e0] sm:$0xff]
        %v523 = vld [vmem:[%s423 + $0x2e8] sm:$0xff]
        %v524 = vld [vmem:[%s423 + $0x2f0] sm:$0xff]
        %v525 = vld [vmem:[%s423 + $0x2f8] sm:$0xff]
        %v526 = vld [vmem:[%s423 + $0x300] sm:$0xff]
        %v527 = vld [vmem:[%s423 + $0x308] sm:$0xff]
        %v528 = vld [vmem:[%s423 + $0x310] sm:$0xff]
        %v529 = vld [vmem:[%s423 + $0x318] sm:$0xff]
        %v530 = vld [vmem:[%s423 + $0x320] sm:$0xff]
        %v531 = vld [vmem:[%s423 + $0x328] sm:$0xff]
        %v532 = vld [vmem:[%s423 + $0x330] sm:$0xff]
        %v533 = vld [vmem:[%s423 + $0x338] sm:$0xff]
        %v534 = vld [vmem:[%s423 + $0x340] sm:$0xff]
        %v535 = vld [vmem:[%s423 + $0x348] sm:$0xff]
        %v536 = vld [vmem:[%s423 + $0x350] sm:$0xff]
        %v537 = vld [vmem:[%s423 + $0x358] sm:$0xff]
        %v538 = vld [vmem:[%s423 + $0x360] sm:$0xff]
        %v539 = vld [vmem:[%s423 + $0x368] sm:$0xff]
        %v540 = vld [vmem:[%s423 + $0x370] sm:$0xff]
        %v541 = vld [vmem:[%s423 + $0x378] sm:$0xff]
        %v542 = vld [vmem:[%s423 + $0x380] sm:$0xff]
        %v543 = vld [vmem:[%s423 + $0x388] sm:$0xff]
        %v544 = vld [vmem:[%s423 + $0x390] sm:$0xff]
        %v545 = vld [vmem:[%s423 + $0x398] sm:$0xff]
        %v546 = vld [vmem:[%s423 + $0x3a0] sm:$0xff]
        %v547 = vld [vmem:[%s423 + $0x3a8] sm:$0xff]
        %v548 = vld [vmem:[%s423 + $0x3b0] sm:$0xff]
        %v549 = vld [vmem:[%s423 + $0x3b8] sm:$0xff]
        %v550 = vld [vmem:[%s423 + $0x3c0] sm:$0xff]
        %v551 = vld [vmem:[%s423 + $0x3c8] sm:$0xff]
        %v552 = vld [vmem:[%s423 + $0x3d0] sm:$0xff]
        %v553 = vld [vmem:[%s423 + $0x3d8] sm:$0xff]
        %v554 = vld [vmem:[%s423 + $0x3e0] sm:$0xff]
        %v555 = vld [vmem:[%s423 + $0x3e8] sm:$0xff]
        %v556 = vld [vmem:[%s423 + $0x3f0] sm:$0xff]
        %v557 = vld [vmem:[%s423 + $0x3f8] sm:$0xff]
        %v558 = vld [vmem:[%s423 + $0x400] sm:$0xff]
        %v559 = vld [vmem:[%s423 + $0x408] sm:$0xff]
        %v560 = vld [vmem:[%s423 + $0x410] sm:$0xff]
        %v561 = vld [vmem:[%s423 + $0x418] sm:$0xff]
        %v562 = vld [vmem:[%s423 + $0x420] sm:$0xff]
        %v563 = vld [vmem:[%s423 + $0x428] sm:$0xff]
        %v564 = vld [vmem:[%s423 + $0x430] sm:$0xff]
        %v565 = vld [vmem:[%s423 + $0x438] sm:$0xff]
        %v566 = vld [vmem:[%s423 + $0x440] sm:$0xff]
        %v567 = vld [vmem:[%s423 + $0x448] sm:$0xff]
        %v568 = vld [vmem:[%s423 + $0x450] sm:$0xff]
        %v569 = vld [vmem:[%s423 + $0x458] sm:$0xff]
        %v570 = vld [vmem:[%s423 + $0x460] sm:$0xff]
        %v571 = vld [vmem:[%s423 + $0x468] sm:$0xff]
        %v572 = vld [vmem:[%s423 + $0x470] sm:$0xff]
        %v573 = vld [vmem:[%s423 + $0x478] sm:$0xff]
        %v574 = vld [vmem:[%s423 + $0x480] sm:$0xff]
        %v575 = vld [vmem:[%s423 + $0x488] sm:$0xff]
        %v576 = vld [vmem:[%s423 + $0x490] sm:$0xff]
        %v577 = vld [vmem:[%s423 + $0x498] sm:$0xff]
        %v578 = vld [vmem:[%s423 + $0x4a0] sm:$0xff]
        %v579 = vld [vmem:[%s423 + $0x4a8] sm:$0xff]
        %v580 = vld [vmem:[%s423 + $0x4b0] sm:$0xff]
        %v581 = vld [vmem:[%s423 + $0x4b8] sm:$0xff]
        %v582 = vld [vmem:[%s423 + $0x4c0] sm:$0xff]
        %v583 = vld [vmem:[%s423 + $0x4c8] sm:$0xff]
        %v584 = vld [vmem:[%s423 + $0x4d0] sm:$0xff]
        %v585 = vld [vmem:[%s423 + $0x4d8] sm:$0xff]
        %v586 = vld [vmem:[%s423 + $0x4e0] sm:$0xff]
        %v587 = vld [vmem:[%s423 + $0x4e8] sm:$0xff]
        %v588 = vld [vmem:[%s423 + $0x4f0] sm:$0xff]
        %v589 = vld [vmem:[%s423 + $0x4f8] sm:$0xff]
        %v590 = vld [vmem:[%s423 + $0x500] sm:$0xff]
        %v591 = vld [vmem:[%s423 + $0x508] sm:$0xff]
        %v592 = vld [vmem:[%s423 + $0x510] sm:$0xff]
        %v593 = vld [vmem:[%s423 + $0x518] sm:$0xff]
        %v594 = vld [vmem:[%s423 + $0x520] sm:$0xff]
        %v595 = vld [vmem:[%s423 + $0x528] sm:$0xff]
        %v596 = vld [vmem:[%s423 + $0x530] sm:$0xff]
        %v597 = vld [vmem:[%s423 + $0x538] sm:$0xff]
        %v598 = vld [vmem:[%s423 + $0x540] sm:$0xff]
        %v599 = vld [vmem:[%s423 + $0x548] sm:$0xff]
        %v600 = vld [vmem:[%s423 + $0x550] sm:$0xff]
        %v601 = vld [vmem:[%s423 + $0x558] sm:$0xff]
        %v602 = vld [vmem:[%s423 + $0x560] sm:$0xff]
        %v603 = vld [vmem:[%s423 + $0x568] sm:$0xff]
        %v604 = vld [vmem:[%s423 + $0x570] sm:$0xff]
        %v605 = vld [vmem:[%s423 + $0x578] sm:$0xff]
        %v606 = vld [vmem:[%s423 + $0x580] sm:$0xff]
        %v607 = vld [vmem:[%s423 + $0x588] sm:$0xff]
        %v608 = vld [vmem:[%s423 + $0x590] sm:$0xff]
        %v609 = vld [vmem:[%s423 + $0x598] sm:$0xff]
        %v610 = vld [vmem:[%s423 + $0x5a0] sm:$0xff]
        %v611 = vld [vmem:[%s423 + $0x5a8] sm:$0xff]
        %v612 = vld [vmem:[%s423 + $0x5b0] sm:$0xff]
        %v613 = vld [vmem:[%s423 + $0x5b8] sm:$0xff]
        %v614 = vld [vmem:[%s423 + $0x5c0] sm:$0xff]
        %v615 = vld [vmem:[%s423 + $0x5c8] sm:$0xff]
        %v616 = vld [vmem:[%s423 + $0x5d0] sm:$0xff]
        %v617 = vld [vmem:[%s423 + $0x5d8] sm:$0xff]
        %v618 = vld [vmem:[%s423 + $0x5e0] sm:$0xff]
        %v619 = vld [vmem:[%s423 + $0x5e8] sm:$0xff]
        %v620 = vld [vmem:[%s423 + $0x5f0] sm:$0xff]
        %v621 = vld [vmem:[%s423 + $0x5f8] sm:$0xff]
        %v622 = vld [vmem:[%s423 + $0x600] sm:$0xff]
        %v623 = vld [vmem:[%s423 + $0x608] sm:$0xff]
        %v624 = vld [vmem:[%s423 + $0x610] sm:$0xff]
        %v625 = vld [vmem:[%s423 + $0x618] sm:$0xff]
        %v626 = vld [vmem:[%s423 + $0x620] sm:$0xff]
        %v627 = vld [vmem:[%s423 + $0x628] sm:$0xff]
        %v628 = vld [vmem:[%s423 + $0x630] sm:$0xff]
        %v629 = vld [vmem:[%s423 + $0x638] sm:$0xff]
        %v630 = vld [vmem:[%s423 + $0x640] sm:$0xff]
        %v631 = vld [vmem:[%s423 + $0x648] sm:$0xff]
        %v632 = vld [vmem:[%s423 + $0x650] sm:$0xff]
        %v633 = vld [vmem:[%s423 + $0x658] sm:$0xff]
        %v634 = vld [vmem:[%s423 + $0x660] sm:$0xff]
        %v635 = vld [vmem:[%s423 + $0x668] sm:$0xff]
        %v636 = vld [vmem:[%s423 + $0x670] sm:$0xff]
        %v637 = vld [vmem:[%s423 + $0x678] sm:$0xff]
        %v638 = vld [vmem:[%s423 + $0x680] sm:$0xff]
        %v639 = vld [vmem:[%s423 + $0x688] sm:$0xff]
        %v640 = vld [vmem:[%s423 + $0x690] sm:$0xff]
        %v641 = vld [vmem:[%s423 + $0x698] sm:$0xff]
        %v642 = vld [vmem:[%s423 + $0x6a0] sm:$0xff]
        %v643 = vld [vmem:[%s423 + $0x6a8] sm:$0xff]
        %v644 = vld [vmem:[%s423 + $0x6b0] sm:$0xff]
        %v645 = vld [vmem:[%s423 + $0x6b8] sm:$0xff]
        %v646 = vld [vmem:[%s423 + $0x6c0] sm:$0xff]
        %v647 = vld [vmem:[%s423 + $0x6c8] sm:$0xff]
        %v648 = vld [vmem:[%s423 + $0x6d0] sm:$0xff]
        %v649 = vld [vmem:[%s423 + $0x6d8] sm:$0xff]
        %v650 = vld [vmem:[%s423 + $0x6e0] sm:$0xff]
        %v651 = vld [vmem:[%s423 + $0x6e8] sm:$0xff]
        %v652 = vld [vmem:[%s423 + $0x6f0] sm:$0xff]
        %v653 = vld [vmem:[%s423 + $0x6f8] sm:$0xff]
        %v654 = vld [vmem:[%s423 + $0x700] sm:$0xff]
        %v655 = vld [vmem:[%s423 + $0x708] sm:$0xff]
        %v656 = vld [vmem:[%s423 + $0x710] sm:$0xff]
        %v657 = vld [vmem:[%s423 + $0x718] sm:$0xff]
        %v658 = vld [vmem:[%s423 + $0x720] sm:$0xff]
        %v659 = vld [vmem:[%s423 + $0x728] sm:$0xff]
        %v660 = vld [vmem:[%s423 + $0x730] sm:$0xff]
        %v661 = vld [vmem:[%s423 + $0x738] sm:$0xff]
        %v662 = vld [vmem:[%s423 + $0x740] sm:$0xff]
        %v663 = vld [vmem:[%s423 + $0x748] sm:$0xff]
        %v664 = vld [vmem:[%s423 + $0x750] sm:$0xff]
        %v665 = vld [vmem:[%s423 + $0x758] sm:$0xff]
        %v666 = vld [vmem:[%s423 + $0x760] sm:$0xff]
        %v667 = vld [vmem:[%s423 + $0x768] sm:$0xff]
        %v668 = vld [vmem:[%s423 + $0x770] sm:$0xff]
        %v669 = vld [vmem:[%s423 + $0x778] sm:$0xff]
        %v670 = vld [vmem:[%s423 + $0x780] sm:$0xff]
        %v671 = vld [vmem:[%s423 + $0x788] sm:$0xff]
        %v672 = vld [vmem:[%s423 + $0x790] sm:$0xff]
        %v673 = vld [vmem:[%s423 + $0x798] sm:$0xff]
        %v674 = vld [vmem:[%s423 + $0x7a0] sm:$0xff]
        %v675 = vld [vmem:[%s423 + $0x7a8] sm:$0xff]
        %v676 = vld [vmem:[%s423 + $0x7b0] sm:$0xff]
        %v677 = vld [vmem:[%s423 + $0x7b8] sm:$0xff]
        %v678 = vld [vmem:[%s423 + $0x7c0] sm:$0xff]
        %v679 = vld [vmem:[%s423 + $0x7c8] sm:$0xff]
        %v680 = vld [vmem:[%s423 + $0x7d0] sm:$0xff]
        %v681 = vld [vmem:[%s423 + $0x7d8] sm:$0xff]
        %v682 = vld [vmem:[%s423 + $0x7e0] sm:$0xff]
        %v683 = vld [vmem:[%s423 + $0x7e8] sm:$0xff]
        %v684 = vld [vmem:[%s423 + $0x7f0] sm:$0xff]
        %v685 = vld [vmem:[%s423 + $0x7f8] sm:$0xff]
        %v686 = vpack.c.bf16 %v432, %v430
        %v687 = vpack.c.bf16 %v433, %v431
        %v688 = vpack.c.bf16 %v436, %v434
        %v689 = vpack.c.bf16 %v437, %v435
        %v690 = vpack.c.bf16 %v440, %v438
        %v691 = vpack.c.bf16 %v441, %v439
        %v692 = vpack.c.bf16 %v444, %v442
        %v693 = vpack.c.bf16 %v445, %v443
        %v694 = vpack.c.bf16 %v448, %v446
        %v695 = vpack.c.bf16 %v449, %v447
        %v696 = vpack.c.bf16 %v452, %v450
        %v697 = vpack.c.bf16 %v453, %v451
        %v698 = vpack.c.bf16 %v456, %v454
        %v699 = vpack.c.bf16 %v457, %v455
        %v700 = vpack.c.bf16 %v460, %v458
        %v701 = vpack.c.bf16 %v461, %v459
        %v702 = vpack.c.bf16 %v464, %v462
        %v703 = vpack.c.bf16 %v465, %v463
        %v704 = vpack.c.bf16 %v468, %v466
        %v705 = vpack.c.bf16 %v469, %v467
        %v706 = vpack.c.bf16 %v472, %v470
        %v707 = vpack.c.bf16 %v473, %v471
        %v708 = vpack.c.bf16 %v476, %v474
        %v709 = vpack.c.bf16 %v477, %v475
        %v710 = vpack.c.bf16 %v480, %v478
        %v711 = vpack.c.bf16 %v481, %v479
        %v712 = vpack.c.bf16 %v484, %v482
        %v713 = vpack.c.bf16 %v485, %v483
        %v714 = vpack.c.bf16 %v488, %v486
        %v715 = vpack.c.bf16 %v489, %v487
        %v716 = vpack.c.bf16 %v492, %v490
        %v717 = vpack.c.bf16 %v493, %v491
        %v718 = vpack.c.bf16 %v496, %v494
        %v719 = vpack.c.bf16 %v497, %v495
        %v720 = vpack.c.bf16 %v500, %v498
        %v721 = vpack.c.bf16 %v501, %v499
        %v722 = vpack.c.bf16 %v504, %v502
        %v723 = vpack.c.bf16 %v505, %v503
        %v724 = vpack.c.bf16 %v508, %v506
        %v725 = vpack.c.bf16 %v509, %v507
        %v726 = vpack.c.bf16 %v512, %v510
        %v727 = vpack.c.bf16 %v513, %v511
        %v728 = vpack.c.bf16 %v516, %v514
        %v729 = vpack.c.bf16 %v517, %v515
        %v730 = vpack.c.bf16 %v520, %v518
        %v731 = vpack.c.bf16 %v521, %v519
        %v732 = vpack.c.bf16 %v524, %v522
        %v733 = vpack.c.bf16 %v525, %v523
        %v734 = vpack.c.bf16 %v528, %v526
        %v735 = vpack.c.bf16 %v529, %v527
        %v736 = vpack.c.bf16 %v532, %v530
        %v737 = vpack.c.bf16 %v533, %v531
        %v738 = vpack.c.bf16 %v536, %v534
        %v739 = vpack.c.bf16 %v537, %v535
        %v740 = vpack.c.bf16 %v540, %v538
        %v741 = vpack.c.bf16 %v541, %v539
        %v742 = vpack.c.bf16 %v544, %v542
        %v743 = vpack.c.bf16 %v545, %v543
        %v744 = vpack.c.bf16 %v548, %v546
        %v745 = vpack.c.bf16 %v549, %v547
        %v746 = vpack.c.bf16 %v552, %v550
        %v747 = vpack.c.bf16 %v553, %v551
        %v748 = vpack.c.bf16 %v556, %v554
        %v749 = vpack.c.bf16 %v557, %v555
        %v750 = vpack.c.bf16 %v560, %v558
        %v751 = vpack.c.bf16 %v561, %v559
        %v752 = vpack.c.bf16 %v564, %v562
        %v753 = vpack.c.bf16 %v565, %v563
        %v754 = vpack.c.bf16 %v568, %v566
        %v755 = vpack.c.bf16 %v569, %v567
        %v756 = vpack.c.bf16 %v572, %v570
        %v757 = vpack.c.bf16 %v573, %v571
        %v758 = vpack.c.bf16 %v576, %v574
        %v759 = vpack.c.bf16 %v577, %v575
        %v760 = vpack.c.bf16 %v580, %v578
        %v761 = vpack.c.bf16 %v581, %v579
        %v762 = vpack.c.bf16 %v584, %v582
        %v763 = vpack.c.bf16 %v585, %v583
        %v764 = vpack.c.bf16 %v588, %v586
        %v765 = vpack.c.bf16 %v589, %v587
        %v766 = vpack.c.bf16 %v592, %v590
        %v767 = vpack.c.bf16 %v593, %v591
        %v768 = vpack.c.bf16 %v596, %v594
        %v769 = vpack.c.bf16 %v597, %v595
        %v770 = vpack.c.bf16 %v600, %v598
        %v771 = vpack.c.bf16 %v601, %v599
        %v772 = vpack.c.bf16 %v604, %v602
        %v773 = vpack.c.bf16 %v605, %v603
        %v774 = vpack.c.bf16 %v608, %v606
        %v775 = vpack.c.bf16 %v609, %v607
        %v776 = vpack.c.bf16 %v612, %v610
        %v777 = vpack.c.bf16 %v613, %v611
        %v778 = vpack.c.bf16 %v616, %v614
        %v779 = vpack.c.bf16 %v617, %v615
        %v780 = vpack.c.bf16 %v620, %v618
        %v781 = vpack.c.bf16 %v621, %v619
        %v782 = vpack.c.bf16 %v624, %v622
        %v783 = vpack.c.bf16 %v625, %v623
        %v784 = vpack.c.bf16 %v628, %v626
        %v785 = vpack.c.bf16 %v629, %v627
        %v786 = vpack.c.bf16 %v632, %v630
        %v787 = vpack.c.bf16 %v633, %v631
        %v788 = vpack.c.bf16 %v636, %v634
        %v789 = vpack.c.bf16 %v637, %v635
        %v790 = vpack.c.bf16 %v640, %v638
        %v791 = vpack.c.bf16 %v641, %v639
        %v792 = vpack.c.bf16 %v644, %v642
        %v793 = vpack.c.bf16 %v645, %v643
        %v794 = vpack.c.bf16 %v648, %v646
        %v795 = vpack.c.bf16 %v649, %v647
        %v796 = vpack.c.bf16 %v652, %v650
        %v797 = vpack.c.bf16 %v653, %v651
        %v798 = vpack.c.bf16 %v656, %v654
        %v799 = vpack.c.bf16 %v657, %v655
        %v800 = vpack.c.bf16 %v660, %v658
        %v801 = vpack.c.bf16 %v661, %v659
        %v802 = vpack.c.bf16 %v664, %v662
        %v803 = vpack.c.bf16 %v665, %v663
        %v804 = vpack.c.bf16 %v668, %v666
        %v805 = vpack.c.bf16 %v669, %v667
        %v806 = vpack.c.bf16 %v672, %v670
        %v807 = vpack.c.bf16 %v673, %v671
        %v808 = vpack.c.bf16 %v676, %v674
        %v809 = vpack.c.bf16 %v677, %v675
        %v810 = vpack.c.bf16 %v680, %v678
        %v811 = vpack.c.bf16 %v681, %v679
        %v812 = vpack.c.bf16 %v684, %v682
        %v813 = vpack.c.bf16 %v685, %v683
        %v814 = vld [vmem:[%s1] sm:$0xff]
        %v815 = vld [vmem:[%s1 + $0x8] sm:$0xff]
        %v816 = vld [vmem:[%s1 + $0x10] sm:$0xff]
        %v817 = vld [vmem:[%s1 + $0x18] sm:$0xff]
        %v818 = vld [vmem:[%s1 + $0x20] sm:$0xff]
        %v819 = vld [vmem:[%s1 + $0x28] sm:$0xff]
        %v820 = vld [vmem:[%s1 + $0x30] sm:$0xff]
        %v821 = vld [vmem:[%s1 + $0x38] sm:$0xff]
        %v822 = vld [vmem:[%s1 + $0x40] sm:$0xff]
        %v823 = vld [vmem:[%s1 + $0x48] sm:$0xff]
        %v824 = vld [vmem:[%s1 + $0x50] sm:$0xff]
        %v825 = vld [vmem:[%s1 + $0x58] sm:$0xff]
        %v826 = vld [vmem:[%s1 + $0x60] sm:$0xff]
        %v827 = vld [vmem:[%s1 + $0x68] sm:$0xff]
        %v828 = vld [vmem:[%s1 + $0x70] sm:$0xff]
        %v829 = vld [vmem:[%s1 + $0x78] sm:$0xff]
        %v830 = vld [vmem:[%s1 + $0x80] sm:$0xff]
        %v831 = vld [vmem:[%s1 + $0x88] sm:$0xff]
        %v832 = vld [vmem:[%s1 + $0x90] sm:$0xff]
        %v833 = vld [vmem:[%s1 + $0x98] sm:$0xff]
        %v834 = vld [vmem:[%s1 + $0xa0] sm:$0xff]
        %v835 = vld [vmem:[%s1 + $0xa8] sm:$0xff]
        %v836 = vld [vmem:[%s1 + $0xb0] sm:$0xff]
        %v837 = vld [vmem:[%s1 + $0xb8] sm:$0xff]
        %v838 = vld [vmem:[%s1 + $0xc0] sm:$0xff]
        %v839 = vld [vmem:[%s1 + $0xc8] sm:$0xff]
        %v840 = vld [vmem:[%s1 + $0xd0] sm:$0xff]
        %v841 = vld [vmem:[%s1 + $0xd8] sm:$0xff]
        %v842 = vld [vmem:[%s1 + $0xe0] sm:$0xff]
        %v843 = vld [vmem:[%s1 + $0xe8] sm:$0xff]
        %v844 = vld [vmem:[%s1 + $0xf0] sm:$0xff]
        %v845 = vld [vmem:[%s1 + $0xf8] sm:$0xff]
        %v846 = vld [vmem:[%s1 + $0x100] sm:$0xff]
        %v847 = vld [vmem:[%s1 + $0x108] sm:$0xff]
        %v848 = vld [vmem:[%s1 + $0x110] sm:$0xff]
        %v849 = vld [vmem:[%s1 + $0x118] sm:$0xff]
        %v850 = vld [vmem:[%s1 + $0x120] sm:$0xff]
        %v851 = vld [vmem:[%s1 + $0x128] sm:$0xff]
        %v852 = vld [vmem:[%s1 + $0x130] sm:$0xff]
        %v853 = vld [vmem:[%s1 + $0x138] sm:$0xff]
        %v854 = vld [vmem:[%s1 + $0x140] sm:$0xff]
        %v855 = vld [vmem:[%s1 + $0x148] sm:$0xff]
        %v856 = vld [vmem:[%s1 + $0x150] sm:$0xff]
        %v857 = vld [vmem:[%s1 + $0x158] sm:$0xff]
        %v858 = vld [vmem:[%s1 + $0x160] sm:$0xff]
        %v859 = vld [vmem:[%s1 + $0x168] sm:$0xff]
        %v860 = vld [vmem:[%s1 + $0x170] sm:$0xff]
        %v861 = vld [vmem:[%s1 + $0x178] sm:$0xff]
        %v862 = vld [vmem:[%s1 + $0x180] sm:$0xff]
        %v863 = vld [vmem:[%s1 + $0x188] sm:$0xff]
        %v864 = vld [vmem:[%s1 + $0x190] sm:$0xff]
        %v865 = vld [vmem:[%s1 + $0x198] sm:$0xff]
        %v866 = vld [vmem:[%s1 + $0x1a0] sm:$0xff]
        %v867 = vld [vmem:[%s1 + $0x1a8] sm:$0xff]
        %v868 = vld [vmem:[%s1 + $0x1b0] sm:$0xff]
        %v869 = vld [vmem:[%s1 + $0x1b8] sm:$0xff]
        %v870 = vld [vmem:[%s1 + $0x1c0] sm:$0xff]
        %v871 = vld [vmem:[%s1 + $0x1c8] sm:$0xff]
        %v872 = vld [vmem:[%s1 + $0x1d0] sm:$0xff]
        %v873 = vld [vmem:[%s1 + $0x1d8] sm:$0xff]
        %v874 = vld [vmem:[%s1 + $0x1e0] sm:$0xff]
        %v875 = vld [vmem:[%s1 + $0x1e8] sm:$0xff]
        %v876 = vld [vmem:[%s1 + $0x1f0] sm:$0xff]
        %v877 = vld [vmem:[%s1 + $0x1f8] sm:$0xff]
        %v878 = vld [vmem:[%s1 + $0x200] sm:$0xff]
        %v879 = vld [vmem:[%s1 + $0x208] sm:$0xff]
        %v880 = vld [vmem:[%s1 + $0x210] sm:$0xff]
        %v881 = vld [vmem:[%s1 + $0x218] sm:$0xff]
        %v882 = vld [vmem:[%s1 + $0x220] sm:$0xff]
        %v883 = vld [vmem:[%s1 + $0x228] sm:$0xff]
        %v884 = vld [vmem:[%s1 + $0x230] sm:$0xff]
        %v885 = vld [vmem:[%s1 + $0x238] sm:$0xff]
        %v886 = vld [vmem:[%s1 + $0x240] sm:$0xff]
        %v887 = vld [vmem:[%s1 + $0x248] sm:$0xff]
        %v888 = vld [vmem:[%s1 + $0x250] sm:$0xff]
        %v889 = vld [vmem:[%s1 + $0x258] sm:$0xff]
        %v890 = vld [vmem:[%s1 + $0x260] sm:$0xff]
        %v891 = vld [vmem:[%s1 + $0x268] sm:$0xff]
        %v892 = vld [vmem:[%s1 + $0x270] sm:$0xff]
        %v893 = vld [vmem:[%s1 + $0x278] sm:$0xff]
        %v894 = vld [vmem:[%s1 + $0x280] sm:$0xff]
        %v895 = vld [vmem:[%s1 + $0x288] sm:$0xff]
        %v896 = vld [vmem:[%s1 + $0x290] sm:$0xff]
        %v897 = vld [vmem:[%s1 + $0x298] sm:$0xff]
        %v898 = vld [vmem:[%s1 + $0x2a0] sm:$0xff]
        %v899 = vld [vmem:[%s1 + $0x2a8] sm:$0xff]
        %v900 = vld [vmem:[%s1 + $0x2b0] sm:$0xff]
        %v901 = vld [vmem:[%s1 + $0x2b8] sm:$0xff]
        %v902 = vld [vmem:[%s1 + $0x2c0] sm:$0xff]
        %v903 = vld [vmem:[%s1 + $0x2c8] sm:$0xff]
        %v904 = vld [vmem:[%s1 + $0x2d0] sm:$0xff]
        %v905 = vld [vmem:[%s1 + $0x2d8] sm:$0xff]
        %v906 = vld [vmem:[%s1 + $0x2e0] sm:$0xff]
        %v907 = vld [vmem:[%s1 + $0x2e8] sm:$0xff]
        %v908 = vld [vmem:[%s1 + $0x2f0] sm:$0xff]
        %v909 = vld [vmem:[%s1 + $0x2f8] sm:$0xff]
        %v910 = vld [vmem:[%s1 + $0x300] sm:$0xff]
        %v911 = vld [vmem:[%s1 + $0x308] sm:$0xff]
        %v912 = vld [vmem:[%s1 + $0x310] sm:$0xff]
        %v913 = vld [vmem:[%s1 + $0x318] sm:$0xff]
        %v914 = vld [vmem:[%s1 + $0x320] sm:$0xff]
        %v915 = vld [vmem:[%s1 + $0x328] sm:$0xff]
        %v916 = vld [vmem:[%s1 + $0x330] sm:$0xff]
        %v917 = vld [vmem:[%s1 + $0x338] sm:$0xff]
        %v918 = vld [vmem:[%s1 + $0x340] sm:$0xff]
        %v919 = vld [vmem:[%s1 + $0x348] sm:$0xff]
        %v920 = vld [vmem:[%s1 + $0x350] sm:$0xff]
        %v921 = vld [vmem:[%s1 + $0x358] sm:$0xff]
        %v922 = vld [vmem:[%s1 + $0x360] sm:$0xff]
        %v923 = vld [vmem:[%s1 + $0x368] sm:$0xff]
        %v924 = vld [vmem:[%s1 + $0x370] sm:$0xff]
        %v925 = vld [vmem:[%s1 + $0x378] sm:$0xff]
        %v926 = vld [vmem:[%s1 + $0x380] sm:$0xff]
        %v927 = vld [vmem:[%s1 + $0x388] sm:$0xff]
        %v928 = vld [vmem:[%s1 + $0x390] sm:$0xff]
        %v929 = vld [vmem:[%s1 + $0x398] sm:$0xff]
        %v930 = vld [vmem:[%s1 + $0x3a0] sm:$0xff]
        %v931 = vld [vmem:[%s1 + $0x3a8] sm:$0xff]
        %v932 = vld [vmem:[%s1 + $0x3b0] sm:$0xff]
        %v933 = vld [vmem:[%s1 + $0x3b8] sm:$0xff]
        %v934 = vld [vmem:[%s1 + $0x3c0] sm:$0xff]
        %v935 = vld [vmem:[%s1 + $0x3c8] sm:$0xff]
        %v936 = vld [vmem:[%s1 + $0x3d0] sm:$0xff]
        %v937 = vld [vmem:[%s1 + $0x3d8] sm:$0xff]
        %v938 = vld [vmem:[%s1 + $0x3e0] sm:$0xff]
        %v939 = vld [vmem:[%s1 + $0x3e8] sm:$0xff]
        %v940 = vld [vmem:[%s1 + $0x3f0] sm:$0xff]
        %v941 = vld [vmem:[%s1 + $0x3f8] sm:$0xff]
        %v1070 = vunpack.c.l.b16 %v814
        %v1071 = vunpack.c.h.b16 %v814
        %v1072 = vunpack.c.l.b16 %v815
        %v1073 = vunpack.c.h.b16 %v815
        %v1074 = vunpack.c.l.b16 %v816
        %v1075 = vunpack.c.h.b16 %v816
        %v1076 = vunpack.c.l.b16 %v817
        %v1077 = vunpack.c.h.b16 %v817
        %v1078 = vunpack.c.l.b16 %v818
        %v1079 = vunpack.c.h.b16 %v818
        %v1080 = vunpack.c.l.b16 %v819
        %v1081 = vunpack.c.h.b16 %v819
        %v1082 = vunpack.c.l.b16 %v820
        %v1083 = vunpack.c.h.b16 %v820
        %v1084 = vunpack.c.l.b16 %v821
        %v1085 = vunpack.c.h.b16 %v821
        %v1086 = vunpack.c.l.b16 %v822
        %v1087 = vunpack.c.h.b16 %v822
        %v1088 = vunpack.c.l.b16 %v823
        %v1089 = vunpack.c.h.b16 %v823
        %v1090 = vunpack.c.l.b16 %v824
        %v1091 = vunpack.c.h.b16 %v824
        %v1092 = vunpack.c.l.b16 %v825
        %v1093 = vunpack.c.h.b16 %v825
        %v1094 = vunpack.c.l.b16 %v826
        %v1095 = vunpack.c.h.b16 %v826
        %v1096 = vunpack.c.l.b16 %v827
        %v1097 = vunpack.c.h.b16 %v827
        %v1098 = vunpack.c.l.b16 %v828
        %v1099 = vunpack.c.h.b16 %v828
        %v1100 = vunpack.c.l.b16 %v829
        %v1101 = vunpack.c.h.b16 %v829
        %v1102 = vunpack.c.l.b16 %v830
        %v1103 = vunpack.c.h.b16 %v830
        %v1104 = vunpack.c.l.b16 %v831
        %v1105 = vunpack.c.h.b16 %v831
        %v1106 = vunpack.c.l.b16 %v832
        %v1107 = vunpack.c.h.b16 %v832
        %v1108 = vunpack.c.l.b16 %v833
        %v1109 = vunpack.c.h.b16 %v833
        %v1110 = vunpack.c.l.b16 %v834
        %v1111 = vunpack.c.h.b16 %v834
        %v1112 = vunpack.c.l.b16 %v835
        %v1113 = vunpack.c.h.b16 %v835
        %v1114 = vunpack.c.l.b16 %v836
        %v1115 = vunpack.c.h.b16 %v836
        %v1116 = vunpack.c.l.b16 %v837
        %v1117 = vunpack.c.h.b16 %v837
        %v1118 = vunpack.c.l.b16 %v838
        %v1119 = vunpack.c.h.b16 %v838
        %v1120 = vunpack.c.l.b16 %v839
        %v1121 = vunpack.c.h.b16 %v839
        %v1122 = vunpack.c.l.b16 %v840
        %v1123 = vunpack.c.h.b16 %v840
        %v1124 = vunpack.c.l.b16 %v841
        %v1125 = vunpack.c.h.b16 %v841
        %v1126 = vunpack.c.l.b16 %v842
        %v1127 = vunpack.c.h.b16 %v842
        %v1128 = vunpack.c.l.b16 %v843
        %v1129 = vunpack.c.h.b16 %v843
        %v1130 = vunpack.c.l.b16 %v844
        %v1131 = vunpack.c.h.b16 %v844
        %v1132 = vunpack.c.l.b16 %v845
        %v1133 = vunpack.c.h.b16 %v845
        %v1134 = vunpack.c.l.b16 %v846
        %v1135 = vunpack.c.h.b16 %v846
        %v1136 = vunpack.c.l.b16 %v847
        %v1137 = vunpack.c.h.b16 %v847
        %v1138 = vunpack.c.l.b16 %v848
        %v1139 = vunpack.c.h.b16 %v848
        %v1140 = vunpack.c.l.b16 %v849
        %v1141 = vunpack.c.h.b16 %v849
        %v1142 = vunpack.c.l.b16 %v850
        %v1143 = vunpack.c.h.b16 %v850
        %v1144 = vunpack.c.l.b16 %v851
        %v1145 = vunpack.c.h.b16 %v851
        %v1146 = vunpack.c.l.b16 %v852
        %v1147 = vunpack.c.h.b16 %v852
        %v1148 = vunpack.c.l.b16 %v853
        %v1149 = vunpack.c.h.b16 %v853
        %v1150 = vunpack.c.l.b16 %v854
        %v1151 = vunpack.c.h.b16 %v854
        %v1152 = vunpack.c.l.b16 %v855
        %v1153 = vunpack.c.h.b16 %v855
        %v1154 = vunpack.c.l.b16 %v856
        %v1155 = vunpack.c.h.b16 %v856
        %v1156 = vunpack.c.l.b16 %v857
        %v1157 = vunpack.c.h.b16 %v857
        %v1158 = vunpack.c.l.b16 %v858
        %v1159 = vunpack.c.h.b16 %v858
        %v1160 = vunpack.c.l.b16 %v859
        %v1161 = vunpack.c.h.b16 %v859
        %v1162 = vunpack.c.l.b16 %v860
        %v1163 = vunpack.c.h.b16 %v860
        %v1164 = vunpack.c.l.b16 %v861
        %v1165 = vunpack.c.h.b16 %v861
        %v1166 = vunpack.c.l.b16 %v862
        %v1167 = vunpack.c.h.b16 %v862
        %v1168 = vunpack.c.l.b16 %v863
        %v1169 = vunpack.c.h.b16 %v863
        %v1170 = vunpack.c.l.b16 %v864
        %v1171 = vunpack.c.h.b16 %v864
        %v1172 = vunpack.c.l.b16 %v865
        %v1173 = vunpack.c.h.b16 %v865
        %v1174 = vunpack.c.l.b16 %v866
        %v1175 = vunpack.c.h.b16 %v866
        %v1176 = vunpack.c.l.b16 %v867
        %v1177 = vunpack.c.h.b16 %v867
        %v1178 = vunpack.c.l.b16 %v868
        %v1179 = vunpack.c.h.b16 %v868
        %v1180 = vunpack.c.l.b16 %v869
        %v1181 = vunpack.c.h.b16 %v869
        %v1182 = vunpack.c.l.b16 %v870
        %v1183 = vunpack.c.h.b16 %v870
        %v1184 = vunpack.c.l.b16 %v871
        %v1185 = vunpack.c.h.b16 %v871
        %v1186 = vunpack.c.l.b16 %v872
        %v1187 = vunpack.c.h.b16 %v872
        %v1188 = vunpack.c.l.b16 %v873
        %v1189 = vunpack.c.h.b16 %v873
        %v1190 = vunpack.c.l.b16 %v874
        %v1191 = vunpack.c.h.b16 %v874
        %v1192 = vunpack.c.l.b16 %v875
        %v1193 = vunpack.c.h.b16 %v875
        %v1194 = vunpack.c.l.b16 %v876
        %v1195 = vunpack.c.h.b16 %v876
        %v1196 = vunpack.c.l.b16 %v877
        %v1197 = vunpack.c.h.b16 %v877
        %v1198 = vunpack.c.l.b16 %v878
        %v1199 = vunpack.c.h.b16 %v878
        %v1200 = vunpack.c.l.b16 %v879
        %v1201 = vunpack.c.h.b16 %v879
        %v1202 = vunpack.c.l.b16 %v880
        %v1203 = vunpack.c.h.b16 %v880
        %v1204 = vunpack.c.l.b16 %v881
        %v1205 = vunpack.c.h.b16 %v881
        %v1206 = vunpack.c.l.b16 %v882
        %v1207 = vunpack.c.h.b16 %v882
        %v1208 = vunpack.c.l.b16 %v883
        %v1209 = vunpack.c.h.b16 %v883
        %v1210 = vunpack.c.l.b16 %v884
        %v1211 = vunpack.c.h.b16 %v884
        %v1212 = vunpack.c.l.b16 %v885
        %v1213 = vunpack.c.h.b16 %v885
        %v1214 = vunpack.c.l.b16 %v886
        %v1215 = vunpack.c.h.b16 %v886
        %v1216 = vunpack.c.l.b16 %v887
        %v1217 = vunpack.c.h.b16 %v887
        %v1218 = vunpack.c.l.b16 %v888
        %v1219 = vunpack.c.h.b16 %v888
        %v1220 = vunpack.c.l.b16 %v889
        %v1221 = vunpack.c.h.b16 %v889
        %v1222 = vunpack.c.l.b16 %v890
        %v1223 = vunpack.c.h.b16 %v890
        %v1224 = vunpack.c.l.b16 %v891
        %v1225 = vunpack.c.h.b16 %v891
        %v1226 = vunpack.c.l.b16 %v892
        %v1227 = vunpack.c.h.b16 %v892
        %v1228 = vunpack.c.l.b16 %v893
        %v1229 = vunpack.c.h.b16 %v893
        %v1230 = vunpack.c.l.b16 %v894
        %v1231 = vunpack.c.h.b16 %v894
        %v1232 = vunpack.c.l.b16 %v895
        %v1233 = vunpack.c.h.b16 %v895
        %v1234 = vunpack.c.l.b16 %v896
        %v1235 = vunpack.c.h.b16 %v896
        %v1236 = vunpack.c.l.b16 %v897
        %v1237 = vunpack.c.h.b16 %v897
        %v1238 = vunpack.c.l.b16 %v898
        %v1239 = vunpack.c.h.b16 %v898
        %v1240 = vunpack.c.l.b16 %v899
        %v1241 = vunpack.c.h.b16 %v899
        %v1242 = vunpack.c.l.b16 %v900
        %v1243 = vunpack.c.h.b16 %v900
        %v1244 = vunpack.c.l.b16 %v901
        %v1245 = vunpack.c.h.b16 %v901
        %v1246 = vunpack.c.l.b16 %v902
        %v1247 = vunpack.c.h.b16 %v902
        %v1248 = vunpack.c.l.b16 %v903
        %v1249 = vunpack.c.h.b16 %v903
        %v1250 = vunpack.c.l.b16 %v904
        %v1251 = vunpack.c.h.b16 %v904
        %v1252 = vunpack.c.l.b16 %v905
        %v1253 = vunpack.c.h.b16 %v905
        %v1254 = vunpack.c.l.b16 %v906
        %v1255 = vunpack.c.h.b16 %v906
        %v1256 = vunpack.c.l.b16 %v907
        %v1257 = vunpack.c.h.b16 %v907
        %v1258 = vunpack.c.l.b16 %v908
        %v1259 = vunpack.c.h.b16 %v908
        %v1260 = vunpack.c.l.b16 %v909
        %v1261 = vunpack.c.h.b16 %v909
        %v1262 = vunpack.c.l.b16 %v910
        %v1263 = vunpack.c.h.b16 %v910
        %v1264 = vunpack.c.l.b16 %v911
        %v1265 = vunpack.c.h.b16 %v911
        %v1266 = vunpack.c.l.b16 %v912
        %v1267 = vunpack.c.h.b16 %v912
        %v1268 = vunpack.c.l.b16 %v913
        %v1269 = vunpack.c.h.b16 %v913
        %v1270 = vunpack.c.l.b16 %v914
        %v1271 = vunpack.c.h.b16 %v914
        %v1272 = vunpack.c.l.b16 %v915
        %v1273 = vunpack.c.h.b16 %v915
        %v1274 = vunpack.c.l.b16 %v916
        %v1275 = vunpack.c.h.b16 %v916
        %v1276 = vunpack.c.l.b16 %v917
        %v1277 = vunpack.c.h.b16 %v917
        %v1278 = vunpack.c.l.b16 %v918
        %v1279 = vunpack.c.h.b16 %v918
        %v1280 = vunpack.c.l.b16 %v919
        %v1281 = vunpack.c.h.b16 %v919
        %v1282 = vunpack.c.l.b16 %v920
        %v1283 = vunpack.c.h.b16 %v920
        %v1284 = vunpack.c.l.b16 %v921
        %v1285 = vunpack.c.h.b16 %v921
        %v1286 = vunpack.c.l.b16 %v922
        %v1287 = vunpack.c.h.b16 %v922
        %v1288 = vunpack.c.l.b16 %v923
        %v1289 = vunpack.c.h.b16 %v923
        %v1290 = vunpack.c.l.b16 %v924
        %v1291 = vunpack.c.h.b16 %v924
        %v1292 = vunpack.c.l.b16 %v925
        %v1293 = vunpack.c.h.b16 %v925
        %v1294 = vunpack.c.l.b16 %v926
        %v1295 = vunpack.c.h.b16 %v926
        %v1296 = vunpack.c.l.b16 %v927
        %v1297 = vunpack.c.h.b16 %v927
        %v1298 = vunpack.c.l.b16 %v928
        %v1299 = vunpack.c.h.b16 %v928
        %v1300 = vunpack.c.l.b16 %v929
        %v1301 = vunpack.c.h.b16 %v929
        %v1302 = vunpack.c.l.b16 %v930
        %v1303 = vunpack.c.h.b16 %v930
        %v1304 = vunpack.c.l.b16 %v931
        %v1305 = vunpack.c.h.b16 %v931
        %v1306 = vunpack.c.l.b16 %v932
        %v1307 = vunpack.c.h.b16 %v932
        %v1308 = vunpack.c.l.b16 %v933
        %v1309 = vunpack.c.h.b16 %v933
        %v1310 = vunpack.c.l.b16 %v934
        %v1311 = vunpack.c.h.b16 %v934
        %v1312 = vunpack.c.l.b16 %v935
        %v1313 = vunpack.c.h.b16 %v935
        %v1314 = vunpack.c.l.b16 %v936
        %v1315 = vunpack.c.h.b16 %v936
        %v1316 = vunpack.c.l.b16 %v937
        %v1317 = vunpack.c.h.b16 %v937
        %v1318 = vunpack.c.l.b16 %v938
        %v1319 = vunpack.c.h.b16 %v938
        %v1320 = vunpack.c.l.b16 %v939
        %v1321 = vunpack.c.h.b16 %v939
        %v1322 = vunpack.c.l.b16 %v940
        %v1323 = vunpack.c.h.b16 %v940
        %v1324 = vunpack.c.l.b16 %v941
        %v1325 = vunpack.c.h.b16 %v941
        %v1326 = vpack.c.b16 %v1078, %v1070
        %v1327 = vpack.c.b16 %v1079, %v1071
        %v1328 = vpack.c.b16 %v1080, %v1072
        %v1329 = vpack.c.b16 %v1081, %v1073
        %v1330 = vpack.c.b16 %v1082, %v1074
        %v1331 = vpack.c.b16 %v1083, %v1075
        %v1332 = vpack.c.b16 %v1084, %v1076
        %v1333 = vpack.c.b16 %v1085, %v1077
        %v1334 = vpack.c.b16 %v1094, %v1086
        %v1335 = vpack.c.b16 %v1095, %v1087
        %v1336 = vpack.c.b16 %v1096, %v1088
        %v1337 = vpack.c.b16 %v1097, %v1089
        %v1338 = vpack.c.b16 %v1098, %v1090
        %v1339 = vpack.c.b16 %v1099, %v1091
        %v1340 = vpack.c.b16 %v1100, %v1092
        %v1341 = vpack.c.b16 %v1101, %v1093
        %v1342 = vpack.c.b16 %v1110, %v1102
        %v1343 = vpack.c.b16 %v1111, %v1103
        %v1344 = vpack.c.b16 %v1112, %v1104
        %v1345 = vpack.c.b16 %v1113, %v1105
        %v1346 = vpack.c.b16 %v1114, %v1106
        %v1347 = vpack.c.b16 %v1115, %v1107
        %v1348 = vpack.c.b16 %v1116, %v1108
        %v1349 = vpack.c.b16 %v1117, %v1109
        %v1350 = vpack.c.b16 %v1126, %v1118
        %v1351 = vpack.c.b16 %v1127, %v1119
        %v1352 = vpack.c.b16 %v1128, %v1120
        %v1353 = vpack.c.b16 %v1129, %v1121
        %v1354 = vpack.c.b16 %v1130, %v1122
        %v1355 = vpack.c.b16 %v1131, %v1123
        %v1356 = vpack.c.b16 %v1132, %v1124
        %v1357 = vpack.c.b16 %v1133, %v1125
        %v1358 = vpack.c.b16 %v1142, %v1134
        %v1359 = vpack.c.b16 %v1143, %v1135
        %v1360 = vpack.c.b16 %v1144, %v1136
        %v1361 = vpack.c.b16 %v1145, %v1137
        %v1362 = vpack.c.b16 %v1146, %v1138
        %v1363 = vpack.c.b16 %v1147, %v1139
        %v1364 = vpack.c.b16 %v1148, %v1140
        %v1365 = vpack.c.b16 %v1149, %v1141
        %v1366 = vpack.c.b16 %v1158, %v1150
        %v1367 = vpack.c.b16 %v1159, %v1151
        %v1368 = vpack.c.b16 %v1160, %v1152
        %v1369 = vpack.c.b16 %v1161, %v1153
        %v1370 = vpack.c.b16 %v1162, %v1154
        %v1371 = vpack.c.b16 %v1163, %v1155
        %v1372 = vpack.c.b16 %v1164, %v1156
        %v1373 = vpack.c.b16 %v1165, %v1157
        %v1374 = vpack.c.b16 %v1174, %v1166
        %v1375 = vpack.c.b16 %v1175, %v1167
        %v1376 = vpack.c.b16 %v1176, %v1168
        %v1377 = vpack.c.b16 %v1177, %v1169
        %v1378 = vpack.c.b16 %v1178, %v1170
        %v1379 = vpack.c.b16 %v1179, %v1171
        %v1380 = vpack.c.b16 %v1180, %v1172
        %v1381 = vpack.c.b16 %v1181, %v1173
        %v1382 = vpack.c.b16 %v1190, %v1182
        %v1383 = vpack.c.b16 %v1191, %v1183
        %v1384 = vpack.c.b16 %v1192, %v1184
        %v1385 = vpack.c.b16 %v1193, %v1185
        %v1386 = vpack.c.b16 %v1194, %v1186
        %v1387 = vpack.c.b16 %v1195, %v1187
        %v1388 = vpack.c.b16 %v1196, %v1188
        %v1389 = vpack.c.b16 %v1197, %v1189
        %v1390 = vpack.c.b16 %v1206, %v1198
        %v1391 = vpack.c.b16 %v1207, %v1199
        %v1392 = vpack.c.b16 %v1208, %v1200
        %v1393 = vpack.c.b16 %v1209, %v1201
        %v1394 = vpack.c.b16 %v1210, %v1202
        %v1395 = vpack.c.b16 %v1211, %v1203
        %v1396 = vpack.c.b16 %v1212, %v1204
        %v1397 = vpack.c.b16 %v1213, %v1205
        %v1398 = vpack.c.b16 %v1222, %v1214
        %v1399 = vpack.c.b16 %v1223, %v1215
        %v1400 = vpack.c.b16 %v1224, %v1216
        %v1401 = vpack.c.b16 %v1225, %v1217
        %v1402 = vpack.c.b16 %v1226, %v1218
        %v1403 = vpack.c.b16 %v1227, %v1219
        %v1404 = vpack.c.b16 %v1228, %v1220
        %v1405 = vpack.c.b16 %v1229, %v1221
        %v1406 = vpack.c.b16 %v1238, %v1230
        %v1407 = vpack.c.b16 %v1239, %v1231
        %v1408 = vpack.c.b16 %v1240, %v1232
        %v1409 = vpack.c.b16 %v1241, %v1233
        %v1410 = vpack.c.b16 %v1242, %v1234
        %v1411 = vpack.c.b16 %v1243, %v1235
        %v1412 = vpack.c.b16 %v1244, %v1236
        %v1413 = vpack.c.b16 %v1245, %v1237
        %v1414 = vpack.c.b16 %v1254, %v1246
        %v1415 = vpack.c.b16 %v1255, %v1247
        %v1416 = vpack.c.b16 %v1256, %v1248
        %v1417 = vpack.c.b16 %v1257, %v1249
        %v1418 = vpack.c.b16 %v1258, %v1250
        %v1419 = vpack.c.b16 %v1259, %v1251
        %v1420 = vpack.c.b16 %v1260, %v1252
        %v1421 = vpack.c.b16 %v1261, %v1253
        %v1422 = vpack.c.b16 %v1270, %v1262
        %v1423 = vpack.c.b16 %v1271, %v1263
        %v1424 = vpack.c.b16 %v1272, %v1264
        %v1425 = vpack.c.b16 %v1273, %v1265
        %v1426 = vpack.c.b16 %v1274, %v1266
        %v1427 = vpack.c.b16 %v1275, %v1267
        %v1428 = vpack.c.b16 %v1276, %v1268
        %v1429 = vpack.c.b16 %v1277, %v1269
        %v1430 = vpack.c.b16 %v1286, %v1278
        %v1431 = vpack.c.b16 %v1287, %v1279
        %v1432 = vpack.c.b16 %v1288, %v1280
        %v1433 = vpack.c.b16 %v1289, %v1281
        %v1434 = vpack.c.b16 %v1290, %v1282
        %v1435 = vpack.c.b16 %v1291, %v1283
        %v1436 = vpack.c.b16 %v1292, %v1284
        %v1437 = vpack.c.b16 %v1293, %v1285
        %v1438 = vpack.c.b16 %v1302, %v1294
        %v1439 = vpack.c.b16 %v1303, %v1295
        %v1440 = vpack.c.b16 %v1304, %v1296
        %v1441 = vpack.c.b16 %v1305, %v1297
        %v1442 = vpack.c.b16 %v1306, %v1298
        %v1443 = vpack.c.b16 %v1307, %v1299
        %v1444 = vpack.c.b16 %v1308, %v1300
        %v1445 = vpack.c.b16 %v1309, %v1301
        %v1446 = vpack.c.b16 %v1318, %v1310
        %v1447 = vpack.c.b16 %v1319, %v1311
        %v1448 = vpack.c.b16 %v1320, %v1312
        %v1449 = vpack.c.b16 %v1321, %v1313
        %v1450 = vpack.c.b16 %v1322, %v1314
        %v1451 = vpack.c.b16 %v1323, %v1315
        %v1452 = vpack.c.b16 %v1324, %v1316
        %v1453 = vpack.c.b16 %v1325, %v1317
        %1582 = vmatpush.bf16.msra.mxu0 %v700
        %1583 = vmatpush.bf16.msra.mxu0 %v698
        %1584 = vmatpush.bf16.msra.mxu0 %v696
        %1585 = vmatpush.bf16.msra.mxu0 %v694
        %1586 = vmatpush.bf16.msra.mxu0 %v692
        %1587 = vmatpush.bf16.msra.mxu0 %v690
        %1588 = vmatpush.bf16.msra.mxu0 %v688
        %1589 = vmatpush.bf16.msra.mxu0 %v686
        %1590 = vmatmul.bf16.gmra.mxu0 %v1326
        %v1591 = vpop.f32.mrf.mxu0
        %v1592 = vadd.f32 0.0, %v1591
        %v1593 = vpop.f32.mrf.mxu0
        %v1594 = vadd.f32 0.0, %v1593
        %1595 = vmatmul.bf16.gmra.mxu0 %v1334
        %v1596 = vpop.f32.mrf.mxu0
        %v1597 = vadd.f32 0.0, %v1596
        %v1598 = vpop.f32.mrf.mxu0
        %v1599 = vadd.f32 0.0, %v1598
        %1600 = vmatmul.bf16.gmra.mxu0 %v1342
        %v1601 = vpop.f32.mrf.mxu0
        %v1602 = vadd.f32 0.0, %v1601
        %v1603 = vpop.f32.mrf.mxu0
        %v1604 = vadd.f32 0.0, %v1603
        %1605 = vmatmul.bf16.gmra.mxu0 %v1350
        %v1606 = vpop.f32.mrf.mxu0
        %v1607 = vadd.f32 0.0, %v1606
        %v1608 = vpop.f32.mrf.mxu0
        %v1609 = vadd.f32 0.0, %v1608
        %1610 = vmatmul.bf16.gmra.mxu0 %v1358
        %v1611 = vpop.f32.mrf.mxu0
        %v1612 = vadd.f32 0.0, %v1611
        %v1613 = vpop.f32.mrf.mxu0
        %v1614 = vadd.f32 0.0, %v1613
        %1615 = vmatmul.bf16.gmra.mxu0 %v1366
        %v1616 = vpop.f32.mrf.mxu0
        %v1617 = vadd.f32 0.0, %v1616
        %v1618 = vpop.f32.mrf.mxu0
        %v1619 = vadd.f32 0.0, %v1618
        %1620 = vmatmul.bf16.gmra.mxu0 %v1374
        %v1621 = vpop.f32.mrf.mxu0
        %v1622 = vadd.f32 0.0, %v1621
        %v1623 = vpop.f32.mrf.mxu0
        %v1624 = vadd.f32 0.0, %v1623
        %1625 = vmatmul.bf16.gmra.mxu0 %v1382
        %v1626 = vpop.f32.mrf.mxu0
        %v1627 = vadd.f32 0.0, %v1626
        %v1628 = vpop.f32.mrf.mxu0
        %v1629 = vadd.f32 0.0, %v1628
        %1630 = vmatmul.bf16.gmra.mxu0 %v1390
        %v1631 = vpop.f32.mrf.mxu0
        %v1632 = vadd.f32 0.0, %v1631
        %v1633 = vpop.f32.mrf.mxu0
        %v1634 = vadd.f32 0.0, %v1633
        %1635 = vmatmul.bf16.gmra.mxu0 %v1398
        %v1636 = vpop.f32.mrf.mxu0
        %v1637 = vadd.f32 0.0, %v1636
        %v1638 = vpop.f32.mrf.mxu0
        %v1639 = vadd.f32 0.0, %v1638
        %1640 = vmatmul.bf16.gmra.mxu0 %v1406
        %v1641 = vpop.f32.mrf.mxu0
        %v1642 = vadd.f32 0.0, %v1641
        %v1643 = vpop.f32.mrf.mxu0
        %v1644 = vadd.f32 0.0, %v1643
        %1645 = vmatmul.bf16.gmra.mxu0 %v1414
        %v1646 = vpop.f32.mrf.mxu0
        %v1647 = vadd.f32 0.0, %v1646
        %v1648 = vpop.f32.mrf.mxu0
        %v1649 = vadd.f32 0.0, %v1648
        %1650 = vmatmul.bf16.gmra.mxu0 %v1422
        %v1651 = vpop.f32.mrf.mxu0
        %v1652 = vadd.f32 0.0, %v1651
        %v1653 = vpop.f32.mrf.mxu0
        %v1654 = vadd.f32 0.0, %v1653
        %1655 = vmatmul.bf16.gmra.mxu0 %v1430
        %v1656 = vpop.f32.mrf.mxu0
        %v1657 = vadd.f32 0.0, %v1656
        %v1658 = vpop.f32.mrf.mxu0
        %v1659 = vadd.f32 0.0, %v1658
        %1660 = vmatmul.bf16.gmra.mxu0 %v1438
        %v1661 = vpop.f32.mrf.mxu0
        %v1662 = vadd.f32 0.0, %v1661
        %v1663 = vpop.f32.mrf.mxu0
        %v1664 = vadd.f32 0.0, %v1663
        %1665 = vmatmul.bf16.gmra.mxu0 %v1446
        %v1666 = vpop.f32.mrf.mxu0
        %v1667 = vadd.f32 0.0, %v1666
        %v1668 = vpop.f32.mrf.mxu0
        %v1669 = vadd.f32 0.0, %v1668
        %1670 = vdwg.mxu0
        %1671 = vmatpush.bf16.msra.mxu0 %v716
        %1672 = vmatpush.bf16.msra.mxu0 %v714
        %1673 = vmatpush.bf16.msra.mxu0 %v712
        %1674 = vmatpush.bf16.msra.mxu0 %v710
        %1675 = vmatpush.bf16.msra.mxu0 %v708
        %1676 = vmatpush.bf16.msra.mxu0 %v706
        %1677 = vmatpush.bf16.msra.mxu0 %v704
        %1678 = vmatpush.bf16.msra.mxu0 %v702
        %1679 = vmatmul.bf16.gmra.mxu0 %v1327
        %v1680 = vpop.f32.mrf.mxu0
        %v1681 = vadd.f32 %v1592, %v1680
        %v1682 = vpop.f32.mrf.mxu0
        %v1683 = vadd.f32 %v1594, %v1682
        %1684 = vmatmul.bf16.gmra.mxu0 %v1335
        %v1685 = vpop.f32.mrf.mxu0
        %v1686 = vadd.f32 %v1597, %v1685
        %v1687 = vpop.f32.mrf.mxu0
        %v1688 = vadd.f32 %v1599, %v1687
        %1689 = vmatmul.bf16.gmra.mxu0 %v1343
        %v1690 = vpop.f32.mrf.mxu0
        %v1691 = vadd.f32 %v1602, %v1690
        %v1692 = vpop.f32.mrf.mxu0
        %v1693 = vadd.f32 %v1604, %v1692
        %1694 = vmatmul.bf16.gmra.mxu0 %v1351
        %v1695 = vpop.f32.mrf.mxu0
        %v1696 = vadd.f32 %v1607, %v1695
        %v1697 = vpop.f32.mrf.mxu0
        %v1698 = vadd.f32 %v1609, %v1697
        %1699 = vmatmul.bf16.gmra.mxu0 %v1359
        %v1700 = vpop.f32.mrf.mxu0
        %v1701 = vadd.f32 %v1612, %v1700
        %v1702 = vpop.f32.mrf.mxu0
        %v1703 = vadd.f32 %v1614, %v1702
        %1704 = vmatmul.bf16.gmra.mxu0 %v1367
        %v1705 = vpop.f32.mrf.mxu0
        %v1706 = vadd.f32 %v1617, %v1705
        %v1707 = vpop.f32.mrf.mxu0
        %v1708 = vadd.f32 %v1619, %v1707
        %1709 = vmatmul.bf16.gmra.mxu0 %v1375
        %v1710 = vpop.f32.mrf.mxu0
        %v1711 = vadd.f32 %v1622, %v1710
        %v1712 = vpop.f32.mrf.mxu0
        %v1713 = vadd.f32 %v1624, %v1712
        %1714 = vmatmul.bf16.gmra.mxu0 %v1383
        %v1715 = vpop.f32.mrf.mxu0
        %v1716 = vadd.f32 %v1627, %v1715
        %v1717 = vpop.f32.mrf.mxu0
        %v1718 = vadd.f32 %v1629, %v1717
        %1719 = vmatmul.bf16.gmra.mxu0 %v1391
        %v1720 = vpop.f32.mrf.mxu0
        %v1721 = vadd.f32 %v1632, %v1720
        %v1722 = vpop.f32.mrf.mxu0
        %v1723 = vadd.f32 %v1634, %v1722
        %1724 = vmatmul.bf16.gmra.mxu0 %v1399
        %v1725 = vpop.f32.mrf.mxu0
        %v1726 = vadd.f32 %v1637, %v1725
        %v1727 = vpop.f32.mrf.mxu0
        %v1728 = vadd.f32 %v1639, %v1727
        %1729 = vmatmul.bf16.gmra.mxu0 %v1407
        %v1730 = vpop.f32.mrf.mxu0
        %v1731 = vadd.f32 %v1642, %v1730
        %v1732 = vpop.f32.mrf.mxu0
        %v1733 = vadd.f32 %v1644, %v1732
        %1734 = vmatmul.bf16.gmra.mxu0 %v1415
        %v1735 = vpop.f32.mrf.mxu0
        %v1736 = vadd.f32 %v1647, %v1735
        %v1737 = vpop.f32.mrf.mxu0
        %v1738 = vadd.f32 %v1649, %v1737
        %1739 = vmatmul.bf16.gmra.mxu0 %v1423
        %v1740 = vpop.f32.mrf.mxu0
        %v1741 = vadd.f32 %v1652, %v1740
        %v1742 = vpop.f32.mrf.mxu0
        %v1743 = vadd.f32 %v1654, %v1742
        %1744 = vmatmul.bf16.gmra.mxu0 %v1431
        %v1745 = vpop.f32.mrf.mxu0
        %v1746 = vadd.f32 %v1657, %v1745
        %v1747 = vpop.f32.mrf.mxu0
        %v1748 = vadd.f32 %v1659, %v1747
        %1749 = vmatmul.bf16.gmra.mxu0 %v1439
        %v1750 = vpop.f32.mrf.mxu0
        %v1751 = vadd.f32 %v1662, %v1750
        %v1752 = vpop.f32.mrf.mxu0
        %v1753 = vadd.f32 %v1664, %v1752
        %1754 = vmatmul.bf16.gmra.mxu0 %v1447
        %v1755 = vpop.f32.mrf.mxu0
        %v1756 = vadd.f32 %v1667, %v1755
        %v1757 = vpop.f32.mrf.mxu0
        %v1758 = vadd.f32 %v1669, %v1757
        %1759 = vdwg.mxu0
        %1760 = vmatpush.bf16.msra.mxu0 %v732
        %1761 = vmatpush.bf16.msra.mxu0 %v730
        %1762 = vmatpush.bf16.msra.mxu0 %v728
        %1763 = vmatpush.bf16.msra.mxu0 %v726
        %1764 = vmatpush.bf16.msra.mxu0 %v724
        %1765 = vmatpush.bf16.msra.mxu0 %v722
        %1766 = vmatpush.bf16.msra.mxu0 %v720
        %1767 = vmatpush.bf16.msra.mxu0 %v718
        %1768 = vmatmul.bf16.gmra.mxu0 %v1328
        %v1769 = vpop.f32.mrf.mxu0
        %v1770 = vadd.f32 %v1681, %v1769
        %v1771 = vpop.f32.mrf.mxu0
        %v1772 = vadd.f32 %v1683, %v1771
        %1773 = vmatmul.bf16.gmra.mxu0 %v1336
        %v1774 = vpop.f32.mrf.mxu0
        %v1775 = vadd.f32 %v1686, %v1774
        %v1776 = vpop.f32.mrf.mxu0
        %v1777 = vadd.f32 %v1688, %v1776
        %1778 = vmatmul.bf16.gmra.mxu0 %v1344
        %v1779 = vpop.f32.mrf.mxu0
        %v1780 = vadd.f32 %v1691, %v1779
        %v1781 = vpop.f32.mrf.mxu0
        %v1782 = vadd.f32 %v1693, %v1781
        %1783 = vmatmul.bf16.gmra.mxu0 %v1352
        %v1784 = vpop.f32.mrf.mxu0
        %v1785 = vadd.f32 %v1696, %v1784
        %v1786 = vpop.f32.mrf.mxu0
        %v1787 = vadd.f32 %v1698, %v1786
        %1788 = vmatmul.bf16.gmra.mxu0 %v1360
        %v1789 = vpop.f32.mrf.mxu0
        %v1790 = vadd.f32 %v1701, %v1789
        %v1791 = vpop.f32.mrf.mxu0
        %v1792 = vadd.f32 %v1703, %v1791
        %1793 = vmatmul.bf16.gmra.mxu0 %v1368
        %v1794 = vpop.f32.mrf.mxu0
        %v1795 = vadd.f32 %v1706, %v1794
        %v1796 = vpop.f32.mrf.mxu0
        %v1797 = vadd.f32 %v1708, %v1796
        %1798 = vmatmul.bf16.gmra.mxu0 %v1376
        %v1799 = vpop.f32.mrf.mxu0
        %v1800 = vadd.f32 %v1711, %v1799
        %v1801 = vpop.f32.mrf.mxu0
        %v1802 = vadd.f32 %v1713, %v1801
        %1803 = vmatmul.bf16.gmra.mxu0 %v1384
        %v1804 = vpop.f32.mrf.mxu0
        %v1805 = vadd.f32 %v1716, %v1804
        %v1806 = vpop.f32.mrf.mxu0
        %v1807 = vadd.f32 %v1718, %v1806
        %1808 = vmatmul.bf16.gmra.mxu0 %v1392
        %v1809 = vpop.f32.mrf.mxu0
        %v1810 = vadd.f32 %v1721, %v1809
        %v1811 = vpop.f32.mrf.mxu0
        %v1812 = vadd.f32 %v1723, %v1811
        %1813 = vmatmul.bf16.gmra.mxu0 %v1400
        %v1814 = vpop.f32.mrf.mxu0
        %v1815 = vadd.f32 %v1726, %v1814
        %v1816 = vpop.f32.mrf.mxu0
        %v1817 = vadd.f32 %v1728, %v1816
        %1818 = vmatmul.bf16.gmra.mxu0 %v1408
        %v1819 = vpop.f32.mrf.mxu0
        %v1820 = vadd.f32 %v1731, %v1819
        %v1821 = vpop.f32.mrf.mxu0
        %v1822 = vadd.f32 %v1733, %v1821
        %1823 = vmatmul.bf16.gmra.mxu0 %v1416
        %v1824 = vpop.f32.mrf.mxu0
        %v1825 = vadd.f32 %v1736, %v1824
        %v1826 = vpop.f32.mrf.mxu0
        %v1827 = vadd.f32 %v1738, %v1826
        %1828 = vmatmul.bf16.gmra.mxu0 %v1424
        %v1829 = vpop.f32.mrf.mxu0
        %v1830 = vadd.f32 %v1741, %v1829
        %v1831 = vpop.f32.mrf.mxu0
        %v1832 = vadd.f32 %v1743, %v1831
        %1833 = vmatmul.bf16.gmra.mxu0 %v1432
        %v1834 = vpop.f32.mrf.mxu0
        %v1835 = vadd.f32 %v1746, %v1834
        %v1836 = vpop.f32.mrf.mxu0
        %v1837 = vadd.f32 %v1748, %v1836
        %1838 = vmatmul.bf16.gmra.mxu0 %v1440
        %v1839 = vpop.f32.mrf.mxu0
        %v1840 = vadd.f32 %v1751, %v1839
        %v1841 = vpop.f32.mrf.mxu0
        %v1842 = vadd.f32 %v1753, %v1841
        %1843 = vmatmul.bf16.gmra.mxu0 %v1448
        %v1844 = vpop.f32.mrf.mxu0
        %v1845 = vadd.f32 %v1756, %v1844
        %v1846 = vpop.f32.mrf.mxu0
        %v1847 = vadd.f32 %v1758, %v1846
        %1848 = vdwg.mxu0
        %1849 = vmatpush.bf16.msra.mxu0 %v748
        %1850 = vmatpush.bf16.msra.mxu0 %v746
        %1851 = vmatpush.bf16.msra.mxu0 %v744
        %1852 = vmatpush.bf16.msra.mxu0 %v742
        %1853 = vmatpush.bf16.msra.mxu0 %v740
        %1854 = vmatpush.bf16.msra.mxu0 %v738
        %1855 = vmatpush.bf16.msra.mxu0 %v736
        %1856 = vmatpush.bf16.msra.mxu0 %v734
        %1857 = vmatmul.bf16.gmra.mxu0 %v1329
        %v1858 = vpop.f32.mrf.mxu0
        %v1859 = vadd.f32 %v1770, %v1858
        %v1860 = vpop.f32.mrf.mxu0
        %v1861 = vadd.f32 %v1772, %v1860
        %1862 = vmatmul.bf16.gmra.mxu0 %v1337
        %v1863 = vpop.f32.mrf.mxu0
        %v1864 = vadd.f32 %v1775, %v1863
        %v1865 = vpop.f32.mrf.mxu0
        %v1866 = vadd.f32 %v1777, %v1865
        %1867 = vmatmul.bf16.gmra.mxu0 %v1345
        %v1868 = vpop.f32.mrf.mxu0
        %v1869 = vadd.f32 %v1780, %v1868
        %v1870 = vpop.f32.mrf.mxu0
        %v1871 = vadd.f32 %v1782, %v1870
        %1872 = vmatmul.bf16.gmra.mxu0 %v1353
        %v1873 = vpop.f32.mrf.mxu0
        %v1874 = vadd.f32 %v1785, %v1873
        %v1875 = vpop.f32.mrf.mxu0
        %v1876 = vadd.f32 %v1787, %v1875
        %1877 = vmatmul.bf16.gmra.mxu0 %v1361
        %v1878 = vpop.f32.mrf.mxu0
        %v1879 = vadd.f32 %v1790, %v1878
        %v1880 = vpop.f32.mrf.mxu0
        %v1881 = vadd.f32 %v1792, %v1880
        %1882 = vmatmul.bf16.gmra.mxu0 %v1369
        %v1883 = vpop.f32.mrf.mxu0
        %v1884 = vadd.f32 %v1795, %v1883
        %v1885 = vpop.f32.mrf.mxu0
        %v1886 = vadd.f32 %v1797, %v1885
        %1887 = vmatmul.bf16.gmra.mxu0 %v1377
        %v1888 = vpop.f32.mrf.mxu0
        %v1889 = vadd.f32 %v1800, %v1888
        %v1890 = vpop.f32.mrf.mxu0
        %v1891 = vadd.f32 %v1802, %v1890
        %1892 = vmatmul.bf16.gmra.mxu0 %v1385
        %v1893 = vpop.f32.mrf.mxu0
        %v1894 = vadd.f32 %v1805, %v1893
        %v1895 = vpop.f32.mrf.mxu0
        %v1896 = vadd.f32 %v1807, %v1895
        %1897 = vmatmul.bf16.gmra.mxu0 %v1393
        %v1898 = vpop.f32.mrf.mxu0
        %v1899 = vadd.f32 %v1810, %v1898
        %v1900 = vpop.f32.mrf.mxu0
        %v1901 = vadd.f32 %v1812, %v1900
        %1902 = vmatmul.bf16.gmra.mxu0 %v1401
        %v1903 = vpop.f32.mrf.mxu0
        %v1904 = vadd.f32 %v1815, %v1903
        %v1905 = vpop.f32.mrf.mxu0
        %v1906 = vadd.f32 %v1817, %v1905
        %1907 = vmatmul.bf16.gmra.mxu0 %v1409
        %v1908 = vpop.f32.mrf.mxu0
        %v1909 = vadd.f32 %v1820, %v1908
        %v1910 = vpop.f32.mrf.mxu0
        %v1911 = vadd.f32 %v1822, %v1910
        %1912 = vmatmul.bf16.gmra.mxu0 %v1417
        %v1913 = vpop.f32.mrf.mxu0
        %v1914 = vadd.f32 %v1825, %v1913
        %v1915 = vpop.f32.mrf.mxu0
        %v1916 = vadd.f32 %v1827, %v1915
        %1917 = vmatmul.bf16.gmra.mxu0 %v1425
        %v1918 = vpop.f32.mrf.mxu0
        %v1919 = vadd.f32 %v1830, %v1918
        %v1920 = vpop.f32.mrf.mxu0
        %v1921 = vadd.f32 %v1832, %v1920
        %1922 = vmatmul.bf16.gmra.mxu0 %v1433
        %v1923 = vpop.f32.mrf.mxu0
        %v1924 = vadd.f32 %v1835, %v1923
        %v1925 = vpop.f32.mrf.mxu0
        %v1926 = vadd.f32 %v1837, %v1925
        %1927 = vmatmul.bf16.gmra.mxu0 %v1441
        %v1928 = vpop.f32.mrf.mxu0
        %v1929 = vadd.f32 %v1840, %v1928
        %v1930 = vpop.f32.mrf.mxu0
        %v1931 = vadd.f32 %v1842, %v1930
        %1932 = vmatmul.bf16.gmra.mxu0 %v1449
        %v1933 = vpop.f32.mrf.mxu0
        %v1934 = vadd.f32 %v1845, %v1933
        %v1935 = vpop.f32.mrf.mxu0
        %v1936 = vadd.f32 %v1847, %v1935
        %1937 = vdwg.mxu0
        %1938 = vmatpush.bf16.msra.mxu0 %v764
        %1939 = vmatpush.bf16.msra.mxu0 %v762
        %1940 = vmatpush.bf16.msra.mxu0 %v760
        %1941 = vmatpush.bf16.msra.mxu0 %v758
        %1942 = vmatpush.bf16.msra.mxu0 %v756
        %1943 = vmatpush.bf16.msra.mxu0 %v754
        %1944 = vmatpush.bf16.msra.mxu0 %v752
        %1945 = vmatpush.bf16.msra.mxu0 %v750
        %1946 = vmatmul.bf16.gmra.mxu0 %v1330
        %v1947 = vpop.f32.mrf.mxu0
        %v1948 = vadd.f32 %v1859, %v1947
        %v1949 = vpop.f32.mrf.mxu0
        %v1950 = vadd.f32 %v1861, %v1949
        %1951 = vmatmul.bf16.gmra.mxu0 %v1338
        %v1952 = vpop.f32.mrf.mxu0
        %v1953 = vadd.f32 %v1864, %v1952
        %v1954 = vpop.f32.mrf.mxu0
        %v1955 = vadd.f32 %v1866, %v1954
        %1956 = vmatmul.bf16.gmra.mxu0 %v1346
        %v1957 = vpop.f32.mrf.mxu0
        %v1958 = vadd.f32 %v1869, %v1957
        %v1959 = vpop.f32.mrf.mxu0
        %v1960 = vadd.f32 %v1871, %v1959
        %1961 = vmatmul.bf16.gmra.mxu0 %v1354
        %v1962 = vpop.f32.mrf.mxu0
        %v1963 = vadd.f32 %v1874, %v1962
        %v1964 = vpop.f32.mrf.mxu0
        %v1965 = vadd.f32 %v1876, %v1964
        %1966 = vmatmul.bf16.gmra.mxu0 %v1362
        %v1967 = vpop.f32.mrf.mxu0
        %v1968 = vadd.f32 %v1879, %v1967
        %v1969 = vpop.f32.mrf.mxu0
        %v1970 = vadd.f32 %v1881, %v1969
        %1971 = vmatmul.bf16.gmra.mxu0 %v1370
        %v1972 = vpop.f32.mrf.mxu0
        %v1973 = vadd.f32 %v1884, %v1972
        %v1974 = vpop.f32.mrf.mxu0
        %v1975 = vadd.f32 %v1886, %v1974
        %1976 = vmatmul.bf16.gmra.mxu0 %v1378
        %v1977 = vpop.f32.mrf.mxu0
        %v1978 = vadd.f32 %v1889, %v1977
        %v1979 = vpop.f32.mrf.mxu0
        %v1980 = vadd.f32 %v1891, %v1979
        %1981 = vmatmul.bf16.gmra.mxu0 %v1386
        %v1982 = vpop.f32.mrf.mxu0
        %v1983 = vadd.f32 %v1894, %v1982
        %v1984 = vpop.f32.mrf.mxu0
        %v1985 = vadd.f32 %v1896, %v1984
        %1986 = vmatmul.bf16.gmra.mxu0 %v1394
        %v1987 = vpop.f32.mrf.mxu0
        %v1988 = vadd.f32 %v1899, %v1987
        %v1989 = vpop.f32.mrf.mxu0
        %v1990 = vadd.f32 %v1901, %v1989
        %1991 = vmatmul.bf16.gmra.mxu0 %v1402
        %v1992 = vpop.f32.mrf.mxu0
        %v1993 = vadd.f32 %v1904, %v1992
        %v1994 = vpop.f32.mrf.mxu0
        %v1995 = vadd.f32 %v1906, %v1994
        %1996 = vmatmul.bf16.gmra.mxu0 %v1410
        %v1997 = vpop.f32.mrf.mxu0
        %v1998 = vadd.f32 %v1909, %v1997
        %v1999 = vpop.f32.mrf.mxu0
        %v2000 = vadd.f32 %v1911, %v1999
        %2001 = vmatmul.bf16.gmra.mxu0 %v1418
        %v2002 = vpop.f32.mrf.mxu0
        %v2003 = vadd.f32 %v1914, %v2002
        %v2004 = vpop.f32.mrf.mxu0
        %v2005 = vadd.f32 %v1916, %v2004
        %2006 = vmatmul.bf16.gmra.mxu0 %v1426
        %v2007 = vpop.f32.mrf.mxu0
        %v2008 = vadd.f32 %v1919, %v2007
        %v2009 = vpop.f32.mrf.mxu0
        %v2010 = vadd.f32 %v1921, %v2009
        %2011 = vmatmul.bf16.gmra.mxu0 %v1434
        %v2012 = vpop.f32.mrf.mxu0
        %v2013 = vadd.f32 %v1924, %v2012
        %v2014 = vpop.f32.mrf.mxu0
        %v2015 = vadd.f32 %v1926, %v2014
        %2016 = vmatmul.bf16.gmra.mxu0 %v1442
        %v2017 = vpop.f32.mrf.mxu0
        %v2018 = vadd.f32 %v1929, %v2017
        %v2019 = vpop.f32.mrf.mxu0
        %v2020 = vadd.f32 %v1931, %v2019
        %2021 = vmatmul.bf16.gmra.mxu0 %v1450
        %v2022 = vpop.f32.mrf.mxu0
        %v2023 = vadd.f32 %v1934, %v2022
        %v2024 = vpop.f32.mrf.mxu0
        %v2025 = vadd.f32 %v1936, %v2024
        %2026 = vdwg.mxu0
        %2027 = vmatpush.bf16.msra.mxu0 %v780
        %2028 = vmatpush.bf16.msra.mxu0 %v778
        %2029 = vmatpush.bf16.msra.mxu0 %v776
        %2030 = vmatpush.bf16.msra.mxu0 %v774
        %2031 = vmatpush.bf16.msra.mxu0 %v772
        %2032 = vmatpush.bf16.msra.mxu0 %v770
        %2033 = vmatpush.bf16.msra.mxu0 %v768
        %2034 = vmatpush.bf16.msra.mxu0 %v766
        %2035 = vmatmul.bf16.gmra.mxu0 %v1331
        %v2036 = vpop.f32.mrf.mxu0
        %v2037 = vadd.f32 %v1948, %v2036
        %v2038 = vpop.f32.mrf.mxu0
        %v2039 = vadd.f32 %v1950, %v2038
        %2040 = vmatmul.bf16.gmra.mxu0 %v1339
        %v2041 = vpop.f32.mrf.mxu0
        %v2042 = vadd.f32 %v1953, %v2041
        %v2043 = vpop.f32.mrf.mxu0
        %v2044 = vadd.f32 %v1955, %v2043
        %2045 = vmatmul.bf16.gmra.mxu0 %v1347
        %v2046 = vpop.f32.mrf.mxu0
        %v2047 = vadd.f32 %v1958, %v2046
        %v2048 = vpop.f32.mrf.mxu0
        %v2049 = vadd.f32 %v1960, %v2048
        %2050 = vmatmul.bf16.gmra.mxu0 %v1355
        %v2051 = vpop.f32.mrf.mxu0
        %v2052 = vadd.f32 %v1963, %v2051
        %v2053 = vpop.f32.mrf.mxu0
        %v2054 = vadd.f32 %v1965, %v2053
        %2055 = vmatmul.bf16.gmra.mxu0 %v1363
        %v2056 = vpop.f32.mrf.mxu0
        %v2057 = vadd.f32 %v1968, %v2056
        %v2058 = vpop.f32.mrf.mxu0
        %v2059 = vadd.f32 %v1970, %v2058
        %2060 = vmatmul.bf16.gmra.mxu0 %v1371
        %v2061 = vpop.f32.mrf.mxu0
        %v2062 = vadd.f32 %v1973, %v2061
        %v2063 = vpop.f32.mrf.mxu0
        %v2064 = vadd.f32 %v1975, %v2063
        %2065 = vmatmul.bf16.gmra.mxu0 %v1379
        %v2066 = vpop.f32.mrf.mxu0
        %v2067 = vadd.f32 %v1978, %v2066
        %v2068 = vpop.f32.mrf.mxu0
        %v2069 = vadd.f32 %v1980, %v2068
        %2070 = vmatmul.bf16.gmra.mxu0 %v1387
        %v2071 = vpop.f32.mrf.mxu0
        %v2072 = vadd.f32 %v1983, %v2071
        %v2073 = vpop.f32.mrf.mxu0
        %v2074 = vadd.f32 %v1985, %v2073
        %2075 = vmatmul.bf16.gmra.mxu0 %v1395
        %v2076 = vpop.f32.mrf.mxu0
        %v2077 = vadd.f32 %v1988, %v2076
        %v2078 = vpop.f32.mrf.mxu0
        %v2079 = vadd.f32 %v1990, %v2078
        %2080 = vmatmul.bf16.gmra.mxu0 %v1403
        %v2081 = vpop.f32.mrf.mxu0
        %v2082 = vadd.f32 %v1993, %v2081
        %v2083 = vpop.f32.mrf.mxu0
        %v2084 = vadd.f32 %v1995, %v2083
        %2085 = vmatmul.bf16.gmra.mxu0 %v1411
        %v2086 = vpop.f32.mrf.mxu0
        %v2087 = vadd.f32 %v1998, %v2086
        %v2088 = vpop.f32.mrf.mxu0
        %v2089 = vadd.f32 %v2000, %v2088
        %2090 = vmatmul.bf16.gmra.mxu0 %v1419
        %v2091 = vpop.f32.mrf.mxu0
        %v2092 = vadd.f32 %v2003, %v2091
        %v2093 = vpop.f32.mrf.mxu0
        %v2094 = vadd.f32 %v2005, %v2093
        %2095 = vmatmul.bf16.gmra.mxu0 %v1427
        %v2096 = vpop.f32.mrf.mxu0
        %v2097 = vadd.f32 %v2008, %v2096
        %v2098 = vpop.f32.mrf.mxu0
        %v2099 = vadd.f32 %v2010, %v2098
        %2100 = vmatmul.bf16.gmra.mxu0 %v1435
        %v2101 = vpop.f32.mrf.mxu0
        %v2102 = vadd.f32 %v2013, %v2101
        %v2103 = vpop.f32.mrf.mxu0
        %v2104 = vadd.f32 %v2015, %v2103
        %2105 = vmatmul.bf16.gmra.mxu0 %v1443
        %v2106 = vpop.f32.mrf.mxu0
        %v2107 = vadd.f32 %v2018, %v2106
        %v2108 = vpop.f32.mrf.mxu0
        %v2109 = vadd.f32 %v2020, %v2108
        %2110 = vmatmul.bf16.gmra.mxu0 %v1451
        %v2111 = vpop.f32.mrf.mxu0
        %v2112 = vadd.f32 %v2023, %v2111
        %v2113 = vpop.f32.mrf.mxu0
        %v2114 = vadd.f32 %v2025, %v2113
        %2115 = vdwg.mxu0
        %2116 = vmatpush.bf16.msra.mxu0 %v796
        %2117 = vmatpush.bf16.msra.mxu0 %v794
        %2118 = vmatpush.bf16.msra.mxu0 %v792
        %2119 = vmatpush.bf16.msra.mxu0 %v790
        %2120 = vmatpush.bf16.msra.mxu0 %v788
        %2121 = vmatpush.bf16.msra.mxu0 %v786
        %2122 = vmatpush.bf16.msra.mxu0 %v784
        %2123 = vmatpush.bf16.msra.mxu0 %v782
        %2124 = vmatmul.bf16.gmra.mxu0 %v1332
        %v2125 = vpop.f32.mrf.mxu0
        %v2126 = vadd.f32 %v2037, %v2125
        %v2127 = vpop.f32.mrf.mxu0
        %v2128 = vadd.f32 %v2039, %v2127
        %2129 = vmatmul.bf16.gmra.mxu0 %v1340
        %v2130 = vpop.f32.mrf.mxu0
        %v2131 = vadd.f32 %v2042, %v2130
        %v2132 = vpop.f32.mrf.mxu0
        %v2133 = vadd.f32 %v2044, %v2132
        %2134 = vmatmul.bf16.gmra.mxu0 %v1348
        %v2135 = vpop.f32.mrf.mxu0
        %v2136 = vadd.f32 %v2047, %v2135
        %v2137 = vpop.f32.mrf.mxu0
        %v2138 = vadd.f32 %v2049, %v2137
        %2139 = vmatmul.bf16.gmra.mxu0 %v1356
        %v2140 = vpop.f32.mrf.mxu0
        %v2141 = vadd.f32 %v2052, %v2140
        %v2142 = vpop.f32.mrf.mxu0
        %v2143 = vadd.f32 %v2054, %v2142
        %2144 = vmatmul.bf16.gmra.mxu0 %v1364
        %v2145 = vpop.f32.mrf.mxu0
        %v2146 = vadd.f32 %v2057, %v2145
        %v2147 = vpop.f32.mrf.mxu0
        %v2148 = vadd.f32 %v2059, %v2147
        %2149 = vmatmul.bf16.gmra.mxu0 %v1372
        %v2150 = vpop.f32.mrf.mxu0
        %v2151 = vadd.f32 %v2062, %v2150
        %v2152 = vpop.f32.mrf.mxu0
        %v2153 = vadd.f32 %v2064, %v2152
        %2154 = vmatmul.bf16.gmra.mxu0 %v1380
        %v2155 = vpop.f32.mrf.mxu0
        %v2156 = vadd.f32 %v2067, %v2155
        %v2157 = vpop.f32.mrf.mxu0
        %v2158 = vadd.f32 %v2069, %v2157
        %2159 = vmatmul.bf16.gmra.mxu0 %v1388
        %v2160 = vpop.f32.mrf.mxu0
        %v2161 = vadd.f32 %v2072, %v2160
        %v2162 = vpop.f32.mrf.mxu0
        %v2163 = vadd.f32 %v2074, %v2162
        %2164 = vmatmul.bf16.gmra.mxu0 %v1396
        %v2165 = vpop.f32.mrf.mxu0
        %v2166 = vadd.f32 %v2077, %v2165
        %v2167 = vpop.f32.mrf.mxu0
        %v2168 = vadd.f32 %v2079, %v2167
        %2169 = vmatmul.bf16.gmra.mxu0 %v1404
        %v2170 = vpop.f32.mrf.mxu0
        %v2171 = vadd.f32 %v2082, %v2170
        %v2172 = vpop.f32.mrf.mxu0
        %v2173 = vadd.f32 %v2084, %v2172
        %2174 = vmatmul.bf16.gmra.mxu0 %v1412
        %v2175 = vpop.f32.mrf.mxu0
        %v2176 = vadd.f32 %v2087, %v2175
        %v2177 = vpop.f32.mrf.mxu0
        %v2178 = vadd.f32 %v2089, %v2177
        %2179 = vmatmul.bf16.gmra.mxu0 %v1420
        %v2180 = vpop.f32.mrf.mxu0
        %v2181 = vadd.f32 %v2092, %v2180
        %v2182 = vpop.f32.mrf.mxu0
        %v2183 = vadd.f32 %v2094, %v2182
        %2184 = vmatmul.bf16.gmra.mxu0 %v1428
        %v2185 = vpop.f32.mrf.mxu0
        %v2186 = vadd.f32 %v2097, %v2185
        %v2187 = vpop.f32.mrf.mxu0
        %v2188 = vadd.f32 %v2099, %v2187
        %2189 = vmatmul.bf16.gmra.mxu0 %v1436
        %v2190 = vpop.f32.mrf.mxu0
        %v2191 = vadd.f32 %v2102, %v2190
        %v2192 = vpop.f32.mrf.mxu0
        %v2193 = vadd.f32 %v2104, %v2192
        %2194 = vmatmul.bf16.gmra.mxu0 %v1444
        %v2195 = vpop.f32.mrf.mxu0
        %v2196 = vadd.f32 %v2107, %v2195
        %v2197 = vpop.f32.mrf.mxu0
        %v2198 = vadd.f32 %v2109, %v2197
        %2199 = vmatmul.bf16.gmra.mxu0 %v1452
        %v2200 = vpop.f32.mrf.mxu0
        %v2201 = vadd.f32 %v2112, %v2200
        %v2202 = vpop.f32.mrf.mxu0
        %v2203 = vadd.f32 %v2114, %v2202
        %2204 = vdwg.mxu0
        %2205 = vmatpush.bf16.msra.mxu0 %v812
        %2206 = vmatpush.bf16.msra.mxu0 %v810
        %2207 = vmatpush.bf16.msra.mxu0 %v808
        %2208 = vmatpush.bf16.msra.mxu0 %v806
        %2209 = vmatpush.bf16.msra.mxu0 %v804
        %2210 = vmatpush.bf16.msra.mxu0 %v802
        %2211 = vmatpush.bf16.msra.mxu0 %v800
        %2212 = vmatpush.bf16.msra.mxu0 %v798
        %2213 = vmatmul.bf16.gmra.mxu0 %v1333
        %v2214 = vpop.f32.mrf.mxu0
        %v2215 = vadd.f32 %v2126, %v2214
        %v2216 = vpop.f32.mrf.mxu0
        %v2217 = vadd.f32 %v2128, %v2216
        %2218 = vmatmul.bf16.gmra.mxu0 %v1341
        %v2219 = vpop.f32.mrf.mxu0
        %v2220 = vadd.f32 %v2131, %v2219
        %v2221 = vpop.f32.mrf.mxu0
        %v2222 = vadd.f32 %v2133, %v2221
        %2223 = vmatmul.bf16.gmra.mxu0 %v1349
        %v2224 = vpop.f32.mrf.mxu0
        %v2225 = vadd.f32 %v2136, %v2224
        %v2226 = vpop.f32.mrf.mxu0
        %v2227 = vadd.f32 %v2138, %v2226
        %2228 = vmatmul.bf16.gmra.mxu0 %v1357
        %v2229 = vpop.f32.mrf.mxu0
        %v2230 = vadd.f32 %v2141, %v2229
        %v2231 = vpop.f32.mrf.mxu0
        %v2232 = vadd.f32 %v2143, %v2231
        %2233 = vmatmul.bf16.gmra.mxu0 %v1365
        %v2234 = vpop.f32.mrf.mxu0
        %v2235 = vadd.f32 %v2146, %v2234
        %v2236 = vpop.f32.mrf.mxu0
        %v2237 = vadd.f32 %v2148, %v2236
        %2238 = vmatmul.bf16.gmra.mxu0 %v1373
        %v2239 = vpop.f32.mrf.mxu0
        %v2240 = vadd.f32 %v2151, %v2239
        %v2241 = vpop.f32.mrf.mxu0
        %v2242 = vadd.f32 %v2153, %v2241
        %2243 = vmatmul.bf16.gmra.mxu0 %v1381
        %v2244 = vpop.f32.mrf.mxu0
        %v2245 = vadd.f32 %v2156, %v2244
        %v2246 = vpop.f32.mrf.mxu0
        %v2247 = vadd.f32 %v2158, %v2246
        %2248 = vmatmul.bf16.gmra.mxu0 %v1389
        %v2249 = vpop.f32.mrf.mxu0
        %v2250 = vadd.f32 %v2161, %v2249
        %v2251 = vpop.f32.mrf.mxu0
        %v2252 = vadd.f32 %v2163, %v2251
        %2253 = vmatmul.bf16.gmra.mxu0 %v1397
        %v2254 = vpop.f32.mrf.mxu0
        %v2255 = vadd.f32 %v2166, %v2254
        %v2256 = vpop.f32.mrf.mxu0
        %v2257 = vadd.f32 %v2168, %v2256
        %2258 = vmatmul.bf16.gmra.mxu0 %v1405
        %v2259 = vpop.f32.mrf.mxu0
        %v2260 = vadd.f32 %v2171, %v2259
        %v2261 = vpop.f32.mrf.mxu0
        %v2262 = vadd.f32 %v2173, %v2261
        %2263 = vmatmul.bf16.gmra.mxu0 %v1413
        %v2264 = vpop.f32.mrf.mxu0
        %v2265 = vadd.f32 %v2176, %v2264
        %v2266 = vpop.f32.mrf.mxu0
        %v2267 = vadd.f32 %v2178, %v2266
        %2268 = vmatmul.bf16.gmra.mxu0 %v1421
        %v2269 = vpop.f32.mrf.mxu0
        %v2270 = vadd.f32 %v2181, %v2269
        %v2271 = vpop.f32.mrf.mxu0
        %v2272 = vadd.f32 %v2183, %v2271
        %2273 = vmatmul.bf16.gmra.mxu0 %v1429
        %v2274 = vpop.f32.mrf.mxu0
        %v2275 = vadd.f32 %v2186, %v2274
        %v2276 = vpop.f32.mrf.mxu0
        %v2277 = vadd.f32 %v2188, %v2276
        %2278 = vmatmul.bf16.gmra.mxu0 %v1437
        %v2279 = vpop.f32.mrf.mxu0
        %v2280 = vadd.f32 %v2191, %v2279
        %v2281 = vpop.f32.mrf.mxu0
        %v2282 = vadd.f32 %v2193, %v2281
        %2283 = vmatmul.bf16.gmra.mxu0 %v1445
        %v2284 = vpop.f32.mrf.mxu0
        %v2285 = vadd.f32 %v2196, %v2284
        %v2286 = vpop.f32.mrf.mxu0
        %v2287 = vadd.f32 %v2198, %v2286
        %2288 = vmatmul.bf16.gmra.mxu0 %v1453
        %v2289 = vpop.f32.mrf.mxu0
        %v2290 = vadd.f32 %v2201, %v2289
        %v2291 = vpop.f32.mrf.mxu0
        %v2292 = vadd.f32 %v2203, %v2291
        %2293 = vdwg.mxu0
        %2294 = vmatpush.bf16.msra.mxu0 %v701
        %2295 = vmatpush.bf16.msra.mxu0 %v699
        %2296 = vmatpush.bf16.msra.mxu0 %v697
        %2297 = vmatpush.bf16.msra.mxu0 %v695
        %2298 = vmatpush.bf16.msra.mxu0 %v693
        %2299 = vmatpush.bf16.msra.mxu0 %v691
        %2300 = vmatpush.bf16.msra.mxu0 %v689
        %2301 = vmatpush.bf16.msra.mxu0 %v687
        %2302 = vmatmul.bf16.gmra.mxu0 %v1326
        %v2303 = vpop.f32.mrf.mxu0
        %v2304 = vadd.f32 0.0, %v2303
        %v2305 = vpop.f32.mrf.mxu0
        %v2306 = vadd.f32 0.0, %v2305
        %2307 = vmatmul.bf16.gmra.mxu0 %v1334
        %v2308 = vpop.f32.mrf.mxu0
        %v2309 = vadd.f32 0.0, %v2308
        %v2310 = vpop.f32.mrf.mxu0
        %v2311 = vadd.f32 0.0, %v2310
        %2312 = vmatmul.bf16.gmra.mxu0 %v1342
        %v2313 = vpop.f32.mrf.mxu0
        %v2314 = vadd.f32 0.0, %v2313
        %v2315 = vpop.f32.mrf.mxu0
        %v2316 = vadd.f32 0.0, %v2315
        %2317 = vmatmul.bf16.gmra.mxu0 %v1350
        %v2318 = vpop.f32.mrf.mxu0
        %v2319 = vadd.f32 0.0, %v2318
        %v2320 = vpop.f32.mrf.mxu0
        %v2321 = vadd.f32 0.0, %v2320
        %2322 = vmatmul.bf16.gmra.mxu0 %v1358
        %v2323 = vpop.f32.mrf.mxu0
        %v2324 = vadd.f32 0.0, %v2323
        %v2325 = vpop.f32.mrf.mxu0
        %v2326 = vadd.f32 0.0, %v2325
        %2327 = vmatmul.bf16.gmra.mxu0 %v1366
        %v2328 = vpop.f32.mrf.mxu0
        %v2329 = vadd.f32 0.0, %v2328
        %v2330 = vpop.f32.mrf.mxu0
        %v2331 = vadd.f32 0.0, %v2330
        %2332 = vmatmul.bf16.gmra.mxu0 %v1374
        %v2333 = vpop.f32.mrf.mxu0
        %v2334 = vadd.f32 0.0, %v2333
        %v2335 = vpop.f32.mrf.mxu0
        %v2336 = vadd.f32 0.0, %v2335
        %2337 = vmatmul.bf16.gmra.mxu0 %v1382
        %v2338 = vpop.f32.mrf.mxu0
        %v2339 = vadd.f32 0.0, %v2338
        %v2340 = vpop.f32.mrf.mxu0
        %v2341 = vadd.f32 0.0, %v2340
        %2342 = vmatmul.bf16.gmra.mxu0 %v1390
        %v2343 = vpop.f32.mrf.mxu0
        %v2344 = vadd.f32 0.0, %v2343
        %v2345 = vpop.f32.mrf.mxu0
        %v2346 = vadd.f32 0.0, %v2345
        %2347 = vmatmul.bf16.gmra.mxu0 %v1398
        %v2348 = vpop.f32.mrf.mxu0
        %v2349 = vadd.f32 0.0, %v2348
        %v2350 = vpop.f32.mrf.mxu0
        %v2351 = vadd.f32 0.0, %v2350
        %2352 = vmatmul.bf16.gmra.mxu0 %v1406
        %v2353 = vpop.f32.mrf.mxu0
        %v2354 = vadd.f32 0.0, %v2353
        %v2355 = vpop.f32.mrf.mxu0
        %v2356 = vadd.f32 0.0, %v2355
        %2357 = vmatmul.bf16.gmra.mxu0 %v1414
        %v2358 = vpop.f32.mrf.mxu0
        %v2359 = vadd.f32 0.0, %v2358
        %v2360 = vpop.f32.mrf.mxu0
        %v2361 = vadd.f32 0.0, %v2360
        %2362 = vmatmul.bf16.gmra.mxu0 %v1422
        %v2363 = vpop.f32.mrf.mxu0
        %v2364 = vadd.f32 0.0, %v2363
        %v2365 = vpop.f32.mrf.mxu0
        %v2366 = vadd.f32 0.0, %v2365
        %2367 = vmatmul.bf16.gmra.mxu0 %v1430
        %v2368 = vpop.f32.mrf.mxu0
        %v2369 = vadd.f32 0.0, %v2368
        %v2370 = vpop.f32.mrf.mxu0
        %v2371 = vadd.f32 0.0, %v2370
        %2372 = vmatmul.bf16.gmra.mxu0 %v1438
        %v2373 = vpop.f32.mrf.mxu0
        %v2374 = vadd.f32 0.0, %v2373
        %v2375 = vpop.f32.mrf.mxu0
        %v2376 = vadd.f32 0.0, %v2375
        %2377 = vmatmul.bf16.gmra.mxu0 %v1446
        %v2378 = vpop.f32.mrf.mxu0
        %v2379 = vadd.f32 0.0, %v2378
        %v2380 = vpop.f32.mrf.mxu0
        %v2381 = vadd.f32 0.0, %v2380
        %2382 = vdwg.mxu0
        %2383 = vmatpush.bf16.msra.mxu0 %v717
        %2384 = vmatpush.bf16.msra.mxu0 %v715
        %2385 = vmatpush.bf16.msra.mxu0 %v713
        %2386 = vmatpush.bf16.msra.mxu0 %v711
        %2387 = vmatpush.bf16.msra.mxu0 %v709
        %2388 = vmatpush.bf16.msra.mxu0 %v707
        %2389 = vmatpush.bf16.msra.mxu0 %v705
        %2390 = vmatpush.bf16.msra.mxu0 %v703
        %2391 = vmatmul.bf16.gmra.mxu0 %v1327
        %v2392 = vpop.f32.mrf.mxu0
        %v2393 = vadd.f32 %v2304, %v2392
        %v2394 = vpop.f32.mrf.mxu0
        %v2395 = vadd.f32 %v2306, %v2394
        %2396 = vmatmul.bf16.gmra.mxu0 %v1335
        %v2397 = vpop.f32.mrf.mxu0
        %v2398 = vadd.f32 %v2309, %v2397
        %v2399 = vpop.f32.mrf.mxu0
        %v2400 = vadd.f32 %v2311, %v2399
        %2401 = vmatmul.bf16.gmra.mxu0 %v1343
        %v2402 = vpop.f32.mrf.mxu0
        %v2403 = vadd.f32 %v2314, %v2402
        %v2404 = vpop.f32.mrf.mxu0
        %v2405 = vadd.f32 %v2316, %v2404
        %2406 = vmatmul.bf16.gmra.mxu0 %v1351
        %v2407 = vpop.f32.mrf.mxu0
        %v2408 = vadd.f32 %v2319, %v2407
        %v2409 = vpop.f32.mrf.mxu0
        %v2410 = vadd.f32 %v2321, %v2409
        %2411 = vmatmul.bf16.gmra.mxu0 %v1359
        %v2412 = vpop.f32.mrf.mxu0
        %v2413 = vadd.f32 %v2324, %v2412
        %v2414 = vpop.f32.mrf.mxu0
        %v2415 = vadd.f32 %v2326, %v2414
        %2416 = vmatmul.bf16.gmra.mxu0 %v1367
        %v2417 = vpop.f32.mrf.mxu0
        %v2418 = vadd.f32 %v2329, %v2417
        %v2419 = vpop.f32.mrf.mxu0
        %v2420 = vadd.f32 %v2331, %v2419
        %2421 = vmatmul.bf16.gmra.mxu0 %v1375
        %v2422 = vpop.f32.mrf.mxu0
        %v2423 = vadd.f32 %v2334, %v2422
        %v2424 = vpop.f32.mrf.mxu0
        %v2425 = vadd.f32 %v2336, %v2424
        %2426 = vmatmul.bf16.gmra.mxu0 %v1383
        %v2427 = vpop.f32.mrf.mxu0
        %v2428 = vadd.f32 %v2339, %v2427
        %v2429 = vpop.f32.mrf.mxu0
        %v2430 = vadd.f32 %v2341, %v2429
        %2431 = vmatmul.bf16.gmra.mxu0 %v1391
        %v2432 = vpop.f32.mrf.mxu0
        %v2433 = vadd.f32 %v2344, %v2432
        %v2434 = vpop.f32.mrf.mxu0
        %v2435 = vadd.f32 %v2346, %v2434
        %2436 = vmatmul.bf16.gmra.mxu0 %v1399
        %v2437 = vpop.f32.mrf.mxu0
        %v2438 = vadd.f32 %v2349, %v2437
        %v2439 = vpop.f32.mrf.mxu0
        %v2440 = vadd.f32 %v2351, %v2439
        %2441 = vmatmul.bf16.gmra.mxu0 %v1407
        %v2442 = vpop.f32.mrf.mxu0
        %v2443 = vadd.f32 %v2354, %v2442
        %v2444 = vpop.f32.mrf.mxu0
        %v2445 = vadd.f32 %v2356, %v2444
        %2446 = vmatmul.bf16.gmra.mxu0 %v1415
        %v2447 = vpop.f32.mrf.mxu0
        %v2448 = vadd.f32 %v2359, %v2447
        %v2449 = vpop.f32.mrf.mxu0
        %v2450 = vadd.f32 %v2361, %v2449
        %2451 = vmatmul.bf16.gmra.mxu0 %v1423
        %v2452 = vpop.f32.mrf.mxu0
        %v2453 = vadd.f32 %v2364, %v2452
        %v2454 = vpop.f32.mrf.mxu0
        %v2455 = vadd.f32 %v2366, %v2454
        %2456 = vmatmul.bf16.gmra.mxu0 %v1431
        %v2457 = vpop.f32.mrf.mxu0
        %v2458 = vadd.f32 %v2369, %v2457
        %v2459 = vpop.f32.mrf.mxu0
        %v2460 = vadd.f32 %v2371, %v2459
        %2461 = vmatmul.bf16.gmra.mxu0 %v1439
        %v2462 = vpop.f32.mrf.mxu0
        %v2463 = vadd.f32 %v2374, %v2462
        %v2464 = vpop.f32.mrf.mxu0
        %v2465 = vadd.f32 %v2376, %v2464
        %2466 = vmatmul.bf16.gmra.mxu0 %v1447
        %v2467 = vpop.f32.mrf.mxu0
        %v2468 = vadd.f32 %v2379, %v2467
        %v2469 = vpop.f32.mrf.mxu0
        %v2470 = vadd.f32 %v2381, %v2469
        %2471 = vdwg.mxu0
        %2472 = vmatpush.bf16.msra.mxu0 %v733
        %2473 = vmatpush.bf16.msra.mxu0 %v731
        %2474 = vmatpush.bf16.msra.mxu0 %v729
        %2475 = vmatpush.bf16.msra.mxu0 %v727
        %2476 = vmatpush.bf16.msra.mxu0 %v725
        %2477 = vmatpush.bf16.msra.mxu0 %v723
        %2478 = vmatpush.bf16.msra.mxu0 %v721
        %2479 = vmatpush.bf16.msra.mxu0 %v719
        %2480 = vmatmul.bf16.gmra.mxu0 %v1328
        %v2481 = vpop.f32.mrf.mxu0
        %v2482 = vadd.f32 %v2393, %v2481
        %v2483 = vpop.f32.mrf.mxu0
        %v2484 = vadd.f32 %v2395, %v2483
        %2485 = vmatmul.bf16.gmra.mxu0 %v1336
        %v2486 = vpop.f32.mrf.mxu0
        %v2487 = vadd.f32 %v2398, %v2486
        %v2488 = vpop.f32.mrf.mxu0
        %v2489 = vadd.f32 %v2400, %v2488
        %2490 = vmatmul.bf16.gmra.mxu0 %v1344
        %v2491 = vpop.f32.mrf.mxu0
        %v2492 = vadd.f32 %v2403, %v2491
        %v2493 = vpop.f32.mrf.mxu0
        %v2494 = vadd.f32 %v2405, %v2493
        %2495 = vmatmul.bf16.gmra.mxu0 %v1352
        %v2496 = vpop.f32.mrf.mxu0
        %v2497 = vadd.f32 %v2408, %v2496
        %v2498 = vpop.f32.mrf.mxu0
        %v2499 = vadd.f32 %v2410, %v2498
        %2500 = vmatmul.bf16.gmra.mxu0 %v1360
        %v2501 = vpop.f32.mrf.mxu0
        %v2502 = vadd.f32 %v2413, %v2501
        %v2503 = vpop.f32.mrf.mxu0
        %v2504 = vadd.f32 %v2415, %v2503
        %2505 = vmatmul.bf16.gmra.mxu0 %v1368
        %v2506 = vpop.f32.mrf.mxu0
        %v2507 = vadd.f32 %v2418, %v2506
        %v2508 = vpop.f32.mrf.mxu0
        %v2509 = vadd.f32 %v2420, %v2508
        %2510 = vmatmul.bf16.gmra.mxu0 %v1376
        %v2511 = vpop.f32.mrf.mxu0
        %v2512 = vadd.f32 %v2423, %v2511
        %v2513 = vpop.f32.mrf.mxu0
        %v2514 = vadd.f32 %v2425, %v2513
        %2515 = vmatmul.bf16.gmra.mxu0 %v1384
        %v2516 = vpop.f32.mrf.mxu0
        %v2517 = vadd.f32 %v2428, %v2516
        %v2518 = vpop.f32.mrf.mxu0
        %v2519 = vadd.f32 %v2430, %v2518
        %2520 = vmatmul.bf16.gmra.mxu0 %v1392
        %v2521 = vpop.f32.mrf.mxu0
        %v2522 = vadd.f32 %v2433, %v2521
        %v2523 = vpop.f32.mrf.mxu0
        %v2524 = vadd.f32 %v2435, %v2523
        %2525 = vmatmul.bf16.gmra.mxu0 %v1400
        %v2526 = vpop.f32.mrf.mxu0
        %v2527 = vadd.f32 %v2438, %v2526
        %v2528 = vpop.f32.mrf.mxu0
        %v2529 = vadd.f32 %v2440, %v2528
        %2530 = vmatmul.bf16.gmra.mxu0 %v1408
        %v2531 = vpop.f32.mrf.mxu0
        %v2532 = vadd.f32 %v2443, %v2531
        %v2533 = vpop.f32.mrf.mxu0
        %v2534 = vadd.f32 %v2445, %v2533
        %2535 = vmatmul.bf16.gmra.mxu0 %v1416
        %v2536 = vpop.f32.mrf.mxu0
        %v2537 = vadd.f32 %v2448, %v2536
        %v2538 = vpop.f32.mrf.mxu0
        %v2539 = vadd.f32 %v2450, %v2538
        %2540 = vmatmul.bf16.gmra.mxu0 %v1424
        %v2541 = vpop.f32.mrf.mxu0
        %v2542 = vadd.f32 %v2453, %v2541
        %v2543 = vpop.f32.mrf.mxu0
        %v2544 = vadd.f32 %v2455, %v2543
        %2545 = vmatmul.bf16.gmra.mxu0 %v1432
        %v2546 = vpop.f32.mrf.mxu0
        %v2547 = vadd.f32 %v2458, %v2546
        %v2548 = vpop.f32.mrf.mxu0
        %v2549 = vadd.f32 %v2460, %v2548
        %2550 = vmatmul.bf16.gmra.mxu0 %v1440
        %v2551 = vpop.f32.mrf.mxu0
        %v2552 = vadd.f32 %v2463, %v2551
        %v2553 = vpop.f32.mrf.mxu0
        %v2554 = vadd.f32 %v2465, %v2553
        %2555 = vmatmul.bf16.gmra.mxu0 %v1448
        %v2556 = vpop.f32.mrf.mxu0
        %v2557 = vadd.f32 %v2468, %v2556
        %v2558 = vpop.f32.mrf.mxu0
        %v2559 = vadd.f32 %v2470, %v2558
        %2560 = vdwg.mxu0
        %2561 = vmatpush.bf16.msra.mxu0 %v749
        %2562 = vmatpush.bf16.msra.mxu0 %v747
        %2563 = vmatpush.bf16.msra.mxu0 %v745
        %2564 = vmatpush.bf16.msra.mxu0 %v743
        %2565 = vmatpush.bf16.msra.mxu0 %v741
        %2566 = vmatpush.bf16.msra.mxu0 %v739
        %2567 = vmatpush.bf16.msra.mxu0 %v737
        %2568 = vmatpush.bf16.msra.mxu0 %v735
        %2569 = vmatmul.bf16.gmra.mxu0 %v1329
        %v2570 = vpop.f32.mrf.mxu0
        %v2571 = vadd.f32 %v2482, %v2570
        %v2572 = vpop.f32.mrf.mxu0
        %v2573 = vadd.f32 %v2484, %v2572
        %2574 = vmatmul.bf16.gmra.mxu0 %v1337
        %v2575 = vpop.f32.mrf.mxu0
        %v2576 = vadd.f32 %v2487, %v2575
        %v2577 = vpop.f32.mrf.mxu0
        %v2578 = vadd.f32 %v2489, %v2577
        %2579 = vmatmul.bf16.gmra.mxu0 %v1345
        %v2580 = vpop.f32.mrf.mxu0
        %v2581 = vadd.f32 %v2492, %v2580
        %v2582 = vpop.f32.mrf.mxu0
        %v2583 = vadd.f32 %v2494, %v2582
        %2584 = vmatmul.bf16.gmra.mxu0 %v1353
        %v2585 = vpop.f32.mrf.mxu0
        %v2586 = vadd.f32 %v2497, %v2585
        %v2587 = vpop.f32.mrf.mxu0
        %v2588 = vadd.f32 %v2499, %v2587
        %2589 = vmatmul.bf16.gmra.mxu0 %v1361
        %v2590 = vpop.f32.mrf.mxu0
        %v2591 = vadd.f32 %v2502, %v2590
        %v2592 = vpop.f32.mrf.mxu0
        %v2593 = vadd.f32 %v2504, %v2592
        %2594 = vmatmul.bf16.gmra.mxu0 %v1369
        %v2595 = vpop.f32.mrf.mxu0
        %v2596 = vadd.f32 %v2507, %v2595
        %v2597 = vpop.f32.mrf.mxu0
        %v2598 = vadd.f32 %v2509, %v2597
        %2599 = vmatmul.bf16.gmra.mxu0 %v1377
        %v2600 = vpop.f32.mrf.mxu0
        %v2601 = vadd.f32 %v2512, %v2600
        %v2602 = vpop.f32.mrf.mxu0
        %v2603 = vadd.f32 %v2514, %v2602
        %2604 = vmatmul.bf16.gmra.mxu0 %v1385
        %v2605 = vpop.f32.mrf.mxu0
        %v2606 = vadd.f32 %v2517, %v2605
        %v2607 = vpop.f32.mrf.mxu0
        %v2608 = vadd.f32 %v2519, %v2607
        %2609 = vmatmul.bf16.gmra.mxu0 %v1393
        %v2610 = vpop.f32.mrf.mxu0
        %v2611 = vadd.f32 %v2522, %v2610
        %v2612 = vpop.f32.mrf.mxu0
        %v2613 = vadd.f32 %v2524, %v2612
        %2614 = vmatmul.bf16.gmra.mxu0 %v1401
        %v2615 = vpop.f32.mrf.mxu0
        %v2616 = vadd.f32 %v2527, %v2615
        %v2617 = vpop.f32.mrf.mxu0
        %v2618 = vadd.f32 %v2529, %v2617
        %2619 = vmatmul.bf16.gmra.mxu0 %v1409
        %v2620 = vpop.f32.mrf.mxu0
        %v2621 = vadd.f32 %v2532, %v2620
        %v2622 = vpop.f32.mrf.mxu0
        %v2623 = vadd.f32 %v2534, %v2622
        %2624 = vmatmul.bf16.gmra.mxu0 %v1417
        %v2625 = vpop.f32.mrf.mxu0
        %v2626 = vadd.f32 %v2537, %v2625
        %v2627 = vpop.f32.mrf.mxu0
        %v2628 = vadd.f32 %v2539, %v2627
        %2629 = vmatmul.bf16.gmra.mxu0 %v1425
        %v2630 = vpop.f32.mrf.mxu0
        %v2631 = vadd.f32 %v2542, %v2630
        %v2632 = vpop.f32.mrf.mxu0
        %v2633 = vadd.f32 %v2544, %v2632
        %2634 = vmatmul.bf16.gmra.mxu0 %v1433
        %v2635 = vpop.f32.mrf.mxu0
        %v2636 = vadd.f32 %v2547, %v2635
        %v2637 = vpop.f32.mrf.mxu0
        %v2638 = vadd.f32 %v2549, %v2637
        %2639 = vmatmul.bf16.gmra.mxu0 %v1441
        %v2640 = vpop.f32.mrf.mxu0
        %v2641 = vadd.f32 %v2552, %v2640
        %v2642 = vpop.f32.mrf.mxu0
        %v2643 = vadd.f32 %v2554, %v2642
        %2644 = vmatmul.bf16.gmra.mxu0 %v1449
        %v2645 = vpop.f32.mrf.mxu0
        %v2646 = vadd.f32 %v2557, %v2645
        %v2647 = vpop.f32.mrf.mxu0
        %v2648 = vadd.f32 %v2559, %v2647
        %2649 = vdwg.mxu0
        %2650 = vmatpush.bf16.msra.mxu0 %v765
        %2651 = vmatpush.bf16.msra.mxu0 %v763
        %2652 = vmatpush.bf16.msra.mxu0 %v761
        %2653 = vmatpush.bf16.msra.mxu0 %v759
        %2654 = vmatpush.bf16.msra.mxu0 %v757
        %2655 = vmatpush.bf16.msra.mxu0 %v755
        %2656 = vmatpush.bf16.msra.mxu0 %v753
        %2657 = vmatpush.bf16.msra.mxu0 %v751
        %2658 = vmatmul.bf16.gmra.mxu0 %v1330
        %v2659 = vpop.f32.mrf.mxu0
        %v2660 = vadd.f32 %v2571, %v2659
        %v2661 = vpop.f32.mrf.mxu0
        %v2662 = vadd.f32 %v2573, %v2661
        %2663 = vmatmul.bf16.gmra.mxu0 %v1338
        %v2664 = vpop.f32.mrf.mxu0
        %v2665 = vadd.f32 %v2576, %v2664
        %v2666 = vpop.f32.mrf.mxu0
        %v2667 = vadd.f32 %v2578, %v2666
        %2668 = vmatmul.bf16.gmra.mxu0 %v1346
        %v2669 = vpop.f32.mrf.mxu0
        %v2670 = vadd.f32 %v2581, %v2669
        %v2671 = vpop.f32.mrf.mxu0
        %v2672 = vadd.f32 %v2583, %v2671
        %2673 = vmatmul.bf16.gmra.mxu0 %v1354
        %v2674 = vpop.f32.mrf.mxu0
        %v2675 = vadd.f32 %v2586, %v2674
        %v2676 = vpop.f32.mrf.mxu0
        %v2677 = vadd.f32 %v2588, %v2676
        %2678 = vmatmul.bf16.gmra.mxu0 %v1362
        %v2679 = vpop.f32.mrf.mxu0
        %v2680 = vadd.f32 %v2591, %v2679
        %v2681 = vpop.f32.mrf.mxu0
        %v2682 = vadd.f32 %v2593, %v2681
        %2683 = vmatmul.bf16.gmra.mxu0 %v1370
        %v2684 = vpop.f32.mrf.mxu0
        %v2685 = vadd.f32 %v2596, %v2684
        %v2686 = vpop.f32.mrf.mxu0
        %v2687 = vadd.f32 %v2598, %v2686
        %2688 = vmatmul.bf16.gmra.mxu0 %v1378
        %v2689 = vpop.f32.mrf.mxu0
        %v2690 = vadd.f32 %v2601, %v2689
        %v2691 = vpop.f32.mrf.mxu0
        %v2692 = vadd.f32 %v2603, %v2691
        %2693 = vmatmul.bf16.gmra.mxu0 %v1386
        %v2694 = vpop.f32.mrf.mxu0
        %v2695 = vadd.f32 %v2606, %v2694
        %v2696 = vpop.f32.mrf.mxu0
        %v2697 = vadd.f32 %v2608, %v2696
        %2698 = vmatmul.bf16.gmra.mxu0 %v1394
        %v2699 = vpop.f32.mrf.mxu0
        %v2700 = vadd.f32 %v2611, %v2699
        %v2701 = vpop.f32.mrf.mxu0
        %v2702 = vadd.f32 %v2613, %v2701
        %2703 = vmatmul.bf16.gmra.mxu0 %v1402
        %v2704 = vpop.f32.mrf.mxu0
        %v2705 = vadd.f32 %v2616, %v2704
        %v2706 = vpop.f32.mrf.mxu0
        %v2707 = vadd.f32 %v2618, %v2706
        %2708 = vmatmul.bf16.gmra.mxu0 %v1410
        %v2709 = vpop.f32.mrf.mxu0
        %v2710 = vadd.f32 %v2621, %v2709
        %v2711 = vpop.f32.mrf.mxu0
        %v2712 = vadd.f32 %v2623, %v2711
        %2713 = vmatmul.bf16.gmra.mxu0 %v1418
        %v2714 = vpop.f32.mrf.mxu0
        %v2715 = vadd.f32 %v2626, %v2714
        %v2716 = vpop.f32.mrf.mxu0
        %v2717 = vadd.f32 %v2628, %v2716
        %2718 = vmatmul.bf16.gmra.mxu0 %v1426
        %v2719 = vpop.f32.mrf.mxu0
        %v2720 = vadd.f32 %v2631, %v2719
        %v2721 = vpop.f32.mrf.mxu0
        %v2722 = vadd.f32 %v2633, %v2721
        %2723 = vmatmul.bf16.gmra.mxu0 %v1434
        %v2724 = vpop.f32.mrf.mxu0
        %v2725 = vadd.f32 %v2636, %v2724
        %v2726 = vpop.f32.mrf.mxu0
        %v2727 = vadd.f32 %v2638, %v2726
        %2728 = vmatmul.bf16.gmra.mxu0 %v1442
        %v2729 = vpop.f32.mrf.mxu0
        %v2730 = vadd.f32 %v2641, %v2729
        %v2731 = vpop.f32.mrf.mxu0
        %v2732 = vadd.f32 %v2643, %v2731
        %2733 = vmatmul.bf16.gmra.mxu0 %v1450
        %v2734 = vpop.f32.mrf.mxu0
        %v2735 = vadd.f32 %v2646, %v2734
        %v2736 = vpop.f32.mrf.mxu0
        %v2737 = vadd.f32 %v2648, %v2736
        %2738 = vdwg.mxu0
        %2739 = vmatpush.bf16.msra.mxu0 %v781
        %2740 = vmatpush.bf16.msra.mxu0 %v779
        %2741 = vmatpush.bf16.msra.mxu0 %v777
        %2742 = vmatpush.bf16.msra.mxu0 %v775
        %2743 = vmatpush.bf16.msra.mxu0 %v773
        %2744 = vmatpush.bf16.msra.mxu0 %v771
        %2745 = vmatpush.bf16.msra.mxu0 %v769
        %2746 = vmatpush.bf16.msra.mxu0 %v767
        %2747 = vmatmul.bf16.gmra.mxu0 %v1331
        %v2748 = vpop.f32.mrf.mxu0
        %v2749 = vadd.f32 %v2660, %v2748
        %v2750 = vpop.f32.mrf.mxu0
        %v2751 = vadd.f32 %v2662, %v2750
        %2752 = vmatmul.bf16.gmra.mxu0 %v1339
        %v2753 = vpop.f32.mrf.mxu0
        %v2754 = vadd.f32 %v2665, %v2753
        %v2755 = vpop.f32.mrf.mxu0
        %v2756 = vadd.f32 %v2667, %v2755
        %2757 = vmatmul.bf16.gmra.mxu0 %v1347
        %v2758 = vpop.f32.mrf.mxu0
        %v2759 = vadd.f32 %v2670, %v2758
        %v2760 = vpop.f32.mrf.mxu0
        %v2761 = vadd.f32 %v2672, %v2760
        %2762 = vmatmul.bf16.gmra.mxu0 %v1355
        %v2763 = vpop.f32.mrf.mxu0
        %v2764 = vadd.f32 %v2675, %v2763
        %v2765 = vpop.f32.mrf.mxu0
        %v2766 = vadd.f32 %v2677, %v2765
        %2767 = vmatmul.bf16.gmra.mxu0 %v1363
        %v2768 = vpop.f32.mrf.mxu0
        %v2769 = vadd.f32 %v2680, %v2768
        %v2770 = vpop.f32.mrf.mxu0
        %v2771 = vadd.f32 %v2682, %v2770
        %2772 = vmatmul.bf16.gmra.mxu0 %v1371
        %v2773 = vpop.f32.mrf.mxu0
        %v2774 = vadd.f32 %v2685, %v2773
        %v2775 = vpop.f32.mrf.mxu0
        %v2776 = vadd.f32 %v2687, %v2775
        %2777 = vmatmul.bf16.gmra.mxu0 %v1379
        %v2778 = vpop.f32.mrf.mxu0
        %v2779 = vadd.f32 %v2690, %v2778
        %v2780 = vpop.f32.mrf.mxu0
        %v2781 = vadd.f32 %v2692, %v2780
        %2782 = vmatmul.bf16.gmra.mxu0 %v1387
        %v2783 = vpop.f32.mrf.mxu0
        %v2784 = vadd.f32 %v2695, %v2783
        %v2785 = vpop.f32.mrf.mxu0
        %v2786 = vadd.f32 %v2697, %v2785
        %2787 = vmatmul.bf16.gmra.mxu0 %v1395
        %v2788 = vpop.f32.mrf.mxu0
        %v2789 = vadd.f32 %v2700, %v2788
        %v2790 = vpop.f32.mrf.mxu0
        %v2791 = vadd.f32 %v2702, %v2790
        %2792 = vmatmul.bf16.gmra.mxu0 %v1403
        %v2793 = vpop.f32.mrf.mxu0
        %v2794 = vadd.f32 %v2705, %v2793
        %v2795 = vpop.f32.mrf.mxu0
        %v2796 = vadd.f32 %v2707, %v2795
        %2797 = vmatmul.bf16.gmra.mxu0 %v1411
        %v2798 = vpop.f32.mrf.mxu0
        %v2799 = vadd.f32 %v2710, %v2798
        %v2800 = vpop.f32.mrf.mxu0
        %v2801 = vadd.f32 %v2712, %v2800
        %2802 = vmatmul.bf16.gmra.mxu0 %v1419
        %v2803 = vpop.f32.mrf.mxu0
        %v2804 = vadd.f32 %v2715, %v2803
        %v2805 = vpop.f32.mrf.mxu0
        %v2806 = vadd.f32 %v2717, %v2805
        %2807 = vmatmul.bf16.gmra.mxu0 %v1427
        %v2808 = vpop.f32.mrf.mxu0
        %v2809 = vadd.f32 %v2720, %v2808
        %v2810 = vpop.f32.mrf.mxu0
        %v2811 = vadd.f32 %v2722, %v2810
        %2812 = vmatmul.bf16.gmra.mxu0 %v1435
        %v2813 = vpop.f32.mrf.mxu0
        %v2814 = vadd.f32 %v2725, %v2813
        %v2815 = vpop.f32.mrf.mxu0
        %v2816 = vadd.f32 %v2727, %v2815
        %2817 = vmatmul.bf16.gmra.mxu0 %v1443
        %v2818 = vpop.f32.mrf.mxu0
        %v2819 = vadd.f32 %v2730, %v2818
        %v2820 = vpop.f32.mrf.mxu0
        %v2821 = vadd.f32 %v2732, %v2820
        %2822 = vmatmul.bf16.gmra.mxu0 %v1451
        %v2823 = vpop.f32.mrf.mxu0
        %v2824 = vadd.f32 %v2735, %v2823
        %v2825 = vpop.f32.mrf.mxu0
        %v2826 = vadd.f32 %v2737, %v2825
        %2827 = vdwg.mxu0
        %2828 = vmatpush.bf16.msra.mxu0 %v797
        %2829 = vmatpush.bf16.msra.mxu0 %v795
        %2830 = vmatpush.bf16.msra.mxu0 %v793
        %2831 = vmatpush.bf16.msra.mxu0 %v791
        %2832 = vmatpush.bf16.msra.mxu0 %v789
        %2833 = vmatpush.bf16.msra.mxu0 %v787
        %2834 = vmatpush.bf16.msra.mxu0 %v785
        %2835 = vmatpush.bf16.msra.mxu0 %v783
        %2836 = vmatmul.bf16.gmra.mxu0 %v1332
        %v2837 = vpop.f32.mrf.mxu0
        %v2838 = vadd.f32 %v2749, %v2837
        %v2839 = vpop.f32.mrf.mxu0
        %v2840 = vadd.f32 %v2751, %v2839
        %2841 = vmatmul.bf16.gmra.mxu0 %v1340
        %v2842 = vpop.f32.mrf.mxu0
        %v2843 = vadd.f32 %v2754, %v2842
        %v2844 = vpop.f32.mrf.mxu0
        %v2845 = vadd.f32 %v2756, %v2844
        %2846 = vmatmul.bf16.gmra.mxu0 %v1348
        %v2847 = vpop.f32.mrf.mxu0
        %v2848 = vadd.f32 %v2759, %v2847
        %v2849 = vpop.f32.mrf.mxu0
        %v2850 = vadd.f32 %v2761, %v2849
        %2851 = vmatmul.bf16.gmra.mxu0 %v1356
        %v2852 = vpop.f32.mrf.mxu0
        %v2853 = vadd.f32 %v2764, %v2852
        %v2854 = vpop.f32.mrf.mxu0
        %v2855 = vadd.f32 %v2766, %v2854
        %2856 = vmatmul.bf16.gmra.mxu0 %v1364
        %v2857 = vpop.f32.mrf.mxu0
        %v2858 = vadd.f32 %v2769, %v2857
        %v2859 = vpop.f32.mrf.mxu0
        %v2860 = vadd.f32 %v2771, %v2859
        %2861 = vmatmul.bf16.gmra.mxu0 %v1372
        %v2862 = vpop.f32.mrf.mxu0
        %v2863 = vadd.f32 %v2774, %v2862
        %v2864 = vpop.f32.mrf.mxu0
        %v2865 = vadd.f32 %v2776, %v2864
        %2866 = vmatmul.bf16.gmra.mxu0 %v1380
        %v2867 = vpop.f32.mrf.mxu0
        %v2868 = vadd.f32 %v2779, %v2867
        %v2869 = vpop.f32.mrf.mxu0
        %v2870 = vadd.f32 %v2781, %v2869
        %2871 = vmatmul.bf16.gmra.mxu0 %v1388
        %v2872 = vpop.f32.mrf.mxu0
        %v2873 = vadd.f32 %v2784, %v2872
        %v2874 = vpop.f32.mrf.mxu0
        %v2875 = vadd.f32 %v2786, %v2874
        %2876 = vmatmul.bf16.gmra.mxu0 %v1396
        %v2877 = vpop.f32.mrf.mxu0
        %v2878 = vadd.f32 %v2789, %v2877
        %v2879 = vpop.f32.mrf.mxu0
        %v2880 = vadd.f32 %v2791, %v2879
        %2881 = vmatmul.bf16.gmra.mxu0 %v1404
        %v2882 = vpop.f32.mrf.mxu0
        %v2883 = vadd.f32 %v2794, %v2882
        %v2884 = vpop.f32.mrf.mxu0
        %v2885 = vadd.f32 %v2796, %v2884
        %2886 = vmatmul.bf16.gmra.mxu0 %v1412
        %v2887 = vpop.f32.mrf.mxu0
        %v2888 = vadd.f32 %v2799, %v2887
        %v2889 = vpop.f32.mrf.mxu0
        %v2890 = vadd.f32 %v2801, %v2889
        %2891 = vmatmul.bf16.gmra.mxu0 %v1420
        %v2892 = vpop.f32.mrf.mxu0
        %v2893 = vadd.f32 %v2804, %v2892
        %v2894 = vpop.f32.mrf.mxu0
        %v2895 = vadd.f32 %v2806, %v2894
        %2896 = vmatmul.bf16.gmra.mxu0 %v1428
        %v2897 = vpop.f32.mrf.mxu0
        %v2898 = vadd.f32 %v2809, %v2897
        %v2899 = vpop.f32.mrf.mxu0
        %v2900 = vadd.f32 %v2811, %v2899
        %2901 = vmatmul.bf16.gmra.mxu0 %v1436
        %v2902 = vpop.f32.mrf.mxu0
        %v2903 = vadd.f32 %v2814, %v2902
        %v2904 = vpop.f32.mrf.mxu0
        %v2905 = vadd.f32 %v2816, %v2904
        %2906 = vmatmul.bf16.gmra.mxu0 %v1444
        %v2907 = vpop.f32.mrf.mxu0
        %v2908 = vadd.f32 %v2819, %v2907
        %v2909 = vpop.f32.mrf.mxu0
        %v2910 = vadd.f32 %v2821, %v2909
        %2911 = vmatmul.bf16.gmra.mxu0 %v1452
        %v2912 = vpop.f32.mrf.mxu0
        %v2913 = vadd.f32 %v2824, %v2912
        %v2914 = vpop.f32.mrf.mxu0
        %v2915 = vadd.f32 %v2826, %v2914
        %2916 = vdwg.mxu0
        %2917 = vmatpush.bf16.msra.mxu0 %v813
        %2918 = vmatpush.bf16.msra.mxu0 %v811
        %2919 = vmatpush.bf16.msra.mxu0 %v809
        %2920 = vmatpush.bf16.msra.mxu0 %v807
        %2921 = vmatpush.bf16.msra.mxu0 %v805
        %2922 = vmatpush.bf16.msra.mxu0 %v803
        %2923 = vmatpush.bf16.msra.mxu0 %v801
        %2924 = vmatpush.bf16.msra.mxu0 %v799
        %2925 = vmatmul.bf16.gmra.mxu0 %v1333
        %v2926 = vpop.f32.mrf.mxu0
        %v2927 = vadd.f32 %v2838, %v2926
        %v2928 = vpop.f32.mrf.mxu0
        %v2929 = vadd.f32 %v2840, %v2928
        %2930 = vmatmul.bf16.gmra.mxu0 %v1341
        %v2931 = vpop.f32.mrf.mxu0
        %v2932 = vadd.f32 %v2843, %v2931
        %v2933 = vpop.f32.mrf.mxu0
        %v2934 = vadd.f32 %v2845, %v2933
        %2935 = vmatmul.bf16.gmra.mxu0 %v1349
        %v2936 = vpop.f32.mrf.mxu0
        %v2937 = vadd.f32 %v2848, %v2936
        %v2938 = vpop.f32.mrf.mxu0
        %v2939 = vadd.f32 %v2850, %v2938
        %2940 = vmatmul.bf16.gmra.mxu0 %v1357
        %v2941 = vpop.f32.mrf.mxu0
        %v2942 = vadd.f32 %v2853, %v2941
        %v2943 = vpop.f32.mrf.mxu0
        %v2944 = vadd.f32 %v2855, %v2943
        %2945 = vmatmul.bf16.gmra.mxu0 %v1365
        %v2946 = vpop.f32.mrf.mxu0
        %v2947 = vadd.f32 %v2858, %v2946
        %v2948 = vpop.f32.mrf.mxu0
        %v2949 = vadd.f32 %v2860, %v2948
        %2950 = vmatmul.bf16.gmra.mxu0 %v1373
        %v2951 = vpop.f32.mrf.mxu0
        %v2952 = vadd.f32 %v2863, %v2951
        %v2953 = vpop.f32.mrf.mxu0
        %v2954 = vadd.f32 %v2865, %v2953
        %2955 = vmatmul.bf16.gmra.mxu0 %v1381
        %v2956 = vpop.f32.mrf.mxu0
        %v2957 = vadd.f32 %v2868, %v2956
        %v2958 = vpop.f32.mrf.mxu0
        %v2959 = vadd.f32 %v2870, %v2958
        %2960 = vmatmul.bf16.gmra.mxu0 %v1389
        %v2961 = vpop.f32.mrf.mxu0
        %v2962 = vadd.f32 %v2873, %v2961
        %v2963 = vpop.f32.mrf.mxu0
        %v2964 = vadd.f32 %v2875, %v2963
        %2965 = vmatmul.bf16.gmra.mxu0 %v1397
        %v2966 = vpop.f32.mrf.mxu0
        %v2967 = vadd.f32 %v2878, %v2966
        %v2968 = vpop.f32.mrf.mxu0
        %v2969 = vadd.f32 %v2880, %v2968
        %2970 = vmatmul.bf16.gmra.mxu0 %v1405
        %v2971 = vpop.f32.mrf.mxu0
        %v2972 = vadd.f32 %v2883, %v2971
        %v2973 = vpop.f32.mrf.mxu0
        %v2974 = vadd.f32 %v2885, %v2973
        %2975 = vmatmul.bf16.gmra.mxu0 %v1413
        %v2976 = vpop.f32.mrf.mxu0
        %v2977 = vadd.f32 %v2888, %v2976
        %v2978 = vpop.f32.mrf.mxu0
        %v2979 = vadd.f32 %v2890, %v2978
        %2980 = vmatmul.bf16.gmra.mxu0 %v1421
        %v2981 = vpop.f32.mrf.mxu0
        %v2982 = vadd.f32 %v2893, %v2981
        %v2983 = vpop.f32.mrf.mxu0
        %v2984 = vadd.f32 %v2895, %v2983
        %2985 = vmatmul.bf16.gmra.mxu0 %v1429
        %v2986 = vpop.f32.mrf.mxu0
        %v2987 = vadd.f32 %v2898, %v2986
        %v2988 = vpop.f32.mrf.mxu0
        %v2989 = vadd.f32 %v2900, %v2988
        %2990 = vmatmul.bf16.gmra.mxu0 %v1437
        %v2991 = vpop.f32.mrf.mxu0
        %v2992 = vadd.f32 %v2903, %v2991
        %v2993 = vpop.f32.mrf.mxu0
        %v2994 = vadd.f32 %v2905, %v2993
        %2995 = vmatmul.bf16.gmra.mxu0 %v1445
        %v2996 = vpop.f32.mrf.mxu0
        %v2997 = vadd.f32 %v2908, %v2996
        %v2998 = vpop.f32.mrf.mxu0
        %v2999 = vadd.f32 %v2910, %v2998
        %3000 = vmatmul.bf16.gmra.mxu0 %v1453
        %v3001 = vpop.f32.mrf.mxu0
        %v3002 = vadd.f32 %v2913, %v3001
        %v3003 = vpop.f32.mrf.mxu0
        %v3004 = vadd.f32 %v2915, %v3003
        %3005 = vdwg.mxu0
        %v3006 = vld [vmem:[%s2] sm:$0xff]
        %v3007 = vld [vmem:[%s2 + $0x8] sm:$0xff]
        %v3008 = vld [vmem:[%s2 + $0x10] sm:$0xff]
        %v3009 = vld [vmem:[%s2 + $0x18] sm:$0xff]
        %v3010 = vld [vmem:[%s2 + $0x20] sm:$0xff]
        %v3011 = vld [vmem:[%s2 + $0x28] sm:$0xff]
        %v3012 = vld [vmem:[%s2 + $0x30] sm:$0xff]
        %v3013 = vld [vmem:[%s2 + $0x38] sm:$0xff]
        %v3014 = vld [vmem:[%s2 + $0x40] sm:$0xff]
        %v3015 = vld [vmem:[%s2 + $0x48] sm:$0xff]
        %v3016 = vld [vmem:[%s2 + $0x50] sm:$0xff]
        %v3017 = vld [vmem:[%s2 + $0x58] sm:$0xff]
        %v3018 = vld [vmem:[%s2 + $0x60] sm:$0xff]
        %v3019 = vld [vmem:[%s2 + $0x68] sm:$0xff]
        %v3020 = vld [vmem:[%s2 + $0x70] sm:$0xff]
        %v3021 = vld [vmem:[%s2 + $0x78] sm:$0xff]
        %v3022 = vld [vmem:[%s2 + $0x80] sm:$0xff]
        %v3023 = vld [vmem:[%s2 + $0x88] sm:$0xff]
        %v3024 = vld [vmem:[%s2 + $0x90] sm:$0xff]
        %v3025 = vld [vmem:[%s2 + $0x98] sm:$0xff]
        %v3026 = vld [vmem:[%s2 + $0xa0] sm:$0xff]
        %v3027 = vld [vmem:[%s2 + $0xa8] sm:$0xff]
        %v3028 = vld [vmem:[%s2 + $0xb0] sm:$0xff]
        %v3029 = vld [vmem:[%s2 + $0xb8] sm:$0xff]
        %v3030 = vld [vmem:[%s2 + $0xc0] sm:$0xff]
        %v3031 = vld [vmem:[%s2 + $0xc8] sm:$0xff]
        %v3032 = vld [vmem:[%s2 + $0xd0] sm:$0xff]
        %v3033 = vld [vmem:[%s2 + $0xd8] sm:$0xff]
        %v3034 = vld [vmem:[%s2 + $0xe0] sm:$0xff]
        %v3035 = vld [vmem:[%s2 + $0xe8] sm:$0xff]
        %v3036 = vld [vmem:[%s2 + $0xf0] sm:$0xff]
        %v3037 = vld [vmem:[%s2 + $0xf8] sm:$0xff]
        %3039 = vset.pattern.permute.xlu0 0
        %3040 = vperm.xlu0 %3039, %v3006
        %v3041 = vpop.permute.xlu0 %3040
        %3044 = vset.pattern.permute.xlu0 0
        %3045 = vperm.xlu0 %3044, %v3007
        %v3046 = vpop.permute.xlu0 %3045
        %3049 = vset.pattern.permute.xlu0 0
        %3050 = vperm.xlu0 %3049, %v3008
        %v3051 = vpop.permute.xlu0 %3050
        %3054 = vset.pattern.permute.xlu0 0
        %3055 = vperm.xlu0 %3054, %v3009
        %v3056 = vpop.permute.xlu0 %3055
        %3059 = vset.pattern.permute.xlu0 0
        %3060 = vperm.xlu0 %3059, %v3010
        %v3061 = vpop.permute.xlu0 %3060
        %3064 = vset.pattern.permute.xlu0 0
        %3065 = vperm.xlu0 %3064, %v3011
        %v3066 = vpop.permute.xlu0 %3065
        %3069 = vset.pattern.permute.xlu0 0
        %3070 = vperm.xlu0 %3069, %v3012
        %v3071 = vpop.permute.xlu0 %3070
        %3074 = vset.pattern.permute.xlu0 0
        %3075 = vperm.xlu0 %3074, %v3013
        %v3076 = vpop.permute.xlu0 %3075
        %3079 = vset.pattern.permute.xlu0 0
        %3080 = vperm.xlu0 %3079, %v3014
        %v3081 = vpop.permute.xlu0 %3080
        %3084 = vset.pattern.permute.xlu0 0
        %3085 = vperm.xlu0 %3084, %v3015
        %v3086 = vpop.permute.xlu0 %3085
        %3089 = vset.pattern.permute.xlu0 0
        %3090 = vperm.xlu0 %3089, %v3016
        %v3091 = vpop.permute.xlu0 %3090
        %3094 = vset.pattern.permute.xlu0 0
        %3095 = vperm.xlu0 %3094, %v3017
        %v3096 = vpop.permute.xlu0 %3095
        %3099 = vset.pattern.permute.xlu0 0
        %3100 = vperm.xlu0 %3099, %v3018
        %v3101 = vpop.permute.xlu0 %3100
        %3104 = vset.pattern.permute.xlu0 0
        %3105 = vperm.xlu0 %3104, %v3019
        %v3106 = vpop.permute.xlu0 %3105
        %3109 = vset.pattern.permute.xlu0 0
        %3110 = vperm.xlu0 %3109, %v3020
        %v3111 = vpop.permute.xlu0 %3110
        %3114 = vset.pattern.permute.xlu0 0
        %3115 = vperm.xlu0 %3114, %v3021
        %v3116 = vpop.permute.xlu0 %3115
        %3119 = vset.pattern.permute.xlu0 0
        %3120 = vperm.xlu0 %3119, %v3022
        %v3121 = vpop.permute.xlu0 %3120
        %3124 = vset.pattern.permute.xlu0 0
        %3125 = vperm.xlu0 %3124, %v3023
        %v3126 = vpop.permute.xlu0 %3125
        %3129 = vset.pattern.permute.xlu0 0
        %3130 = vperm.xlu0 %3129, %v3024
        %v3131 = vpop.permute.xlu0 %3130
        %3134 = vset.pattern.permute.xlu0 0
        %3135 = vperm.xlu0 %3134, %v3025
        %v3136 = vpop.permute.xlu0 %3135
        %3139 = vset.pattern.permute.xlu0 0
        %3140 = vperm.xlu0 %3139, %v3026
        %v3141 = vpop.permute.xlu0 %3140
        %3144 = vset.pattern.permute.xlu0 0
        %3145 = vperm.xlu0 %3144, %v3027
        %v3146 = vpop.permute.xlu0 %3145
        %3149 = vset.pattern.permute.xlu0 0
        %3150 = vperm.xlu0 %3149, %v3028
        %v3151 = vpop.permute.xlu0 %3150
        %3154 = vset.pattern.permute.xlu0 0
        %3155 = vperm.xlu0 %3154, %v3029
        %v3156 = vpop.permute.xlu0 %3155
        %3159 = vset.pattern.permute.xlu0 0
        %3160 = vperm.xlu0 %3159, %v3030
        %v3161 = vpop.permute.xlu0 %3160
        %3164 = vset.pattern.permute.xlu0 0
        %3165 = vperm.xlu0 %3164, %v3031
        %v3166 = vpop.permute.xlu0 %3165
        %3169 = vset.pattern.permute.xlu0 0
        %3170 = vperm.xlu0 %3169, %v3032
        %v3171 = vpop.permute.xlu0 %3170
        %3174 = vset.pattern.permute.xlu0 0
        %3175 = vperm.xlu0 %3174, %v3033
        %v3176 = vpop.permute.xlu0 %3175
        %3179 = vset.pattern.permute.xlu0 0
        %3180 = vperm.xlu0 %3179, %v3034
        %v3181 = vpop.permute.xlu0 %3180
        %3184 = vset.pattern.permute.xlu0 0
        %3185 = vperm.xlu0 %3184, %v3035
        %v3186 = vpop.permute.xlu0 %3185
        %3189 = vset.pattern.permute.xlu0 0
        %3190 = vperm.xlu0 %3189, %v3036
        %v3191 = vpop.permute.xlu0 %3190
        %3194 = vset.pattern.permute.xlu0 0
        %3195 = vperm.xlu0 %3194, %v3037
        %v3196 = vpop.permute.xlu0 %3195
        %v3198 = vmul.f32 %v2215, %v3041
        %v3199 = vmul.f32 %v2927, %v3041
        %v3200 = vmul.f32 %v2217, %v3046
        %v3201 = vmul.f32 %v2929, %v3046
        %v3202 = vmul.f32 %v2220, %v3051
        %v3203 = vmul.f32 %v2932, %v3051
        %v3204 = vmul.f32 %v2222, %v3056
        %v3205 = vmul.f32 %v2934, %v3056
        %v3206 = vmul.f32 %v2225, %v3061
        %v3207 = vmul.f32 %v2937, %v3061
        %v3208 = vmul.f32 %v2227, %v3066
        %v3209 = vmul.f32 %v2939, %v3066
        %v3210 = vmul.f32 %v2230, %v3071
        %v3211 = vmul.f32 %v2942, %v3071
        %v3212 = vmul.f32 %v2232, %v3076
        %v3213 = vmul.f32 %v2944, %v3076
        %v3214 = vmul.f32 %v2235, %v3081
        %v3215 = vmul.f32 %v2947, %v3081
        %v3216 = vmul.f32 %v2237, %v3086
        %v3217 = vmul.f32 %v2949, %v3086
        %v3218 = vmul.f32 %v2240, %v3091
        %v3219 = vmul.f32 %v2952, %v3091
        %v3220 = vmul.f32 %v2242, %v3096
        %v3221 = vmul.f32 %v2954, %v3096
        %v3222 = vmul.f32 %v2245, %v3101
        %v3223 = vmul.f32 %v2957, %v3101
        %v3224 = vmul.f32 %v2247, %v3106
        %v3225 = vmul.f32 %v2959, %v3106
        %v3226 = vmul.f32 %v2250, %v3111
        %v3227 = vmul.f32 %v2962, %v3111
        %v3228 = vmul.f32 %v2252, %v3116
        %v3229 = vmul.f32 %v2964, %v3116
        %v3230 = vmul.f32 %v2255, %v3121
        %v3231 = vmul.f32 %v2967, %v3121
        %v3232 = vmul.f32 %v2257, %v3126
        %v3233 = vmul.f32 %v2969, %v3126
        %v3234 = vmul.f32 %v2260, %v3131
        %v3235 = vmul.f32 %v2972, %v3131
        %v3236 = vmul.f32 %v2262, %v3136
        %v3237 = vmul.f32 %v2974, %v3136
        %v3238 = vmul.f32 %v2265, %v3141
        %v3239 = vmul.f32 %v2977, %v3141
        %v3240 = vmul.f32 %v2267, %v3146
        %v3241 = vmul.f32 %v2979, %v3146
        %v3242 = vmul.f32 %v2270, %v3151
        %v3243 = vmul.f32 %v2982, %v3151
        %v3244 = vmul.f32 %v2272, %v3156
        %v3245 = vmul.f32 %v2984, %v3156
        %v3246 = vmul.f32 %v2275, %v3161
        %v3247 = vmul.f32 %v2987, %v3161
        %v3248 = vmul.f32 %v2277, %v3166
        %v3249 = vmul.f32 %v2989, %v3166
        %v3250 = vmul.f32 %v2280, %v3171
        %v3251 = vmul.f32 %v2992, %v3171
        %v3252 = vmul.f32 %v2282, %v3176
        %v3253 = vmul.f32 %v2994, %v3176
        %v3254 = vmul.f32 %v2285, %v3181
        %v3255 = vmul.f32 %v2997, %v3181
        %v3256 = vmul.f32 %v2287, %v3186
        %v3257 = vmul.f32 %v2999, %v3186
        %v3258 = vmul.f32 %v2290, %v3191
        %v3259 = vmul.f32 %v3002, %v3191
        %v3260 = vmul.f32 %v2292, %v3196
        %v3261 = vmul.f32 %v3004, %v3196
        %v3262 = vld [vmem:[%s3] sm:$0xff]
        %v3263 = vld [vmem:[%s3 + $0x8] sm:$0xff]
        %v3264 = vld [vmem:[%s3 + $0x10] sm:$0xff]
        %v3265 = vld [vmem:[%s3 + $0x18] sm:$0xff]
        %v3266 = vld [vmem:[%s3 + $0x20] sm:$0xff]
        %v3267 = vld [vmem:[%s3 + $0x28] sm:$0xff]
        %v3268 = vld [vmem:[%s3 + $0x30] sm:$0xff]
        %v3269 = vld [vmem:[%s3 + $0x38] sm:$0xff]
        %v3270 = vld [vmem:[%s3 + $0x40] sm:$0xff]
        %v3271 = vld [vmem:[%s3 + $0x48] sm:$0xff]
        %v3272 = vld [vmem:[%s3 + $0x50] sm:$0xff]
        %v3273 = vld [vmem:[%s3 + $0x58] sm:$0xff]
        %v3274 = vld [vmem:[%s3 + $0x60] sm:$0xff]
        %v3275 = vld [vmem:[%s3 + $0x68] sm:$0xff]
        %v3276 = vld [vmem:[%s3 + $0x70] sm:$0xff]
        %v3277 = vld [vmem:[%s3 + $0x78] sm:$0xff]
        %v3278 = vld [vmem:[%s3 + $0x80] sm:$0xff]
        %v3279 = vld [vmem:[%s3 + $0x88] sm:$0xff]
        %v3280 = vld [vmem:[%s3 + $0x90] sm:$0xff]
        %v3281 = vld [vmem:[%s3 + $0x98] sm:$0xff]
        %v3282 = vld [vmem:[%s3 + $0xa0] sm:$0xff]
        %v3283 = vld [vmem:[%s3 + $0xa8] sm:$0xff]
        %v3284 = vld [vmem:[%s3 + $0xb0] sm:$0xff]
        %v3285 = vld [vmem:[%s3 + $0xb8] sm:$0xff]
        %v3286 = vld [vmem:[%s3 + $0xc0] sm:$0xff]
        %v3287 = vld [vmem:[%s3 + $0xc8] sm:$0xff]
        %v3288 = vld [vmem:[%s3 + $0xd0] sm:$0xff]
        %v3289 = vld [vmem:[%s3 + $0xd8] sm:$0xff]
        %v3290 = vld [vmem:[%s3 + $0xe0] sm:$0xff]
        %v3291 = vld [vmem:[%s3 + $0xe8] sm:$0xff]
        %v3292 = vld [vmem:[%s3 + $0xf0] sm:$0xff]
        %v3293 = vld [vmem:[%s3 + $0xf8] sm:$0xff]
        %3295 = vset.pattern.permute.xlu0 0
        %3296 = vperm.xlu0 %3295, %v3262
        %v3297 = vpop.permute.xlu0 %3296
        %3300 = vset.pattern.permute.xlu0 0
        %3301 = vperm.xlu0 %3300, %v3263
        %v3302 = vpop.permute.xlu0 %3301
        %3305 = vset.pattern.permute.xlu0 0
        %3306 = vperm.xlu0 %3305, %v3264
        %v3307 = vpop.permute.xlu0 %3306
        %3310 = vset.pattern.permute.xlu0 0
        %3311 = vperm.xlu0 %3310, %v3265
        %v3312 = vpop.permute.xlu0 %3311
        %3315 = vset.pattern.permute.xlu0 0
        %3316 = vperm.xlu0 %3315, %v3266
        %v3317 = vpop.permute.xlu0 %3316
        %3320 = vset.pattern.permute.xlu0 0
        %3321 = vperm.xlu0 %3320, %v3267
        %v3322 = vpop.permute.xlu0 %3321
        %3325 = vset.pattern.permute.xlu0 0
        %3326 = vperm.xlu0 %3325, %v3268
        %v3327 = vpop.permute.xlu0 %3326
        %3330 = vset.pattern.permute.xlu0 0
        %3331 = vperm.xlu0 %3330, %v3269
        %v3332 = vpop.permute.xlu0 %3331
        %3335 = vset.pattern.permute.xlu0 0
        %3336 = vperm.xlu0 %3335, %v3270
        %v3337 = vpop.permute.xlu0 %3336
        %3340 = vset.pattern.permute.xlu0 0
        %3341 = vperm.xlu0 %3340, %v3271
        %v3342 = vpop.permute.xlu0 %3341
        %3345 = vset.pattern.permute.xlu0 0
        %3346 = vperm.xlu0 %3345, %v3272
        %v3347 = vpop.permute.xlu0 %3346
        %3350 = vset.pattern.permute.xlu0 0
        %3351 = vperm.xlu0 %3350, %v3273
        %v3352 = vpop.permute.xlu0 %3351
        %3355 = vset.pattern.permute.xlu0 0
        %3356 = vperm.xlu0 %3355, %v3274
        %v3357 = vpop.permute.xlu0 %3356
        %3360 = vset.pattern.permute.xlu0 0
        %3361 = vperm.xlu0 %3360, %v3275
        %v3362 = vpop.permute.xlu0 %3361
        %3365 = vset.pattern.permute.xlu0 0
        %3366 = vperm.xlu0 %3365, %v3276
        %v3367 = vpop.permute.xlu0 %3366
        %3370 = vset.pattern.permute.xlu0 0
        %3371 = vperm.xlu0 %3370, %v3277
        %v3372 = vpop.permute.xlu0 %3371
        %3375 = vset.pattern.permute.xlu0 0
        %3376 = vperm.xlu0 %3375, %v3278
        %v3377 = vpop.permute.xlu0 %3376
        %3380 = vset.pattern.permute.xlu0 0
        %3381 = vperm.xlu0 %3380, %v3279
        %v3382 = vpop.permute.xlu0 %3381
        %3385 = vset.pattern.permute.xlu0 0
        %3386 = vperm.xlu0 %3385, %v3280
        %v3387 = vpop.permute.xlu0 %3386
        %3390 = vset.pattern.permute.xlu0 0
        %3391 = vperm.xlu0 %3390, %v3281
        %v3392 = vpop.permute.xlu0 %3391
        %3395 = vset.pattern.permute.xlu0 0
        %3396 = vperm.xlu0 %3395, %v3282
        %v3397 = vpop.permute.xlu0 %3396
        %3400 = vset.pattern.permute.xlu0 0
        %3401 = vperm.xlu0 %3400, %v3283
        %v3402 = vpop.permute.xlu0 %3401
        %3405 = vset.pattern.permute.xlu0 0
        %3406 = vperm.xlu0 %3405, %v3284
        %v3407 = vpop.permute.xlu0 %3406
        %3410 = vset.pattern.permute.xlu0 0
        %3411 = vperm.xlu0 %3410, %v3285
        %v3412 = vpop.permute.xlu0 %3411
        %3415 = vset.pattern.permute.xlu0 0
        %3416 = vperm.xlu0 %3415, %v3286
        %v3417 = vpop.permute.xlu0 %3416
        %3420 = vset.pattern.permute.xlu0 0
        %3421 = vperm.xlu0 %3420, %v3287
        %v3422 = vpop.permute.xlu0 %3421
        %3425 = vset.pattern.permute.xlu0 0
        %3426 = vperm.xlu0 %3425, %v3288
        %v3427 = vpop.permute.xlu0 %3426
        %3430 = vset.pattern.permute.xlu0 0
        %3431 = vperm.xlu0 %3430, %v3289
        %v3432 = vpop.permute.xlu0 %3431
        %3435 = vset.pattern.permute.xlu0 0
        %3436 = vperm.xlu0 %3435, %v3290
        %v3437 = vpop.permute.xlu0 %3436
        %3440 = vset.pattern.permute.xlu0 0
        %3441 = vperm.xlu0 %3440, %v3291
        %v3442 = vpop.permute.xlu0 %3441
        %3445 = vset.pattern.permute.xlu0 0
        %3446 = vperm.xlu0 %3445, %v3292
        %v3447 = vpop.permute.xlu0 %3446
        %3450 = vset.pattern.permute.xlu0 0
        %3451 = vperm.xlu0 %3450, %v3293
        %v3452 = vpop.permute.xlu0 %3451
        %v3454 = vadd.f32 %v3198, %v3297
        %v3455 = vadd.f32 %v3199, %v3297
        %v3456 = vadd.f32 %v3200, %v3302
        %v3457 = vadd.f32 %v3201, %v3302
        %v3458 = vadd.f32 %v3202, %v3307
        %v3459 = vadd.f32 %v3203, %v3307
        %v3460 = vadd.f32 %v3204, %v3312
        %v3461 = vadd.f32 %v3205, %v3312
        %v3462 = vadd.f32 %v3206, %v3317
        %v3463 = vadd.f32 %v3207, %v3317
        %v3464 = vadd.f32 %v3208, %v3322
        %v3465 = vadd.f32 %v3209, %v3322
        %v3466 = vadd.f32 %v3210, %v3327
        %v3467 = vadd.f32 %v3211, %v3327
        %v3468 = vadd.f32 %v3212, %v3332
        %v3469 = vadd.f32 %v3213, %v3332
        %v3470 = vadd.f32 %v3214, %v3337
        %v3471 = vadd.f32 %v3215, %v3337
        %v3472 = vadd.f32 %v3216, %v3342
        %v3473 = vadd.f32 %v3217, %v3342
        %v3474 = vadd.f32 %v3218, %v3347
        %v3475 = vadd.f32 %v3219, %v3347
        %v3476 = vadd.f32 %v3220, %v3352
        %v3477 = vadd.f32 %v3221, %v3352
        %v3478 = vadd.f32 %v3222, %v3357
        %v3479 = vadd.f32 %v3223, %v3357
        %v3480 = vadd.f32 %v3224, %v3362
        %v3481 = vadd.f32 %v3225, %v3362
        %v3482 = vadd.f32 %v3226, %v3367
        %v3483 = vadd.f32 %v3227, %v3367
        %v3484 = vadd.f32 %v3228, %v3372
        %v3485 = vadd.f32 %v3229, %v3372
        %v3486 = vadd.f32 %v3230, %v3377
        %v3487 = vadd.f32 %v3231, %v3377
        %v3488 = vadd.f32 %v3232, %v3382
        %v3489 = vadd.f32 %v3233, %v3382
        %v3490 = vadd.f32 %v3234, %v3387
        %v3491 = vadd.f32 %v3235, %v3387
        %v3492 = vadd.f32 %v3236, %v3392
        %v3493 = vadd.f32 %v3237, %v3392
        %v3494 = vadd.f32 %v3238, %v3397
        %v3495 = vadd.f32 %v3239, %v3397
        %v3496 = vadd.f32 %v3240, %v3402
        %v3497 = vadd.f32 %v3241, %v3402
        %v3498 = vadd.f32 %v3242, %v3407
        %v3499 = vadd.f32 %v3243, %v3407
        %v3500 = vadd.f32 %v3244, %v3412
        %v3501 = vadd.f32 %v3245, %v3412
        %v3502 = vadd.f32 %v3246, %v3417
        %v3503 = vadd.f32 %v3247, %v3417
        %v3504 = vadd.f32 %v3248, %v3422
        %v3505 = vadd.f32 %v3249, %v3422
        %v3506 = vadd.f32 %v3250, %v3427
        %v3507 = vadd.f32 %v3251, %v3427
        %v3508 = vadd.f32 %v3252, %v3432
        %v3509 = vadd.f32 %v3253, %v3432
        %v3510 = vadd.f32 %v3254, %v3437
        %v3511 = vadd.f32 %v3255, %v3437
        %v3512 = vadd.f32 %v3256, %v3442
        %v3513 = vadd.f32 %v3257, %v3442
        %v3514 = vadd.f32 %v3258, %v3447
        %v3515 = vadd.f32 %v3259, %v3447
        %v3516 = vadd.f32 %v3260, %v3452
        %v3517 = vadd.f32 %v3261, %v3452
        %v3518 = vmax.f32 %v3454, 0.0
        %v3519 = vmax.f32 %v3455, 0.0
        %v3520 = vmax.f32 %v3456, 0.0
        %v3521 = vmax.f32 %v3457, 0.0
        %v3522 = vmax.f32 %v3458, 0.0
        %v3523 = vmax.f32 %v3459, 0.0
        %v3524 = vmax.f32 %v3460, 0.0
        %v3525 = vmax.f32 %v3461, 0.0
        %v3526 = vmax.f32 %v3462, 0.0
        %v3527 = vmax.f32 %v3463, 0.0
        %v3528 = vmax.f32 %v3464, 0.0
        %v3529 = vmax.f32 %v3465, 0.0
        %v3530 = vmax.f32 %v3466, 0.0
        %v3531 = vmax.f32 %v3467, 0.0
        %v3532 = vmax.f32 %v3468, 0.0
        %v3533 = vmax.f32 %v3469, 0.0
        %v3534 = vmax.f32 %v3470, 0.0
        %v3535 = vmax.f32 %v3471, 0.0
        %v3536 = vmax.f32 %v3472, 0.0
        %v3537 = vmax.f32 %v3473, 0.0
        %v3538 = vmax.f32 %v3474, 0.0
        %v3539 = vmax.f32 %v3475, 0.0
        %v3540 = vmax.f32 %v3476, 0.0
        %v3541 = vmax.f32 %v3477, 0.0
        %v3542 = vmax.f32 %v3478, 0.0
        %v3543 = vmax.f32 %v3479, 0.0
        %v3544 = vmax.f32 %v3480, 0.0
        %v3545 = vmax.f32 %v3481, 0.0
        %v3546 = vmax.f32 %v3482, 0.0
        %v3547 = vmax.f32 %v3483, 0.0
        %v3548 = vmax.f32 %v3484, 0.0
        %v3549 = vmax.f32 %v3485, 0.0
        %v3550 = vmax.f32 %v3486, 0.0
        %v3551 = vmax.f32 %v3487, 0.0
        %v3552 = vmax.f32 %v3488, 0.0
        %v3553 = vmax.f32 %v3489, 0.0
        %v3554 = vmax.f32 %v3490, 0.0
        %v3555 = vmax.f32 %v3491, 0.0
        %v3556 = vmax.f32 %v3492, 0.0
        %v3557 = vmax.f32 %v3493, 0.0
        %v3558 = vmax.f32 %v3494, 0.0
        %v3559 = vmax.f32 %v3495, 0.0
        %v3560 = vmax.f32 %v3496, 0.0
        %v3561 = vmax.f32 %v3497, 0.0
        %v3562 = vmax.f32 %v3498, 0.0
        %v3563 = vmax.f32 %v3499, 0.0
        %v3564 = vmax.f32 %v3500, 0.0
        %v3565 = vmax.f32 %v3501, 0.0
        %v3566 = vmax.f32 %v3502, 0.0
        %v3567 = vmax.f32 %v3503, 0.0
        %v3568 = vmax.f32 %v3504, 0.0
        %v3569 = vmax.f32 %v3505, 0.0
        %v3570 = vmax.f32 %v3506, 0.0
        %v3571 = vmax.f32 %v3507, 0.0
        %v3572 = vmax.f32 %v3508, 0.0
        %v3573 = vmax.f32 %v3509, 0.0
        %v3574 = vmax.f32 %v3510, 0.0
        %v3575 = vmax.f32 %v3511, 0.0
        %v3576 = vmax.f32 %v3512, 0.0
        %v3577 = vmax.f32 %v3513, 0.0
        %v3578 = vmax.f32 %v3514, 0.0
        %v3579 = vmax.f32 %v3515, 0.0
        %v3580 = vmax.f32 %v3516, 0.0
        %v3581 = vmax.f32 %v3517, 0.0
        %v3582 = vld [vmem:[%s4] sm:$0xf]
        %v3583 = vld [vmem:[%s4 + $0x4] sm:$0xf]
        %v3584 = vld [vmem:[%s4 + $0x8] sm:$0xf]
        %v3585 = vld [vmem:[%s4 + $0xc] sm:$0xf]
        %v3586 = vld [vmem:[%s4 + $0x10] sm:$0xf]
        %v3587 = vld [vmem:[%s4 + $0x14] sm:$0xf]
        %v3588 = vld [vmem:[%s4 + $0x18] sm:$0xf]
        %v3589 = vld [vmem:[%s4 + $0x1c] sm:$0xf]
        %v3590 = vld [vmem:[%s4 + $0x20] sm:$0xf]
        %v3591 = vld [vmem:[%s4 + $0x24] sm:$0xf]
        %v3592 = vld [vmem:[%s4 + $0x28] sm:$0xf]
        %v3593 = vld [vmem:[%s4 + $0x2c] sm:$0xf]
        %v3594 = vld [vmem:[%s4 + $0x30] sm:$0xf]
        %v3595 = vld [vmem:[%s4 + $0x34] sm:$0xf]
        %v3596 = vld [vmem:[%s4 + $0x38] sm:$0xf]
        %v3597 = vld [vmem:[%s4 + $0x3c] sm:$0xf]
        %v3598 = vld [vmem:[%s4 + $0x40] sm:$0xf]
        %v3599 = vld [vmem:[%s4 + $0x44] sm:$0xf]
        %v3618 = vunpack.c.l.b16 %v3582
        %v3619 = vunpack.c.l.b16 %v3583
        %v3620 = vunpack.c.l.b16 %v3584
        %v3621 = vunpack.c.l.b16 %v3585
        %v3622 = vunpack.c.l.b16 %v3586
        %v3623 = vunpack.c.l.b16 %v3587
        %v3624 = vunpack.c.l.b16 %v3588
        %v3625 = vunpack.c.l.b16 %v3589
        %v3626 = vunpack.c.l.b16 %v3590
        %v3627 = vunpack.c.l.b16 %v3591
        %v3628 = vunpack.c.l.b16 %v3592
        %v3629 = vunpack.c.l.b16 %v3593
        %v3630 = vunpack.c.l.b16 %v3594
        %v3631 = vunpack.c.l.b16 %v3595
        %v3632 = vunpack.c.l.b16 %v3596
        %v3633 = vunpack.c.l.b16 %v3597
        %v3634 = vunpack.c.l.b16 %v3598
        %v3635 = vunpack.c.l.b16 %v3599
        %v3636 = vpack.c.b16 %v3619, %v3618
        %v3637 = vpack.c.b16 %v3621, %v3620
        %v3638 = vpack.c.b16 %v3623, %v3622
        %v3639 = vpack.c.b16 %v3625, %v3624
        %v3640 = vpack.c.b16 %v3627, %v3626
        %v3641 = vpack.c.b16 %v3629, %v3628
        %v3642 = vpack.c.b16 %v3631, %v3630
        %v3643 = vpack.c.b16 %v3633, %v3632
        %v3644 = vpack.c.b16 %v3635, %v3634
        %vm3654 = vcmask 130048
        %v3656 = vsel %vm3654, %v687, 0
        %v3659 = vsel %vm3654, %v689, 0
        %v3662 = vsel %vm3654, %v691, 0
        %v3665 = vsel %vm3654, %v693, 0
        %v3668 = vsel %vm3654, %v695, 0
        %v3671 = vsel %vm3654, %v697, 0
        %v3674 = vsel %vm3654, %v699, 0
        %v3677 = vsel %vm3654, %v701, 0
        %v3680 = vsel %vm3654, %v703, 0
        %v3683 = vsel %vm3654, %v705, 0
        %v3686 = vsel %vm3654, %v707, 0
        %v3689 = vsel %vm3654, %v709, 0
        %v3692 = vsel %vm3654, %v711, 0
        %v3695 = vsel %vm3654, %v713, 0
        %v3698 = vsel %vm3654, %v715, 0
        %v3701 = vsel %vm3654, %v717, 0
        %v3704 = vsel %vm3654, %v719, 0
        %v3707 = vsel %vm3654, %v721, 0
        %v3710 = vsel %vm3654, %v723, 0
        %v3713 = vsel %vm3654, %v725, 0
        %v3716 = vsel %vm3654, %v727, 0
        %v3719 = vsel %vm3654, %v729, 0
        %v3722 = vsel %vm3654, %v731, 0
        %v3725 = vsel %vm3654, %v733, 0
        %v3728 = vsel %vm3654, %v735, 0
        %v3731 = vsel %vm3654, %v737, 0
        %v3734 = vsel %vm3654, %v739, 0
        %v3737 = vsel %vm3654, %v741, 0
        %v3740 = vsel %vm3654, %v743, 0
        %v3743 = vsel %vm3654, %v745, 0
        %v3746 = vsel %vm3654, %v747, 0
        %v3749 = vsel %vm3654, %v749, 0
        %v3752 = vsel %vm3654, %v751, 0
        %v3755 = vsel %vm3654, %v753, 0
        %v3758 = vsel %vm3654, %v755, 0
        %v3761 = vsel %vm3654, %v757, 0
        %v3764 = vsel %vm3654, %v759, 0
        %v3767 = vsel %vm3654, %v761, 0
        %v3770 = vsel %vm3654, %v763, 0
        %v3773 = vsel %vm3654, %v765, 0
        %v3776 = vsel %vm3654, %v767, 0
        %v3779 = vsel %vm3654, %v769, 0
        %v3782 = vsel %vm3654, %v771, 0
        %v3785 = vsel %vm3654, %v773, 0
        %v3788 = vsel %vm3654, %v775, 0
        %v3791 = vsel %vm3654, %v777, 0
        %v3794 = vsel %vm3654, %v779, 0
        %v3797 = vsel %vm3654, %v781, 0
        %v3800 = vsel %vm3654, %v783, 0
        %v3803 = vsel %vm3654, %v785, 0
        %v3806 = vsel %vm3654, %v787, 0
        %v3809 = vsel %vm3654, %v789, 0
        %v3812 = vsel %vm3654, %v791, 0
        %v3815 = vsel %vm3654, %v793, 0
        %v3818 = vsel %vm3654, %v795, 0
        %v3821 = vsel %vm3654, %v797, 0
        %v3824 = vsel %vm3654, %v799, 0
        %v3827 = vsel %vm3654, %v801, 0
        %v3830 = vsel %vm3654, %v803, 0
        %v3833 = vsel %vm3654, %v805, 0
        %v3836 = vsel %vm3654, %v807, 0
        %v3839 = vsel %vm3654, %v809, 0
        %v3842 = vsel %vm3654, %v811, 0
        %v3845 = vsel %vm3654, %v813, 0
        %3847 = vmatpush.bf16.msra.mxu0 %v3643
        %3848 = vmatpush.bf16.msra.mxu0 %v3642
        %3849 = vmatpush.bf16.msra.mxu0 %v3641
        %3850 = vmatpush.bf16.msra.mxu0 %v3640
        %3851 = vmatpush.bf16.msra.mxu0 %v3639
        %3852 = vmatpush.bf16.msra.mxu0 %v3638
        %3853 = vmatpush.bf16.msra.mxu0 %v3637
        %3854 = vmatpush.bf16.msra.mxu0 %v3636
        %3855 = vmatmul.bf16.gmra.mxu0 %v686
        %v3856 = vpop.f32.mrf.mxu0
        %v3857 = vadd.f32 0.0, %v3856
        %v3858 = vpop.f32.mrf.mxu0
        %v3859 = vadd.f32 0.0, %v3858
        %3860 = vmatmul.bf16.gmra.mxu0 %v688
        %v3861 = vpop.f32.mrf.mxu0
        %v3862 = vadd.f32 0.0, %v3861
        %v3863 = vpop.f32.mrf.mxu0
        %v3864 = vadd.f32 0.0, %v3863
        %3865 = vmatmul.bf16.gmra.mxu0 %v690
        %v3866 = vpop.f32.mrf.mxu0
        %v3867 = vadd.f32 0.0, %v3866
        %v3868 = vpop.f32.mrf.mxu0
        %v3869 = vadd.f32 0.0, %v3868
        %3870 = vmatmul.bf16.gmra.mxu0 %v692
        %v3871 = vpop.f32.mrf.mxu0
        %v3872 = vadd.f32 0.0, %v3871
        %v3873 = vpop.f32.mrf.mxu0
        %v3874 = vadd.f32 0.0, %v3873
        %3875 = vmatmul.bf16.gmra.mxu0 %v694
        %v3876 = vpop.f32.mrf.mxu0
        %v3877 = vadd.f32 0.0, %v3876
        %v3878 = vpop.f32.mrf.mxu0
        %v3879 = vadd.f32 0.0, %v3878
        %3880 = vmatmul.bf16.gmra.mxu0 %v696
        %v3881 = vpop.f32.mrf.mxu0
        %v3882 = vadd.f32 0.0, %v3881
        %v3883 = vpop.f32.mrf.mxu0
        %v3884 = vadd.f32 0.0, %v3883
        %3885 = vmatmul.bf16.gmra.mxu0 %v698
        %v3886 = vpop.f32.mrf.mxu0
        %v3887 = vadd.f32 0.0, %v3886
        %v3888 = vpop.f32.mrf.mxu0
        %v3889 = vadd.f32 0.0, %v3888
        %3890 = vmatmul.bf16.gmra.mxu0 %v700
        %v3891 = vpop.f32.mrf.mxu0
        %v3892 = vadd.f32 0.0, %v3891
        %v3893 = vpop.f32.mrf.mxu0
        %v3894 = vadd.f32 0.0, %v3893
        %3895 = vmatmul.bf16.gmra.mxu0 %v702
        %v3896 = vpop.f32.mrf.mxu0
        %v3897 = vadd.f32 0.0, %v3896
        %v3898 = vpop.f32.mrf.mxu0
        %v3899 = vadd.f32 0.0, %v3898
        %3900 = vmatmul.bf16.gmra.mxu0 %v704
        %v3901 = vpop.f32.mrf.mxu0
        %v3902 = vadd.f32 0.0, %v3901
        %v3903 = vpop.f32.mrf.mxu0
        %v3904 = vadd.f32 0.0, %v3903
        %3905 = vmatmul.bf16.gmra.mxu0 %v706
        %v3906 = vpop.f32.mrf.mxu0
        %v3907 = vadd.f32 0.0, %v3906
        %v3908 = vpop.f32.mrf.mxu0
        %v3909 = vadd.f32 0.0, %v3908
        %3910 = vmatmul.bf16.gmra.mxu0 %v708
        %v3911 = vpop.f32.mrf.mxu0
        %v3912 = vadd.f32 0.0, %v3911
        %v3913 = vpop.f32.mrf.mxu0
        %v3914 = vadd.f32 0.0, %v3913
        %3915 = vmatmul.bf16.gmra.mxu0 %v710
        %v3916 = vpop.f32.mrf.mxu0
        %v3917 = vadd.f32 0.0, %v3916
        %v3918 = vpop.f32.mrf.mxu0
        %v3919 = vadd.f32 0.0, %v3918
        %3920 = vmatmul.bf16.gmra.mxu0 %v712
        %v3921 = vpop.f32.mrf.mxu0
        %v3922 = vadd.f32 0.0, %v3921
        %v3923 = vpop.f32.mrf.mxu0
        %v3924 = vadd.f32 0.0, %v3923
        %3925 = vmatmul.bf16.gmra.mxu0 %v714
        %v3926 = vpop.f32.mrf.mxu0
        %v3927 = vadd.f32 0.0, %v3926
        %v3928 = vpop.f32.mrf.mxu0
        %v3929 = vadd.f32 0.0, %v3928
        %3930 = vmatmul.bf16.gmra.mxu0 %v716
        %v3931 = vpop.f32.mrf.mxu0
        %v3932 = vadd.f32 0.0, %v3931
        %v3933 = vpop.f32.mrf.mxu0
        %v3934 = vadd.f32 0.0, %v3933
        %3935 = vmatmul.bf16.gmra.mxu0 %v718
        %v3936 = vpop.f32.mrf.mxu0
        %v3937 = vadd.f32 0.0, %v3936
        %v3938 = vpop.f32.mrf.mxu0
        %v3939 = vadd.f32 0.0, %v3938
        %3940 = vmatmul.bf16.gmra.mxu0 %v720
        %v3941 = vpop.f32.mrf.mxu0
        %v3942 = vadd.f32 0.0, %v3941
        %v3943 = vpop.f32.mrf.mxu0
        %v3944 = vadd.f32 0.0, %v3943
        %3945 = vmatmul.bf16.gmra.mxu0 %v722
        %v3946 = vpop.f32.mrf.mxu0
        %v3947 = vadd.f32 0.0, %v3946
        %v3948 = vpop.f32.mrf.mxu0
        %v3949 = vadd.f32 0.0, %v3948
        %3950 = vmatmul.bf16.gmra.mxu0 %v724
        %v3951 = vpop.f32.mrf.mxu0
        %v3952 = vadd.f32 0.0, %v3951
        %v3953 = vpop.f32.mrf.mxu0
        %v3954 = vadd.f32 0.0, %v3953
        %3955 = vmatmul.bf16.gmra.mxu0 %v726
        %v3956 = vpop.f32.mrf.mxu0
        %v3957 = vadd.f32 0.0, %v3956
        %v3958 = vpop.f32.mrf.mxu0
        %v3959 = vadd.f32 0.0, %v3958
        %3960 = vmatmul.bf16.gmra.mxu0 %v728
        %v3961 = vpop.f32.mrf.mxu0
        %v3962 = vadd.f32 0.0, %v3961
        %v3963 = vpop.f32.mrf.mxu0
        %v3964 = vadd.f32 0.0, %v3963
        %3965 = vmatmul.bf16.gmra.mxu0 %v730
        %v3966 = vpop.f32.mrf.mxu0
        %v3967 = vadd.f32 0.0, %v3966
        %v3968 = vpop.f32.mrf.mxu0
        %v3969 = vadd.f32 0.0, %v3968
        %3970 = vmatmul.bf16.gmra.mxu0 %v732
        %v3971 = vpop.f32.mrf.mxu0
        %v3972 = vadd.f32 0.0, %v3971
        %v3973 = vpop.f32.mrf.mxu0
        %v3974 = vadd.f32 0.0, %v3973
        %3975 = vmatmul.bf16.gmra.mxu0 %v734
        %v3976 = vpop.f32.mrf.mxu0
        %v3977 = vadd.f32 0.0, %v3976
        %v3978 = vpop.f32.mrf.mxu0
        %v3979 = vadd.f32 0.0, %v3978
        %3980 = vmatmul.bf16.gmra.mxu0 %v736
        %v3981 = vpop.f32.mrf.mxu0
        %v3982 = vadd.f32 0.0, %v3981
        %v3983 = vpop.f32.mrf.mxu0
        %v3984 = vadd.f32 0.0, %v3983
        %3985 = vmatmul.bf16.gmra.mxu0 %v738
        %v3986 = vpop.f32.mrf.mxu0
        %v3987 = vadd.f32 0.0, %v3986
        %v3988 = vpop.f32.mrf.mxu0
        %v3989 = vadd.f32 0.0, %v3988
        %3990 = vmatmul.bf16.gmra.mxu0 %v740
        %v3991 = vpop.f32.mrf.mxu0
        %v3992 = vadd.f32 0.0, %v3991
        %v3993 = vpop.f32.mrf.mxu0
        %v3994 = vadd.f32 0.0, %v3993
        %3995 = vmatmul.bf16.gmra.mxu0 %v742
        %v3996 = vpop.f32.mrf.mxu0
        %v3997 = vadd.f32 0.0, %v3996
        %v3998 = vpop.f32.mrf.mxu0
        %v3999 = vadd.f32 0.0, %v3998
        %4000 = vmatmul.bf16.gmra.mxu0 %v744
        %v4001 = vpop.f32.mrf.mxu0
        %v4002 = vadd.f32 0.0, %v4001
        %v4003 = vpop.f32.mrf.mxu0
        %v4004 = vadd.f32 0.0, %v4003
        %4005 = vmatmul.bf16.gmra.mxu0 %v746
        %v4006 = vpop.f32.mrf.mxu0
        %v4007 = vadd.f32 0.0, %v4006
        %v4008 = vpop.f32.mrf.mxu0
        %v4009 = vadd.f32 0.0, %v4008
        %4010 = vmatmul.bf16.gmra.mxu0 %v748
        %v4011 = vpop.f32.mrf.mxu0
        %v4012 = vadd.f32 0.0, %v4011
        %v4013 = vpop.f32.mrf.mxu0
        %v4014 = vadd.f32 0.0, %v4013
        %4015 = vmatmul.bf16.gmra.mxu0 %v750
        %v4016 = vpop.f32.mrf.mxu0
        %v4017 = vadd.f32 0.0, %v4016
        %v4018 = vpop.f32.mrf.mxu0
        %v4019 = vadd.f32 0.0, %v4018
        %4020 = vmatmul.bf16.gmra.mxu0 %v752
        %v4021 = vpop.f32.mrf.mxu0
        %v4022 = vadd.f32 0.0, %v4021
        %v4023 = vpop.f32.mrf.mxu0
        %v4024 = vadd.f32 0.0, %v4023
        %4025 = vmatmul.bf16.gmra.mxu0 %v754
        %v4026 = vpop.f32.mrf.mxu0
        %v4027 = vadd.f32 0.0, %v4026
        %v4028 = vpop.f32.mrf.mxu0
        %v4029 = vadd.f32 0.0, %v4028
        %4030 = vmatmul.bf16.gmra.mxu0 %v756
        %v4031 = vpop.f32.mrf.mxu0
        %v4032 = vadd.f32 0.0, %v4031
        %v4033 = vpop.f32.mrf.mxu0
        %v4034 = vadd.f32 0.0, %v4033
        %4035 = vmatmul.bf16.gmra.mxu0 %v758
        %v4036 = vpop.f32.mrf.mxu0
        %v4037 = vadd.f32 0.0, %v4036
        %v4038 = vpop.f32.mrf.mxu0
        %v4039 = vadd.f32 0.0, %v4038
        %4040 = vmatmul.bf16.gmra.mxu0 %v760
        %v4041 = vpop.f32.mrf.mxu0
        %v4042 = vadd.f32 0.0, %v4041
        %v4043 = vpop.f32.mrf.mxu0
        %v4044 = vadd.f32 0.0, %v4043
        %4045 = vmatmul.bf16.gmra.mxu0 %v762
        %v4046 = vpop.f32.mrf.mxu0
        %v4047 = vadd.f32 0.0, %v4046
        %v4048 = vpop.f32.mrf.mxu0
        %v4049 = vadd.f32 0.0, %v4048
        %4050 = vmatmul.bf16.gmra.mxu0 %v764
        %v4051 = vpop.f32.mrf.mxu0
        %v4052 = vadd.f32 0.0, %v4051
        %v4053 = vpop.f32.mrf.mxu0
        %v4054 = vadd.f32 0.0, %v4053
        %4055 = vmatmul.bf16.gmra.mxu0 %v766
        %v4056 = vpop.f32.mrf.mxu0
        %v4057 = vadd.f32 0.0, %v4056
        %v4058 = vpop.f32.mrf.mxu0
        %v4059 = vadd.f32 0.0, %v4058
        %4060 = vmatmul.bf16.gmra.mxu0 %v768
        %v4061 = vpop.f32.mrf.mxu0
        %v4062 = vadd.f32 0.0, %v4061
        %v4063 = vpop.f32.mrf.mxu0
        %v4064 = vadd.f32 0.0, %v4063
        %4065 = vmatmul.bf16.gmra.mxu0 %v770
        %v4066 = vpop.f32.mrf.mxu0
        %v4067 = vadd.f32 0.0, %v4066
        %v4068 = vpop.f32.mrf.mxu0
        %v4069 = vadd.f32 0.0, %v4068
        %4070 = vmatmul.bf16.gmra.mxu0 %v772
        %v4071 = vpop.f32.mrf.mxu0
        %v4072 = vadd.f32 0.0, %v4071
        %v4073 = vpop.f32.mrf.mxu0
        %v4074 = vadd.f32 0.0, %v4073
        %4075 = vmatmul.bf16.gmra.mxu0 %v774
        %v4076 = vpop.f32.mrf.mxu0
        %v4077 = vadd.f32 0.0, %v4076
        %v4078 = vpop.f32.mrf.mxu0
        %v4079 = vadd.f32 0.0, %v4078
        %4080 = vmatmul.bf16.gmra.mxu0 %v776
        %v4081 = vpop.f32.mrf.mxu0
        %v4082 = vadd.f32 0.0, %v4081
        %v4083 = vpop.f32.mrf.mxu0
        %v4084 = vadd.f32 0.0, %v4083
        %4085 = vmatmul.bf16.gmra.mxu0 %v778
        %v4086 = vpop.f32.mrf.mxu0
        %v4087 = vadd.f32 0.0, %v4086
        %v4088 = vpop.f32.mrf.mxu0
        %v4089 = vadd.f32 0.0, %v4088
        %4090 = vmatmul.bf16.gmra.mxu0 %v780
        %v4091 = vpop.f32.mrf.mxu0
        %v4092 = vadd.f32 0.0, %v4091
        %v4093 = vpop.f32.mrf.mxu0
        %v4094 = vadd.f32 0.0, %v4093
        %4095 = vmatmul.bf16.gmra.mxu0 %v782
        %v4096 = vpop.f32.mrf.mxu0
        %v4097 = vadd.f32 0.0, %v4096
        %v4098 = vpop.f32.mrf.mxu0
        %v4099 = vadd.f32 0.0, %v4098
        %4100 = vmatmul.bf16.gmra.mxu0 %v784
        %v4101 = vpop.f32.mrf.mxu0
        %v4102 = vadd.f32 0.0, %v4101
        %v4103 = vpop.f32.mrf.mxu0
        %v4104 = vadd.f32 0.0, %v4103
        %4105 = vmatmul.bf16.gmra.mxu0 %v786
        %v4106 = vpop.f32.mrf.mxu0
        %v4107 = vadd.f32 0.0, %v4106
        %v4108 = vpop.f32.mrf.mxu0
        %v4109 = vadd.f32 0.0, %v4108
        %4110 = vmatmul.bf16.gmra.mxu0 %v788
        %v4111 = vpop.f32.mrf.mxu0
        %v4112 = vadd.f32 0.0, %v4111
        %v4113 = vpop.f32.mrf.mxu0
        %v4114 = vadd.f32 0.0, %v4113
        %4115 = vmatmul.bf16.gmra.mxu0 %v790
        %v4116 = vpop.f32.mrf.mxu0
        %v4117 = vadd.f32 0.0, %v4116
        %v4118 = vpop.f32.mrf.mxu0
        %v4119 = vadd.f32 0.0, %v4118
        %4120 = vmatmul.bf16.gmra.mxu0 %v792
        %v4121 = vpop.f32.mrf.mxu0
        %v4122 = vadd.f32 0.0, %v4121
        %v4123 = vpop.f32.mrf.mxu0
        %v4124 = vadd.f32 0.0, %v4123
        %4125 = vmatmul.bf16.gmra.mxu0 %v794
        %v4126 = vpop.f32.mrf.mxu0
        %v4127 = vadd.f32 0.0, %v4126
        %v4128 = vpop.f32.mrf.mxu0
        %v4129 = vadd.f32 0.0, %v4128
        %4130 = vmatmul.bf16.gmra.mxu0 %v796
        %v4131 = vpop.f32.mrf.mxu0
        %v4132 = vadd.f32 0.0, %v4131
        %v4133 = vpop.f32.mrf.mxu0
        %v4134 = vadd.f32 0.0, %v4133
        %4135 = vmatmul.bf16.gmra.mxu0 %v798
        %v4136 = vpop.f32.mrf.mxu0
        %v4137 = vadd.f32 0.0, %v4136
        %v4138 = vpop.f32.mrf.mxu0
        %v4139 = vadd.f32 0.0, %v4138
        %4140 = vmatmul.bf16.gmra.mxu0 %v800
        %v4141 = vpop.f32.mrf.mxu0
        %v4142 = vadd.f32 0.0, %v4141
        %v4143 = vpop.f32.mrf.mxu0
        %v4144 = vadd.f32 0.0, %v4143
        %4145 = vmatmul.bf16.gmra.mxu0 %v802
        %v4146 = vpop.f32.mrf.mxu0
        %v4147 = vadd.f32 0.0, %v4146
        %v4148 = vpop.f32.mrf.mxu0
        %v4149 = vadd.f32 0.0, %v4148
        %4150 = vmatmul.bf16.gmra.mxu0 %v804
        %v4151 = vpop.f32.mrf.mxu0
        %v4152 = vadd.f32 0.0, %v4151
        %v4153 = vpop.f32.mrf.mxu0
        %v4154 = vadd.f32 0.0, %v4153
        %4155 = vmatmul.bf16.gmra.mxu0 %v806
        %v4156 = vpop.f32.mrf.mxu0
        %v4157 = vadd.f32 0.0, %v4156
        %v4158 = vpop.f32.mrf.mxu0
        %v4159 = vadd.f32 0.0, %v4158
        %4160 = vmatmul.bf16.gmra.mxu0 %v808
        %v4161 = vpop.f32.mrf.mxu0
        %v4162 = vadd.f32 0.0, %v4161
        %v4163 = vpop.f32.mrf.mxu0
        %v4164 = vadd.f32 0.0, %v4163
        %4165 = vmatmul.bf16.gmra.mxu0 %v810
        %v4166 = vpop.f32.mrf.mxu0
        %v4167 = vadd.f32 0.0, %v4166
        %v4168 = vpop.f32.mrf.mxu0
        %v4169 = vadd.f32 0.0, %v4168
        %4170 = vmatmul.bf16.gmra.mxu0 %v812
        %v4171 = vpop.f32.mrf.mxu0
        %v4172 = vadd.f32 0.0, %v4171
        %v4173 = vpop.f32.mrf.mxu0
        %v4174 = vadd.f32 0.0, %v4173
        %4175 = vdwg.mxu0
        %4176 = vmatpush.bf16.msra.mxu0 0
        %4177 = vmatpush.bf16.msra.mxu0 0
        %4178 = vmatpush.bf16.msra.mxu0 0
        %4179 = vmatpush.bf16.msra.mxu0 0
        %4180 = vmatpush.bf16.msra.mxu0 0
        %4181 = vmatpush.bf16.msra.mxu0 0
        %4182 = vmatpush.bf16.msra.mxu0 0
        %4183 = vmatpush.bf16.msra.mxu0 %v3644
        %4184 = vmatmul.bf16.gmra.mxu0 %v3656
        %v4185 = vpop.f32.mrf.mxu0
        %v4186 = vadd.f32 %v3857, %v4185
        %v4187 = vpop.f32.mrf.mxu0
        %v4188 = vadd.f32 %v3859, %v4187
        %4189 = vmatmul.bf16.gmra.mxu0 %v3659
        %v4190 = vpop.f32.mrf.mxu0
        %v4191 = vadd.f32 %v3862, %v4190
        %v4192 = vpop.f32.mrf.mxu0
        %v4193 = vadd.f32 %v3864, %v4192
        %4194 = vmatmul.bf16.gmra.mxu0 %v3662
        %v4195 = vpop.f32.mrf.mxu0
        %v4196 = vadd.f32 %v3867, %v4195
        %v4197 = vpop.f32.mrf.mxu0
        %v4198 = vadd.f32 %v3869, %v4197
        %4199 = vmatmul.bf16.gmra.mxu0 %v3665
        %v4200 = vpop.f32.mrf.mxu0
        %v4201 = vadd.f32 %v3872, %v4200
        %v4202 = vpop.f32.mrf.mxu0
        %v4203 = vadd.f32 %v3874, %v4202
        %4204 = vmatmul.bf16.gmra.mxu0 %v3668
        %v4205 = vpop.f32.mrf.mxu0
        %v4206 = vadd.f32 %v3877, %v4205
        %v4207 = vpop.f32.mrf.mxu0
        %v4208 = vadd.f32 %v3879, %v4207
        %4209 = vmatmul.bf16.gmra.mxu0 %v3671
        %v4210 = vpop.f32.mrf.mxu0
        %v4211 = vadd.f32 %v3882, %v4210
        %v4212 = vpop.f32.mrf.mxu0
        %v4213 = vadd.f32 %v3884, %v4212
        %4214 = vmatmul.bf16.gmra.mxu0 %v3674
        %v4215 = vpop.f32.mrf.mxu0
        %v4216 = vadd.f32 %v3887, %v4215
        %v4217 = vpop.f32.mrf.mxu0
        %v4218 = vadd.f32 %v3889, %v4217
        %4219 = vmatmul.bf16.gmra.mxu0 %v3677
        %v4220 = vpop.f32.mrf.mxu0
        %v4221 = vadd.f32 %v3892, %v4220
        %v4222 = vpop.f32.mrf.mxu0
        %v4223 = vadd.f32 %v3894, %v4222
        %4224 = vmatmul.bf16.gmra.mxu0 %v3680
        %v4225 = vpop.f32.mrf.mxu0
        %v4226 = vadd.f32 %v3897, %v4225
        %v4227 = vpop.f32.mrf.mxu0
        %v4228 = vadd.f32 %v3899, %v4227
        %4229 = vmatmul.bf16.gmra.mxu0 %v3683
        %v4230 = vpop.f32.mrf.mxu0
        %v4231 = vadd.f32 %v3902, %v4230
        %v4232 = vpop.f32.mrf.mxu0
        %v4233 = vadd.f32 %v3904, %v4232
        %4234 = vmatmul.bf16.gmra.mxu0 %v3686
        %v4235 = vpop.f32.mrf.mxu0
        %v4236 = vadd.f32 %v3907, %v4235
        %v4237 = vpop.f32.mrf.mxu0
        %v4238 = vadd.f32 %v3909, %v4237
        %4239 = vmatmul.bf16.gmra.mxu0 %v3689
        %v4240 = vpop.f32.mrf.mxu0
        %v4241 = vadd.f32 %v3912, %v4240
        %v4242 = vpop.f32.mrf.mxu0
        %v4243 = vadd.f32 %v3914, %v4242
        %4244 = vmatmul.bf16.gmra.mxu0 %v3692
        %v4245 = vpop.f32.mrf.mxu0
        %v4246 = vadd.f32 %v3917, %v4245
        %v4247 = vpop.f32.mrf.mxu0
        %v4248 = vadd.f32 %v3919, %v4247
        %4249 = vmatmul.bf16.gmra.mxu0 %v3695
        %v4250 = vpop.f32.mrf.mxu0
        %v4251 = vadd.f32 %v3922, %v4250
        %v4252 = vpop.f32.mrf.mxu0
        %v4253 = vadd.f32 %v3924, %v4252
        %4254 = vmatmul.bf16.gmra.mxu0 %v3698
        %v4255 = vpop.f32.mrf.mxu0
        %v4256 = vadd.f32 %v3927, %v4255
        %v4257 = vpop.f32.mrf.mxu0
        %v4258 = vadd.f32 %v3929, %v4257
        %4259 = vmatmul.bf16.gmra.mxu0 %v3701
        %v4260 = vpop.f32.mrf.mxu0
        %v4261 = vadd.f32 %v3932, %v4260
        %v4262 = vpop.f32.mrf.mxu0
        %v4263 = vadd.f32 %v3934, %v4262
        %4264 = vmatmul.bf16.gmra.mxu0 %v3704
        %v4265 = vpop.f32.mrf.mxu0
        %v4266 = vadd.f32 %v3937, %v4265
        %v4267 = vpop.f32.mrf.mxu0
        %v4268 = vadd.f32 %v3939, %v4267
        %4269 = vmatmul.bf16.gmra.mxu0 %v3707
        %v4270 = vpop.f32.mrf.mxu0
        %v4271 = vadd.f32 %v3942, %v4270
        %v4272 = vpop.f32.mrf.mxu0
        %v4273 = vadd.f32 %v3944, %v4272
        %4274 = vmatmul.bf16.gmra.mxu0 %v3710
        %v4275 = vpop.f32.mrf.mxu0
        %v4276 = vadd.f32 %v3947, %v4275
        %v4277 = vpop.f32.mrf.mxu0
        %v4278 = vadd.f32 %v3949, %v4277
        %4279 = vmatmul.bf16.gmra.mxu0 %v3713
        %v4280 = vpop.f32.mrf.mxu0
        %v4281 = vadd.f32 %v3952, %v4280
        %v4282 = vpop.f32.mrf.mxu0
        %v4283 = vadd.f32 %v3954, %v4282
        %4284 = vmatmul.bf16.gmra.mxu0 %v3716
        %v4285 = vpop.f32.mrf.mxu0
        %v4286 = vadd.f32 %v3957, %v4285
        %v4287 = vpop.f32.mrf.mxu0
        %v4288 = vadd.f32 %v3959, %v4287
        %4289 = vmatmul.bf16.gmra.mxu0 %v3719
        %v4290 = vpop.f32.mrf.mxu0
        %v4291 = vadd.f32 %v3962, %v4290
        %v4292 = vpop.f32.mrf.mxu0
        %v4293 = vadd.f32 %v3964, %v4292
        %4294 = vmatmul.bf16.gmra.mxu0 %v3722
        %v4295 = vpop.f32.mrf.mxu0
        %v4296 = vadd.f32 %v3967, %v4295
        %v4297 = vpop.f32.mrf.mxu0
        %v4298 = vadd.f32 %v3969, %v4297
        %4299 = vmatmul.bf16.gmra.mxu0 %v3725
        %v4300 = vpop.f32.mrf.mxu0
        %v4301 = vadd.f32 %v3972, %v4300
        %v4302 = vpop.f32.mrf.mxu0
        %v4303 = vadd.f32 %v3974, %v4302
        %4304 = vmatmul.bf16.gmra.mxu0 %v3728
        %v4305 = vpop.f32.mrf.mxu0
        %v4306 = vadd.f32 %v3977, %v4305
        %v4307 = vpop.f32.mrf.mxu0
        %v4308 = vadd.f32 %v3979, %v4307
        %4309 = vmatmul.bf16.gmra.mxu0 %v3731
        %v4310 = vpop.f32.mrf.mxu0
        %v4311 = vadd.f32 %v3982, %v4310
        %v4312 = vpop.f32.mrf.mxu0
        %v4313 = vadd.f32 %v3984, %v4312
        %4314 = vmatmul.bf16.gmra.mxu0 %v3734
        %v4315 = vpop.f32.mrf.mxu0
        %v4316 = vadd.f32 %v3987, %v4315
        %v4317 = vpop.f32.mrf.mxu0
        %v4318 = vadd.f32 %v3989, %v4317
        %4319 = vmatmul.bf16.gmra.mxu0 %v3737
        %v4320 = vpop.f32.mrf.mxu0
        %v4321 = vadd.f32 %v3992, %v4320
        %v4322 = vpop.f32.mrf.mxu0
        %v4323 = vadd.f32 %v3994, %v4322
        %4324 = vmatmul.bf16.gmra.mxu0 %v3740
        %v4325 = vpop.f32.mrf.mxu0
        %v4326 = vadd.f32 %v3997, %v4325
        %v4327 = vpop.f32.mrf.mxu0
        %v4328 = vadd.f32 %v3999, %v4327
        %4329 = vmatmul.bf16.gmra.mxu0 %v3743
        %v4330 = vpop.f32.mrf.mxu0
        %v4331 = vadd.f32 %v4002, %v4330
        %v4332 = vpop.f32.mrf.mxu0
        %v4333 = vadd.f32 %v4004, %v4332
        %4334 = vmatmul.bf16.gmra.mxu0 %v3746
        %v4335 = vpop.f32.mrf.mxu0
        %v4336 = vadd.f32 %v4007, %v4335
        %v4337 = vpop.f32.mrf.mxu0
        %v4338 = vadd.f32 %v4009, %v4337
        %4339 = vmatmul.bf16.gmra.mxu0 %v3749
        %v4340 = vpop.f32.mrf.mxu0
        %v4341 = vadd.f32 %v4012, %v4340
        %v4342 = vpop.f32.mrf.mxu0
        %v4343 = vadd.f32 %v4014, %v4342
        %4344 = vmatmul.bf16.gmra.mxu0 %v3752
        %v4345 = vpop.f32.mrf.mxu0
        %v4346 = vadd.f32 %v4017, %v4345
        %v4347 = vpop.f32.mrf.mxu0
        %v4348 = vadd.f32 %v4019, %v4347
        %4349 = vmatmul.bf16.gmra.mxu0 %v3755
        %v4350 = vpop.f32.mrf.mxu0
        %v4351 = vadd.f32 %v4022, %v4350
        %v4352 = vpop.f32.mrf.mxu0
        %v4353 = vadd.f32 %v4024, %v4352
        %4354 = vmatmul.bf16.gmra.mxu0 %v3758
        %v4355 = vpop.f32.mrf.mxu0
        %v4356 = vadd.f32 %v4027, %v4355
        %v4357 = vpop.f32.mrf.mxu0
        %v4358 = vadd.f32 %v4029, %v4357
        %4359 = vmatmul.bf16.gmra.mxu0 %v3761
        %v4360 = vpop.f32.mrf.mxu0
        %v4361 = vadd.f32 %v4032, %v4360
        %v4362 = vpop.f32.mrf.mxu0
        %v4363 = vadd.f32 %v4034, %v4362
        %4364 = vmatmul.bf16.gmra.mxu0 %v3764
        %v4365 = vpop.f32.mrf.mxu0
        %v4366 = vadd.f32 %v4037, %v4365
        %v4367 = vpop.f32.mrf.mxu0
        %v4368 = vadd.f32 %v4039, %v4367
        %4369 = vmatmul.bf16.gmra.mxu0 %v3767
        %v4370 = vpop.f32.mrf.mxu0
        %v4371 = vadd.f32 %v4042, %v4370
        %v4372 = vpop.f32.mrf.mxu0
        %v4373 = vadd.f32 %v4044, %v4372
        %4374 = vmatmul.bf16.gmra.mxu0 %v3770
        %v4375 = vpop.f32.mrf.mxu0
        %v4376 = vadd.f32 %v4047, %v4375
        %v4377 = vpop.f32.mrf.mxu0
        %v4378 = vadd.f32 %v4049, %v4377
        %4379 = vmatmul.bf16.gmra.mxu0 %v3773
        %v4380 = vpop.f32.mrf.mxu0
        %v4381 = vadd.f32 %v4052, %v4380
        %v4382 = vpop.f32.mrf.mxu0
        %v4383 = vadd.f32 %v4054, %v4382
        %4384 = vmatmul.bf16.gmra.mxu0 %v3776
        %v4385 = vpop.f32.mrf.mxu0
        %v4386 = vadd.f32 %v4057, %v4385
        %v4387 = vpop.f32.mrf.mxu0
        %v4388 = vadd.f32 %v4059, %v4387
        %4389 = vmatmul.bf16.gmra.mxu0 %v3779
        %v4390 = vpop.f32.mrf.mxu0
        %v4391 = vadd.f32 %v4062, %v4390
        %v4392 = vpop.f32.mrf.mxu0
        %v4393 = vadd.f32 %v4064, %v4392
        %4394 = vmatmul.bf16.gmra.mxu0 %v3782
        %v4395 = vpop.f32.mrf.mxu0
        %v4396 = vadd.f32 %v4067, %v4395
        %v4397 = vpop.f32.mrf.mxu0
        %v4398 = vadd.f32 %v4069, %v4397
        %4399 = vmatmul.bf16.gmra.mxu0 %v3785
        %v4400 = vpop.f32.mrf.mxu0
        %v4401 = vadd.f32 %v4072, %v4400
        %v4402 = vpop.f32.mrf.mxu0
        %v4403 = vadd.f32 %v4074, %v4402
        %4404 = vmatmul.bf16.gmra.mxu0 %v3788
        %v4405 = vpop.f32.mrf.mxu0
        %v4406 = vadd.f32 %v4077, %v4405
        %v4407 = vpop.f32.mrf.mxu0
        %v4408 = vadd.f32 %v4079, %v4407
        %4409 = vmatmul.bf16.gmra.mxu0 %v3791
        %v4410 = vpop.f32.mrf.mxu0
        %v4411 = vadd.f32 %v4082, %v4410
        %v4412 = vpop.f32.mrf.mxu0
        %v4413 = vadd.f32 %v4084, %v4412
        %4414 = vmatmul.bf16.gmra.mxu0 %v3794
        %v4415 = vpop.f32.mrf.mxu0
        %v4416 = vadd.f32 %v4087, %v4415
        %v4417 = vpop.f32.mrf.mxu0
        %v4418 = vadd.f32 %v4089, %v4417
        %4419 = vmatmul.bf16.gmra.mxu0 %v3797
        %v4420 = vpop.f32.mrf.mxu0
        %v4421 = vadd.f32 %v4092, %v4420
        %v4422 = vpop.f32.mrf.mxu0
        %v4423 = vadd.f32 %v4094, %v4422
        %4424 = vmatmul.bf16.gmra.mxu0 %v3800
        %v4425 = vpop.f32.mrf.mxu0
        %v4426 = vadd.f32 %v4097, %v4425
        %v4427 = vpop.f32.mrf.mxu0
        %v4428 = vadd.f32 %v4099, %v4427
        %4429 = vmatmul.bf16.gmra.mxu0 %v3803
        %v4430 = vpop.f32.mrf.mxu0
        %v4431 = vadd.f32 %v4102, %v4430
        %v4432 = vpop.f32.mrf.mxu0
        %v4433 = vadd.f32 %v4104, %v4432
        %4434 = vmatmul.bf16.gmra.mxu0 %v3806
        %v4435 = vpop.f32.mrf.mxu0
        %v4436 = vadd.f32 %v4107, %v4435
        %v4437 = vpop.f32.mrf.mxu0
        %v4438 = vadd.f32 %v4109, %v4437
        %4439 = vmatmul.bf16.gmra.mxu0 %v3809
        %v4440 = vpop.f32.mrf.mxu0
        %v4441 = vadd.f32 %v4112, %v4440
        %v4442 = vpop.f32.mrf.mxu0
        %v4443 = vadd.f32 %v4114, %v4442
        %4444 = vmatmul.bf16.gmra.mxu0 %v3812
        %v4445 = vpop.f32.mrf.mxu0
        %v4446 = vadd.f32 %v4117, %v4445
        %v4447 = vpop.f32.mrf.mxu0
        %v4448 = vadd.f32 %v4119, %v4447
        %4449 = vmatmul.bf16.gmra.mxu0 %v3815
        %v4450 = vpop.f32.mrf.mxu0
        %v4451 = vadd.f32 %v4122, %v4450
        %v4452 = vpop.f32.mrf.mxu0
        %v4453 = vadd.f32 %v4124, %v4452
        %4454 = vmatmul.bf16.gmra.mxu0 %v3818
        %v4455 = vpop.f32.mrf.mxu0
        %v4456 = vadd.f32 %v4127, %v4455
        %v4457 = vpop.f32.mrf.mxu0
        %v4458 = vadd.f32 %v4129, %v4457
        %4459 = vmatmul.bf16.gmra.mxu0 %v3821
        %v4460 = vpop.f32.mrf.mxu0
        %v4461 = vadd.f32 %v4132, %v4460
        %v4462 = vpop.f32.mrf.mxu0
        %v4463 = vadd.f32 %v4134, %v4462
        %4464 = vmatmul.bf16.gmra.mxu0 %v3824
        %v4465 = vpop.f32.mrf.mxu0
        %v4466 = vadd.f32 %v4137, %v4465
        %v4467 = vpop.f32.mrf.mxu0
        %v4468 = vadd.f32 %v4139, %v4467
        %4469 = vmatmul.bf16.gmra.mxu0 %v3827
        %v4470 = vpop.f32.mrf.mxu0
        %v4471 = vadd.f32 %v4142, %v4470
        %v4472 = vpop.f32.mrf.mxu0
        %v4473 = vadd.f32 %v4144, %v4472
        %4474 = vmatmul.bf16.gmra.mxu0 %v3830
        %v4475 = vpop.f32.mrf.mxu0
        %v4476 = vadd.f32 %v4147, %v4475
        %v4477 = vpop.f32.mrf.mxu0
        %v4478 = vadd.f32 %v4149, %v4477
        %4479 = vmatmul.bf16.gmra.mxu0 %v3833
        %v4480 = vpop.f32.mrf.mxu0
        %v4481 = vadd.f32 %v4152, %v4480
        %v4482 = vpop.f32.mrf.mxu0
        %v4483 = vadd.f32 %v4154, %v4482
        %4484 = vmatmul.bf16.gmra.mxu0 %v3836
        %v4485 = vpop.f32.mrf.mxu0
        %v4486 = vadd.f32 %v4157, %v4485
        %v4487 = vpop.f32.mrf.mxu0
        %v4488 = vadd.f32 %v4159, %v4487
        %4489 = vmatmul.bf16.gmra.mxu0 %v3839
        %v4490 = vpop.f32.mrf.mxu0
        %v4491 = vadd.f32 %v4162, %v4490
        %v4492 = vpop.f32.mrf.mxu0
        %v4493 = vadd.f32 %v4164, %v4492
        %4494 = vmatmul.bf16.gmra.mxu0 %v3842
        %v4495 = vpop.f32.mrf.mxu0
        %v4496 = vadd.f32 %v4167, %v4495
        %v4497 = vpop.f32.mrf.mxu0
        %v4498 = vadd.f32 %v4169, %v4497
        %4499 = vmatmul.bf16.gmra.mxu0 %v3845
        %v4500 = vpop.f32.mrf.mxu0
        %v4501 = vadd.f32 %v4172, %v4500
        %v4502 = vpop.f32.mrf.mxu0
        %v4503 = vadd.f32 %v4174, %v4502
        %4504 = vdwg.mxu0
        %v4505 = vld [vmem:[%s5] sm:$0xff]
        %v4506 = vld [vmem:[%s5 + $0x8] sm:$0xff]
        %v4507 = vld [vmem:[%s5 + $0x10] sm:$0xff]
        %v4508 = vld [vmem:[%s5 + $0x18] sm:$0xff]
        %v4509 = vld [vmem:[%s5 + $0x20] sm:$0xff]
        %v4510 = vld [vmem:[%s5 + $0x28] sm:$0xff]
        %v4511 = vld [vmem:[%s5 + $0x30] sm:$0xff]
        %v4512 = vld [vmem:[%s5 + $0x38] sm:$0xff]
        %v4513 = vld [vmem:[%s5 + $0x40] sm:$0xff]
        %v4514 = vld [vmem:[%s5 + $0x48] sm:$0xff]
        %v4515 = vld [vmem:[%s5 + $0x50] sm:$0xff]
        %v4516 = vld [vmem:[%s5 + $0x58] sm:$0xff]
        %v4517 = vld [vmem:[%s5 + $0x60] sm:$0xff]
        %v4518 = vld [vmem:[%s5 + $0x68] sm:$0xff]
        %v4519 = vld [vmem:[%s5 + $0x70] sm:$0xff]
        %v4520 = vld [vmem:[%s5 + $0x78] sm:$0xff]
        %v4521 = vld [vmem:[%s5 + $0x80] sm:$0xff]
        %v4522 = vld [vmem:[%s5 + $0x88] sm:$0xff]
        %v4523 = vld [vmem:[%s5 + $0x90] sm:$0xff]
        %v4524 = vld [vmem:[%s5 + $0x98] sm:$0xff]
        %v4525 = vld [vmem:[%s5 + $0xa0] sm:$0xff]
        %v4526 = vld [vmem:[%s5 + $0xa8] sm:$0xff]
        %v4527 = vld [vmem:[%s5 + $0xb0] sm:$0xff]
        %v4528 = vld [vmem:[%s5 + $0xb8] sm:$0xff]
        %v4529 = vld [vmem:[%s5 + $0xc0] sm:$0xff]
        %v4530 = vld [vmem:[%s5 + $0xc8] sm:$0xff]
        %v4531 = vld [vmem:[%s5 + $0xd0] sm:$0xff]
        %v4532 = vld [vmem:[%s5 + $0xd8] sm:$0xff]
        %v4533 = vld [vmem:[%s5 + $0xe0] sm:$0xff]
        %v4534 = vld [vmem:[%s5 + $0xe8] sm:$0xff]
        %v4535 = vld [vmem:[%s5 + $0xf0] sm:$0xff]
        %v4536 = vld [vmem:[%s5 + $0xf8] sm:$0xff]
        %v4537 = vld [vmem:[%s5 + $0x100] sm:$0xff]
        %v4538 = vld [vmem:[%s5 + $0x108] sm:$0xff]
        %v4539 = vld [vmem:[%s5 + $0x110] sm:$0xff]
        %v4540 = vld [vmem:[%s5 + $0x118] sm:$0xff]
        %v4541 = vld [vmem:[%s5 + $0x120] sm:$0xff]
        %v4542 = vld [vmem:[%s5 + $0x128] sm:$0xff]
        %v4543 = vld [vmem:[%s5 + $0x130] sm:$0xff]
        %v4544 = vld [vmem:[%s5 + $0x138] sm:$0xff]
        %v4545 = vld [vmem:[%s5 + $0x140] sm:$0xff]
        %v4546 = vld [vmem:[%s5 + $0x148] sm:$0xff]
        %v4547 = vld [vmem:[%s5 + $0x150] sm:$0xff]
        %v4548 = vld [vmem:[%s5 + $0x158] sm:$0xff]
        %v4549 = vld [vmem:[%s5 + $0x160] sm:$0xff]
        %v4550 = vld [vmem:[%s5 + $0x168] sm:$0xff]
        %v4551 = vld [vmem:[%s5 + $0x170] sm:$0xff]
        %v4552 = vld [vmem:[%s5 + $0x178] sm:$0xff]
        %v4553 = vld [vmem:[%s5 + $0x180] sm:$0xff]
        %v4554 = vld [vmem:[%s5 + $0x188] sm:$0xff]
        %v4555 = vld [vmem:[%s5 + $0x190] sm:$0xff]
        %v4556 = vld [vmem:[%s5 + $0x198] sm:$0xff]
        %v4557 = vld [vmem:[%s5 + $0x1a0] sm:$0xff]
        %v4558 = vld [vmem:[%s5 + $0x1a8] sm:$0xff]
        %v4559 = vld [vmem:[%s5 + $0x1b0] sm:$0xff]
        %v4560 = vld [vmem:[%s5 + $0x1b8] sm:$0xff]
        %v4561 = vld [vmem:[%s5 + $0x1c0] sm:$0xff]
        %v4562 = vld [vmem:[%s5 + $0x1c8] sm:$0xff]
        %v4563 = vld [vmem:[%s5 + $0x1d0] sm:$0xff]
        %v4564 = vld [vmem:[%s5 + $0x1d8] sm:$0xff]
        %v4565 = vld [vmem:[%s5 + $0x1e0] sm:$0xff]
        %v4566 = vld [vmem:[%s5 + $0x1e8] sm:$0xff]
        %v4567 = vld [vmem:[%s5 + $0x1f0] sm:$0xff]
        %v4568 = vld [vmem:[%s5 + $0x1f8] sm:$0xff]
        %v4569 = vld [vmem:[%s5 + $0x200] sm:$0xff]
        %v4570 = vld [vmem:[%s5 + $0x208] sm:$0xff]
        %v4571 = vld [vmem:[%s5 + $0x210] sm:$0xff]
        %v4572 = vld [vmem:[%s5 + $0x218] sm:$0xff]
        %v4573 = vld [vmem:[%s5 + $0x220] sm:$0xff]
        %v4574 = vld [vmem:[%s5 + $0x228] sm:$0xff]
        %v4575 = vld [vmem:[%s5 + $0x230] sm:$0xff]
        %v4576 = vld [vmem:[%s5 + $0x238] sm:$0xff]
        %v4577 = vld [vmem:[%s5 + $0x240] sm:$0xff]
        %v4578 = vld [vmem:[%s5 + $0x248] sm:$0xff]
        %v4579 = vld [vmem:[%s5 + $0x250] sm:$0xff]
        %v4580 = vld [vmem:[%s5 + $0x258] sm:$0xff]
        %v4581 = vld [vmem:[%s5 + $0x260] sm:$0xff]
        %v4582 = vld [vmem:[%s5 + $0x268] sm:$0xff]
        %v4583 = vld [vmem:[%s5 + $0x270] sm:$0xff]
        %v4584 = vld [vmem:[%s5 + $0x278] sm:$0xff]
        %v4585 = vld [vmem:[%s5 + $0x280] sm:$0xff]
        %v4586 = vld [vmem:[%s5 + $0x288] sm:$0xff]
        %v4587 = vld [vmem:[%s5 + $0x290] sm:$0xff]
        %v4588 = vld [vmem:[%s5 + $0x298] sm:$0xff]
        %v4589 = vld [vmem:[%s5 + $0x2a0] sm:$0xff]
        %v4590 = vld [vmem:[%s5 + $0x2a8] sm:$0xff]
        %v4591 = vld [vmem:[%s5 + $0x2b0] sm:$0xff]
        %v4592 = vld [vmem:[%s5 + $0x2b8] sm:$0xff]
        %v4593 = vld [vmem:[%s5 + $0x2c0] sm:$0xff]
        %v4594 = vld [vmem:[%s5 + $0x2c8] sm:$0xff]
        %v4595 = vld [vmem:[%s5 + $0x2d0] sm:$0xff]
        %v4596 = vld [vmem:[%s5 + $0x2d8] sm:$0xff]
        %v4597 = vld [vmem:[%s5 + $0x2e0] sm:$0xff]
        %v4598 = vld [vmem:[%s5 + $0x2e8] sm:$0xff]
        %v4599 = vld [vmem:[%s5 + $0x2f0] sm:$0xff]
        %v4600 = vld [vmem:[%s5 + $0x2f8] sm:$0xff]
        %v4601 = vld [vmem:[%s5 + $0x300] sm:$0xff]
        %v4602 = vld [vmem:[%s5 + $0x308] sm:$0xff]
        %v4603 = vld [vmem:[%s5 + $0x310] sm:$0xff]
        %v4604 = vld [vmem:[%s5 + $0x318] sm:$0xff]
        %v4605 = vld [vmem:[%s5 + $0x320] sm:$0xff]
        %v4606 = vld [vmem:[%s5 + $0x328] sm:$0xff]
        %v4607 = vld [vmem:[%s5 + $0x330] sm:$0xff]
        %v4608 = vld [vmem:[%s5 + $0x338] sm:$0xff]
        %v4609 = vld [vmem:[%s5 + $0x340] sm:$0xff]
        %v4610 = vld [vmem:[%s5 + $0x348] sm:$0xff]
        %v4611 = vld [vmem:[%s5 + $0x350] sm:$0xff]
        %v4612 = vld [vmem:[%s5 + $0x358] sm:$0xff]
        %v4613 = vld [vmem:[%s5 + $0x360] sm:$0xff]
        %v4614 = vld [vmem:[%s5 + $0x368] sm:$0xff]
        %v4615 = vld [vmem:[%s5 + $0x370] sm:$0xff]
        %v4616 = vld [vmem:[%s5 + $0x378] sm:$0xff]
        %v4617 = vld [vmem:[%s5 + $0x380] sm:$0xff]
        %v4618 = vld [vmem:[%s5 + $0x388] sm:$0xff]
        %v4619 = vld [vmem:[%s5 + $0x390] sm:$0xff]
        %v4620 = vld [vmem:[%s5 + $0x398] sm:$0xff]
        %v4621 = vld [vmem:[%s5 + $0x3a0] sm:$0xff]
        %v4622 = vld [vmem:[%s5 + $0x3a8] sm:$0xff]
        %v4623 = vld [vmem:[%s5 + $0x3b0] sm:$0xff]
        %v4624 = vld [vmem:[%s5 + $0x3b8] sm:$0xff]
        %v4625 = vld [vmem:[%s5 + $0x3c0] sm:$0xff]
        %v4626 = vld [vmem:[%s5 + $0x3c8] sm:$0xff]
        %v4627 = vld [vmem:[%s5 + $0x3d0] sm:$0xff]
        %v4628 = vld [vmem:[%s5 + $0x3d8] sm:$0xff]
        %v4629 = vld [vmem:[%s5 + $0x3e0] sm:$0xff]
        %v4630 = vld [vmem:[%s5 + $0x3e8] sm:$0xff]
        %v4631 = vld [vmem:[%s5 + $0x3f0] sm:$0xff]
        %v4632 = vld [vmem:[%s5 + $0x3f8] sm:$0xff]
        %v4633 = vld [vmem:[%s5 + $0x400] sm:$0xff]
        %v4634 = vld [vmem:[%s5 + $0x408] sm:$0xff]
        %v4635 = vld [vmem:[%s5 + $0x410] sm:$0xff]
        %v4636 = vld [vmem:[%s5 + $0x418] sm:$0xff]
        %v4637 = vld [vmem:[%s5 + $0x420] sm:$0xff]
        %v4638 = vld [vmem:[%s5 + $0x428] sm:$0xff]
        %v4639 = vld [vmem:[%s5 + $0x430] sm:$0xff]
        %v4640 = vld [vmem:[%s5 + $0x438] sm:$0xff]
        %v4641 = vld [vmem:[%s5 + $0x440] sm:$0xff]
        %v4642 = vld [vmem:[%s5 + $0x448] sm:$0xff]
        %v4643 = vld [vmem:[%s5 + $0x450] sm:$0xff]
        %v4644 = vld [vmem:[%s5 + $0x458] sm:$0xff]
        %v4645 = vld [vmem:[%s5 + $0x460] sm:$0xff]
        %v4646 = vld [vmem:[%s5 + $0x468] sm:$0xff]
        %v4647 = vld [vmem:[%s5 + $0x470] sm:$0xff]
        %v4648 = vld [vmem:[%s5 + $0x478] sm:$0xff]
        %v4649 = vld [vmem:[%s5 + $0x480] sm:$0xff]
        %v4650 = vld [vmem:[%s5 + $0x488] sm:$0xff]
        %v4651 = vld [vmem:[%s5 + $0x490] sm:$0xff]
        %v4652 = vld [vmem:[%s5 + $0x498] sm:$0xff]
        %v4653 = vld [vmem:[%s5 + $0x4a0] sm:$0xff]
        %v4654 = vld [vmem:[%s5 + $0x4a8] sm:$0xff]
        %v4655 = vld [vmem:[%s5 + $0x4b0] sm:$0xff]
        %v4656 = vld [vmem:[%s5 + $0x4b8] sm:$0xff]
        %v4657 = vld [vmem:[%s5 + $0x4c0] sm:$0xff]
        %v4658 = vld [vmem:[%s5 + $0x4c8] sm:$0xff]
        %v4659 = vld [vmem:[%s5 + $0x4d0] sm:$0xff]
        %v4660 = vld [vmem:[%s5 + $0x4d8] sm:$0xff]
        %v4661 = vld [vmem:[%s5 + $0x4e0] sm:$0xff]
        %v4662 = vld [vmem:[%s5 + $0x4e8] sm:$0xff]
        %v4663 = vld [vmem:[%s5 + $0x4f0] sm:$0xff]
        %v4664 = vld [vmem:[%s5 + $0x4f8] sm:$0xff]
        %v4665 = vld [vmem:[%s5 + $0x500] sm:$0xff]
        %v4666 = vld [vmem:[%s5 + $0x508] sm:$0xff]
        %v4667 = vld [vmem:[%s5 + $0x510] sm:$0xff]
        %v4668 = vld [vmem:[%s5 + $0x518] sm:$0xff]
        %v4669 = vld [vmem:[%s5 + $0x520] sm:$0xff]
        %v4670 = vld [vmem:[%s5 + $0x528] sm:$0xff]
        %v4671 = vld [vmem:[%s5 + $0x530] sm:$0xff]
        %v4672 = vld [vmem:[%s5 + $0x538] sm:$0xff]
        %v4673 = vld [vmem:[%s5 + $0x540] sm:$0xff]
        %v4674 = vld [vmem:[%s5 + $0x548] sm:$0xff]
        %v4675 = vld [vmem:[%s5 + $0x550] sm:$0xff]
        %v4676 = vld [vmem:[%s5 + $0x558] sm:$0xff]
        %v4677 = vld [vmem:[%s5 + $0x560] sm:$0xff]
        %v4678 = vld [vmem:[%s5 + $0x568] sm:$0xff]
        %v4679 = vld [vmem:[%s5 + $0x570] sm:$0xff]
        %v4680 = vld [vmem:[%s5 + $0x578] sm:$0xff]
        %v4681 = vld [vmem:[%s5 + $0x580] sm:$0xff]
        %v4682 = vld [vmem:[%s5 + $0x588] sm:$0xff]
        %v4683 = vld [vmem:[%s5 + $0x590] sm:$0xff]
        %v4684 = vld [vmem:[%s5 + $0x598] sm:$0xff]
        %v4685 = vld [vmem:[%s5 + $0x5a0] sm:$0xff]
        %v4686 = vld [vmem:[%s5 + $0x5a8] sm:$0xff]
        %v4687 = vld [vmem:[%s5 + $0x5b0] sm:$0xff]
        %v4688 = vld [vmem:[%s5 + $0x5b8] sm:$0xff]
        %v4689 = vld [vmem:[%s5 + $0x5c0] sm:$0xff]
        %v4690 = vld [vmem:[%s5 + $0x5c8] sm:$0xff]
        %v4691 = vld [vmem:[%s5 + $0x5d0] sm:$0xff]
        %v4692 = vld [vmem:[%s5 + $0x5d8] sm:$0xff]
        %v4693 = vld [vmem:[%s5 + $0x5e0] sm:$0xff]
        %v4694 = vld [vmem:[%s5 + $0x5e8] sm:$0xff]
        %v4695 = vld [vmem:[%s5 + $0x5f0] sm:$0xff]
        %v4696 = vld [vmem:[%s5 + $0x5f8] sm:$0xff]
        %v4697 = vpack.c.bf16 %v4188, %v4186
        %v4698 = vpack.c.bf16 %v4193, %v4191
        %v4699 = vpack.c.bf16 %v4198, %v4196
        %v4700 = vpack.c.bf16 %v4203, %v4201
        %v4701 = vpack.c.bf16 %v4208, %v4206
        %v4702 = vpack.c.bf16 %v4213, %v4211
        %v4703 = vpack.c.bf16 %v4218, %v4216
        %v4704 = vpack.c.bf16 %v4223, %v4221
        %v4705 = vpack.c.bf16 %v4228, %v4226
        %v4706 = vpack.c.bf16 %v4233, %v4231
        %v4707 = vpack.c.bf16 %v4238, %v4236
        %v4708 = vpack.c.bf16 %v4243, %v4241
        %v4709 = vpack.c.bf16 %v4248, %v4246
        %v4710 = vpack.c.bf16 %v4253, %v4251
        %v4711 = vpack.c.bf16 %v4258, %v4256
        %v4712 = vpack.c.bf16 %v4263, %v4261
        %v4713 = vpack.c.bf16 %v4268, %v4266
        %v4714 = vpack.c.bf16 %v4273, %v4271
        %v4715 = vpack.c.bf16 %v4278, %v4276
        %v4716 = vpack.c.bf16 %v4283, %v4281
        %v4717 = vpack.c.bf16 %v4288, %v4286
        %v4718 = vpack.c.bf16 %v4293, %v4291
        %v4719 = vpack.c.bf16 %v4298, %v4296
        %v4720 = vpack.c.bf16 %v4303, %v4301
        %v4721 = vpack.c.bf16 %v4308, %v4306
        %v4722 = vpack.c.bf16 %v4313, %v4311
        %v4723 = vpack.c.bf16 %v4318, %v4316
        %v4724 = vpack.c.bf16 %v4323, %v4321
        %v4725 = vpack.c.bf16 %v4328, %v4326
        %v4726 = vpack.c.bf16 %v4333, %v4331
        %v4727 = vpack.c.bf16 %v4338, %v4336
        %v4728 = vpack.c.bf16 %v4343, %v4341
        %v4729 = vpack.c.bf16 %v4348, %v4346
        %v4730 = vpack.c.bf16 %v4353, %v4351
        %v4731 = vpack.c.bf16 %v4358, %v4356
        %v4732 = vpack.c.bf16 %v4363, %v4361
        %v4733 = vpack.c.bf16 %v4368, %v4366
        %v4734 = vpack.c.bf16 %v4373, %v4371
        %v4735 = vpack.c.bf16 %v4378, %v4376
        %v4736 = vpack.c.bf16 %v4383, %v4381
        %v4737 = vpack.c.bf16 %v4388, %v4386
        %v4738 = vpack.c.bf16 %v4393, %v4391
        %v4739 = vpack.c.bf16 %v4398, %v4396
        %v4740 = vpack.c.bf16 %v4403, %v4401
        %v4741 = vpack.c.bf16 %v4408, %v4406
        %v4742 = vpack.c.bf16 %v4413, %v4411
        %v4743 = vpack.c.bf16 %v4418, %v4416
        %v4744 = vpack.c.bf16 %v4423, %v4421
        %v4745 = vpack.c.bf16 %v4428, %v4426
        %v4746 = vpack.c.bf16 %v4433, %v4431
        %v4747 = vpack.c.bf16 %v4438, %v4436
        %v4748 = vpack.c.bf16 %v4443, %v4441
        %v4749 = vpack.c.bf16 %v4448, %v4446
        %v4750 = vpack.c.bf16 %v4453, %v4451
        %v4751 = vpack.c.bf16 %v4458, %v4456
        %v4752 = vpack.c.bf16 %v4463, %v4461
        %v4753 = vpack.c.bf16 %v4468, %v4466
        %v4754 = vpack.c.bf16 %v4473, %v4471
        %v4755 = vpack.c.bf16 %v4478, %v4476
        %v4756 = vpack.c.bf16 %v4483, %v4481
        %v4757 = vpack.c.bf16 %v4488, %v4486
        %v4758 = vpack.c.bf16 %v4493, %v4491
        %v4759 = vpack.c.bf16 %v4498, %v4496
        %v4760 = vpack.c.bf16 %v4503, %v4501
        %v4953 = vunpack.c.l.b16 %v4505
        %v4954 = vunpack.c.h.b16 %v4505
        %v4955 = vunpack.c.l.b16 %v4506
        %v4956 = vunpack.c.h.b16 %v4506
        %v4957 = vunpack.c.l.b16 %v4507
        %v4958 = vunpack.c.h.b16 %v4507
        %v4959 = vunpack.c.l.b16 %v4508
        %v4960 = vunpack.c.h.b16 %v4508
        %v4961 = vunpack.c.l.b16 %v4509
        %v4962 = vunpack.c.h.b16 %v4509
        %v4963 = vunpack.c.l.b16 %v4510
        %v4964 = vunpack.c.h.b16 %v4510
        %v4965 = vunpack.c.l.b16 %v4511
        %v4966 = vunpack.c.h.b16 %v4511
        %v4967 = vunpack.c.l.b16 %v4512
        %v4968 = vunpack.c.h.b16 %v4512
        %v4969 = vunpack.c.l.b16 %v4513
        %v4970 = vunpack.c.h.b16 %v4513
        %v4971 = vunpack.c.l.b16 %v4514
        %v4972 = vunpack.c.h.b16 %v4514
        %v4973 = vunpack.c.l.b16 %v4515
        %v4974 = vunpack.c.h.b16 %v4515
        %v4975 = vunpack.c.l.b16 %v4516
        %v4976 = vunpack.c.h.b16 %v4516
        %v4977 = vunpack.c.l.b16 %v4517
        %v4978 = vunpack.c.h.b16 %v4517
        %v4979 = vunpack.c.l.b16 %v4518
        %v4980 = vunpack.c.h.b16 %v4518
        %v4981 = vunpack.c.l.b16 %v4519
        %v4982 = vunpack.c.h.b16 %v4519
        %v4983 = vunpack.c.l.b16 %v4520
        %v4984 = vunpack.c.h.b16 %v4520
        %v4985 = vunpack.c.l.b16 %v4521
        %v4986 = vunpack.c.h.b16 %v4521
        %v4987 = vunpack.c.l.b16 %v4522
        %v4988 = vunpack.c.h.b16 %v4522
        %v4989 = vunpack.c.l.b16 %v4523
        %v4990 = vunpack.c.h.b16 %v4523
        %v4991 = vunpack.c.l.b16 %v4524
        %v4992 = vunpack.c.h.b16 %v4524
        %v4993 = vunpack.c.l.b16 %v4525
        %v4994 = vunpack.c.h.b16 %v4525
        %v4995 = vunpack.c.l.b16 %v4526
        %v4996 = vunpack.c.h.b16 %v4526
        %v4997 = vunpack.c.l.b16 %v4527
        %v4998 = vunpack.c.h.b16 %v4527
        %v4999 = vunpack.c.l.b16 %v4528
        %v5000 = vunpack.c.h.b16 %v4528
        %v5001 = vunpack.c.l.b16 %v4529
        %v5002 = vunpack.c.h.b16 %v4529
        %v5003 = vunpack.c.l.b16 %v4530
        %v5004 = vunpack.c.h.b16 %v4530
        %v5005 = vunpack.c.l.b16 %v4531
        %v5006 = vunpack.c.h.b16 %v4531
        %v5007 = vunpack.c.l.b16 %v4532
        %v5008 = vunpack.c.h.b16 %v4532
        %v5009 = vunpack.c.l.b16 %v4533
        %v5010 = vunpack.c.h.b16 %v4533
        %v5011 = vunpack.c.l.b16 %v4534
        %v5012 = vunpack.c.h.b16 %v4534
        %v5013 = vunpack.c.l.b16 %v4535
        %v5014 = vunpack.c.h.b16 %v4535
        %v5015 = vunpack.c.l.b16 %v4536
        %v5016 = vunpack.c.h.b16 %v4536
        %v5017 = vunpack.c.l.b16 %v4537
        %v5018 = vunpack.c.h.b16 %v4537
        %v5019 = vunpack.c.l.b16 %v4538
        %v5020 = vunpack.c.h.b16 %v4538
        %v5021 = vunpack.c.l.b16 %v4539
        %v5022 = vunpack.c.h.b16 %v4539
        %v5023 = vunpack.c.l.b16 %v4540
        %v5024 = vunpack.c.h.b16 %v4540
        %v5025 = vunpack.c.l.b16 %v4541
        %v5026 = vunpack.c.h.b16 %v4541
        %v5027 = vunpack.c.l.b16 %v4542
        %v5028 = vunpack.c.h.b16 %v4542
        %v5029 = vunpack.c.l.b16 %v4543
        %v5030 = vunpack.c.h.b16 %v4543
        %v5031 = vunpack.c.l.b16 %v4544
        %v5032 = vunpack.c.h.b16 %v4544
        %v5033 = vunpack.c.l.b16 %v4545
        %v5034 = vunpack.c.h.b16 %v4545
        %v5035 = vunpack.c.l.b16 %v4546
        %v5036 = vunpack.c.h.b16 %v4546
        %v5037 = vunpack.c.l.b16 %v4547
        %v5038 = vunpack.c.h.b16 %v4547
        %v5039 = vunpack.c.l.b16 %v4548
        %v5040 = vunpack.c.h.b16 %v4548
        %v5041 = vunpack.c.l.b16 %v4549
        %v5042 = vunpack.c.h.b16 %v4549
        %v5043 = vunpack.c.l.b16 %v4550
        %v5044 = vunpack.c.h.b16 %v4550
        %v5045 = vunpack.c.l.b16 %v4551
        %v5046 = vunpack.c.h.b16 %v4551
        %v5047 = vunpack.c.l.b16 %v4552
        %v5048 = vunpack.c.h.b16 %v4552
        %v5049 = vunpack.c.l.b16 %v4553
        %v5050 = vunpack.c.h.b16 %v4553
        %v5051 = vunpack.c.l.b16 %v4554
        %v5052 = vunpack.c.h.b16 %v4554
        %v5053 = vunpack.c.l.b16 %v4555
        %v5054 = vunpack.c.h.b16 %v4555
        %v5055 = vunpack.c.l.b16 %v4556
        %v5056 = vunpack.c.h.b16 %v4556
        %v5057 = vunpack.c.l.b16 %v4557
        %v5058 = vunpack.c.h.b16 %v4557
        %v5059 = vunpack.c.l.b16 %v4558
        %v5060 = vunpack.c.h.b16 %v4558
        %v5061 = vunpack.c.l.b16 %v4559
        %v5062 = vunpack.c.h.b16 %v4559
        %v5063 = vunpack.c.l.b16 %v4560
        %v5064 = vunpack.c.h.b16 %v4560
        %v5065 = vunpack.c.l.b16 %v4561
        %v5066 = vunpack.c.h.b16 %v4561
        %v5067 = vunpack.c.l.b16 %v4562
        %v5068 = vunpack.c.h.b16 %v4562
        %v5069 = vunpack.c.l.b16 %v4563
        %v5070 = vunpack.c.h.b16 %v4563
        %v5071 = vunpack.c.l.b16 %v4564
        %v5072 = vunpack.c.h.b16 %v4564
        %v5073 = vunpack.c.l.b16 %v4565
        %v5074 = vunpack.c.h.b16 %v4565
        %v5075 = vunpack.c.l.b16 %v4566
        %v5076 = vunpack.c.h.b16 %v4566
        %v5077 = vunpack.c.l.b16 %v4567
        %v5078 = vunpack.c.h.b16 %v4567
        %v5079 = vunpack.c.l.b16 %v4568
        %v5080 = vunpack.c.h.b16 %v4568
        %v5081 = vunpack.c.l.b16 %v4569
        %v5082 = vunpack.c.h.b16 %v4569
        %v5083 = vunpack.c.l.b16 %v4570
        %v5084 = vunpack.c.h.b16 %v4570
        %v5085 = vunpack.c.l.b16 %v4571
        %v5086 = vunpack.c.h.b16 %v4571
        %v5087 = vunpack.c.l.b16 %v4572
        %v5088 = vunpack.c.h.b16 %v4572
        %v5089 = vunpack.c.l.b16 %v4573
        %v5090 = vunpack.c.h.b16 %v4573
        %v5091 = vunpack.c.l.b16 %v4574
        %v5092 = vunpack.c.h.b16 %v4574
        %v5093 = vunpack.c.l.b16 %v4575
        %v5094 = vunpack.c.h.b16 %v4575
        %v5095 = vunpack.c.l.b16 %v4576
        %v5096 = vunpack.c.h.b16 %v4576
        %v5097 = vunpack.c.l.b16 %v4577
        %v5098 = vunpack.c.h.b16 %v4577
        %v5099 = vunpack.c.l.b16 %v4578
        %v5100 = vunpack.c.h.b16 %v4578
        %v5101 = vunpack.c.l.b16 %v4579
        %v5102 = vunpack.c.h.b16 %v4579
        %v5103 = vunpack.c.l.b16 %v4580
        %v5104 = vunpack.c.h.b16 %v4580
        %v5105 = vunpack.c.l.b16 %v4581
        %v5106 = vunpack.c.h.b16 %v4581
        %v5107 = vunpack.c.l.b16 %v4582
        %v5108 = vunpack.c.h.b16 %v4582
        %v5109 = vunpack.c.l.b16 %v4583
        %v5110 = vunpack.c.h.b16 %v4583
        %v5111 = vunpack.c.l.b16 %v4584
        %v5112 = vunpack.c.h.b16 %v4584
        %v5113 = vunpack.c.l.b16 %v4585
        %v5114 = vunpack.c.h.b16 %v4585
        %v5115 = vunpack.c.l.b16 %v4586
        %v5116 = vunpack.c.h.b16 %v4586
        %v5117 = vunpack.c.l.b16 %v4587
        %v5118 = vunpack.c.h.b16 %v4587
        %v5119 = vunpack.c.l.b16 %v4588
        %v5120 = vunpack.c.h.b16 %v4588
        %v5121 = vunpack.c.l.b16 %v4589
        %v5122 = vunpack.c.h.b16 %v4589
        %v5123 = vunpack.c.l.b16 %v4590
        %v5124 = vunpack.c.h.b16 %v4590
        %v5125 = vunpack.c.l.b16 %v4591
        %v5126 = vunpack.c.h.b16 %v4591
        %v5127 = vunpack.c.l.b16 %v4592
        %v5128 = vunpack.c.h.b16 %v4592
        %v5129 = vunpack.c.l.b16 %v4593
        %v5130 = vunpack.c.h.b16 %v4593
        %v5131 = vunpack.c.l.b16 %v4594
        %v5132 = vunpack.c.h.b16 %v4594
        %v5133 = vunpack.c.l.b16 %v4595
        %v5134 = vunpack.c.h.b16 %v4595
        %v5135 = vunpack.c.l.b16 %v4596
        %v5136 = vunpack.c.h.b16 %v4596
        %v5137 = vunpack.c.l.b16 %v4597
        %v5138 = vunpack.c.h.b16 %v4597
        %v5139 = vunpack.c.l.b16 %v4598
        %v5140 = vunpack.c.h.b16 %v4598
        %v5141 = vunpack.c.l.b16 %v4599
        %v5142 = vunpack.c.h.b16 %v4599
        %v5143 = vunpack.c.l.b16 %v4600
        %v5144 = vunpack.c.h.b16 %v4600
        %v5145 = vunpack.c.l.b16 %v4601
        %v5146 = vunpack.c.h.b16 %v4601
        %v5147 = vunpack.c.l.b16 %v4602
        %v5148 = vunpack.c.h.b16 %v4602
        %v5149 = vunpack.c.l.b16 %v4603
        %v5150 = vunpack.c.h.b16 %v4603
        %v5151 = vunpack.c.l.b16 %v4604
        %v5152 = vunpack.c.h.b16 %v4604
        %v5153 = vunpack.c.l.b16 %v4605
        %v5154 = vunpack.c.h.b16 %v4605
        %v5155 = vunpack.c.l.b16 %v4606
        %v5156 = vunpack.c.h.b16 %v4606
        %v5157 = vunpack.c.l.b16 %v4607
        %v5158 = vunpack.c.h.b16 %v4607
        %v5159 = vunpack.c.l.b16 %v4608
        %v5160 = vunpack.c.h.b16 %v4608
        %v5161 = vunpack.c.l.b16 %v4609
        %v5162 = vunpack.c.h.b16 %v4609
        %v5163 = vunpack.c.l.b16 %v4610
        %v5164 = vunpack.c.h.b16 %v4610
        %v5165 = vunpack.c.l.b16 %v4611
        %v5166 = vunpack.c.h.b16 %v4611
        %v5167 = vunpack.c.l.b16 %v4612
        %v5168 = vunpack.c.h.b16 %v4612
        %v5169 = vunpack.c.l.b16 %v4613
        %v5170 = vunpack.c.h.b16 %v4613
        %v5171 = vunpack.c.l.b16 %v4614
        %v5172 = vunpack.c.h.b16 %v4614
        %v5173 = vunpack.c.l.b16 %v4615
        %v5174 = vunpack.c.h.b16 %v4615
        %v5175 = vunpack.c.l.b16 %v4616
        %v5176 = vunpack.c.h.b16 %v4616
        %v5177 = vunpack.c.l.b16 %v4617
        %v5178 = vunpack.c.h.b16 %v4617
        %v5179 = vunpack.c.l.b16 %v4618
        %v5180 = vunpack.c.h.b16 %v4618
        %v5181 = vunpack.c.l.b16 %v4619
        %v5182 = vunpack.c.h.b16 %v4619
        %v5183 = vunpack.c.l.b16 %v4620
        %v5184 = vunpack.c.h.b16 %v4620
        %v5185 = vunpack.c.l.b16 %v4621
        %v5186 = vunpack.c.h.b16 %v4621
        %v5187 = vunpack.c.l.b16 %v4622
        %v5188 = vunpack.c.h.b16 %v4622
        %v5189 = vunpack.c.l.b16 %v4623
        %v5190 = vunpack.c.h.b16 %v4623
        %v5191 = vunpack.c.l.b16 %v4624
        %v5192 = vunpack.c.h.b16 %v4624
        %v5193 = vunpack.c.l.b16 %v4625
        %v5194 = vunpack.c.h.b16 %v4625
        %v5195 = vunpack.c.l.b16 %v4626
        %v5196 = vunpack.c.h.b16 %v4626
        %v5197 = vunpack.c.l.b16 %v4627
        %v5198 = vunpack.c.h.b16 %v4627
        %v5199 = vunpack.c.l.b16 %v4628
        %v5200 = vunpack.c.h.b16 %v4628
        %v5201 = vunpack.c.l.b16 %v4629
        %v5202 = vunpack.c.h.b16 %v4629
        %v5203 = vunpack.c.l.b16 %v4630
        %v5204 = vunpack.c.h.b16 %v4630
        %v5205 = vunpack.c.l.b16 %v4631
        %v5206 = vunpack.c.h.b16 %v4631
        %v5207 = vunpack.c.l.b16 %v4632
        %v5208 = vunpack.c.h.b16 %v4632
        %v5209 = vunpack.c.l.b16 %v4633
        %v5210 = vunpack.c.h.b16 %v4633
        %v5211 = vunpack.c.l.b16 %v4634
        %v5212 = vunpack.c.h.b16 %v4634
        %v5213 = vunpack.c.l.b16 %v4635
        %v5214 = vunpack.c.h.b16 %v4635
        %v5215 = vunpack.c.l.b16 %v4636
        %v5216 = vunpack.c.h.b16 %v4636
        %v5217 = vunpack.c.l.b16 %v4637
        %v5218 = vunpack.c.h.b16 %v4637
        %v5219 = vunpack.c.l.b16 %v4638
        %v5220 = vunpack.c.h.b16 %v4638
        %v5221 = vunpack.c.l.b16 %v4639
        %v5222 = vunpack.c.h.b16 %v4639
        %v5223 = vunpack.c.l.b16 %v4640
        %v5224 = vunpack.c.h.b16 %v4640
        %v5225 = vunpack.c.l.b16 %v4641
        %v5226 = vunpack.c.h.b16 %v4641
        %v5227 = vunpack.c.l.b16 %v4642
        %v5228 = vunpack.c.h.b16 %v4642
        %v5229 = vunpack.c.l.b16 %v4643
        %v5230 = vunpack.c.h.b16 %v4643
        %v5231 = vunpack.c.l.b16 %v4644
        %v5232 = vunpack.c.h.b16 %v4644
        %v5233 = vunpack.c.l.b16 %v4645
        %v5234 = vunpack.c.h.b16 %v4645
        %v5235 = vunpack.c.l.b16 %v4646
        %v5236 = vunpack.c.h.b16 %v4646
        %v5237 = vunpack.c.l.b16 %v4647
        %v5238 = vunpack.c.h.b16 %v4647
        %v5239 = vunpack.c.l.b16 %v4648
        %v5240 = vunpack.c.h.b16 %v4648
        %v5241 = vunpack.c.l.b16 %v4649
        %v5242 = vunpack.c.h.b16 %v4649
        %v5243 = vunpack.c.l.b16 %v4650
        %v5244 = vunpack.c.h.b16 %v4650
        %v5245 = vunpack.c.l.b16 %v4651
        %v5246 = vunpack.c.h.b16 %v4651
        %v5247 = vunpack.c.l.b16 %v4652
        %v5248 = vunpack.c.h.b16 %v4652
        %v5249 = vunpack.c.l.b16 %v4653
        %v5250 = vunpack.c.h.b16 %v4653
        %v5251 = vunpack.c.l.b16 %v4654
        %v5252 = vunpack.c.h.b16 %v4654
        %v5253 = vunpack.c.l.b16 %v4655
        %v5254 = vunpack.c.h.b16 %v4655
        %v5255 = vunpack.c.l.b16 %v4656
        %v5256 = vunpack.c.h.b16 %v4656
        %v5257 = vunpack.c.l.b16 %v4657
        %v5258 = vunpack.c.h.b16 %v4657
        %v5259 = vunpack.c.l.b16 %v4658
        %v5260 = vunpack.c.h.b16 %v4658
        %v5261 = vunpack.c.l.b16 %v4659
        %v5262 = vunpack.c.h.b16 %v4659
        %v5263 = vunpack.c.l.b16 %v4660
        %v5264 = vunpack.c.h.b16 %v4660
        %v5265 = vunpack.c.l.b16 %v4661
        %v5266 = vunpack.c.h.b16 %v4661
        %v5267 = vunpack.c.l.b16 %v4662
        %v5268 = vunpack.c.h.b16 %v4662
        %v5269 = vunpack.c.l.b16 %v4663
        %v5270 = vunpack.c.h.b16 %v4663
        %v5271 = vunpack.c.l.b16 %v4664
        %v5272 = vunpack.c.h.b16 %v4664
        %v5273 = vunpack.c.l.b16 %v4665
        %v5274 = vunpack.c.h.b16 %v4665
        %v5275 = vunpack.c.l.b16 %v4666
        %v5276 = vunpack.c.h.b16 %v4666
        %v5277 = vunpack.c.l.b16 %v4667
        %v5278 = vunpack.c.h.b16 %v4667
        %v5279 = vunpack.c.l.b16 %v4668
        %v5280 = vunpack.c.h.b16 %v4668
        %v5281 = vunpack.c.l.b16 %v4669
        %v5282 = vunpack.c.h.b16 %v4669
        %v5283 = vunpack.c.l.b16 %v4670
        %v5284 = vunpack.c.h.b16 %v4670
        %v5285 = vunpack.c.l.b16 %v4671
        %v5286 = vunpack.c.h.b16 %v4671
        %v5287 = vunpack.c.l.b16 %v4672
        %v5288 = vunpack.c.h.b16 %v4672
        %v5289 = vunpack.c.l.b16 %v4673
        %v5290 = vunpack.c.h.b16 %v4673
        %v5291 = vunpack.c.l.b16 %v4674
        %v5292 = vunpack.c.h.b16 %v4674
        %v5293 = vunpack.c.l.b16 %v4675
        %v5294 = vunpack.c.h.b16 %v4675
        %v5295 = vunpack.c.l.b16 %v4676
        %v5296 = vunpack.c.h.b16 %v4676
        %v5297 = vunpack.c.l.b16 %v4677
        %v5298 = vunpack.c.h.b16 %v4677
        %v5299 = vunpack.c.l.b16 %v4678
        %v5300 = vunpack.c.h.b16 %v4678
        %v5301 = vunpack.c.l.b16 %v4679
        %v5302 = vunpack.c.h.b16 %v4679
        %v5303 = vunpack.c.l.b16 %v4680
        %v5304 = vunpack.c.h.b16 %v4680
        %v5305 = vunpack.c.l.b16 %v4681
        %v5306 = vunpack.c.h.b16 %v4681
        %v5307 = vunpack.c.l.b16 %v4682
        %v5308 = vunpack.c.h.b16 %v4682
        %v5309 = vunpack.c.l.b16 %v4683
        %v5310 = vunpack.c.h.b16 %v4683
        %v5311 = vunpack.c.l.b16 %v4684
        %v5312 = vunpack.c.h.b16 %v4684
        %v5313 = vunpack.c.l.b16 %v4685
        %v5314 = vunpack.c.h.b16 %v4685
        %v5315 = vunpack.c.l.b16 %v4686
        %v5316 = vunpack.c.h.b16 %v4686
        %v5317 = vunpack.c.l.b16 %v4687
        %v5318 = vunpack.c.h.b16 %v4687
        %v5319 = vunpack.c.l.b16 %v4688
        %v5320 = vunpack.c.h.b16 %v4688
        %v5321 = vunpack.c.l.b16 %v4689
        %v5322 = vunpack.c.h.b16 %v4689
        %v5323 = vunpack.c.l.b16 %v4690
        %v5324 = vunpack.c.h.b16 %v4690
        %v5325 = vunpack.c.l.b16 %v4691
        %v5326 = vunpack.c.h.b16 %v4691
        %v5327 = vunpack.c.l.b16 %v4692
        %v5328 = vunpack.c.h.b16 %v4692
        %v5329 = vunpack.c.l.b16 %v4693
        %v5330 = vunpack.c.h.b16 %v4693
        %v5331 = vunpack.c.l.b16 %v4694
        %v5332 = vunpack.c.h.b16 %v4694
        %v5333 = vunpack.c.l.b16 %v4695
        %v5334 = vunpack.c.h.b16 %v4695
        %v5335 = vunpack.c.l.b16 %v4696
        %v5336 = vunpack.c.h.b16 %v4696
        %v5337 = vpack.c.b16 %v4961, %v4953
        %v5338 = vpack.c.b16 %v4962, %v4954
        %v5339 = vpack.c.b16 %v4963, %v4955
        %v5340 = vpack.c.b16 %v4964, %v4956
        %v5341 = vpack.c.b16 %v4965, %v4957
        %v5342 = vpack.c.b16 %v4966, %v4958
        %v5343 = vpack.c.b16 %v4967, %v4959
        %v5344 = vpack.c.b16 %v4968, %v4960
        %v5345 = vpack.c.b16 %v4977, %v4969
        %v5346 = vpack.c.b16 %v4978, %v4970
        %v5347 = vpack.c.b16 %v4979, %v4971
        %v5348 = vpack.c.b16 %v4980, %v4972
        %v5349 = vpack.c.b16 %v4981, %v4973
        %v5350 = vpack.c.b16 %v4982, %v4974
        %v5351 = vpack.c.b16 %v4983, %v4975
        %v5352 = vpack.c.b16 %v4984, %v4976
        %v5353 = vpack.c.b16 %v4993, %v4985
        %v5354 = vpack.c.b16 %v4994, %v4986
        %v5355 = vpack.c.b16 %v4995, %v4987
        %v5356 = vpack.c.b16 %v4996, %v4988
        %v5357 = vpack.c.b16 %v4997, %v4989
        %v5358 = vpack.c.b16 %v4998, %v4990
        %v5359 = vpack.c.b16 %v4999, %v4991
        %v5360 = vpack.c.b16 %v5000, %v4992
        %v5361 = vpack.c.b16 %v5009, %v5001
        %v5362 = vpack.c.b16 %v5010, %v5002
        %v5363 = vpack.c.b16 %v5011, %v5003
        %v5364 = vpack.c.b16 %v5012, %v5004
        %v5365 = vpack.c.b16 %v5013, %v5005
        %v5366 = vpack.c.b16 %v5014, %v5006
        %v5367 = vpack.c.b16 %v5015, %v5007
        %v5368 = vpack.c.b16 %v5016, %v5008
        %v5369 = vpack.c.b16 %v5025, %v5017
        %v5370 = vpack.c.b16 %v5026, %v5018
        %v5371 = vpack.c.b16 %v5027, %v5019
        %v5372 = vpack.c.b16 %v5028, %v5020
        %v5373 = vpack.c.b16 %v5029, %v5021
        %v5374 = vpack.c.b16 %v5030, %v5022
        %v5375 = vpack.c.b16 %v5031, %v5023
        %v5376 = vpack.c.b16 %v5032, %v5024
        %v5377 = vpack.c.b16 %v5041, %v5033
        %v5378 = vpack.c.b16 %v5042, %v5034
        %v5379 = vpack.c.b16 %v5043, %v5035
        %v5380 = vpack.c.b16 %v5044, %v5036
        %v5381 = vpack.c.b16 %v5045, %v5037
        %v5382 = vpack.c.b16 %v5046, %v5038
        %v5383 = vpack.c.b16 %v5047, %v5039
        %v5384 = vpack.c.b16 %v5048, %v5040
        %v5385 = vpack.c.b16 %v5057, %v5049
        %v5386 = vpack.c.b16 %v5058, %v5050
        %v5387 = vpack.c.b16 %v5059, %v5051
        %v5388 = vpack.c.b16 %v5060, %v5052
        %v5389 = vpack.c.b16 %v5061, %v5053
        %v5390 = vpack.c.b16 %v5062, %v5054
        %v5391 = vpack.c.b16 %v5063, %v5055
        %v5392 = vpack.c.b16 %v5064, %v5056
        %v5393 = vpack.c.b16 %v5073, %v5065
        %v5394 = vpack.c.b16 %v5074, %v5066
        %v5395 = vpack.c.b16 %v5075, %v5067
        %v5396 = vpack.c.b16 %v5076, %v5068
        %v5397 = vpack.c.b16 %v5077, %v5069
        %v5398 = vpack.c.b16 %v5078, %v5070
        %v5399 = vpack.c.b16 %v5079, %v5071
        %v5400 = vpack.c.b16 %v5080, %v5072
        %v5401 = vpack.c.b16 %v5089, %v5081
        %v5402 = vpack.c.b16 %v5090, %v5082
        %v5403 = vpack.c.b16 %v5091, %v5083
        %v5404 = vpack.c.b16 %v5092, %v5084
        %v5405 = vpack.c.b16 %v5093, %v5085
        %v5406 = vpack.c.b16 %v5094, %v5086
        %v5407 = vpack.c.b16 %v5095, %v5087
        %v5408 = vpack.c.b16 %v5096, %v5088
        %v5409 = vpack.c.b16 %v5105, %v5097
        %v5410 = vpack.c.b16 %v5106, %v5098
        %v5411 = vpack.c.b16 %v5107, %v5099
        %v5412 = vpack.c.b16 %v5108, %v5100
        %v5413 = vpack.c.b16 %v5109, %v5101
        %v5414 = vpack.c.b16 %v5110, %v5102
        %v5415 = vpack.c.b16 %v5111, %v5103
        %v5416 = vpack.c.b16 %v5112, %v5104
        %v5417 = vpack.c.b16 %v5121, %v5113
        %v5418 = vpack.c.b16 %v5122, %v5114
        %v5419 = vpack.c.b16 %v5123, %v5115
        %v5420 = vpack.c.b16 %v5124, %v5116
        %v5421 = vpack.c.b16 %v5125, %v5117
        %v5422 = vpack.c.b16 %v5126, %v5118
        %v5423 = vpack.c.b16 %v5127, %v5119
        %v5424 = vpack.c.b16 %v5128, %v5120
        %v5425 = vpack.c.b16 %v5137, %v5129
        %v5426 = vpack.c.b16 %v5138, %v5130
        %v5427 = vpack.c.b16 %v5139, %v5131
        %v5428 = vpack.c.b16 %v5140, %v5132
        %v5429 = vpack.c.b16 %v5141, %v5133
        %v5430 = vpack.c.b16 %v5142, %v5134
        %v5431 = vpack.c.b16 %v5143, %v5135
        %v5432 = vpack.c.b16 %v5144, %v5136
        %v5433 = vpack.c.b16 %v5153, %v5145
        %v5434 = vpack.c.b16 %v5154, %v5146
        %v5435 = vpack.c.b16 %v5155, %v5147
        %v5436 = vpack.c.b16 %v5156, %v5148
        %v5437 = vpack.c.b16 %v5157, %v5149
        %v5438 = vpack.c.b16 %v5158, %v5150
        %v5439 = vpack.c.b16 %v5159, %v5151
        %v5440 = vpack.c.b16 %v5160, %v5152
        %v5441 = vpack.c.b16 %v5169, %v5161
        %v5442 = vpack.c.b16 %v5170, %v5162
        %v5443 = vpack.c.b16 %v5171, %v5163
        %v5444 = vpack.c.b16 %v5172, %v5164
        %v5445 = vpack.c.b16 %v5173, %v5165
        %v5446 = vpack.c.b16 %v5174, %v5166
        %v5447 = vpack.c.b16 %v5175, %v5167
        %v5448 = vpack.c.b16 %v5176, %v5168
        %v5449 = vpack.c.b16 %v5185, %v5177
        %v5450 = vpack.c.b16 %v5186, %v5178
        %v5451 = vpack.c.b16 %v5187, %v5179
        %v5452 = vpack.c.b16 %v5188, %v5180
        %v5453 = vpack.c.b16 %v5189, %v5181
        %v5454 = vpack.c.b16 %v5190, %v5182
        %v5455 = vpack.c.b16 %v5191, %v5183
        %v5456 = vpack.c.b16 %v5192, %v5184
        %v5457 = vpack.c.b16 %v5201, %v5193
        %v5458 = vpack.c.b16 %v5202, %v5194
        %v5459 = vpack.c.b16 %v5203, %v5195
        %v5460 = vpack.c.b16 %v5204, %v5196
        %v5461 = vpack.c.b16 %v5205, %v5197
        %v5462 = vpack.c.b16 %v5206, %v5198
        %v5463 = vpack.c.b16 %v5207, %v5199
        %v5464 = vpack.c.b16 %v5208, %v5200
        %v5465 = vpack.c.b16 %v5217, %v5209
        %v5466 = vpack.c.b16 %v5218, %v5210
        %v5467 = vpack.c.b16 %v5219, %v5211
        %v5468 = vpack.c.b16 %v5220, %v5212
        %v5469 = vpack.c.b16 %v5221, %v5213
        %v5470 = vpack.c.b16 %v5222, %v5214
        %v5471 = vpack.c.b16 %v5223, %v5215
        %v5472 = vpack.c.b16 %v5224, %v5216
        %v5473 = vpack.c.b16 %v5233, %v5225
        %v5474 = vpack.c.b16 %v5234, %v5226
        %v5475 = vpack.c.b16 %v5235, %v5227
        %v5476 = vpack.c.b16 %v5236, %v5228
        %v5477 = vpack.c.b16 %v5237, %v5229
        %v5478 = vpack.c.b16 %v5238, %v5230
        %v5479 = vpack.c.b16 %v5239, %v5231
        %v5480 = vpack.c.b16 %v5240, %v5232
        %v5481 = vpack.c.b16 %v5249, %v5241
        %v5482 = vpack.c.b16 %v5250, %v5242
        %v5483 = vpack.c.b16 %v5251, %v5243
        %v5484 = vpack.c.b16 %v5252, %v5244
        %v5485 = vpack.c.b16 %v5253, %v5245
        %v5486 = vpack.c.b16 %v5254, %v5246
        %v5487 = vpack.c.b16 %v5255, %v5247
        %v5488 = vpack.c.b16 %v5256, %v5248
        %v5489 = vpack.c.b16 %v5265, %v5257
        %v5490 = vpack.c.b16 %v5266, %v5258
        %v5491 = vpack.c.b16 %v5267, %v5259
        %v5492 = vpack.c.b16 %v5268, %v5260
        %v5493 = vpack.c.b16 %v5269, %v5261
        %v5494 = vpack.c.b16 %v5270, %v5262
        %v5495 = vpack.c.b16 %v5271, %v5263
        %v5496 = vpack.c.b16 %v5272, %v5264
        %v5497 = vpack.c.b16 %v5281, %v5273
        %v5498 = vpack.c.b16 %v5282, %v5274
        %v5499 = vpack.c.b16 %v5283, %v5275
        %v5500 = vpack.c.b16 %v5284, %v5276
        %v5501 = vpack.c.b16 %v5285, %v5277
        %v5502 = vpack.c.b16 %v5286, %v5278
        %v5503 = vpack.c.b16 %v5287, %v5279
        %v5504 = vpack.c.b16 %v5288, %v5280
        %v5505 = vpack.c.b16 %v5297, %v5289
        %v5506 = vpack.c.b16 %v5298, %v5290
        %v5507 = vpack.c.b16 %v5299, %v5291
        %v5508 = vpack.c.b16 %v5300, %v5292
        %v5509 = vpack.c.b16 %v5301, %v5293
        %v5510 = vpack.c.b16 %v5302, %v5294
        %v5511 = vpack.c.b16 %v5303, %v5295
        %v5512 = vpack.c.b16 %v5304, %v5296
        %v5513 = vpack.c.b16 %v5313, %v5305
        %v5514 = vpack.c.b16 %v5314, %v5306
        %v5515 = vpack.c.b16 %v5315, %v5307
        %v5516 = vpack.c.b16 %v5316, %v5308
        %v5517 = vpack.c.b16 %v5317, %v5309
        %v5518 = vpack.c.b16 %v5318, %v5310
        %v5519 = vpack.c.b16 %v5319, %v5311
        %v5520 = vpack.c.b16 %v5320, %v5312
        %v5521 = vpack.c.b16 %v5329, %v5321
        %v5522 = vpack.c.b16 %v5330, %v5322
        %v5523 = vpack.c.b16 %v5331, %v5323
        %v5524 = vpack.c.b16 %v5332, %v5324
        %v5525 = vpack.c.b16 %v5333, %v5325
        %v5526 = vpack.c.b16 %v5334, %v5326
        %v5527 = vpack.c.b16 %v5335, %v5327
        %v5528 = vpack.c.b16 %v5336, %v5328
        %5721 = vmatpush.bf16.msra.mxu0 %v4704
        %5722 = vmatpush.bf16.msra.mxu0 %v4703
        %5723 = vmatpush.bf16.msra.mxu0 %v4702
        %5724 = vmatpush.bf16.msra.mxu0 %v4701
        %5725 = vmatpush.bf16.msra.mxu0 %v4700
        %5726 = vmatpush.bf16.msra.mxu0 %v4699
        %5727 = vmatpush.bf16.msra.mxu0 %v4698
        %5728 = vmatpush.bf16.msra.mxu0 %v4697
        %5729 = vmatmul.bf16.gmra.mxu0 %v5337
        %v5730 = vpop.f32.mrf.mxu0
        %v5731 = vadd.f32 0.0, %v5730
        %v5732 = vpop.f32.mrf.mxu0
        %v5733 = vadd.f32 0.0, %v5732
        %5734 = vmatmul.bf16.gmra.mxu0 %v5345
        %v5735 = vpop.f32.mrf.mxu0
        %v5736 = vadd.f32 0.0, %v5735
        %v5737 = vpop.f32.mrf.mxu0
        %v5738 = vadd.f32 0.0, %v5737
        %5739 = vmatmul.bf16.gmra.mxu0 %v5353
        %v5740 = vpop.f32.mrf.mxu0
        %v5741 = vadd.f32 0.0, %v5740
        %v5742 = vpop.f32.mrf.mxu0
        %v5743 = vadd.f32 0.0, %v5742
        %5744 = vmatmul.bf16.gmra.mxu0 %v5361
        %v5745 = vpop.f32.mrf.mxu0
        %v5746 = vadd.f32 0.0, %v5745
        %v5747 = vpop.f32.mrf.mxu0
        %v5748 = vadd.f32 0.0, %v5747
        %5749 = vmatmul.bf16.gmra.mxu0 %v5369
        %v5750 = vpop.f32.mrf.mxu0
        %v5751 = vadd.f32 0.0, %v5750
        %v5752 = vpop.f32.mrf.mxu0
        %v5753 = vadd.f32 0.0, %v5752
        %5754 = vmatmul.bf16.gmra.mxu0 %v5377
        %v5755 = vpop.f32.mrf.mxu0
        %v5756 = vadd.f32 0.0, %v5755
        %v5757 = vpop.f32.mrf.mxu0
        %v5758 = vadd.f32 0.0, %v5757
        %5759 = vmatmul.bf16.gmra.mxu0 %v5385
        %v5760 = vpop.f32.mrf.mxu0
        %v5761 = vadd.f32 0.0, %v5760
        %v5762 = vpop.f32.mrf.mxu0
        %v5763 = vadd.f32 0.0, %v5762
        %5764 = vmatmul.bf16.gmra.mxu0 %v5393
        %v5765 = vpop.f32.mrf.mxu0
        %v5766 = vadd.f32 0.0, %v5765
        %v5767 = vpop.f32.mrf.mxu0
        %v5768 = vadd.f32 0.0, %v5767
        %5769 = vmatmul.bf16.gmra.mxu0 %v5401
        %v5770 = vpop.f32.mrf.mxu0
        %v5771 = vadd.f32 0.0, %v5770
        %v5772 = vpop.f32.mrf.mxu0
        %v5773 = vadd.f32 0.0, %v5772
        %5774 = vmatmul.bf16.gmra.mxu0 %v5409
        %v5775 = vpop.f32.mrf.mxu0
        %v5776 = vadd.f32 0.0, %v5775
        %v5777 = vpop.f32.mrf.mxu0
        %v5778 = vadd.f32 0.0, %v5777
        %5779 = vmatmul.bf16.gmra.mxu0 %v5417
        %v5780 = vpop.f32.mrf.mxu0
        %v5781 = vadd.f32 0.0, %v5780
        %v5782 = vpop.f32.mrf.mxu0
        %v5783 = vadd.f32 0.0, %v5782
        %5784 = vmatmul.bf16.gmra.mxu0 %v5425
        %v5785 = vpop.f32.mrf.mxu0
        %v5786 = vadd.f32 0.0, %v5785
        %v5787 = vpop.f32.mrf.mxu0
        %v5788 = vadd.f32 0.0, %v5787
        %5789 = vmatmul.bf16.gmra.mxu0 %v5433
        %v5790 = vpop.f32.mrf.mxu0
        %v5791 = vadd.f32 0.0, %v5790
        %v5792 = vpop.f32.mrf.mxu0
        %v5793 = vadd.f32 0.0, %v5792
        %5794 = vmatmul.bf16.gmra.mxu0 %v5441
        %v5795 = vpop.f32.mrf.mxu0
        %v5796 = vadd.f32 0.0, %v5795
        %v5797 = vpop.f32.mrf.mxu0
        %v5798 = vadd.f32 0.0, %v5797
        %5799 = vmatmul.bf16.gmra.mxu0 %v5449
        %v5800 = vpop.f32.mrf.mxu0
        %v5801 = vadd.f32 0.0, %v5800
        %v5802 = vpop.f32.mrf.mxu0
        %v5803 = vadd.f32 0.0, %v5802
        %5804 = vmatmul.bf16.gmra.mxu0 %v5457
        %v5805 = vpop.f32.mrf.mxu0
        %v5806 = vadd.f32 0.0, %v5805
        %v5807 = vpop.f32.mrf.mxu0
        %v5808 = vadd.f32 0.0, %v5807
        %5809 = vmatmul.bf16.gmra.mxu0 %v5465
        %v5810 = vpop.f32.mrf.mxu0
        %v5811 = vadd.f32 0.0, %v5810
        %v5812 = vpop.f32.mrf.mxu0
        %v5813 = vadd.f32 0.0, %v5812
        %5814 = vmatmul.bf16.gmra.mxu0 %v5473
        %v5815 = vpop.f32.mrf.mxu0
        %v5816 = vadd.f32 0.0, %v5815
        %v5817 = vpop.f32.mrf.mxu0
        %v5818 = vadd.f32 0.0, %v5817
        %5819 = vmatmul.bf16.gmra.mxu0 %v5481
        %v5820 = vpop.f32.mrf.mxu0
        %v5821 = vadd.f32 0.0, %v5820
        %v5822 = vpop.f32.mrf.mxu0
        %v5823 = vadd.f32 0.0, %v5822
        %5824 = vmatmul.bf16.gmra.mxu0 %v5489
        %v5825 = vpop.f32.mrf.mxu0
        %v5826 = vadd.f32 0.0, %v5825
        %v5827 = vpop.f32.mrf.mxu0
        %v5828 = vadd.f32 0.0, %v5827
        %5829 = vmatmul.bf16.gmra.mxu0 %v5497
        %v5830 = vpop.f32.mrf.mxu0
        %v5831 = vadd.f32 0.0, %v5830
        %v5832 = vpop.f32.mrf.mxu0
        %v5833 = vadd.f32 0.0, %v5832
        %5834 = vmatmul.bf16.gmra.mxu0 %v5505
        %v5835 = vpop.f32.mrf.mxu0
        %v5836 = vadd.f32 0.0, %v5835
        %v5837 = vpop.f32.mrf.mxu0
        %v5838 = vadd.f32 0.0, %v5837
        %5839 = vmatmul.bf16.gmra.mxu0 %v5513
        %v5840 = vpop.f32.mrf.mxu0
        %v5841 = vadd.f32 0.0, %v5840
        %v5842 = vpop.f32.mrf.mxu0
        %v5843 = vadd.f32 0.0, %v5842
        %5844 = vmatmul.bf16.gmra.mxu0 %v5521
        %v5845 = vpop.f32.mrf.mxu0
        %v5846 = vadd.f32 0.0, %v5845
        %v5847 = vpop.f32.mrf.mxu0
        %v5848 = vadd.f32 0.0, %v5847
        %5849 = vdwg.mxu0
        %5850 = vmatpush.bf16.msra.mxu0 %v4712
        %5851 = vmatpush.bf16.msra.mxu0 %v4711
        %5852 = vmatpush.bf16.msra.mxu0 %v4710
        %5853 = vmatpush.bf16.msra.mxu0 %v4709
        %5854 = vmatpush.bf16.msra.mxu0 %v4708
        %5855 = vmatpush.bf16.msra.mxu0 %v4707
        %5856 = vmatpush.bf16.msra.mxu0 %v4706
        %5857 = vmatpush.bf16.msra.mxu0 %v4705
        %5858 = vmatmul.bf16.gmra.mxu0 %v5338
        %v5859 = vpop.f32.mrf.mxu0
        %v5860 = vadd.f32 %v5731, %v5859
        %v5861 = vpop.f32.mrf.mxu0
        %v5862 = vadd.f32 %v5733, %v5861
        %5863 = vmatmul.bf16.gmra.mxu0 %v5346
        %v5864 = vpop.f32.mrf.mxu0
        %v5865 = vadd.f32 %v5736, %v5864
        %v5866 = vpop.f32.mrf.mxu0
        %v5867 = vadd.f32 %v5738, %v5866
        %5868 = vmatmul.bf16.gmra.mxu0 %v5354
        %v5869 = vpop.f32.mrf.mxu0
        %v5870 = vadd.f32 %v5741, %v5869
        %v5871 = vpop.f32.mrf.mxu0
        %v5872 = vadd.f32 %v5743, %v5871
        %5873 = vmatmul.bf16.gmra.mxu0 %v5362
        %v5874 = vpop.f32.mrf.mxu0
        %v5875 = vadd.f32 %v5746, %v5874
        %v5876 = vpop.f32.mrf.mxu0
        %v5877 = vadd.f32 %v5748, %v5876
        %5878 = vmatmul.bf16.gmra.mxu0 %v5370
        %v5879 = vpop.f32.mrf.mxu0
        %v5880 = vadd.f32 %v5751, %v5879
        %v5881 = vpop.f32.mrf.mxu0
        %v5882 = vadd.f32 %v5753, %v5881
        %5883 = vmatmul.bf16.gmra.mxu0 %v5378
        %v5884 = vpop.f32.mrf.mxu0
        %v5885 = vadd.f32 %v5756, %v5884
        %v5886 = vpop.f32.mrf.mxu0
        %v5887 = vadd.f32 %v5758, %v5886
        %5888 = vmatmul.bf16.gmra.mxu0 %v5386
        %v5889 = vpop.f32.mrf.mxu0
        %v5890 = vadd.f32 %v5761, %v5889
        %v5891 = vpop.f32.mrf.mxu0
        %v5892 = vadd.f32 %v5763, %v5891
        %5893 = vmatmul.bf16.gmra.mxu0 %v5394
        %v5894 = vpop.f32.mrf.mxu0
        %v5895 = vadd.f32 %v5766, %v5894
        %v5896 = vpop.f32.mrf.mxu0
        %v5897 = vadd.f32 %v5768, %v5896
        %5898 = vmatmul.bf16.gmra.mxu0 %v5402
        %v5899 = vpop.f32.mrf.mxu0
        %v5900 = vadd.f32 %v5771, %v5899
        %v5901 = vpop.f32.mrf.mxu0
        %v5902 = vadd.f32 %v5773, %v5901
        %5903 = vmatmul.bf16.gmra.mxu0 %v5410
        %v5904 = vpop.f32.mrf.mxu0
        %v5905 = vadd.f32 %v5776, %v5904
        %v5906 = vpop.f32.mrf.mxu0
        %v5907 = vadd.f32 %v5778, %v5906
        %5908 = vmatmul.bf16.gmra.mxu0 %v5418
        %v5909 = vpop.f32.mrf.mxu0
        %v5910 = vadd.f32 %v5781, %v5909
        %v5911 = vpop.f32.mrf.mxu0
        %v5912 = vadd.f32 %v5783, %v5911
        %5913 = vmatmul.bf16.gmra.mxu0 %v5426
        %v5914 = vpop.f32.mrf.mxu0
        %v5915 = vadd.f32 %v5786, %v5914
        %v5916 = vpop.f32.mrf.mxu0
        %v5917 = vadd.f32 %v5788, %v5916
        %5918 = vmatmul.bf16.gmra.mxu0 %v5434
        %v5919 = vpop.f32.mrf.mxu0
        %v5920 = vadd.f32 %v5791, %v5919
        %v5921 = vpop.f32.mrf.mxu0
        %v5922 = vadd.f32 %v5793, %v5921
        %5923 = vmatmul.bf16.gmra.mxu0 %v5442
        %v5924 = vpop.f32.mrf.mxu0
        %v5925 = vadd.f32 %v5796, %v5924
        %v5926 = vpop.f32.mrf.mxu0
        %v5927 = vadd.f32 %v5798, %v5926
        %5928 = vmatmul.bf16.gmra.mxu0 %v5450
        %v5929 = vpop.f32.mrf.mxu0
        %v5930 = vadd.f32 %v5801, %v5929
        %v5931 = vpop.f32.mrf.mxu0
        %v5932 = vadd.f32 %v5803, %v5931
        %5933 = vmatmul.bf16.gmra.mxu0 %v5458
        %v5934 = vpop.f32.mrf.mxu0
        %v5935 = vadd.f32 %v5806, %v5934
        %v5936 = vpop.f32.mrf.mxu0
        %v5937 = vadd.f32 %v5808, %v5936
        %5938 = vmatmul.bf16.gmra.mxu0 %v5466
        %v5939 = vpop.f32.mrf.mxu0
        %v5940 = vadd.f32 %v5811, %v5939
        %v5941 = vpop.f32.mrf.mxu0
        %v5942 = vadd.f32 %v5813, %v5941
        %5943 = vmatmul.bf16.gmra.mxu0 %v5474
        %v5944 = vpop.f32.mrf.mxu0
        %v5945 = vadd.f32 %v5816, %v5944
        %v5946 = vpop.f32.mrf.mxu0
        %v5947 = vadd.f32 %v5818, %v5946
        %5948 = vmatmul.bf16.gmra.mxu0 %v5482
        %v5949 = vpop.f32.mrf.mxu0
        %v5950 = vadd.f32 %v5821, %v5949
        %v5951 = vpop.f32.mrf.mxu0
        %v5952 = vadd.f32 %v5823, %v5951
        %5953 = vmatmul.bf16.gmra.mxu0 %v5490
        %v5954 = vpop.f32.mrf.mxu0
        %v5955 = vadd.f32 %v5826, %v5954
        %v5956 = vpop.f32.mrf.mxu0
        %v5957 = vadd.f32 %v5828, %v5956
        %5958 = vmatmul.bf16.gmra.mxu0 %v5498
        %v5959 = vpop.f32.mrf.mxu0
        %v5960 = vadd.f32 %v5831, %v5959
        %v5961 = vpop.f32.mrf.mxu0
        %v5962 = vadd.f32 %v5833, %v5961
        %5963 = vmatmul.bf16.gmra.mxu0 %v5506
        %v5964 = vpop.f32.mrf.mxu0
        %v5965 = vadd.f32 %v5836, %v5964
        %v5966 = vpop.f32.mrf.mxu0
        %v5967 = vadd.f32 %v5838, %v5966
        %5968 = vmatmul.bf16.gmra.mxu0 %v5514
        %v5969 = vpop.f32.mrf.mxu0
        %v5970 = vadd.f32 %v5841, %v5969
        %v5971 = vpop.f32.mrf.mxu0
        %v5972 = vadd.f32 %v5843, %v5971
        %5973 = vmatmul.bf16.gmra.mxu0 %v5522
        %v5974 = vpop.f32.mrf.mxu0
        %v5975 = vadd.f32 %v5846, %v5974
        %v5976 = vpop.f32.mrf.mxu0
        %v5977 = vadd.f32 %v5848, %v5976
        %5978 = vdwg.mxu0
        %5979 = vmatpush.bf16.msra.mxu0 %v4720
        %5980 = vmatpush.bf16.msra.mxu0 %v4719
        %5981 = vmatpush.bf16.msra.mxu0 %v4718
        %5982 = vmatpush.bf16.msra.mxu0 %v4717
        %5983 = vmatpush.bf16.msra.mxu0 %v4716
        %5984 = vmatpush.bf16.msra.mxu0 %v4715
        %5985 = vmatpush.bf16.msra.mxu0 %v4714
        %5986 = vmatpush.bf16.msra.mxu0 %v4713
        %5987 = vmatmul.bf16.gmra.mxu0 %v5339
        %v5988 = vpop.f32.mrf.mxu0
        %v5989 = vadd.f32 %v5860, %v5988
        %v5990 = vpop.f32.mrf.mxu0
        %v5991 = vadd.f32 %v5862, %v5990
        %5992 = vmatmul.bf16.gmra.mxu0 %v5347
        %v5993 = vpop.f32.mrf.mxu0
        %v5994 = vadd.f32 %v5865, %v5993
        %v5995 = vpop.f32.mrf.mxu0
        %v5996 = vadd.f32 %v5867, %v5995
        %5997 = vmatmul.bf16.gmra.mxu0 %v5355
        %v5998 = vpop.f32.mrf.mxu0
        %v5999 = vadd.f32 %v5870, %v5998
        %v6000 = vpop.f32.mrf.mxu0
        %v6001 = vadd.f32 %v5872, %v6000
        %6002 = vmatmul.bf16.gmra.mxu0 %v5363
        %v6003 = vpop.f32.mrf.mxu0
        %v6004 = vadd.f32 %v5875, %v6003
        %v6005 = vpop.f32.mrf.mxu0
        %v6006 = vadd.f32 %v5877, %v6005
        %6007 = vmatmul.bf16.gmra.mxu0 %v5371
        %v6008 = vpop.f32.mrf.mxu0
        %v6009 = vadd.f32 %v5880, %v6008
        %v6010 = vpop.f32.mrf.mxu0
        %v6011 = vadd.f32 %v5882, %v6010
        %6012 = vmatmul.bf16.gmra.mxu0 %v5379
        %v6013 = vpop.f32.mrf.mxu0
        %v6014 = vadd.f32 %v5885, %v6013
        %v6015 = vpop.f32.mrf.mxu0
        %v6016 = vadd.f32 %v5887, %v6015
        %6017 = vmatmul.bf16.gmra.mxu0 %v5387
        %v6018 = vpop.f32.mrf.mxu0
        %v6019 = vadd.f32 %v5890, %v6018
        %v6020 = vpop.f32.mrf.mxu0
        %v6021 = vadd.f32 %v5892, %v6020
        %6022 = vmatmul.bf16.gmra.mxu0 %v5395
        %v6023 = vpop.f32.mrf.mxu0
        %v6024 = vadd.f32 %v5895, %v6023
        %v6025 = vpop.f32.mrf.mxu0
        %v6026 = vadd.f32 %v5897, %v6025
        %6027 = vmatmul.bf16.gmra.mxu0 %v5403
        %v6028 = vpop.f32.mrf.mxu0
        %v6029 = vadd.f32 %v5900, %v6028
        %v6030 = vpop.f32.mrf.mxu0
        %v6031 = vadd.f32 %v5902, %v6030
        %6032 = vmatmul.bf16.gmra.mxu0 %v5411
        %v6033 = vpop.f32.mrf.mxu0
        %v6034 = vadd.f32 %v5905, %v6033
        %v6035 = vpop.f32.mrf.mxu0
        %v6036 = vadd.f32 %v5907, %v6035
        %6037 = vmatmul.bf16.gmra.mxu0 %v5419
        %v6038 = vpop.f32.mrf.mxu0
        %v6039 = vadd.f32 %v5910, %v6038
        %v6040 = vpop.f32.mrf.mxu0
        %v6041 = vadd.f32 %v5912, %v6040
        %6042 = vmatmul.bf16.gmra.mxu0 %v5427
        %v6043 = vpop.f32.mrf.mxu0
        %v6044 = vadd.f32 %v5915, %v6043
        %v6045 = vpop.f32.mrf.mxu0
        %v6046 = vadd.f32 %v5917, %v6045
        %6047 = vmatmul.bf16.gmra.mxu0 %v5435
        %v6048 = vpop.f32.mrf.mxu0
        %v6049 = vadd.f32 %v5920, %v6048
        %v6050 = vpop.f32.mrf.mxu0
        %v6051 = vadd.f32 %v5922, %v6050
        %6052 = vmatmul.bf16.gmra.mxu0 %v5443
        %v6053 = vpop.f32.mrf.mxu0
        %v6054 = vadd.f32 %v5925, %v6053
        %v6055 = vpop.f32.mrf.mxu0
        %v6056 = vadd.f32 %v5927, %v6055
        %6057 = vmatmul.bf16.gmra.mxu0 %v5451
        %v6058 = vpop.f32.mrf.mxu0
        %v6059 = vadd.f32 %v5930, %v6058
        %v6060 = vpop.f32.mrf.mxu0
        %v6061 = vadd.f32 %v5932, %v6060
        %6062 = vmatmul.bf16.gmra.mxu0 %v5459
        %v6063 = vpop.f32.mrf.mxu0
        %v6064 = vadd.f32 %v5935, %v6063
        %v6065 = vpop.f32.mrf.mxu0
        %v6066 = vadd.f32 %v5937, %v6065
        %6067 = vmatmul.bf16.gmra.mxu0 %v5467
        %v6068 = vpop.f32.mrf.mxu0
        %v6069 = vadd.f32 %v5940, %v6068
        %v6070 = vpop.f32.mrf.mxu0
        %v6071 = vadd.f32 %v5942, %v6070
        %6072 = vmatmul.bf16.gmra.mxu0 %v5475
        %v6073 = vpop.f32.mrf.mxu0
        %v6074 = vadd.f32 %v5945, %v6073
        %v6075 = vpop.f32.mrf.mxu0
        %v6076 = vadd.f32 %v5947, %v6075
        %6077 = vmatmul.bf16.gmra.mxu0 %v5483
        %v6078 = vpop.f32.mrf.mxu0
        %v6079 = vadd.f32 %v5950, %v6078
        %v6080 = vpop.f32.mrf.mxu0
        %v6081 = vadd.f32 %v5952, %v6080
        %6082 = vmatmul.bf16.gmra.mxu0 %v5491
        %v6083 = vpop.f32.mrf.mxu0
        %v6084 = vadd.f32 %v5955, %v6083
        %v6085 = vpop.f32.mrf.mxu0
        %v6086 = vadd.f32 %v5957, %v6085
        %6087 = vmatmul.bf16.gmra.mxu0 %v5499
        %v6088 = vpop.f32.mrf.mxu0
        %v6089 = vadd.f32 %v5960, %v6088
        %v6090 = vpop.f32.mrf.mxu0
        %v6091 = vadd.f32 %v5962, %v6090
        %6092 = vmatmul.bf16.gmra.mxu0 %v5507
        %v6093 = vpop.f32.mrf.mxu0
        %v6094 = vadd.f32 %v5965, %v6093
        %v6095 = vpop.f32.mrf.mxu0
        %v6096 = vadd.f32 %v5967, %v6095
        %6097 = vmatmul.bf16.gmra.mxu0 %v5515
        %v6098 = vpop.f32.mrf.mxu0
        %v6099 = vadd.f32 %v5970, %v6098
        %v6100 = vpop.f32.mrf.mxu0
        %v6101 = vadd.f32 %v5972, %v6100
        %6102 = vmatmul.bf16.gmra.mxu0 %v5523
        %v6103 = vpop.f32.mrf.mxu0
        %v6104 = vadd.f32 %v5975, %v6103
        %v6105 = vpop.f32.mrf.mxu0
        %v6106 = vadd.f32 %v5977, %v6105
        %6107 = vdwg.mxu0
        %6108 = vmatpush.bf16.msra.mxu0 %v4728
        %6109 = vmatpush.bf16.msra.mxu0 %v4727
        %6110 = vmatpush.bf16.msra.mxu0 %v4726
        %6111 = vmatpush.bf16.msra.mxu0 %v4725
        %6112 = vmatpush.bf16.msra.mxu0 %v4724
        %6113 = vmatpush.bf16.msra.mxu0 %v4723
        %6114 = vmatpush.bf16.msra.mxu0 %v4722
        %6115 = vmatpush.bf16.msra.mxu0 %v4721
        %6116 = vmatmul.bf16.gmra.mxu0 %v5340
        %v6117 = vpop.f32.mrf.mxu0
        %v6118 = vadd.f32 %v5989, %v6117
        %v6119 = vpop.f32.mrf.mxu0
        %v6120 = vadd.f32 %v5991, %v6119
        %6121 = vmatmul.bf16.gmra.mxu0 %v5348
        %v6122 = vpop.f32.mrf.mxu0
        %v6123 = vadd.f32 %v5994, %v6122
        %v6124 = vpop.f32.mrf.mxu0
        %v6125 = vadd.f32 %v5996, %v6124
        %6126 = vmatmul.bf16.gmra.mxu0 %v5356
        %v6127 = vpop.f32.mrf.mxu0
        %v6128 = vadd.f32 %v5999, %v6127
        %v6129 = vpop.f32.mrf.mxu0
        %v6130 = vadd.f32 %v6001, %v6129
        %6131 = vmatmul.bf16.gmra.mxu0 %v5364
        %v6132 = vpop.f32.mrf.mxu0
        %v6133 = vadd.f32 %v6004, %v6132
        %v6134 = vpop.f32.mrf.mxu0
        %v6135 = vadd.f32 %v6006, %v6134
        %6136 = vmatmul.bf16.gmra.mxu0 %v5372
        %v6137 = vpop.f32.mrf.mxu0
        %v6138 = vadd.f32 %v6009, %v6137
        %v6139 = vpop.f32.mrf.mxu0
        %v6140 = vadd.f32 %v6011, %v6139
        %6141 = vmatmul.bf16.gmra.mxu0 %v5380
        %v6142 = vpop.f32.mrf.mxu0
        %v6143 = vadd.f32 %v6014, %v6142
        %v6144 = vpop.f32.mrf.mxu0
        %v6145 = vadd.f32 %v6016, %v6144
        %6146 = vmatmul.bf16.gmra.mxu0 %v5388
        %v6147 = vpop.f32.mrf.mxu0
        %v6148 = vadd.f32 %v6019, %v6147
        %v6149 = vpop.f32.mrf.mxu0
        %v6150 = vadd.f32 %v6021, %v6149
        %6151 = vmatmul.bf16.gmra.mxu0 %v5396
        %v6152 = vpop.f32.mrf.mxu0
        %v6153 = vadd.f32 %v6024, %v6152
        %v6154 = vpop.f32.mrf.mxu0
        %v6155 = vadd.f32 %v6026, %v6154
        %6156 = vmatmul.bf16.gmra.mxu0 %v5404
        %v6157 = vpop.f32.mrf.mxu0
        %v6158 = vadd.f32 %v6029, %v6157
        %v6159 = vpop.f32.mrf.mxu0
        %v6160 = vadd.f32 %v6031, %v6159
        %6161 = vmatmul.bf16.gmra.mxu0 %v5412
        %v6162 = vpop.f32.mrf.mxu0
        %v6163 = vadd.f32 %v6034, %v6162
        %v6164 = vpop.f32.mrf.mxu0
        %v6165 = vadd.f32 %v6036, %v6164
        %6166 = vmatmul.bf16.gmra.mxu0 %v5420
        %v6167 = vpop.f32.mrf.mxu0
        %v6168 = vadd.f32 %v6039, %v6167
        %v6169 = vpop.f32.mrf.mxu0
        %v6170 = vadd.f32 %v6041, %v6169
        %6171 = vmatmul.bf16.gmra.mxu0 %v5428
        %v6172 = vpop.f32.mrf.mxu0
        %v6173 = vadd.f32 %v6044, %v6172
        %v6174 = vpop.f32.mrf.mxu0
        %v6175 = vadd.f32 %v6046, %v6174
        %6176 = vmatmul.bf16.gmra.mxu0 %v5436
        %v6177 = vpop.f32.mrf.mxu0
        %v6178 = vadd.f32 %v6049, %v6177
        %v6179 = vpop.f32.mrf.mxu0
        %v6180 = vadd.f32 %v6051, %v6179
        %6181 = vmatmul.bf16.gmra.mxu0 %v5444
        %v6182 = vpop.f32.mrf.mxu0
        %v6183 = vadd.f32 %v6054, %v6182
        %v6184 = vpop.f32.mrf.mxu0
        %v6185 = vadd.f32 %v6056, %v6184
        %6186 = vmatmul.bf16.gmra.mxu0 %v5452
        %v6187 = vpop.f32.mrf.mxu0
        %v6188 = vadd.f32 %v6059, %v6187
        %v6189 = vpop.f32.mrf.mxu0
        %v6190 = vadd.f32 %v6061, %v6189
        %6191 = vmatmul.bf16.gmra.mxu0 %v5460
        %v6192 = vpop.f32.mrf.mxu0
        %v6193 = vadd.f32 %v6064, %v6192
        %v6194 = vpop.f32.mrf.mxu0
        %v6195 = vadd.f32 %v6066, %v6194
        %6196 = vmatmul.bf16.gmra.mxu0 %v5468
        %v6197 = vpop.f32.mrf.mxu0
        %v6198 = vadd.f32 %v6069, %v6197
        %v6199 = vpop.f32.mrf.mxu0
        %v6200 = vadd.f32 %v6071, %v6199
        %6201 = vmatmul.bf16.gmra.mxu0 %v5476
        %v6202 = vpop.f32.mrf.mxu0
        %v6203 = vadd.f32 %v6074, %v6202
        %v6204 = vpop.f32.mrf.mxu0
        %v6205 = vadd.f32 %v6076, %v6204
        %6206 = vmatmul.bf16.gmra.mxu0 %v5484
        %v6207 = vpop.f32.mrf.mxu0
        %v6208 = vadd.f32 %v6079, %v6207
        %v6209 = vpop.f32.mrf.mxu0
        %v6210 = vadd.f32 %v6081, %v6209
        %6211 = vmatmul.bf16.gmra.mxu0 %v5492
        %v6212 = vpop.f32.mrf.mxu0
        %v6213 = vadd.f32 %v6084, %v6212
        %v6214 = vpop.f32.mrf.mxu0
        %v6215 = vadd.f32 %v6086, %v6214
        %6216 = vmatmul.bf16.gmra.mxu0 %v5500
        %v6217 = vpop.f32.mrf.mxu0
        %v6218 = vadd.f32 %v6089, %v6217
        %v6219 = vpop.f32.mrf.mxu0
        %v6220 = vadd.f32 %v6091, %v6219
        %6221 = vmatmul.bf16.gmra.mxu0 %v5508
        %v6222 = vpop.f32.mrf.mxu0
        %v6223 = vadd.f32 %v6094, %v6222
        %v6224 = vpop.f32.mrf.mxu0
        %v6225 = vadd.f32 %v6096, %v6224
        %6226 = vmatmul.bf16.gmra.mxu0 %v5516
        %v6227 = vpop.f32.mrf.mxu0
        %v6228 = vadd.f32 %v6099, %v6227
        %v6229 = vpop.f32.mrf.mxu0
        %v6230 = vadd.f32 %v6101, %v6229
        %6231 = vmatmul.bf16.gmra.mxu0 %v5524
        %v6232 = vpop.f32.mrf.mxu0
        %v6233 = vadd.f32 %v6104, %v6232
        %v6234 = vpop.f32.mrf.mxu0
        %v6235 = vadd.f32 %v6106, %v6234
        %6236 = vdwg.mxu0
        %6237 = vmatpush.bf16.msra.mxu0 %v4736
        %6238 = vmatpush.bf16.msra.mxu0 %v4735
        %6239 = vmatpush.bf16.msra.mxu0 %v4734
        %6240 = vmatpush.bf16.msra.mxu0 %v4733
        %6241 = vmatpush.bf16.msra.mxu0 %v4732
        %6242 = vmatpush.bf16.msra.mxu0 %v4731
        %6243 = vmatpush.bf16.msra.mxu0 %v4730
        %6244 = vmatpush.bf16.msra.mxu0 %v4729
        %6245 = vmatmul.bf16.gmra.mxu0 %v5341
        %v6246 = vpop.f32.mrf.mxu0
        %v6247 = vadd.f32 %v6118, %v6246
        %v6248 = vpop.f32.mrf.mxu0
        %v6249 = vadd.f32 %v6120, %v6248
        %6250 = vmatmul.bf16.gmra.mxu0 %v5349
        %v6251 = vpop.f32.mrf.mxu0
        %v6252 = vadd.f32 %v6123, %v6251
        %v6253 = vpop.f32.mrf.mxu0
        %v6254 = vadd.f32 %v6125, %v6253
        %6255 = vmatmul.bf16.gmra.mxu0 %v5357
        %v6256 = vpop.f32.mrf.mxu0
        %v6257 = vadd.f32 %v6128, %v6256
        %v6258 = vpop.f32.mrf.mxu0
        %v6259 = vadd.f32 %v6130, %v6258
        %6260 = vmatmul.bf16.gmra.mxu0 %v5365
        %v6261 = vpop.f32.mrf.mxu0
        %v6262 = vadd.f32 %v6133, %v6261
        %v6263 = vpop.f32.mrf.mxu0
        %v6264 = vadd.f32 %v6135, %v6263
        %6265 = vmatmul.bf16.gmra.mxu0 %v5373
        %v6266 = vpop.f32.mrf.mxu0
        %v6267 = vadd.f32 %v6138, %v6266
        %v6268 = vpop.f32.mrf.mxu0
        %v6269 = vadd.f32 %v6140, %v6268
        %6270 = vmatmul.bf16.gmra.mxu0 %v5381
        %v6271 = vpop.f32.mrf.mxu0
        %v6272 = vadd.f32 %v6143, %v6271
        %v6273 = vpop.f32.mrf.mxu0
        %v6274 = vadd.f32 %v6145, %v6273
        %6275 = vmatmul.bf16.gmra.mxu0 %v5389
        %v6276 = vpop.f32.mrf.mxu0
        %v6277 = vadd.f32 %v6148, %v6276
        %v6278 = vpop.f32.mrf.mxu0
        %v6279 = vadd.f32 %v6150, %v6278
        %6280 = vmatmul.bf16.gmra.mxu0 %v5397
        %v6281 = vpop.f32.mrf.mxu0
        %v6282 = vadd.f32 %v6153, %v6281
        %v6283 = vpop.f32.mrf.mxu0
        %v6284 = vadd.f32 %v6155, %v6283
        %6285 = vmatmul.bf16.gmra.mxu0 %v5405
        %v6286 = vpop.f32.mrf.mxu0
        %v6287 = vadd.f32 %v6158, %v6286
        %v6288 = vpop.f32.mrf.mxu0
        %v6289 = vadd.f32 %v6160, %v6288
        %6290 = vmatmul.bf16.gmra.mxu0 %v5413
        %v6291 = vpop.f32.mrf.mxu0
        %v6292 = vadd.f32 %v6163, %v6291
        %v6293 = vpop.f32.mrf.mxu0
        %v6294 = vadd.f32 %v6165, %v6293
        %6295 = vmatmul.bf16.gmra.mxu0 %v5421
        %v6296 = vpop.f32.mrf.mxu0
        %v6297 = vadd.f32 %v6168, %v6296
        %v6298 = vpop.f32.mrf.mxu0
        %v6299 = vadd.f32 %v6170, %v6298
        %6300 = vmatmul.bf16.gmra.mxu0 %v5429
        %v6301 = vpop.f32.mrf.mxu0
        %v6302 = vadd.f32 %v6173, %v6301
        %v6303 = vpop.f32.mrf.mxu0
        %v6304 = vadd.f32 %v6175, %v6303
        %6305 = vmatmul.bf16.gmra.mxu0 %v5437
        %v6306 = vpop.f32.mrf.mxu0
        %v6307 = vadd.f32 %v6178, %v6306
        %v6308 = vpop.f32.mrf.mxu0
        %v6309 = vadd.f32 %v6180, %v6308
        %6310 = vmatmul.bf16.gmra.mxu0 %v5445
        %v6311 = vpop.f32.mrf.mxu0
        %v6312 = vadd.f32 %v6183, %v6311
        %v6313 = vpop.f32.mrf.mxu0
        %v6314 = vadd.f32 %v6185, %v6313
        %6315 = vmatmul.bf16.gmra.mxu0 %v5453
        %v6316 = vpop.f32.mrf.mxu0
        %v6317 = vadd.f32 %v6188, %v6316
        %v6318 = vpop.f32.mrf.mxu0
        %v6319 = vadd.f32 %v6190, %v6318
        %6320 = vmatmul.bf16.gmra.mxu0 %v5461
        %v6321 = vpop.f32.mrf.mxu0
        %v6322 = vadd.f32 %v6193, %v6321
        %v6323 = vpop.f32.mrf.mxu0
        %v6324 = vadd.f32 %v6195, %v6323
        %6325 = vmatmul.bf16.gmra.mxu0 %v5469
        %v6326 = vpop.f32.mrf.mxu0
        %v6327 = vadd.f32 %v6198, %v6326
        %v6328 = vpop.f32.mrf.mxu0
        %v6329 = vadd.f32 %v6200, %v6328
        %6330 = vmatmul.bf16.gmra.mxu0 %v5477
        %v6331 = vpop.f32.mrf.mxu0
        %v6332 = vadd.f32 %v6203, %v6331
        %v6333 = vpop.f32.mrf.mxu0
        %v6334 = vadd.f32 %v6205, %v6333
        %6335 = vmatmul.bf16.gmra.mxu0 %v5485
        %v6336 = vpop.f32.mrf.mxu0
        %v6337 = vadd.f32 %v6208, %v6336
        %v6338 = vpop.f32.mrf.mxu0
        %v6339 = vadd.f32 %v6210, %v6338
        %6340 = vmatmul.bf16.gmra.mxu0 %v5493
        %v6341 = vpop.f32.mrf.mxu0
        %v6342 = vadd.f32 %v6213, %v6341
        %v6343 = vpop.f32.mrf.mxu0
        %v6344 = vadd.f32 %v6215, %v6343
        %6345 = vmatmul.bf16.gmra.mxu0 %v5501
        %v6346 = vpop.f32.mrf.mxu0
        %v6347 = vadd.f32 %v6218, %v6346
        %v6348 = vpop.f32.mrf.mxu0
        %v6349 = vadd.f32 %v6220, %v6348
        %6350 = vmatmul.bf16.gmra.mxu0 %v5509
        %v6351 = vpop.f32.mrf.mxu0
        %v6352 = vadd.f32 %v6223, %v6351
        %v6353 = vpop.f32.mrf.mxu0
        %v6354 = vadd.f32 %v6225, %v6353
        %6355 = vmatmul.bf16.gmra.mxu0 %v5517
        %v6356 = vpop.f32.mrf.mxu0
        %v6357 = vadd.f32 %v6228, %v6356
        %v6358 = vpop.f32.mrf.mxu0
        %v6359 = vadd.f32 %v6230, %v6358
        %6360 = vmatmul.bf16.gmra.mxu0 %v5525
        %v6361 = vpop.f32.mrf.mxu0
        %v6362 = vadd.f32 %v6233, %v6361
        %v6363 = vpop.f32.mrf.mxu0
        %v6364 = vadd.f32 %v6235, %v6363
        %6365 = vdwg.mxu0
        %6366 = vmatpush.bf16.msra.mxu0 %v4744
        %6367 = vmatpush.bf16.msra.mxu0 %v4743
        %6368 = vmatpush.bf16.msra.mxu0 %v4742
        %6369 = vmatpush.bf16.msra.mxu0 %v4741
        %6370 = vmatpush.bf16.msra.mxu0 %v4740
        %6371 = vmatpush.bf16.msra.mxu0 %v4739
        %6372 = vmatpush.bf16.msra.mxu0 %v4738
        %6373 = vmatpush.bf16.msra.mxu0 %v4737
        %6374 = vmatmul.bf16.gmra.mxu0 %v5342
        %v6375 = vpop.f32.mrf.mxu0
        %v6376 = vadd.f32 %v6247, %v6375
        %v6377 = vpop.f32.mrf.mxu0
        %v6378 = vadd.f32 %v6249, %v6377
        %6379 = vmatmul.bf16.gmra.mxu0 %v5350
        %v6380 = vpop.f32.mrf.mxu0
        %v6381 = vadd.f32 %v6252, %v6380
        %v6382 = vpop.f32.mrf.mxu0
        %v6383 = vadd.f32 %v6254, %v6382
        %6384 = vmatmul.bf16.gmra.mxu0 %v5358
        %v6385 = vpop.f32.mrf.mxu0
        %v6386 = vadd.f32 %v6257, %v6385
        %v6387 = vpop.f32.mrf.mxu0
        %v6388 = vadd.f32 %v6259, %v6387
        %6389 = vmatmul.bf16.gmra.mxu0 %v5366
        %v6390 = vpop.f32.mrf.mxu0
        %v6391 = vadd.f32 %v6262, %v6390
        %v6392 = vpop.f32.mrf.mxu0
        %v6393 = vadd.f32 %v6264, %v6392
        %6394 = vmatmul.bf16.gmra.mxu0 %v5374
        %v6395 = vpop.f32.mrf.mxu0
        %v6396 = vadd.f32 %v6267, %v6395
        %v6397 = vpop.f32.mrf.mxu0
        %v6398 = vadd.f32 %v6269, %v6397
        %6399 = vmatmul.bf16.gmra.mxu0 %v5382
        %v6400 = vpop.f32.mrf.mxu0
        %v6401 = vadd.f32 %v6272, %v6400
        %v6402 = vpop.f32.mrf.mxu0
        %v6403 = vadd.f32 %v6274, %v6402
        %6404 = vmatmul.bf16.gmra.mxu0 %v5390
        %v6405 = vpop.f32.mrf.mxu0
        %v6406 = vadd.f32 %v6277, %v6405
        %v6407 = vpop.f32.mrf.mxu0
        %v6408 = vadd.f32 %v6279, %v6407
        %6409 = vmatmul.bf16.gmra.mxu0 %v5398
        %v6410 = vpop.f32.mrf.mxu0
        %v6411 = vadd.f32 %v6282, %v6410
        %v6412 = vpop.f32.mrf.mxu0
        %v6413 = vadd.f32 %v6284, %v6412
        %6414 = vmatmul.bf16.gmra.mxu0 %v5406
        %v6415 = vpop.f32.mrf.mxu0
        %v6416 = vadd.f32 %v6287, %v6415
        %v6417 = vpop.f32.mrf.mxu0
        %v6418 = vadd.f32 %v6289, %v6417
        %6419 = vmatmul.bf16.gmra.mxu0 %v5414
        %v6420 = vpop.f32.mrf.mxu0
        %v6421 = vadd.f32 %v6292, %v6420
        %v6422 = vpop.f32.mrf.mxu0
        %v6423 = vadd.f32 %v6294, %v6422
        %6424 = vmatmul.bf16.gmra.mxu0 %v5422
        %v6425 = vpop.f32.mrf.mxu0
        %v6426 = vadd.f32 %v6297, %v6425
        %v6427 = vpop.f32.mrf.mxu0
        %v6428 = vadd.f32 %v6299, %v6427
        %6429 = vmatmul.bf16.gmra.mxu0 %v5430
        %v6430 = vpop.f32.mrf.mxu0
        %v6431 = vadd.f32 %v6302, %v6430
        %v6432 = vpop.f32.mrf.mxu0
        %v6433 = vadd.f32 %v6304, %v6432
        %6434 = vmatmul.bf16.gmra.mxu0 %v5438
        %v6435 = vpop.f32.mrf.mxu0
        %v6436 = vadd.f32 %v6307, %v6435
        %v6437 = vpop.f32.mrf.mxu0
        %v6438 = vadd.f32 %v6309, %v6437
        %6439 = vmatmul.bf16.gmra.mxu0 %v5446
        %v6440 = vpop.f32.mrf.mxu0
        %v6441 = vadd.f32 %v6312, %v6440
        %v6442 = vpop.f32.mrf.mxu0
        %v6443 = vadd.f32 %v6314, %v6442
        %6444 = vmatmul.bf16.gmra.mxu0 %v5454
        %v6445 = vpop.f32.mrf.mxu0
        %v6446 = vadd.f32 %v6317, %v6445
        %v6447 = vpop.f32.mrf.mxu0
        %v6448 = vadd.f32 %v6319, %v6447
        %6449 = vmatmul.bf16.gmra.mxu0 %v5462
        %v6450 = vpop.f32.mrf.mxu0
        %v6451 = vadd.f32 %v6322, %v6450
        %v6452 = vpop.f32.mrf.mxu0
        %v6453 = vadd.f32 %v6324, %v6452
        %6454 = vmatmul.bf16.gmra.mxu0 %v5470
        %v6455 = vpop.f32.mrf.mxu0
        %v6456 = vadd.f32 %v6327, %v6455
        %v6457 = vpop.f32.mrf.mxu0
        %v6458 = vadd.f32 %v6329, %v6457
        %6459 = vmatmul.bf16.gmra.mxu0 %v5478
        %v6460 = vpop.f32.mrf.mxu0
        %v6461 = vadd.f32 %v6332, %v6460
        %v6462 = vpop.f32.mrf.mxu0
        %v6463 = vadd.f32 %v6334, %v6462
        %6464 = vmatmul.bf16.gmra.mxu0 %v5486
        %v6465 = vpop.f32.mrf.mxu0
        %v6466 = vadd.f32 %v6337, %v6465
        %v6467 = vpop.f32.mrf.mxu0
        %v6468 = vadd.f32 %v6339, %v6467
        %6469 = vmatmul.bf16.gmra.mxu0 %v5494
        %v6470 = vpop.f32.mrf.mxu0
        %v6471 = vadd.f32 %v6342, %v6470
        %v6472 = vpop.f32.mrf.mxu0
        %v6473 = vadd.f32 %v6344, %v6472
        %6474 = vmatmul.bf16.gmra.mxu0 %v5502
        %v6475 = vpop.f32.mrf.mxu0
        %v6476 = vadd.f32 %v6347, %v6475
        %v6477 = vpop.f32.mrf.mxu0
        %v6478 = vadd.f32 %v6349, %v6477
        %6479 = vmatmul.bf16.gmra.mxu0 %v5510
        %v6480 = vpop.f32.mrf.mxu0
        %v6481 = vadd.f32 %v6352, %v6480
        %v6482 = vpop.f32.mrf.mxu0
        %v6483 = vadd.f32 %v6354, %v6482
        %6484 = vmatmul.bf16.gmra.mxu0 %v5518
        %v6485 = vpop.f32.mrf.mxu0
        %v6486 = vadd.f32 %v6357, %v6485
        %v6487 = vpop.f32.mrf.mxu0
        %v6488 = vadd.f32 %v6359, %v6487
        %6489 = vmatmul.bf16.gmra.mxu0 %v5526
        %v6490 = vpop.f32.mrf.mxu0
        %v6491 = vadd.f32 %v6362, %v6490
        %v6492 = vpop.f32.mrf.mxu0
        %v6493 = vadd.f32 %v6364, %v6492
        %6494 = vdwg.mxu0
        %6495 = vmatpush.bf16.msra.mxu0 %v4752
        %6496 = vmatpush.bf16.msra.mxu0 %v4751
        %6497 = vmatpush.bf16.msra.mxu0 %v4750
        %6498 = vmatpush.bf16.msra.mxu0 %v4749
        %6499 = vmatpush.bf16.msra.mxu0 %v4748
        %6500 = vmatpush.bf16.msra.mxu0 %v4747
        %6501 = vmatpush.bf16.msra.mxu0 %v4746
        %6502 = vmatpush.bf16.msra.mxu0 %v4745
        %6503 = vmatmul.bf16.gmra.mxu0 %v5343
        %v6504 = vpop.f32.mrf.mxu0
        %v6505 = vadd.f32 %v6376, %v6504
        %v6506 = vpop.f32.mrf.mxu0
        %v6507 = vadd.f32 %v6378, %v6506
        %6508 = vmatmul.bf16.gmra.mxu0 %v5351
        %v6509 = vpop.f32.mrf.mxu0
        %v6510 = vadd.f32 %v6381, %v6509
        %v6511 = vpop.f32.mrf.mxu0
        %v6512 = vadd.f32 %v6383, %v6511
        %6513 = vmatmul.bf16.gmra.mxu0 %v5359
        %v6514 = vpop.f32.mrf.mxu0
        %v6515 = vadd.f32 %v6386, %v6514
        %v6516 = vpop.f32.mrf.mxu0
        %v6517 = vadd.f32 %v6388, %v6516
        %6518 = vmatmul.bf16.gmra.mxu0 %v5367
        %v6519 = vpop.f32.mrf.mxu0
        %v6520 = vadd.f32 %v6391, %v6519
        %v6521 = vpop.f32.mrf.mxu0
        %v6522 = vadd.f32 %v6393, %v6521
        %6523 = vmatmul.bf16.gmra.mxu0 %v5375
        %v6524 = vpop.f32.mrf.mxu0
        %v6525 = vadd.f32 %v6396, %v6524
        %v6526 = vpop.f32.mrf.mxu0
        %v6527 = vadd.f32 %v6398, %v6526
        %6528 = vmatmul.bf16.gmra.mxu0 %v5383
        %v6529 = vpop.f32.mrf.mxu0
        %v6530 = vadd.f32 %v6401, %v6529
        %v6531 = vpop.f32.mrf.mxu0
        %v6532 = vadd.f32 %v6403, %v6531
        %6533 = vmatmul.bf16.gmra.mxu0 %v5391
        %v6534 = vpop.f32.mrf.mxu0
        %v6535 = vadd.f32 %v6406, %v6534
        %v6536 = vpop.f32.mrf.mxu0
        %v6537 = vadd.f32 %v6408, %v6536
        %6538 = vmatmul.bf16.gmra.mxu0 %v5399
        %v6539 = vpop.f32.mrf.mxu0
        %v6540 = vadd.f32 %v6411, %v6539
        %v6541 = vpop.f32.mrf.mxu0
        %v6542 = vadd.f32 %v6413, %v6541
        %6543 = vmatmul.bf16.gmra.mxu0 %v5407
        %v6544 = vpop.f32.mrf.mxu0
        %v6545 = vadd.f32 %v6416, %v6544
        %v6546 = vpop.f32.mrf.mxu0
        %v6547 = vadd.f32 %v6418, %v6546
        %6548 = vmatmul.bf16.gmra.mxu0 %v5415
        %v6549 = vpop.f32.mrf.mxu0
        %v6550 = vadd.f32 %v6421, %v6549
        %v6551 = vpop.f32.mrf.mxu0
        %v6552 = vadd.f32 %v6423, %v6551
        %6553 = vmatmul.bf16.gmra.mxu0 %v5423
        %v6554 = vpop.f32.mrf.mxu0
        %v6555 = vadd.f32 %v6426, %v6554
        %v6556 = vpop.f32.mrf.mxu0
        %v6557 = vadd.f32 %v6428, %v6556
        %6558 = vmatmul.bf16.gmra.mxu0 %v5431
        %v6559 = vpop.f32.mrf.mxu0
        %v6560 = vadd.f32 %v6431, %v6559
        %v6561 = vpop.f32.mrf.mxu0
        %v6562 = vadd.f32 %v6433, %v6561
        %6563 = vmatmul.bf16.gmra.mxu0 %v5439
        %v6564 = vpop.f32.mrf.mxu0
        %v6565 = vadd.f32 %v6436, %v6564
        %v6566 = vpop.f32.mrf.mxu0
        %v6567 = vadd.f32 %v6438, %v6566
        %6568 = vmatmul.bf16.gmra.mxu0 %v5447
        %v6569 = vpop.f32.mrf.mxu0
        %v6570 = vadd.f32 %v6441, %v6569
        %v6571 = vpop.f32.mrf.mxu0
        %v6572 = vadd.f32 %v6443, %v6571
        %6573 = vmatmul.bf16.gmra.mxu0 %v5455
        %v6574 = vpop.f32.mrf.mxu0
        %v6575 = vadd.f32 %v6446, %v6574
        %v6576 = vpop.f32.mrf.mxu0
        %v6577 = vadd.f32 %v6448, %v6576
        %6578 = vmatmul.bf16.gmra.mxu0 %v5463
        %v6579 = vpop.f32.mrf.mxu0
        %v6580 = vadd.f32 %v6451, %v6579
        %v6581 = vpop.f32.mrf.mxu0
        %v6582 = vadd.f32 %v6453, %v6581
        %6583 = vmatmul.bf16.gmra.mxu0 %v5471
        %v6584 = vpop.f32.mrf.mxu0
        %v6585 = vadd.f32 %v6456, %v6584
        %v6586 = vpop.f32.mrf.mxu0
        %v6587 = vadd.f32 %v6458, %v6586
        %6588 = vmatmul.bf16.gmra.mxu0 %v5479
        %v6589 = vpop.f32.mrf.mxu0
        %v6590 = vadd.f32 %v6461, %v6589
        %v6591 = vpop.f32.mrf.mxu0
        %v6592 = vadd.f32 %v6463, %v6591
        %6593 = vmatmul.bf16.gmra.mxu0 %v5487
        %v6594 = vpop.f32.mrf.mxu0
        %v6595 = vadd.f32 %v6466, %v6594
        %v6596 = vpop.f32.mrf.mxu0
        %v6597 = vadd.f32 %v6468, %v6596
        %6598 = vmatmul.bf16.gmra.mxu0 %v5495
        %v6599 = vpop.f32.mrf.mxu0
        %v6600 = vadd.f32 %v6471, %v6599
        %v6601 = vpop.f32.mrf.mxu0
        %v6602 = vadd.f32 %v6473, %v6601
        %6603 = vmatmul.bf16.gmra.mxu0 %v5503
        %v6604 = vpop.f32.mrf.mxu0
        %v6605 = vadd.f32 %v6476, %v6604
        %v6606 = vpop.f32.mrf.mxu0
        %v6607 = vadd.f32 %v6478, %v6606
        %6608 = vmatmul.bf16.gmra.mxu0 %v5511
        %v6609 = vpop.f32.mrf.mxu0
        %v6610 = vadd.f32 %v6481, %v6609
        %v6611 = vpop.f32.mrf.mxu0
        %v6612 = vadd.f32 %v6483, %v6611
        %6613 = vmatmul.bf16.gmra.mxu0 %v5519
        %v6614 = vpop.f32.mrf.mxu0
        %v6615 = vadd.f32 %v6486, %v6614
        %v6616 = vpop.f32.mrf.mxu0
        %v6617 = vadd.f32 %v6488, %v6616
        %6618 = vmatmul.bf16.gmra.mxu0 %v5527
        %v6619 = vpop.f32.mrf.mxu0
        %v6620 = vadd.f32 %v6491, %v6619
        %v6621 = vpop.f32.mrf.mxu0
        %v6622 = vadd.f32 %v6493, %v6621
        %6623 = vdwg.mxu0
        %6624 = vmatpush.bf16.msra.mxu0 %v4760
        %6625 = vmatpush.bf16.msra.mxu0 %v4759
        %6626 = vmatpush.bf16.msra.mxu0 %v4758
        %6627 = vmatpush.bf16.msra.mxu0 %v4757
        %6628 = vmatpush.bf16.msra.mxu0 %v4756
        %6629 = vmatpush.bf16.msra.mxu0 %v4755
        %6630 = vmatpush.bf16.msra.mxu0 %v4754
        %6631 = vmatpush.bf16.msra.mxu0 %v4753
        %6632 = vmatmul.bf16.gmra.mxu0 %v5344
        %v6633 = vpop.f32.mrf.mxu0
        %v6634 = vadd.f32 %v6505, %v6633
        %v6635 = vpop.f32.mrf.mxu0
        %v6636 = vadd.f32 %v6507, %v6635
        %6637 = vmatmul.bf16.gmra.mxu0 %v5352
        %v6638 = vpop.f32.mrf.mxu0
        %v6639 = vadd.f32 %v6510, %v6638
        %v6640 = vpop.f32.mrf.mxu0
        %v6641 = vadd.f32 %v6512, %v6640
        %6642 = vmatmul.bf16.gmra.mxu0 %v5360
        %v6643 = vpop.f32.mrf.mxu0
        %v6644 = vadd.f32 %v6515, %v6643
        %v6645 = vpop.f32.mrf.mxu0
        %v6646 = vadd.f32 %v6517, %v6645
        %6647 = vmatmul.bf16.gmra.mxu0 %v5368
        %v6648 = vpop.f32.mrf.mxu0
        %v6649 = vadd.f32 %v6520, %v6648
        %v6650 = vpop.f32.mrf.mxu0
        %v6651 = vadd.f32 %v6522, %v6650
        %6652 = vmatmul.bf16.gmra.mxu0 %v5376
        %v6653 = vpop.f32.mrf.mxu0
        %v6654 = vadd.f32 %v6525, %v6653
        %v6655 = vpop.f32.mrf.mxu0
        %v6656 = vadd.f32 %v6527, %v6655
        %6657 = vmatmul.bf16.gmra.mxu0 %v5384
        %v6658 = vpop.f32.mrf.mxu0
        %v6659 = vadd.f32 %v6530, %v6658
        %v6660 = vpop.f32.mrf.mxu0
        %v6661 = vadd.f32 %v6532, %v6660
        %6662 = vmatmul.bf16.gmra.mxu0 %v5392
        %v6663 = vpop.f32.mrf.mxu0
        %v6664 = vadd.f32 %v6535, %v6663
        %v6665 = vpop.f32.mrf.mxu0
        %v6666 = vadd.f32 %v6537, %v6665
        %6667 = vmatmul.bf16.gmra.mxu0 %v5400
        %v6668 = vpop.f32.mrf.mxu0
        %v6669 = vadd.f32 %v6540, %v6668
        %v6670 = vpop.f32.mrf.mxu0
        %v6671 = vadd.f32 %v6542, %v6670
        %6672 = vmatmul.bf16.gmra.mxu0 %v5408
        %v6673 = vpop.f32.mrf.mxu0
        %v6674 = vadd.f32 %v6545, %v6673
        %v6675 = vpop.f32.mrf.mxu0
        %v6676 = vadd.f32 %v6547, %v6675
        %6677 = vmatmul.bf16.gmra.mxu0 %v5416
        %v6678 = vpop.f32.mrf.mxu0
        %v6679 = vadd.f32 %v6550, %v6678
        %v6680 = vpop.f32.mrf.mxu0
        %v6681 = vadd.f32 %v6552, %v6680
        %6682 = vmatmul.bf16.gmra.mxu0 %v5424
        %v6683 = vpop.f32.mrf.mxu0
        %v6684 = vadd.f32 %v6555, %v6683
        %v6685 = vpop.f32.mrf.mxu0
        %v6686 = vadd.f32 %v6557, %v6685
        %6687 = vmatmul.bf16.gmra.mxu0 %v5432
        %v6688 = vpop.f32.mrf.mxu0
        %v6689 = vadd.f32 %v6560, %v6688
        %v6690 = vpop.f32.mrf.mxu0
        %v6691 = vadd.f32 %v6562, %v6690
        %6692 = vmatmul.bf16.gmra.mxu0 %v5440
        %v6693 = vpop.f32.mrf.mxu0
        %v6694 = vadd.f32 %v6565, %v6693
        %v6695 = vpop.f32.mrf.mxu0
        %v6696 = vadd.f32 %v6567, %v6695
        %6697 = vmatmul.bf16.gmra.mxu0 %v5448
        %v6698 = vpop.f32.mrf.mxu0
        %v6699 = vadd.f32 %v6570, %v6698
        %v6700 = vpop.f32.mrf.mxu0
        %v6701 = vadd.f32 %v6572, %v6700
        %6702 = vmatmul.bf16.gmra.mxu0 %v5456
        %v6703 = vpop.f32.mrf.mxu0
        %v6704 = vadd.f32 %v6575, %v6703
        %v6705 = vpop.f32.mrf.mxu0
        %v6706 = vadd.f32 %v6577, %v6705
        %6707 = vmatmul.bf16.gmra.mxu0 %v5464
        %v6708 = vpop.f32.mrf.mxu0
        %v6709 = vadd.f32 %v6580, %v6708
        %v6710 = vpop.f32.mrf.mxu0
        %v6711 = vadd.f32 %v6582, %v6710
        %6712 = vmatmul.bf16.gmra.mxu0 %v5472
        %v6713 = vpop.f32.mrf.mxu0
        %v6714 = vadd.f32 %v6585, %v6713
        %v6715 = vpop.f32.mrf.mxu0
        %v6716 = vadd.f32 %v6587, %v6715
        %6717 = vmatmul.bf16.gmra.mxu0 %v5480
        %v6718 = vpop.f32.mrf.mxu0
        %v6719 = vadd.f32 %v6590, %v6718
        %v6720 = vpop.f32.mrf.mxu0
        %v6721 = vadd.f32 %v6592, %v6720
        %6722 = vmatmul.bf16.gmra.mxu0 %v5488
        %v6723 = vpop.f32.mrf.mxu0
        %v6724 = vadd.f32 %v6595, %v6723
        %v6725 = vpop.f32.mrf.mxu0
        %v6726 = vadd.f32 %v6597, %v6725
        %6727 = vmatmul.bf16.gmra.mxu0 %v5496
        %v6728 = vpop.f32.mrf.mxu0
        %v6729 = vadd.f32 %v6600, %v6728
        %v6730 = vpop.f32.mrf.mxu0
        %v6731 = vadd.f32 %v6602, %v6730
        %6732 = vmatmul.bf16.gmra.mxu0 %v5504
        %v6733 = vpop.f32.mrf.mxu0
        %v6734 = vadd.f32 %v6605, %v6733
        %v6735 = vpop.f32.mrf.mxu0
        %v6736 = vadd.f32 %v6607, %v6735
        %6737 = vmatmul.bf16.gmra.mxu0 %v5512
        %v6738 = vpop.f32.mrf.mxu0
        %v6739 = vadd.f32 %v6610, %v6738
        %v6740 = vpop.f32.mrf.mxu0
        %v6741 = vadd.f32 %v6612, %v6740
        %6742 = vmatmul.bf16.gmra.mxu0 %v5520
        %v6743 = vpop.f32.mrf.mxu0
        %v6744 = vadd.f32 %v6615, %v6743
        %v6745 = vpop.f32.mrf.mxu0
        %v6746 = vadd.f32 %v6617, %v6745
        %6747 = vmatmul.bf16.gmra.mxu0 %v5528
        %v6748 = vpop.f32.mrf.mxu0
        %v6749 = vadd.f32 %v6620, %v6748
        %v6750 = vpop.f32.mrf.mxu0
        %v6751 = vadd.f32 %v6622, %v6750
        %6752 = vdwg.mxu0
        %v6753 = vld [vmem:[%s6] sm:$0xff]
        %v6754 = vld [vmem:[%s6 + $0x8] sm:$0xff]
        %v6755 = vld [vmem:[%s6 + $0x10] sm:$0xff]
        %v6756 = vld [vmem:[%s6 + $0x18] sm:$0xff]
        %v6757 = vld [vmem:[%s6 + $0x20] sm:$0xff]
        %v6758 = vld [vmem:[%s6 + $0x28] sm:$0xff]
        %v6759 = vld [vmem:[%s6 + $0x30] sm:$0xff]
        %v6760 = vld [vmem:[%s6 + $0x38] sm:$0xff]
        %v6761 = vld [vmem:[%s6 + $0x40] sm:$0xff]
        %v6762 = vld [vmem:[%s6 + $0x48] sm:$0xff]
        %v6763 = vld [vmem:[%s6 + $0x50] sm:$0xff]
        %v6764 = vld [vmem:[%s6 + $0x58] sm:$0xff]
        %v6765 = vld [vmem:[%s6 + $0x60] sm:$0xff]
        %v6766 = vld [vmem:[%s6 + $0x68] sm:$0xff]
        %v6767 = vld [vmem:[%s6 + $0x70] sm:$0xff]
        %v6768 = vld [vmem:[%s6 + $0x78] sm:$0xff]
        %v6769 = vld [vmem:[%s6 + $0x80] sm:$0xff]
        %v6770 = vld [vmem:[%s6 + $0x88] sm:$0xff]
        %v6771 = vld [vmem:[%s6 + $0x90] sm:$0xff]
        %v6772 = vld [vmem:[%s6 + $0x98] sm:$0xff]
        %v6773 = vld [vmem:[%s6 + $0xa0] sm:$0xff]
        %v6774 = vld [vmem:[%s6 + $0xa8] sm:$0xff]
        %v6775 = vld [vmem:[%s6 + $0xb0] sm:$0xff]
        %v6776 = vld [vmem:[%s6 + $0xb8] sm:$0xff]
        %v6777 = vld [vmem:[%s6 + $0xc0] sm:$0xff]
        %v6778 = vld [vmem:[%s6 + $0xc8] sm:$0xff]
        %v6779 = vld [vmem:[%s6 + $0xd0] sm:$0xff]
        %v6780 = vld [vmem:[%s6 + $0xd8] sm:$0xff]
        %v6781 = vld [vmem:[%s6 + $0xe0] sm:$0xff]
        %v6782 = vld [vmem:[%s6 + $0xe8] sm:$0xff]
        %v6783 = vld [vmem:[%s6 + $0xf0] sm:$0xff]
        %v6784 = vld [vmem:[%s6 + $0xf8] sm:$0xff]
        %v6785 = vld [vmem:[%s6 + $0x100] sm:$0xff]
        %v6786 = vld [vmem:[%s6 + $0x108] sm:$0xff]
        %v6787 = vld [vmem:[%s6 + $0x110] sm:$0xff]
        %v6788 = vld [vmem:[%s6 + $0x118] sm:$0xff]
        %v6789 = vld [vmem:[%s6 + $0x120] sm:$0xff]
        %v6790 = vld [vmem:[%s6 + $0x128] sm:$0xff]
        %v6791 = vld [vmem:[%s6 + $0x130] sm:$0xff]
        %v6792 = vld [vmem:[%s6 + $0x138] sm:$0xff]
        %v6793 = vld [vmem:[%s6 + $0x140] sm:$0xff]
        %v6794 = vld [vmem:[%s6 + $0x148] sm:$0xff]
        %v6795 = vld [vmem:[%s6 + $0x150] sm:$0xff]
        %v6796 = vld [vmem:[%s6 + $0x158] sm:$0xff]
        %v6797 = vld [vmem:[%s6 + $0x160] sm:$0xff]
        %v6798 = vld [vmem:[%s6 + $0x168] sm:$0xff]
        %v6799 = vld [vmem:[%s6 + $0x170] sm:$0xff]
        %v6800 = vld [vmem:[%s6 + $0x178] sm:$0xff]
        %6802 = vset.pattern.permute.xlu0 0
        %6803 = vperm.xlu0 %6802, %v6753
        %v6804 = vpop.permute.xlu0 %6803
        %6807 = vset.pattern.permute.xlu0 0
        %6808 = vperm.xlu0 %6807, %v6754
        %v6809 = vpop.permute.xlu0 %6808
        %6812 = vset.pattern.permute.xlu0 0
        %6813 = vperm.xlu0 %6812, %v6755
        %v6814 = vpop.permute.xlu0 %6813
        %6817 = vset.pattern.permute.xlu0 0
        %6818 = vperm.xlu0 %6817, %v6756
        %v6819 = vpop.permute.xlu0 %6818
        %6822 = vset.pattern.permute.xlu0 0
        %6823 = vperm.xlu0 %6822, %v6757
        %v6824 = vpop.permute.xlu0 %6823
        %6827 = vset.pattern.permute.xlu0 0
        %6828 = vperm.xlu0 %6827, %v6758
        %v6829 = vpop.permute.xlu0 %6828
        %6832 = vset.pattern.permute.xlu0 0
        %6833 = vperm.xlu0 %6832, %v6759
        %v6834 = vpop.permute.xlu0 %6833
        %6837 = vset.pattern.permute.xlu0 0
        %6838 = vperm.xlu0 %6837, %v6760
        %v6839 = vpop.permute.xlu0 %6838
        %6842 = vset.pattern.permute.xlu0 0
        %6843 = vperm.xlu0 %6842, %v6761
        %v6844 = vpop.permute.xlu0 %6843
        %6847 = vset.pattern.permute.xlu0 0
        %6848 = vperm.xlu0 %6847, %v6762
        %v6849 = vpop.permute.xlu0 %6848
        %6852 = vset.pattern.permute.xlu0 0
        %6853 = vperm.xlu0 %6852, %v6763
        %v6854 = vpop.permute.xlu0 %6853
        %6857 = vset.pattern.permute.xlu0 0
        %6858 = vperm.xlu0 %6857, %v6764
        %v6859 = vpop.permute.xlu0 %6858
        %6862 = vset.pattern.permute.xlu0 0
        %6863 = vperm.xlu0 %6862, %v6765
        %v6864 = vpop.permute.xlu0 %6863
        %6867 = vset.pattern.permute.xlu0 0
        %6868 = vperm.xlu0 %6867, %v6766
        %v6869 = vpop.permute.xlu0 %6868
        %6872 = vset.pattern.permute.xlu0 0
        %6873 = vperm.xlu0 %6872, %v6767
        %v6874 = vpop.permute.xlu0 %6873
        %6877 = vset.pattern.permute.xlu0 0
        %6878 = vperm.xlu0 %6877, %v6768
        %v6879 = vpop.permute.xlu0 %6878
        %6882 = vset.pattern.permute.xlu0 0
        %6883 = vperm.xlu0 %6882, %v6769
        %v6884 = vpop.permute.xlu0 %6883
        %6887 = vset.pattern.permute.xlu0 0
        %6888 = vperm.xlu0 %6887, %v6770
        %v6889 = vpop.permute.xlu0 %6888
        %6892 = vset.pattern.permute.xlu0 0
        %6893 = vperm.xlu0 %6892, %v6771
        %v6894 = vpop.permute.xlu0 %6893
        %6897 = vset.pattern.permute.xlu0 0
        %6898 = vperm.xlu0 %6897, %v6772
        %v6899 = vpop.permute.xlu0 %6898
        %6902 = vset.pattern.permute.xlu0 0
        %6903 = vperm.xlu0 %6902, %v6773
        %v6904 = vpop.permute.xlu0 %6903
        %6907 = vset.pattern.permute.xlu0 0
        %6908 = vperm.xlu0 %6907, %v6774
        %v6909 = vpop.permute.xlu0 %6908
        %6912 = vset.pattern.permute.xlu0 0
        %6913 = vperm.xlu0 %6912, %v6775
        %v6914 = vpop.permute.xlu0 %6913
        %6917 = vset.pattern.permute.xlu0 0
        %6918 = vperm.xlu0 %6917, %v6776
        %v6919 = vpop.permute.xlu0 %6918
        %6922 = vset.pattern.permute.xlu0 0
        %6923 = vperm.xlu0 %6922, %v6777
        %v6924 = vpop.permute.xlu0 %6923
        %6927 = vset.pattern.permute.xlu0 0
        %6928 = vperm.xlu0 %6927, %v6778
        %v6929 = vpop.permute.xlu0 %6928
        %6932 = vset.pattern.permute.xlu0 0
        %6933 = vperm.xlu0 %6932, %v6779
        %v6934 = vpop.permute.xlu0 %6933
        %6937 = vset.pattern.permute.xlu0 0
        %6938 = vperm.xlu0 %6937, %v6780
        %v6939 = vpop.permute.xlu0 %6938
        %6942 = vset.pattern.permute.xlu0 0
        %6943 = vperm.xlu0 %6942, %v6781
        %v6944 = vpop.permute.xlu0 %6943
        %6947 = vset.pattern.permute.xlu0 0
        %6948 = vperm.xlu0 %6947, %v6782
        %v6949 = vpop.permute.xlu0 %6948
        %6952 = vset.pattern.permute.xlu0 0
        %6953 = vperm.xlu0 %6952, %v6783
        %v6954 = vpop.permute.xlu0 %6953
        %6957 = vset.pattern.permute.xlu0 0
        %6958 = vperm.xlu0 %6957, %v6784
        %v6959 = vpop.permute.xlu0 %6958
        %6962 = vset.pattern.permute.xlu0 0
        %6963 = vperm.xlu0 %6962, %v6785
        %v6964 = vpop.permute.xlu0 %6963
        %6967 = vset.pattern.permute.xlu0 0
        %6968 = vperm.xlu0 %6967, %v6786
        %v6969 = vpop.permute.xlu0 %6968
        %6972 = vset.pattern.permute.xlu0 0
        %6973 = vperm.xlu0 %6972, %v6787
        %v6974 = vpop.permute.xlu0 %6973
        %6977 = vset.pattern.permute.xlu0 0
        %6978 = vperm.xlu0 %6977, %v6788
        %v6979 = vpop.permute.xlu0 %6978
        %6982 = vset.pattern.permute.xlu0 0
        %6983 = vperm.xlu0 %6982, %v6789
        %v6984 = vpop.permute.xlu0 %6983
        %6987 = vset.pattern.permute.xlu0 0
        %6988 = vperm.xlu0 %6987, %v6790
        %v6989 = vpop.permute.xlu0 %6988
        %6992 = vset.pattern.permute.xlu0 0
        %6993 = vperm.xlu0 %6992, %v6791
        %v6994 = vpop.permute.xlu0 %6993
        %6997 = vset.pattern.permute.xlu0 0
        %6998 = vperm.xlu0 %6997, %v6792
        %v6999 = vpop.permute.xlu0 %6998
        %7002 = vset.pattern.permute.xlu0 0
        %7003 = vperm.xlu0 %7002, %v6793
        %v7004 = vpop.permute.xlu0 %7003
        %7007 = vset.pattern.permute.xlu0 0
        %7008 = vperm.xlu0 %7007, %v6794
        %v7009 = vpop.permute.xlu0 %7008
        %7012 = vset.pattern.permute.xlu0 0
        %7013 = vperm.xlu0 %7012, %v6795
        %v7014 = vpop.permute.xlu0 %7013
        %7017 = vset.pattern.permute.xlu0 0
        %7018 = vperm.xlu0 %7017, %v6796
        %v7019 = vpop.permute.xlu0 %7018
        %7022 = vset.pattern.permute.xlu0 0
        %7023 = vperm.xlu0 %7022, %v6797
        %v7024 = vpop.permute.xlu0 %7023
        %7027 = vset.pattern.permute.xlu0 0
        %7028 = vperm.xlu0 %7027, %v6798
        %v7029 = vpop.permute.xlu0 %7028
        %7032 = vset.pattern.permute.xlu0 0
        %7033 = vperm.xlu0 %7032, %v6799
        %v7034 = vpop.permute.xlu0 %7033
        %7037 = vset.pattern.permute.xlu0 0
        %7038 = vperm.xlu0 %7037, %v6800
        %v7039 = vpop.permute.xlu0 %7038
        %v7041 = vmul.f32 %v6634, %v6804
        %v7042 = vmul.f32 %v6636, %v6809
        %v7043 = vmul.f32 %v6639, %v6814
        %v7044 = vmul.f32 %v6641, %v6819
        %v7045 = vmul.f32 %v6644, %v6824
        %v7046 = vmul.f32 %v6646, %v6829
        %v7047 = vmul.f32 %v6649, %v6834
        %v7048 = vmul.f32 %v6651, %v6839
        %v7049 = vmul.f32 %v6654, %v6844
        %v7050 = vmul.f32 %v6656, %v6849
        %v7051 = vmul.f32 %v6659, %v6854
        %v7052 = vmul.f32 %v6661, %v6859
        %v7053 = vmul.f32 %v6664, %v6864
        %v7054 = vmul.f32 %v6666, %v6869
        %v7055 = vmul.f32 %v6669, %v6874
        %v7056 = vmul.f32 %v6671, %v6879
        %v7057 = vmul.f32 %v6674, %v6884
        %v7058 = vmul.f32 %v6676, %v6889
        %v7059 = vmul.f32 %v6679, %v6894
        %v7060 = vmul.f32 %v6681, %v6899
        %v7061 = vmul.f32 %v6684, %v6904
        %v7062 = vmul.f32 %v6686, %v6909
        %v7063 = vmul.f32 %v6689, %v6914
        %v7064 = vmul.f32 %v6691, %v6919
        %v7065 = vmul.f32 %v6694, %v6924
        %v7066 = vmul.f32 %v6696, %v6929
        %v7067 = vmul.f32 %v6699, %v6934
        %v7068 = vmul.f32 %v6701, %v6939
        %v7069 = vmul.f32 %v6704, %v6944
        %v7070 = vmul.f32 %v6706, %v6949
        %v7071 = vmul.f32 %v6709, %v6954
        %v7072 = vmul.f32 %v6711, %v6959
        %v7073 = vmul.f32 %v6714, %v6964
        %v7074 = vmul.f32 %v6716, %v6969
        %v7075 = vmul.f32 %v6719, %v6974
        %v7076 = vmul.f32 %v6721, %v6979
        %v7077 = vmul.f32 %v6724, %v6984
        %v7078 = vmul.f32 %v6726, %v6989
        %v7079 = vmul.f32 %v6729, %v6994
        %v7080 = vmul.f32 %v6731, %v6999
        %v7081 = vmul.f32 %v6734, %v7004
        %v7082 = vmul.f32 %v6736, %v7009
        %v7083 = vmul.f32 %v6739, %v7014
        %v7084 = vmul.f32 %v6741, %v7019
        %v7085 = vmul.f32 %v6744, %v7024
        %v7086 = vmul.f32 %v6746, %v7029
        %v7087 = vmul.f32 %v6749, %v7034
        %v7088 = vmul.f32 %v6751, %v7039
        %v7089 = vld [vmem:[%s7] sm:$0xff]
        %v7090 = vld [vmem:[%s7 + $0x8] sm:$0xff]
        %v7091 = vld [vmem:[%s7 + $0x10] sm:$0xff]
        %v7092 = vld [vmem:[%s7 + $0x18] sm:$0xff]
        %v7093 = vld [vmem:[%s7 + $0x20] sm:$0xff]
        %v7094 = vld [vmem:[%s7 + $0x28] sm:$0xff]
        %v7095 = vld [vmem:[%s7 + $0x30] sm:$0xff]
        %v7096 = vld [vmem:[%s7 + $0x38] sm:$0xff]
        %v7097 = vld [vmem:[%s7 + $0x40] sm:$0xff]
        %v7098 = vld [vmem:[%s7 + $0x48] sm:$0xff]
        %v7099 = vld [vmem:[%s7 + $0x50] sm:$0xff]
        %v7100 = vld [vmem:[%s7 + $0x58] sm:$0xff]
        %v7101 = vld [vmem:[%s7 + $0x60] sm:$0xff]
        %v7102 = vld [vmem:[%s7 + $0x68] sm:$0xff]
        %v7103 = vld [vmem:[%s7 + $0x70] sm:$0xff]
        %v7104 = vld [vmem:[%s7 + $0x78] sm:$0xff]
        %v7105 = vld [vmem:[%s7 + $0x80] sm:$0xff]
        %v7106 = vld [vmem:[%s7 + $0x88] sm:$0xff]
        %v7107 = vld [vmem:[%s7 + $0x90] sm:$0xff]
        %v7108 = vld [vmem:[%s7 + $0x98] sm:$0xff]
        %v7109 = vld [vmem:[%s7 + $0xa0] sm:$0xff]
        %v7110 = vld [vmem:[%s7 + $0xa8] sm:$0xff]
        %v7111 = vld [vmem:[%s7 + $0xb0] sm:$0xff]
        %v7112 = vld [vmem:[%s7 + $0xb8] sm:$0xff]
        %v7113 = vld [vmem:[%s7 + $0xc0] sm:$0xff]
        %v7114 = vld [vmem:[%s7 + $0xc8] sm:$0xff]
        %v7115 = vld [vmem:[%s7 + $0xd0] sm:$0xff]
        %v7116 = vld [vmem:[%s7 + $0xd8] sm:$0xff]
        %v7117 = vld [vmem:[%s7 + $0xe0] sm:$0xff]
        %v7118 = vld [vmem:[%s7 + $0xe8] sm:$0xff]
        %v7119 = vld [vmem:[%s7 + $0xf0] sm:$0xff]
        %v7120 = vld [vmem:[%s7 + $0xf8] sm:$0xff]
        %v7121 = vld [vmem:[%s7 + $0x100] sm:$0xff]
        %v7122 = vld [vmem:[%s7 + $0x108] sm:$0xff]
        %v7123 = vld [vmem:[%s7 + $0x110] sm:$0xff]
        %v7124 = vld [vmem:[%s7 + $0x118] sm:$0xff]
        %v7125 = vld [vmem:[%s7 + $0x120] sm:$0xff]
        %v7126 = vld [vmem:[%s7 + $0x128] sm:$0xff]
        %v7127 = vld [vmem:[%s7 + $0x130] sm:$0xff]
        %v7128 = vld [vmem:[%s7 + $0x138] sm:$0xff]
        %v7129 = vld [vmem:[%s7 + $0x140] sm:$0xff]
        %v7130 = vld [vmem:[%s7 + $0x148] sm:$0xff]
        %v7131 = vld [vmem:[%s7 + $0x150] sm:$0xff]
        %v7132 = vld [vmem:[%s7 + $0x158] sm:$0xff]
        %v7133 = vld [vmem:[%s7 + $0x160] sm:$0xff]
        %v7134 = vld [vmem:[%s7 + $0x168] sm:$0xff]
        %v7135 = vld [vmem:[%s7 + $0x170] sm:$0xff]
        %v7136 = vld [vmem:[%s7 + $0x178] sm:$0xff]
        %7138 = vset.pattern.permute.xlu0 0
        %7139 = vperm.xlu0 %7138, %v7089
        %v7140 = vpop.permute.xlu0 %7139
        %7143 = vset.pattern.permute.xlu0 0
        %7144 = vperm.xlu0 %7143, %v7090
        %v7145 = vpop.permute.xlu0 %7144
        %7148 = vset.pattern.permute.xlu0 0
        %7149 = vperm.xlu0 %7148, %v7091
        %v7150 = vpop.permute.xlu0 %7149
        %7153 = vset.pattern.permute.xlu0 0
        %7154 = vperm.xlu0 %7153, %v7092
        %v7155 = vpop.permute.xlu0 %7154
        %7158 = vset.pattern.permute.xlu0 0
        %7159 = vperm.xlu0 %7158, %v7093
        %v7160 = vpop.permute.xlu0 %7159
        %7163 = vset.pattern.permute.xlu0 0
        %7164 = vperm.xlu0 %7163, %v7094
        %v7165 = vpop.permute.xlu0 %7164
        %7168 = vset.pattern.permute.xlu0 0
        %7169 = vperm.xlu0 %7168, %v7095
        %v7170 = vpop.permute.xlu0 %7169
        %7173 = vset.pattern.permute.xlu0 0
        %7174 = vperm.xlu0 %7173, %v7096
        %v7175 = vpop.permute.xlu0 %7174
        %7178 = vset.pattern.permute.xlu0 0
        %7179 = vperm.xlu0 %7178, %v7097
        %v7180 = vpop.permute.xlu0 %7179
        %7183 = vset.pattern.permute.xlu0 0
        %7184 = vperm.xlu0 %7183, %v7098
        %v7185 = vpop.permute.xlu0 %7184
        %7188 = vset.pattern.permute.xlu0 0
        %7189 = vperm.xlu0 %7188, %v7099
        %v7190 = vpop.permute.xlu0 %7189
        %7193 = vset.pattern.permute.xlu0 0
        %7194 = vperm.xlu0 %7193, %v7100
        %v7195 = vpop.permute.xlu0 %7194
        %7198 = vset.pattern.permute.xlu0 0
        %7199 = vperm.xlu0 %7198, %v7101
        %v7200 = vpop.permute.xlu0 %7199
        %7203 = vset.pattern.permute.xlu0 0
        %7204 = vperm.xlu0 %7203, %v7102
        %v7205 = vpop.permute.xlu0 %7204
        %7208 = vset.pattern.permute.xlu0 0
        %7209 = vperm.xlu0 %7208, %v7103
        %v7210 = vpop.permute.xlu0 %7209
        %7213 = vset.pattern.permute.xlu0 0
        %7214 = vperm.xlu0 %7213, %v7104
        %v7215 = vpop.permute.xlu0 %7214
        %7218 = vset.pattern.permute.xlu0 0
        %7219 = vperm.xlu0 %7218, %v7105
        %v7220 = vpop.permute.xlu0 %7219
        %7223 = vset.pattern.permute.xlu0 0
        %7224 = vperm.xlu0 %7223, %v7106
        %v7225 = vpop.permute.xlu0 %7224
        %7228 = vset.pattern.permute.xlu0 0
        %7229 = vperm.xlu0 %7228, %v7107
        %v7230 = vpop.permute.xlu0 %7229
        %7233 = vset.pattern.permute.xlu0 0
        %7234 = vperm.xlu0 %7233, %v7108
        %v7235 = vpop.permute.xlu0 %7234
        %7238 = vset.pattern.permute.xlu0 0
        %7239 = vperm.xlu0 %7238, %v7109
        %v7240 = vpop.permute.xlu0 %7239
        %7243 = vset.pattern.permute.xlu0 0
        %7244 = vperm.xlu0 %7243, %v7110
        %v7245 = vpop.permute.xlu0 %7244
        %7248 = vset.pattern.permute.xlu0 0
        %7249 = vperm.xlu0 %7248, %v7111
        %v7250 = vpop.permute.xlu0 %7249
        %7253 = vset.pattern.permute.xlu0 0
        %7254 = vperm.xlu0 %7253, %v7112
        %v7255 = vpop.permute.xlu0 %7254
        %7258 = vset.pattern.permute.xlu0 0
        %7259 = vperm.xlu0 %7258, %v7113
        %v7260 = vpop.permute.xlu0 %7259
        %7263 = vset.pattern.permute.xlu0 0
        %7264 = vperm.xlu0 %7263, %v7114
        %v7265 = vpop.permute.xlu0 %7264
        %7268 = vset.pattern.permute.xlu0 0
        %7269 = vperm.xlu0 %7268, %v7115
        %v7270 = vpop.permute.xlu0 %7269
        %7273 = vset.pattern.permute.xlu0 0
        %7274 = vperm.xlu0 %7273, %v7116
        %v7275 = vpop.permute.xlu0 %7274
        %7278 = vset.pattern.permute.xlu0 0
        %7279 = vperm.xlu0 %7278, %v7117
        %v7280 = vpop.permute.xlu0 %7279
        %7283 = vset.pattern.permute.xlu0 0
        %7284 = vperm.xlu0 %7283, %v7118
        %v7285 = vpop.permute.xlu0 %7284
        %7288 = vset.pattern.permute.xlu0 0
        %7289 = vperm.xlu0 %7288, %v7119
        %v7290 = vpop.permute.xlu0 %7289
        %7293 = vset.pattern.permute.xlu0 0
        %7294 = vperm.xlu0 %7293, %v7120
        %v7295 = vpop.permute.xlu0 %7294
        %7298 = vset.pattern.permute.xlu0 0
        %7299 = vperm.xlu0 %7298, %v7121
        %v7300 = vpop.permute.xlu0 %7299
        %7303 = vset.pattern.permute.xlu0 0
        %7304 = vperm.xlu0 %7303, %v7122
        %v7305 = vpop.permute.xlu0 %7304
        %7308 = vset.pattern.permute.xlu0 0
        %7309 = vperm.xlu0 %7308, %v7123
        %v7310 = vpop.permute.xlu0 %7309
        %7313 = vset.pattern.permute.xlu0 0
        %7314 = vperm.xlu0 %7313, %v7124
        %v7315 = vpop.permute.xlu0 %7314
        %7318 = vset.pattern.permute.xlu0 0
        %7319 = vperm.xlu0 %7318, %v7125
        %v7320 = vpop.permute.xlu0 %7319
        %7323 = vset.pattern.permute.xlu0 0
        %7324 = vperm.xlu0 %7323, %v7126
        %v7325 = vpop.permute.xlu0 %7324
        %7328 = vset.pattern.permute.xlu0 0
        %7329 = vperm.xlu0 %7328, %v7127
        %v7330 = vpop.permute.xlu0 %7329
        %7333 = vset.pattern.permute.xlu0 0
        %7334 = vperm.xlu0 %7333, %v7128
        %v7335 = vpop.permute.xlu0 %7334
        %7338 = vset.pattern.permute.xlu0 0
        %7339 = vperm.xlu0 %7338, %v7129
        %v7340 = vpop.permute.xlu0 %7339
        %7343 = vset.pattern.permute.xlu0 0
        %7344 = vperm.xlu0 %7343, %v7130
        %v7345 = vpop.permute.xlu0 %7344
        %7348 = vset.pattern.permute.xlu0 0
        %7349 = vperm.xlu0 %7348, %v7131
        %v7350 = vpop.permute.xlu0 %7349
        %7353 = vset.pattern.permute.xlu0 0
        %7354 = vperm.xlu0 %7353, %v7132
        %v7355 = vpop.permute.xlu0 %7354
        %7358 = vset.pattern.permute.xlu0 0
        %7359 = vperm.xlu0 %7358, %v7133
        %v7360 = vpop.permute.xlu0 %7359
        %7363 = vset.pattern.permute.xlu0 0
        %7364 = vperm.xlu0 %7363, %v7134
        %v7365 = vpop.permute.xlu0 %7364
        %7368 = vset.pattern.permute.xlu0 0
        %7369 = vperm.xlu0 %7368, %v7135
        %v7370 = vpop.permute.xlu0 %7369
        %7373 = vset.pattern.permute.xlu0 0
        %7374 = vperm.xlu0 %7373, %v7136
        %v7375 = vpop.permute.xlu0 %7374
        %v7377 = vadd.f32 %v7041, %v7140
        %v7378 = vadd.f32 %v7042, %v7145
        %v7379 = vadd.f32 %v7043, %v7150
        %v7380 = vadd.f32 %v7044, %v7155
        %v7381 = vadd.f32 %v7045, %v7160
        %v7382 = vadd.f32 %v7046, %v7165
        %v7383 = vadd.f32 %v7047, %v7170
        %v7384 = vadd.f32 %v7048, %v7175
        %v7385 = vadd.f32 %v7049, %v7180
        %v7386 = vadd.f32 %v7050, %v7185
        %v7387 = vadd.f32 %v7051, %v7190
        %v7388 = vadd.f32 %v7052, %v7195
        %v7389 = vadd.f32 %v7053, %v7200
        %v7390 = vadd.f32 %v7054, %v7205
        %v7391 = vadd.f32 %v7055, %v7210
        %v7392 = vadd.f32 %v7056, %v7215
        %v7393 = vadd.f32 %v7057, %v7220
        %v7394 = vadd.f32 %v7058, %v7225
        %v7395 = vadd.f32 %v7059, %v7230
        %v7396 = vadd.f32 %v7060, %v7235
        %v7397 = vadd.f32 %v7061, %v7240
        %v7398 = vadd.f32 %v7062, %v7245
        %v7399 = vadd.f32 %v7063, %v7250
        %v7400 = vadd.f32 %v7064, %v7255
        %v7401 = vadd.f32 %v7065, %v7260
        %v7402 = vadd.f32 %v7066, %v7265
        %v7403 = vadd.f32 %v7067, %v7270
        %v7404 = vadd.f32 %v7068, %v7275
        %v7405 = vadd.f32 %v7069, %v7280
        %v7406 = vadd.f32 %v7070, %v7285
        %v7407 = vadd.f32 %v7071, %v7290
        %v7408 = vadd.f32 %v7072, %v7295
        %v7409 = vadd.f32 %v7073, %v7300
        %v7410 = vadd.f32 %v7074, %v7305
        %v7411 = vadd.f32 %v7075, %v7310
        %v7412 = vadd.f32 %v7076, %v7315
        %v7413 = vadd.f32 %v7077, %v7320
        %v7414 = vadd.f32 %v7078, %v7325
        %v7415 = vadd.f32 %v7079, %v7330
        %v7416 = vadd.f32 %v7080, %v7335
        %v7417 = vadd.f32 %v7081, %v7340
        %v7418 = vadd.f32 %v7082, %v7345
        %v7419 = vadd.f32 %v7083, %v7350
        %v7420 = vadd.f32 %v7084, %v7355
        %v7421 = vadd.f32 %v7085, %v7360
        %v7422 = vadd.f32 %v7086, %v7365
        %v7423 = vadd.f32 %v7087, %v7370
        %v7424 = vadd.f32 %v7088, %v7375
        %v7425 = vmax.f32 %v7377, 0.0
        %v7426 = vmax.f32 %v7378, 0.0
        %v7427 = vmax.f32 %v7379, 0.0
        %v7428 = vmax.f32 %v7380, 0.0
        %v7429 = vmax.f32 %v7381, 0.0
        %v7430 = vmax.f32 %v7382, 0.0
        %v7431 = vmax.f32 %v7383, 0.0
        %v7432 = vmax.f32 %v7384, 0.0
        %v7433 = vmax.f32 %v7385, 0.0
        %v7434 = vmax.f32 %v7386, 0.0
        %v7435 = vmax.f32 %v7387, 0.0
        %v7436 = vmax.f32 %v7388, 0.0
        %v7437 = vmax.f32 %v7389, 0.0
        %v7438 = vmax.f32 %v7390, 0.0
        %v7439 = vmax.f32 %v7391, 0.0
        %v7440 = vmax.f32 %v7392, 0.0
        %v7441 = vmax.f32 %v7393, 0.0
        %v7442 = vmax.f32 %v7394, 0.0
        %v7443 = vmax.f32 %v7395, 0.0
        %v7444 = vmax.f32 %v7396, 0.0
        %v7445 = vmax.f32 %v7397, 0.0
        %v7446 = vmax.f32 %v7398, 0.0
        %v7447 = vmax.f32 %v7399, 0.0
        %v7448 = vmax.f32 %v7400, 0.0
        %v7449 = vmax.f32 %v7401, 0.0
        %v7450 = vmax.f32 %v7402, 0.0
        %v7451 = vmax.f32 %v7403, 0.0
        %v7452 = vmax.f32 %v7404, 0.0
        %v7453 = vmax.f32 %v7405, 0.0
        %v7454 = vmax.f32 %v7406, 0.0
        %v7455 = vmax.f32 %v7407, 0.0
        %v7456 = vmax.f32 %v7408, 0.0
        %v7457 = vmax.f32 %v7409, 0.0
        %v7458 = vmax.f32 %v7410, 0.0
        %v7459 = vmax.f32 %v7411, 0.0
        %v7460 = vmax.f32 %v7412, 0.0
        %v7461 = vmax.f32 %v7413, 0.0
        %v7462 = vmax.f32 %v7414, 0.0
        %v7463 = vmax.f32 %v7415, 0.0
        %v7464 = vmax.f32 %v7416, 0.0
        %v7465 = vmax.f32 %v7417, 0.0
        %v7466 = vmax.f32 %v7418, 0.0
        %v7467 = vmax.f32 %v7419, 0.0
        %v7468 = vmax.f32 %v7420, 0.0
        %v7469 = vmax.f32 %v7421, 0.0
        %v7470 = vmax.f32 %v7422, 0.0
        %v7471 = vmax.f32 %v7423, 0.0
        %v7472 = vmax.f32 %v7424, 0.0
        %v7473 = vld [vmem:[%s8] sm:$0xff]
        %v7474 = vld [vmem:[%s8 + $0x8] sm:$0xff]
        %v7475 = vld [vmem:[%s8 + $0x10] sm:$0xff]
        %v7476 = vld [vmem:[%s8 + $0x18] sm:$0xff]
        %v7477 = vld [vmem:[%s8 + $0x20] sm:$0xff]
        %v7478 = vld [vmem:[%s8 + $0x28] sm:$0xff]
        %v7479 = vld [vmem:[%s8 + $0x30] sm:$0xff]
        %v7480 = vld [vmem:[%s8 + $0x38] sm:$0xff]
        %v7481 = vld [vmem:[%s8 + $0x40] sm:$0xff]
        %v7482 = vld [vmem:[%s8 + $0x48] sm:$0xff]
        %v7483 = vld [vmem:[%s8 + $0x50] sm:$0xff]
        %v7484 = vld [vmem:[%s8 + $0x58] sm:$0xff]
        %v7485 = vld [vmem:[%s8 + $0x60] sm:$0xff]
        %v7486 = vld [vmem:[%s8 + $0x68] sm:$0xff]
        %v7487 = vld [vmem:[%s8 + $0x70] sm:$0xff]
        %v7488 = vld [vmem:[%s8 + $0x78] sm:$0xff]
        %v7489 = vld [vmem:[%s8 + $0x80] sm:$0xff]
        %v7490 = vld [vmem:[%s8 + $0x88] sm:$0xff]
        %v7491 = vld [vmem:[%s8 + $0x90] sm:$0xff]
        %v7492 = vld [vmem:[%s8 + $0x98] sm:$0xff]
        %v7493 = vld [vmem:[%s8 + $0xa0] sm:$0xff]
        %v7494 = vld [vmem:[%s8 + $0xa8] sm:$0xff]
        %v7495 = vld [vmem:[%s8 + $0xb0] sm:$0xff]
        %v7496 = vld [vmem:[%s8 + $0xb8] sm:$0xff]
        %v7497 = vld [vmem:[%s8 + $0xc0] sm:$0xff]
        %v7498 = vld [vmem:[%s8 + $0xc8] sm:$0xff]
        %v7499 = vld [vmem:[%s8 + $0xd0] sm:$0xff]
        %v7500 = vld [vmem:[%s8 + $0xd8] sm:$0xff]
        %v7501 = vld [vmem:[%s8 + $0xe0] sm:$0xff]
        %v7502 = vld [vmem:[%s8 + $0xe8] sm:$0xff]
        %v7503 = vld [vmem:[%s8 + $0xf0] sm:$0xff]
        %v7504 = vld [vmem:[%s8 + $0xf8] sm:$0xff]
        %v7505 = vld [vmem:[%s8 + $0x100] sm:$0xff]
        %v7506 = vld [vmem:[%s8 + $0x108] sm:$0xff]
        %v7507 = vld [vmem:[%s8 + $0x110] sm:$0xff]
        %v7508 = vld [vmem:[%s8 + $0x118] sm:$0xff]
        %v7509 = vld [vmem:[%s8 + $0x120] sm:$0xff]
        %v7510 = vld [vmem:[%s8 + $0x128] sm:$0xff]
        %v7511 = vld [vmem:[%s8 + $0x130] sm:$0xff]
        %v7512 = vld [vmem:[%s8 + $0x138] sm:$0xff]
        %v7513 = vld [vmem:[%s8 + $0x140] sm:$0xff]
        %v7514 = vld [vmem:[%s8 + $0x148] sm:$0xff]
        %v7515 = vld [vmem:[%s8 + $0x150] sm:$0xff]
        %v7516 = vld [vmem:[%s8 + $0x158] sm:$0xff]
        %v7517 = vld [vmem:[%s8 + $0x160] sm:$0xff]
        %v7518 = vld [vmem:[%s8 + $0x168] sm:$0xff]
        %v7519 = vld [vmem:[%s8 + $0x170] sm:$0xff]
        %v7520 = vld [vmem:[%s8 + $0x178] sm:$0xff]
        %v7521 = vmul.f32 %v7425, %v7473
        %v7522 = vmul.f32 %v7426, %v7474
        %v7523 = vmul.f32 %v7427, %v7475
        %v7524 = vmul.f32 %v7428, %v7476
        %v7525 = vmul.f32 %v7429, %v7477
        %v7526 = vmul.f32 %v7430, %v7478
        %v7527 = vmul.f32 %v7431, %v7479
        %v7528 = vmul.f32 %v7432, %v7480
        %v7529 = vmul.f32 %v7433, %v7481
        %v7530 = vmul.f32 %v7434, %v7482
        %v7531 = vmul.f32 %v7435, %v7483
        %v7532 = vmul.f32 %v7436, %v7484
        %v7533 = vmul.f32 %v7437, %v7485
        %v7534 = vmul.f32 %v7438, %v7486
        %v7535 = vmul.f32 %v7439, %v7487
        %v7536 = vmul.f32 %v7440, %v7488
        %v7537 = vmul.f32 %v7441, %v7489
        %v7538 = vmul.f32 %v7442, %v7490
        %v7539 = vmul.f32 %v7443, %v7491
        %v7540 = vmul.f32 %v7444, %v7492
        %v7541 = vmul.f32 %v7445, %v7493
        %v7542 = vmul.f32 %v7446, %v7494
        %v7543 = vmul.f32 %v7447, %v7495
        %v7544 = vmul.f32 %v7448, %v7496
        %v7545 = vmul.f32 %v7449, %v7497
        %v7546 = vmul.f32 %v7450, %v7498
        %v7547 = vmul.f32 %v7451, %v7499
        %v7548 = vmul.f32 %v7452, %v7500
        %v7549 = vmul.f32 %v7453, %v7501
        %v7550 = vmul.f32 %v7454, %v7502
        %v7551 = vmul.f32 %v7455, %v7503
        %v7552 = vmul.f32 %v7456, %v7504
        %v7553 = vmul.f32 %v7457, %v7505
        %v7554 = vmul.f32 %v7458, %v7506
        %v7555 = vmul.f32 %v7459, %v7507
        %v7556 = vmul.f32 %v7460, %v7508
        %v7557 = vmul.f32 %v7461, %v7509
        %v7558 = vmul.f32 %v7462, %v7510
        %v7559 = vmul.f32 %v7463, %v7511
        %v7560 = vmul.f32 %v7464, %v7512
        %v7561 = vmul.f32 %v7465, %v7513
        %v7562 = vmul.f32 %v7466, %v7514
        %v7563 = vmul.f32 %v7467, %v7515
        %v7564 = vmul.f32 %v7468, %v7516
        %v7565 = vmul.f32 %v7469, %v7517
        %v7566 = vmul.f32 %v7470, %v7518
        %v7567 = vmul.f32 %v7471, %v7519
        %v7568 = vmul.f32 %v7472, %v7520
        %vm7569 = vcmask 236544
        %v7570 = vsel %vm7569, %v7521, 0.0
        %7571 = vadd.xlane.f32.xlu0 %v7570
        %v7572 = vpop.xlane.xlu0 %7571
        %v7573 = vsel %vm7569, %v7522, 0.0
        %7574 = vadd.xlane.f32.xlu0 %v7573
        %v7575 = vpop.xlane.xlu0 %7574
        %v7576 = vsel %vm7569, %v7523, 0.0
        %7577 = vadd.xlane.f32.xlu0 %v7576
        %v7578 = vpop.xlane.xlu0 %7577
        %v7579 = vsel %vm7569, %v7524, 0.0
        %7580 = vadd.xlane.f32.xlu0 %v7579
        %v7581 = vpop.xlane.xlu0 %7580
        %v7582 = vsel %vm7569, %v7525, 0.0
        %7583 = vadd.xlane.f32.xlu0 %v7582
        %v7584 = vpop.xlane.xlu0 %7583
        %v7585 = vsel %vm7569, %v7526, 0.0
        %7586 = vadd.xlane.f32.xlu0 %v7585
        %v7587 = vpop.xlane.xlu0 %7586
        %v7588 = vsel %vm7569, %v7527, 0.0
        %7589 = vadd.xlane.f32.xlu0 %v7588
        %v7590 = vpop.xlane.xlu0 %7589
        %v7591 = vsel %vm7569, %v7528, 0.0
        %7592 = vadd.xlane.f32.xlu0 %v7591
        %v7593 = vpop.xlane.xlu0 %7592
        %v7594 = vsel %vm7569, %v7529, 0.0
        %7595 = vadd.xlane.f32.xlu0 %v7594
        %v7596 = vpop.xlane.xlu0 %7595
        %v7597 = vsel %vm7569, %v7530, 0.0
        %7598 = vadd.xlane.f32.xlu0 %v7597
        %v7599 = vpop.xlane.xlu0 %7598
        %v7600 = vsel %vm7569, %v7531, 0.0
        %7601 = vadd.xlane.f32.xlu0 %v7600
        %v7602 = vpop.xlane.xlu0 %7601
        %v7603 = vsel %vm7569, %v7532, 0.0
        %7604 = vadd.xlane.f32.xlu0 %v7603
        %v7605 = vpop.xlane.xlu0 %7604
        %v7606 = vsel %vm7569, %v7533, 0.0
        %7607 = vadd.xlane.f32.xlu0 %v7606
        %v7608 = vpop.xlane.xlu0 %7607
        %v7609 = vsel %vm7569, %v7534, 0.0
        %7610 = vadd.xlane.f32.xlu0 %v7609
        %v7611 = vpop.xlane.xlu0 %7610
        %v7612 = vsel %vm7569, %v7535, 0.0
        %7613 = vadd.xlane.f32.xlu0 %v7612
        %v7614 = vpop.xlane.xlu0 %7613
        %v7615 = vsel %vm7569, %v7536, 0.0
        %7616 = vadd.xlane.f32.xlu0 %v7615
        %v7617 = vpop.xlane.xlu0 %7616
        %v7618 = vsel %vm7569, %v7537, 0.0
        %7619 = vadd.xlane.f32.xlu0 %v7618
        %v7620 = vpop.xlane.xlu0 %7619
        %v7621 = vsel %vm7569, %v7538, 0.0
        %7622 = vadd.xlane.f32.xlu0 %v7621
        %v7623 = vpop.xlane.xlu0 %7622
        %v7624 = vsel %vm7569, %v7539, 0.0
        %7625 = vadd.xlane.f32.xlu0 %v7624
        %v7626 = vpop.xlane.xlu0 %7625
        %v7627 = vsel %vm7569, %v7540, 0.0
        %7628 = vadd.xlane.f32.xlu0 %v7627
        %v7629 = vpop.xlane.xlu0 %7628
        %v7630 = vsel %vm7569, %v7541, 0.0
        %7631 = vadd.xlane.f32.xlu0 %v7630
        %v7632 = vpop.xlane.xlu0 %7631
        %v7633 = vsel %vm7569, %v7542, 0.0
        %7634 = vadd.xlane.f32.xlu0 %v7633
        %v7635 = vpop.xlane.xlu0 %7634
        %v7636 = vsel %vm7569, %v7543, 0.0
        %7637 = vadd.xlane.f32.xlu0 %v7636
        %v7638 = vpop.xlane.xlu0 %7637
        %v7639 = vsel %vm7569, %v7544, 0.0
        %7640 = vadd.xlane.f32.xlu0 %v7639
        %v7641 = vpop.xlane.xlu0 %7640
        %v7642 = vsel %vm7569, %v7545, 0.0
        %7643 = vadd.xlane.f32.xlu0 %v7642
        %v7644 = vpop.xlane.xlu0 %7643
        %v7645 = vsel %vm7569, %v7546, 0.0
        %7646 = vadd.xlane.f32.xlu0 %v7645
        %v7647 = vpop.xlane.xlu0 %7646
        %v7648 = vsel %vm7569, %v7547, 0.0
        %7649 = vadd.xlane.f32.xlu0 %v7648
        %v7650 = vpop.xlane.xlu0 %7649
        %v7651 = vsel %vm7569, %v7548, 0.0
        %7652 = vadd.xlane.f32.xlu0 %v7651
        %v7653 = vpop.xlane.xlu0 %7652
        %v7654 = vsel %vm7569, %v7549, 0.0
        %7655 = vadd.xlane.f32.xlu0 %v7654
        %v7656 = vpop.xlane.xlu0 %7655
        %v7657 = vsel %vm7569, %v7550, 0.0
        %7658 = vadd.xlane.f32.xlu0 %v7657
        %v7659 = vpop.xlane.xlu0 %7658
        %v7660 = vsel %vm7569, %v7551, 0.0
        %7661 = vadd.xlane.f32.xlu0 %v7660
        %v7662 = vpop.xlane.xlu0 %7661
        %v7663 = vsel %vm7569, %v7552, 0.0
        %7664 = vadd.xlane.f32.xlu0 %v7663
        %v7665 = vpop.xlane.xlu0 %7664
        %v7666 = vsel %vm7569, %v7553, 0.0
        %7667 = vadd.xlane.f32.xlu0 %v7666
        %v7668 = vpop.xlane.xlu0 %7667
        %v7669 = vsel %vm7569, %v7554, 0.0
        %7670 = vadd.xlane.f32.xlu0 %v7669
        %v7671 = vpop.xlane.xlu0 %7670
        %v7672 = vsel %vm7569, %v7555, 0.0
        %7673 = vadd.xlane.f32.xlu0 %v7672
        %v7674 = vpop.xlane.xlu0 %7673
        %v7675 = vsel %vm7569, %v7556, 0.0
        %7676 = vadd.xlane.f32.xlu0 %v7675
        %v7677 = vpop.xlane.xlu0 %7676
        %v7678 = vsel %vm7569, %v7557, 0.0
        %7679 = vadd.xlane.f32.xlu0 %v7678
        %v7680 = vpop.xlane.xlu0 %7679
        %v7681 = vsel %vm7569, %v7558, 0.0
        %7682 = vadd.xlane.f32.xlu0 %v7681
        %v7683 = vpop.xlane.xlu0 %7682
        %v7684 = vsel %vm7569, %v7559, 0.0
        %7685 = vadd.xlane.f32.xlu0 %v7684
        %v7686 = vpop.xlane.xlu0 %7685
        %v7687 = vsel %vm7569, %v7560, 0.0
        %7688 = vadd.xlane.f32.xlu0 %v7687
        %v7689 = vpop.xlane.xlu0 %7688
        %v7690 = vsel %vm7569, %v7561, 0.0
        %7691 = vadd.xlane.f32.xlu0 %v7690
        %v7692 = vpop.xlane.xlu0 %7691
        %v7693 = vsel %vm7569, %v7562, 0.0
        %7694 = vadd.xlane.f32.xlu0 %v7693
        %v7695 = vpop.xlane.xlu0 %7694
        %v7696 = vsel %vm7569, %v7563, 0.0
        %7697 = vadd.xlane.f32.xlu0 %v7696
        %v7698 = vpop.xlane.xlu0 %7697
        %v7699 = vsel %vm7569, %v7564, 0.0
        %7700 = vadd.xlane.f32.xlu0 %v7699
        %v7701 = vpop.xlane.xlu0 %7700
        %v7702 = vsel %vm7569, %v7565, 0.0
        %7703 = vadd.xlane.f32.xlu0 %v7702
        %v7704 = vpop.xlane.xlu0 %7703
        %v7705 = vsel %vm7569, %v7566, 0.0
        %7706 = vadd.xlane.f32.xlu0 %v7705
        %v7707 = vpop.xlane.xlu0 %7706
        %v7708 = vsel %vm7569, %v7567, 0.0
        %7709 = vadd.xlane.f32.xlu0 %v7708
        %v7710 = vpop.xlane.xlu0 %7709
        %v7711 = vsel %vm7569, %v7568, 0.0
        %7712 = vadd.xlane.f32.xlu0 %v7711
        %v7713 = vpop.xlane.xlu0 %7712
        %v7714 = vadd.f32 %v7572, %v7620
        %v7715 = vadd.f32 %v7575, %v7623
        %v7716 = vadd.f32 %v7578, %v7626
        %v7717 = vadd.f32 %v7581, %v7629
        %v7718 = vadd.f32 %v7584, %v7632
        %v7719 = vadd.f32 %v7587, %v7635
        %v7720 = vadd.f32 %v7590, %v7638
        %v7721 = vadd.f32 %v7593, %v7641
        %v7722 = vadd.f32 %v7596, %v7644
        %v7723 = vadd.f32 %v7599, %v7647
        %v7724 = vadd.f32 %v7602, %v7650
        %v7725 = vadd.f32 %v7605, %v7653
        %v7726 = vadd.f32 %v7608, %v7656
        %v7727 = vadd.f32 %v7611, %v7659
        %v7728 = vadd.f32 %v7614, %v7662
        %v7729 = vadd.f32 %v7617, %v7665
        %v7730 = vadd.f32 %v7714, %v7668
        %v7731 = vadd.f32 %v7715, %v7671
        %v7732 = vadd.f32 %v7716, %v7674
        %v7733 = vadd.f32 %v7717, %v7677
        %v7734 = vadd.f32 %v7718, %v7680
        %v7735 = vadd.f32 %v7719, %v7683
        %v7736 = vadd.f32 %v7720, %v7686
        %v7737 = vadd.f32 %v7721, %v7689
        %v7738 = vadd.f32 %v7722, %v7692
        %v7739 = vadd.f32 %v7723, %v7695
        %v7740 = vadd.f32 %v7724, %v7698
        %v7741 = vadd.f32 %v7725, %v7701
        %v7742 = vadd.f32 %v7726, %v7704
        %v7743 = vadd.f32 %v7727, %v7707
        %v7744 = vadd.f32 %v7728, %v7710
        %v7745 = vadd.f32 %v7729, %v7713
        %v7746 = vmul.f32 %v3518, %v7730
        %v7747 = vmul.f32 %v3519, %v7730
        %v7748 = vmul.f32 %v3520, %v7731
        %v7749 = vmul.f32 %v3521, %v7731
        %v7750 = vmul.f32 %v3522, %v7732
        %v7751 = vmul.f32 %v3523, %v7732
        %v7752 = vmul.f32 %v3524, %v7733
        %v7753 = vmul.f32 %v3525, %v7733
        %v7754 = vmul.f32 %v3526, %v7734
        %v7755 = vmul.f32 %v3527, %v7734
        %v7756 = vmul.f32 %v3528, %v7735
        %v7757 = vmul.f32 %v3529, %v7735
        %v7758 = vmul.f32 %v3530, %v7736
        %v7759 = vmul.f32 %v3531, %v7736
        %v7760 = vmul.f32 %v3532, %v7737
        %v7761 = vmul.f32 %v3533, %v7737
        %v7762 = vmul.f32 %v3534, %v7738
        %v7763 = vmul.f32 %v3535, %v7738
        %v7764 = vmul.f32 %v3536, %v7739
        %v7765 = vmul.f32 %v3537, %v7739
        %v7766 = vmul.f32 %v3538, %v7740
        %v7767 = vmul.f32 %v3539, %v7740
        %v7768 = vmul.f32 %v3540, %v7741
        %v7769 = vmul.f32 %v3541, %v7741
        %v7770 = vmul.f32 %v3542, %v7742
        %v7771 = vmul.f32 %v3543, %v7742
        %v7772 = vmul.f32 %v3544, %v7743
        %v7773 = vmul.f32 %v3545, %v7743
        %v7774 = vmul.f32 %v3546, %v7744
        %v7775 = vmul.f32 %v3547, %v7744
        %v7776 = vmul.f32 %v3548, %v7745
        %v7777 = vmul.f32 %v3549, %v7745
        %v7778 = vld [vmem:[#allocation2] sm:$0x1]
        %v7780 = vperm.slane %v7778, 0
        %7781 = vset.pattern.permute.xlu0 0
        %7782 = vperm.xlu0 %7781, %v7780
        %v7783 = vpop.permute.xlu0 %7782
        %v7785 = vmul.f32 %v3550, %v7783
        %v7786 = vmul.f32 %v3551, %v7783
        %v7787 = vmul.f32 %v3552, %v7783
        %v7788 = vmul.f32 %v3553, %v7783
        %v7789 = vmul.f32 %v3554, %v7783
        %v7790 = vmul.f32 %v3555, %v7783
        %v7791 = vmul.f32 %v3556, %v7783
        %v7792 = vmul.f32 %v3557, %v7783
        %v7793 = vmul.f32 %v3558, %v7783
        %v7794 = vmul.f32 %v3559, %v7783
        %v7795 = vmul.f32 %v3560, %v7783
        %v7796 = vmul.f32 %v3561, %v7783
        %v7797 = vmul.f32 %v3562, %v7783
        %v7798 = vmul.f32 %v3563, %v7783
        %v7799 = vmul.f32 %v3564, %v7783
        %v7800 = vmul.f32 %v3565, %v7783
        %v7801 = vmul.f32 %v3566, %v7783
        %v7802 = vmul.f32 %v3567, %v7783
        %v7803 = vmul.f32 %v3568, %v7783
        %v7804 = vmul.f32 %v3569, %v7783
        %v7805 = vmul.f32 %v3570, %v7783
        %v7806 = vmul.f32 %v3571, %v7783
        %v7807 = vmul.f32 %v3572, %v7783
        %v7808 = vmul.f32 %v3573, %v7783
        %v7809 = vmul.f32 %v3574, %v7783
        %v7810 = vmul.f32 %v3575, %v7783
        %v7811 = vmul.f32 %v3576, %v7783
        %v7812 = vmul.f32 %v3577, %v7783
        %v7813 = vmul.f32 %v3578, %v7783
        %v7814 = vmul.f32 %v3579, %v7783
        %v7815 = vmul.f32 %v3580, %v7783
        %v7816 = vmul.f32 %v3581, %v7783
        %v7817 = vadd.f32 %v7746, %v7785
        %v7818 = vadd.f32 %v7747, %v7786
        %v7819 = vadd.f32 %v7748, %v7787
        %v7820 = vadd.f32 %v7749, %v7788
        %v7821 = vadd.f32 %v7750, %v7789
        %v7822 = vadd.f32 %v7751, %v7790
        %v7823 = vadd.f32 %v7752, %v7791
        %v7824 = vadd.f32 %v7753, %v7792
        %v7825 = vadd.f32 %v7754, %v7793
        %v7826 = vadd.f32 %v7755, %v7794
        %v7827 = vadd.f32 %v7756, %v7795
        %v7828 = vadd.f32 %v7757, %v7796
        %v7829 = vadd.f32 %v7758, %v7797
        %v7830 = vadd.f32 %v7759, %v7798
        %v7831 = vadd.f32 %v7760, %v7799
        %v7832 = vadd.f32 %v7761, %v7800
        %v7833 = vadd.f32 %v7762, %v7801
        %v7834 = vadd.f32 %v7763, %v7802
        %v7835 = vadd.f32 %v7764, %v7803
        %v7836 = vadd.f32 %v7765, %v7804
        %v7837 = vadd.f32 %v7766, %v7805
        %v7838 = vadd.f32 %v7767, %v7806
        %v7839 = vadd.f32 %v7768, %v7807
        %v7840 = vadd.f32 %v7769, %v7808
        %v7841 = vadd.f32 %v7770, %v7809
        %v7842 = vadd.f32 %v7771, %v7810
        %v7843 = vadd.f32 %v7772, %v7811
        %v7844 = vadd.f32 %v7773, %v7812
        %v7845 = vadd.f32 %v7774, %v7813
        %v7846 = vadd.f32 %v7775, %v7814
        %v7847 = vadd.f32 %v7776, %v7815
        %v7848 = vadd.f32 %v7777, %v7816
        %v7849 = vadd.f32 %v7817, %v7819
        %v7850 = vadd.f32 %v7849, %v7821
        %v7851 = vadd.f32 %v7850, %v7823
        %v7852 = vadd.f32 %v7851, %v7825
        %v7853 = vadd.f32 %v7852, %v7827
        %v7854 = vadd.f32 %v7853, %v7829
        %v7855 = vadd.f32 %v7854, %v7831
        %v7856 = vadd.f32 %v7855, %v7833
        %v7857 = vadd.f32 %v7856, %v7835
        %v7858 = vadd.f32 %v7857, %v7837
        %v7859 = vadd.f32 %v7858, %v7839
        %v7860 = vadd.f32 %v7859, %v7841
        %v7861 = vadd.f32 %v7860, %v7843
        %v7862 = vadd.f32 %v7861, %v7845
        %v7863 = vadd.f32 %v7862, %v7847
        %v7864 = vrot.slane %v7863, 4
        %v7865 = vadd.f32 %v7863, %v7864
        %v7866 = vrot.slane %v7865, 2
        %v7867 = vadd.f32 %v7865, %v7866
        %v7868 = vrot.slane %v7867, 1
        %v7869 = vadd.f32 %v7867, %v7868
        %v7870 = vsel %vm3654, %v7818, 0.0
        %v7871 = vsel %vm3654, %v7820, 0.0
        %v7872 = vadd.f32 %v7870, %v7871
        %v7873 = vsel %vm3654, %v7822, 0.0
        %v7874 = vadd.f32 %v7872, %v7873
        %v7875 = vsel %vm3654, %v7824, 0.0
        %v7876 = vadd.f32 %v7874, %v7875
        %v7877 = vsel %vm3654, %v7826, 0.0
        %v7878 = vadd.f32 %v7876, %v7877
        %v7879 = vsel %vm3654, %v7828, 0.0
        %v7880 = vadd.f32 %v7878, %v7879
        %v7881 = vsel %vm3654, %v7830, 0.0
        %v7882 = vadd.f32 %v7880, %v7881
        %v7883 = vsel %vm3654, %v7832, 0.0
        %v7884 = vadd.f32 %v7882, %v7883
        %v7885 = vsel %vm3654, %v7834, 0.0
        %v7886 = vadd.f32 %v7884, %v7885
        %v7887 = vsel %vm3654, %v7836, 0.0
        %v7888 = vadd.f32 %v7886, %v7887
        %v7889 = vsel %vm3654, %v7838, 0.0
        %v7890 = vadd.f32 %v7888, %v7889
        %v7891 = vsel %vm3654, %v7840, 0.0
        %v7892 = vadd.f32 %v7890, %v7891
        %v7893 = vsel %vm3654, %v7842, 0.0
        %v7894 = vadd.f32 %v7892, %v7893
        %v7895 = vsel %vm3654, %v7844, 0.0
        %v7896 = vadd.f32 %v7894, %v7895
        %v7897 = vsel %vm3654, %v7846, 0.0
        %v7898 = vadd.f32 %v7896, %v7897
        %v7899 = vsel %vm3654, %v7848, 0.0
        %v7900 = vadd.f32 %v7898, %v7899
        %v7901 = vrot.slane %v7900, 4
        %v7902 = vadd.f32 %v7900, %v7901
        %v7903 = vrot.slane %v7902, 2
        %v7904 = vadd.f32 %v7902, %v7903
        %v7905 = vrot.slane %v7904, 1
        %v7906 = vadd.f32 %v7904, %v7905
        %v7907 = vld [vmem:[#allocation3] sm:$0x1]
        %7909 = vset.pattern.permute.xlu0 0
        %7910 = vperm.xlu0 %7909, %v7907
        %v7911 = vpop.permute.xlu0 %7910
        %v7913 = vperm.slane %v7911, 0
        %v7914 = vadd.f32 %v7869, %v7913
        %v7915 = vadd.f32 %v7906, %v7913
        %v7916 = vxor.u32 %v7914, 2147483648
        %v7917 = vxor.u32 %v7915, 2147483648
        %v7918 = vmul.f32 %v7916, 1.442695
        %v7919 = vpow.pop %v7918
        %v7920 = vmul.f32 %v7917, 1.442695
        %v7921 = vpow.pop %v7920
        %v7922 = vadd.f32 %v7919, 1.0
        %v7923 = vadd.f32 %v7921, 1.0
        %v7924 = vrcp.pop %v7922
        %v7925 = vmul.f32 %v7922, %v7924
        %v7926 = vsub.f32 1.0, %v7925
        %v7927 = vmul.f32 %v7924, %v7926
        %v7928 = vadd.f32 %v7924, %v7927
        %vm7929 = vweird.f32 %v7922
        %vm7930 = vweird.f32 %v7924
        %vm7931 = vmor %vm7929, %vm7930
        %v7932 = vsel %vm7931, %v7924, %v7928
        %v7933 = vand.u32 2147483647, %v7922
        %vm7934 = vcmp.eq.f32.partialorder %v7933, 8.507059e+37
        %v7935 = vand.u32 %v7922, 2147483648
        %v7936 = vor.u32 1.1754944e-38, %v7935
        %v7937 = vsel %vm7934, %v7936, %v7932
        %v7938 = vmul.f32 1.0, %v7937
        %v7939 = vrcp.pop %v7923
        %v7940 = vmul.f32 %v7923, %v7939
        %v7941 = vsub.f32 1.0, %v7940
        %v7942 = vmul.f32 %v7939, %v7941
        %v7943 = vadd.f32 %v7939, %v7942
        %vm7944 = vweird.f32 %v7923
        %vm7945 = vweird.f32 %v7939
        %vm7946 = vmor %vm7944, %vm7945
        %v7947 = vsel %vm7946, %v7939, %v7943
        %v7948 = vand.u32 2147483647, %v7923
        %vm7949 = vcmp.eq.f32.partialorder %v7948, 8.507059e+37
        %v7950 = vand.u32 %v7923, 2147483648
        %v7951 = vor.u32 1.1754944e-38, %v7950
        %v7952 = vsel %vm7949, %v7951, %v7947
        %v7953 = vmul.f32 1.0, %v7952
        %v7956 = vrot.slane %v7953, 7
        %vm7957 = vcmask 1040384
        %v7958 = vsel %vm7957, %v7938, %v7956
        %v7960 = vlaneseq
        %vm7961 = vcmp.ge.s32.totalorder %v7960, 0
        %vm7962 = vcmp.lt.s32.totalorder %v7960, 144
        %vm7963 = vmand %vm7961, %vm7962
        %7964 = vst.msk [vmem:[%s418] sm:$0x3] %vm7963, %v7958
        %v7965 = vld [vmem:[%s423] sm:$0xff]
        %v7966 = vld [vmem:[%s423 + $0x8] sm:$0xff]
        %v7967 = vld [vmem:[%s423 + $0x10] sm:$0xff]
        %v7968 = vld [vmem:[%s423 + $0x18] sm:$0xff]
        %v7969 = vld [vmem:[%s423 + $0x20] sm:$0xff]
        %v7970 = vld [vmem:[%s423 + $0x28] sm:$0xff]
        %v7971 = vld [vmem:[%s423 + $0x30] sm:$0xff]
        %v7972 = vld [vmem:[%s423 + $0x38] sm:$0xff]
        %v7973 = vld [vmem:[%s423 + $0x40] sm:$0xff]
        %v7974 = vld [vmem:[%s423 + $0x48] sm:$0xff]
        %v7975 = vld [vmem:[%s423 + $0x50] sm:$0xff]
        %v7976 = vld [vmem:[%s423 + $0x58] sm:$0xff]
        %v7977 = vld [vmem:[%s423 + $0x60] sm:$0xff]
        %v7978 = vld [vmem:[%s423 + $0x68] sm:$0xff]
        %v7979 = vld [vmem:[%s423 + $0x70] sm:$0xff]
        %v7980 = vld [vmem:[%s423 + $0x78] sm:$0xff]
        %v7981 = vld [vmem:[%s423 + $0x80] sm:$0xff]
        %v7982 = vld [vmem:[%s423 + $0x88] sm:$0xff]
        %v7983 = vld [vmem:[%s423 + $0x90] sm:$0xff]
        %v7984 = vld [vmem:[%s423 + $0x98] sm:$0xff]
        %v7985 = vld [vmem:[%s423 + $0xa0] sm:$0xff]
        %v7986 = vld [vmem:[%s423 + $0xa8] sm:$0xff]
        %v7987 = vld [vmem:[%s423 + $0xb0] sm:$0xff]
        %v7988 = vld [vmem:[%s423 + $0xb8] sm:$0xff]
        %v7989 = vld [vmem:[%s423 + $0xc0] sm:$0xff]
        %v7990 = vld [vmem:[%s423 + $0xc8] sm:$0xff]
        %v7991 = vld [vmem:[%s423 + $0xd0] sm:$0xff]
        %v7992 = vld [vmem:[%s423 + $0xd8] sm:$0xff]
        %v7993 = vld [vmem:[%s423 + $0xe0] sm:$0xff]
        %v7994 = vld [vmem:[%s423 + $0xe8] sm:$0xff]
        %v7995 = vld [vmem:[%s423 + $0xf0] sm:$0xff]
        %v7996 = vld [vmem:[%s423 + $0xf8] sm:$0xff]
        %v7997 = vld [vmem:[%s423 + $0x100] sm:$0xff]
        %v7998 = vld [vmem:[%s423 + $0x108] sm:$0xff]
        %v7999 = vld [vmem:[%s423 + $0x110] sm:$0xff]
        %v8000 = vld [vmem:[%s423 + $0x118] sm:$0xff]
        %v8001 = vld [vmem:[%s423 + $0x120] sm:$0xff]
        %v8002 = vld [vmem:[%s423 + $0x128] sm:$0xff]
        %v8003 = vld [vmem:[%s423 + $0x130] sm:$0xff]
        %v8004 = vld [vmem:[%s423 + $0x138] sm:$0xff]
        %v8005 = vld [vmem:[%s423 + $0x140] sm:$0xff]
        %v8006 = vld [vmem:[%s423 + $0x148] sm:$0xff]
        %v8007 = vld [vmem:[%s423 + $0x150] sm:$0xff]
        %v8008 = vld [vmem:[%s423 + $0x158] sm:$0xff]
        %v8009 = vld [vmem:[%s423 + $0x160] sm:$0xff]
        %v8010 = vld [vmem:[%s423 + $0x168] sm:$0xff]
        %v8011 = vld [vmem:[%s423 + $0x170] sm:$0xff]
        %v8012 = vld [vmem:[%s423 + $0x178] sm:$0xff]
        %v8013 = vld [vmem:[%s423 + $0x180] sm:$0xff]
        %v8014 = vld [vmem:[%s423 + $0x188] sm:$0xff]
        %v8015 = vld [vmem:[%s423 + $0x190] sm:$0xff]
        %v8016 = vld [vmem:[%s423 + $0x198] sm:$0xff]
        %v8017 = vld [vmem:[%s423 + $0x1a0] sm:$0xff]
        %v8018 = vld [vmem:[%s423 + $0x1a8] sm:$0xff]
        %v8019 = vld [vmem:[%s423 + $0x1b0] sm:$0xff]
        %v8020 = vld [vmem:[%s423 + $0x1b8] sm:$0xff]
        %v8021 = vld [vmem:[%s423 + $0x1c0] sm:$0xff]
        %v8022 = vld [vmem:[%s423 + $0x1c8] sm:$0xff]
        %v8023 = vld [vmem:[%s423 + $0x1d0] sm:$0xff]
        %v8024 = vld [vmem:[%s423 + $0x1d8] sm:$0xff]
        %v8025 = vld [vmem:[%s423 + $0x1e0] sm:$0xff]
        %v8026 = vld [vmem:[%s423 + $0x1e8] sm:$0xff]
        %v8027 = vld [vmem:[%s423 + $0x1f0] sm:$0xff]
        %v8028 = vld [vmem:[%s423 + $0x1f8] sm:$0xff]
        %v8029 = vld [vmem:[%s423 + $0x200] sm:$0xff]
        %v8030 = vld [vmem:[%s423 + $0x208] sm:$0xff]
        %v8031 = vld [vmem:[%s423 + $0x210] sm:$0xff]
        %v8032 = vld [vmem:[%s423 + $0x218] sm:$0xff]
        %v8033 = vld [vmem:[%s423 + $0x220] sm:$0xff]
        %v8034 = vld [vmem:[%s423 + $0x228] sm:$0xff]
        %v8035 = vld [vmem:[%s423 + $0x230] sm:$0xff]
        %v8036 = vld [vmem:[%s423 + $0x238] sm:$0xff]
        %v8037 = vld [vmem:[%s423 + $0x240] sm:$0xff]
        %v8038 = vld [vmem:[%s423 + $0x248] sm:$0xff]
        %v8039 = vld [vmem:[%s423 + $0x250] sm:$0xff]
        %v8040 = vld [vmem:[%s423 + $0x258] sm:$0xff]
        %v8041 = vld [vmem:[%s423 + $0x260] sm:$0xff]
        %v8042 = vld [vmem:[%s423 + $0x268] sm:$0xff]
        %v8043 = vld [vmem:[%s423 + $0x270] sm:$0xff]
        %v8044 = vld [vmem:[%s423 + $0x278] sm:$0xff]
        %v8045 = vld [vmem:[%s423 + $0x280] sm:$0xff]
        %v8046 = vld [vmem:[%s423 + $0x288] sm:$0xff]
        %v8047 = vld [vmem:[%s423 + $0x290] sm:$0xff]
        %v8048 = vld [vmem:[%s423 + $0x298] sm:$0xff]
        %v8049 = vld [vmem:[%s423 + $0x2a0] sm:$0xff]
        %v8050 = vld [vmem:[%s423 + $0x2a8] sm:$0xff]
        %v8051 = vld [vmem:[%s423 + $0x2b0] sm:$0xff]
        %v8052 = vld [vmem:[%s423 + $0x2b8] sm:$0xff]
        %v8053 = vld [vmem:[%s423 + $0x2c0] sm:$0xff]
        %v8054 = vld [vmem:[%s423 + $0x2c8] sm:$0xff]
        %v8055 = vld [vmem:[%s423 + $0x2d0] sm:$0xff]
        %v8056 = vld [vmem:[%s423 + $0x2d8] sm:$0xff]
        %v8057 = vld [vmem:[%s423 + $0x2e0] sm:$0xff]
        %v8058 = vld [vmem:[%s423 + $0x2e8] sm:$0xff]
        %v8059 = vld [vmem:[%s423 + $0x2f0] sm:$0xff]
        %v8060 = vld [vmem:[%s423 + $0x2f8] sm:$0xff]
        %v8061 = vld [vmem:[%s423 + $0x300] sm:$0xff]
        %v8062 = vld [vmem:[%s423 + $0x308] sm:$0xff]
        %v8063 = vld [vmem:[%s423 + $0x310] sm:$0xff]
        %v8064 = vld [vmem:[%s423 + $0x318] sm:$0xff]
        %v8065 = vld [vmem:[%s423 + $0x320] sm:$0xff]
        %v8066 = vld [vmem:[%s423 + $0x328] sm:$0xff]
        %v8067 = vld [vmem:[%s423 + $0x330] sm:$0xff]
        %v8068 = vld [vmem:[%s423 + $0x338] sm:$0xff]
        %v8069 = vld [vmem:[%s423 + $0x340] sm:$0xff]
        %v8070 = vld [vmem:[%s423 + $0x348] sm:$0xff]
        %v8071 = vld [vmem:[%s423 + $0x350] sm:$0xff]
        %v8072 = vld [vmem:[%s423 + $0x358] sm:$0xff]
        %v8073 = vld [vmem:[%s423 + $0x360] sm:$0xff]
        %v8074 = vld [vmem:[%s423 + $0x368] sm:$0xff]
        %v8075 = vld [vmem:[%s423 + $0x370] sm:$0xff]
        %v8076 = vld [vmem:[%s423 + $0x378] sm:$0xff]
        %v8077 = vld [vmem:[%s423 + $0x380] sm:$0xff]
        %v8078 = vld [vmem:[%s423 + $0x388] sm:$0xff]
        %v8079 = vld [vmem:[%s423 + $0x390] sm:$0xff]
        %v8080 = vld [vmem:[%s423 + $0x398] sm:$0xff]
        %v8081 = vld [vmem:[%s423 + $0x3a0] sm:$0xff]
        %v8082 = vld [vmem:[%s423 + $0x3a8] sm:$0xff]
        %v8083 = vld [vmem:[%s423 + $0x3b0] sm:$0xff]
        %v8084 = vld [vmem:[%s423 + $0x3b8] sm:$0xff]
        %v8085 = vld [vmem:[%s423 + $0x3c0] sm:$0xff]
        %v8086 = vld [vmem:[%s423 + $0x3c8] sm:$0xff]
        %v8087 = vld [vmem:[%s423 + $0x3d0] sm:$0xff]
        %v8088 = vld [vmem:[%s423 + $0x3d8] sm:$0xff]
        %v8089 = vld [vmem:[%s423 + $0x3e0] sm:$0xff]
        %v8090 = vld [vmem:[%s423 + $0x3e8] sm:$0xff]
        %v8091 = vld [vmem:[%s423 + $0x3f0] sm:$0xff]
        %v8092 = vld [vmem:[%s423 + $0x3f8] sm:$0xff]
        %v8093 = vld [vmem:[%s423 + $0x400] sm:$0xff]
        %v8094 = vld [vmem:[%s423 + $0x408] sm:$0xff]
        %v8095 = vld [vmem:[%s423 + $0x410] sm:$0xff]
        %v8096 = vld [vmem:[%s423 + $0x418] sm:$0xff]
        %v8097 = vld [vmem:[%s423 + $0x420] sm:$0xff]
        %v8098 = vld [vmem:[%s423 + $0x428] sm:$0xff]
        %v8099 = vld [vmem:[%s423 + $0x430] sm:$0xff]
        %v8100 = vld [vmem:[%s423 + $0x438] sm:$0xff]
        %v8101 = vld [vmem:[%s423 + $0x440] sm:$0xff]
        %v8102 = vld [vmem:[%s423 + $0x448] sm:$0xff]
        %v8103 = vld [vmem:[%s423 + $0x450] sm:$0xff]
        %v8104 = vld [vmem:[%s423 + $0x458] sm:$0xff]
        %v8105 = vld [vmem:[%s423 + $0x460] sm:$0xff]
        %v8106 = vld [vmem:[%s423 + $0x468] sm:$0xff]
        %v8107 = vld [vmem:[%s423 + $0x470] sm:$0xff]
        %v8108 = vld [vmem:[%s423 + $0x478] sm:$0xff]
        %v8109 = vld [vmem:[%s423 + $0x480] sm:$0xff]
        %v8110 = vld [vmem:[%s423 + $0x488] sm:$0xff]
        %v8111 = vld [vmem:[%s423 + $0x490] sm:$0xff]
        %v8112 = vld [vmem:[%s423 + $0x498] sm:$0xff]
        %v8113 = vld [vmem:[%s423 + $0x4a0] sm:$0xff]
        %v8114 = vld [vmem:[%s423 + $0x4a8] sm:$0xff]
        %v8115 = vld [vmem:[%s423 + $0x4b0] sm:$0xff]
        %v8116 = vld [vmem:[%s423 + $0x4b8] sm:$0xff]
        %v8117 = vld [vmem:[%s423 + $0x4c0] sm:$0xff]
        %v8118 = vld [vmem:[%s423 + $0x4c8] sm:$0xff]
        %v8119 = vld [vmem:[%s423 + $0x4d0] sm:$0xff]
        %v8120 = vld [vmem:[%s423 + $0x4d8] sm:$0xff]
        %v8121 = vld [vmem:[%s423 + $0x4e0] sm:$0xff]
        %v8122 = vld [vmem:[%s423 + $0x4e8] sm:$0xff]
        %v8123 = vld [vmem:[%s423 + $0x4f0] sm:$0xff]
        %v8124 = vld [vmem:[%s423 + $0x4f8] sm:$0xff]
        %v8125 = vld [vmem:[%s423 + $0x500] sm:$0xff]
        %v8126 = vld [vmem:[%s423 + $0x508] sm:$0xff]
        %v8127 = vld [vmem:[%s423 + $0x510] sm:$0xff]
        %v8128 = vld [vmem:[%s423 + $0x518] sm:$0xff]
        %v8129 = vld [vmem:[%s423 + $0x520] sm:$0xff]
        %v8130 = vld [vmem:[%s423 + $0x528] sm:$0xff]
        %v8131 = vld [vmem:[%s423 + $0x530] sm:$0xff]
        %v8132 = vld [vmem:[%s423 + $0x538] sm:$0xff]
        %v8133 = vld [vmem:[%s423 + $0x540] sm:$0xff]
        %v8134 = vld [vmem:[%s423 + $0x548] sm:$0xff]
        %v8135 = vld [vmem:[%s423 + $0x550] sm:$0xff]
        %v8136 = vld [vmem:[%s423 + $0x558] sm:$0xff]
        %v8137 = vld [vmem:[%s423 + $0x560] sm:$0xff]
        %v8138 = vld [vmem:[%s423 + $0x568] sm:$0xff]
        %v8139 = vld [vmem:[%s423 + $0x570] sm:$0xff]
        %v8140 = vld [vmem:[%s423 + $0x578] sm:$0xff]
        %v8141 = vld [vmem:[%s423 + $0x580] sm:$0xff]
        %v8142 = vld [vmem:[%s423 + $0x588] sm:$0xff]
        %v8143 = vld [vmem:[%s423 + $0x590] sm:$0xff]
        %v8144 = vld [vmem:[%s423 + $0x598] sm:$0xff]
        %v8145 = vld [vmem:[%s423 + $0x5a0] sm:$0xff]
        %v8146 = vld [vmem:[%s423 + $0x5a8] sm:$0xff]
        %v8147 = vld [vmem:[%s423 + $0x5b0] sm:$0xff]
        %v8148 = vld [vmem:[%s423 + $0x5b8] sm:$0xff]
        %v8149 = vld [vmem:[%s423 + $0x5c0] sm:$0xff]
        %v8150 = vld [vmem:[%s423 + $0x5c8] sm:$0xff]
        %v8151 = vld [vmem:[%s423 + $0x5d0] sm:$0xff]
        %v8152 = vld [vmem:[%s423 + $0x5d8] sm:$0xff]
        %v8153 = vld [vmem:[%s423 + $0x5e0] sm:$0xff]
        %v8154 = vld [vmem:[%s423 + $0x5e8] sm:$0xff]
        %v8155 = vld [vmem:[%s423 + $0x5f0] sm:$0xff]
        %v8156 = vld [vmem:[%s423 + $0x5f8] sm:$0xff]
        %v8157 = vld [vmem:[%s423 + $0x600] sm:$0xff]
        %v8158 = vld [vmem:[%s423 + $0x608] sm:$0xff]
        %v8159 = vld [vmem:[%s423 + $0x610] sm:$0xff]
        %v8160 = vld [vmem:[%s423 + $0x618] sm:$0xff]
        %v8161 = vld [vmem:[%s423 + $0x620] sm:$0xff]
        %v8162 = vld [vmem:[%s423 + $0x628] sm:$0xff]
        %v8163 = vld [vmem:[%s423 + $0x630] sm:$0xff]
        %v8164 = vld [vmem:[%s423 + $0x638] sm:$0xff]
        %v8165 = vld [vmem:[%s423 + $0x640] sm:$0xff]
        %v8166 = vld [vmem:[%s423 + $0x648] sm:$0xff]
        %v8167 = vld [vmem:[%s423 + $0x650] sm:$0xff]
        %v8168 = vld [vmem:[%s423 + $0x658] sm:$0xff]
        %v8169 = vld [vmem:[%s423 + $0x660] sm:$0xff]
        %v8170 = vld [vmem:[%s423 + $0x668] sm:$0xff]
        %v8171 = vld [vmem:[%s423 + $0x670] sm:$0xff]
        %v8172 = vld [vmem:[%s423 + $0x678] sm:$0xff]
        %v8173 = vld [vmem:[%s423 + $0x680] sm:$0xff]
        %v8174 = vld [vmem:[%s423 + $0x688] sm:$0xff]
        %v8175 = vld [vmem:[%s423 + $0x690] sm:$0xff]
        %v8176 = vld [vmem:[%s423 + $0x698] sm:$0xff]
        %v8177 = vld [vmem:[%s423 + $0x6a0] sm:$0xff]
        %v8178 = vld [vmem:[%s423 + $0x6a8] sm:$0xff]
        %v8179 = vld [vmem:[%s423 + $0x6b0] sm:$0xff]
        %v8180 = vld [vmem:[%s423 + $0x6b8] sm:$0xff]
        %v8181 = vld [vmem:[%s423 + $0x6c0] sm:$0xff]
        %v8182 = vld [vmem:[%s423 + $0x6c8] sm:$0xff]
        %v8183 = vld [vmem:[%s423 + $0x6d0] sm:$0xff]
        %v8184 = vld [vmem:[%s423 + $0x6d8] sm:$0xff]
        %v8185 = vld [vmem:[%s423 + $0x6e0] sm:$0xff]
        %v8186 = vld [vmem:[%s423 + $0x6e8] sm:$0xff]
        %v8187 = vld [vmem:[%s423 + $0x6f0] sm:$0xff]
        %v8188 = vld [vmem:[%s423 + $0x6f8] sm:$0xff]
        %v8189 = vld [vmem:[%s423 + $0x700] sm:$0xff]
        %v8190 = vld [vmem:[%s423 + $0x708] sm:$0xff]
        %v8191 = vld [vmem:[%s423 + $0x710] sm:$0xff]
        %v8192 = vld [vmem:[%s423 + $0x718] sm:$0xff]
        %v8193 = vld [vmem:[%s423 + $0x720] sm:$0xff]
        %v8194 = vld [vmem:[%s423 + $0x728] sm:$0xff]
        %v8195 = vld [vmem:[%s423 + $0x730] sm:$0xff]
        %v8196 = vld [vmem:[%s423 + $0x738] sm:$0xff]
        %v8197 = vld [vmem:[%s423 + $0x740] sm:$0xff]
        %v8198 = vld [vmem:[%s423 + $0x748] sm:$0xff]
        %v8199 = vld [vmem:[%s423 + $0x750] sm:$0xff]
        %v8200 = vld [vmem:[%s423 + $0x758] sm:$0xff]
        %v8201 = vld [vmem:[%s423 + $0x760] sm:$0xff]
        %v8202 = vld [vmem:[%s423 + $0x768] sm:$0xff]
        %v8203 = vld [vmem:[%s423 + $0x770] sm:$0xff]
        %v8204 = vld [vmem:[%s423 + $0x778] sm:$0xff]
        %v8205 = vld [vmem:[%s423 + $0x780] sm:$0xff]
        %v8206 = vld [vmem:[%s423 + $0x788] sm:$0xff]
        %v8207 = vld [vmem:[%s423 + $0x790] sm:$0xff]
        %v8208 = vld [vmem:[%s423 + $0x798] sm:$0xff]
        %v8209 = vld [vmem:[%s423 + $0x7a0] sm:$0xff]
        %v8210 = vld [vmem:[%s423 + $0x7a8] sm:$0xff]
        %v8211 = vld [vmem:[%s423 + $0x7b0] sm:$0xff]
        %v8212 = vld [vmem:[%s423 + $0x7b8] sm:$0xff]
        %v8213 = vld [vmem:[%s423 + $0x7c0] sm:$0xff]
        %v8214 = vld [vmem:[%s423 + $0x7c8] sm:$0xff]
        %v8215 = vld [vmem:[%s423 + $0x7d0] sm:$0xff]
        %v8216 = vld [vmem:[%s423 + $0x7d8] sm:$0xff]
        %v8217 = vld [vmem:[%s423 + $0x7e0] sm:$0xff]
        %v8218 = vld [vmem:[%s423 + $0x7e8] sm:$0xff]
        %v8219 = vld [vmem:[%s423 + $0x7f0] sm:$0xff]
        %v8220 = vld [vmem:[%s423 + $0x7f8] sm:$0xff]
        %v8221 = vmul.f32 %v7938, %v7965
        %v8222 = vmul.f32 %v7953, %v7966
        %v8223 = vmul.f32 %v7938, %v7967
        %v8224 = vmul.f32 %v7953, %v7968
        %v8225 = vmul.f32 %v7938, %v7969
        %v8226 = vmul.f32 %v7953, %v7970
        %v8227 = vmul.f32 %v7938, %v7971
        %v8228 = vmul.f32 %v7953, %v7972
        %v8229 = vmul.f32 %v7938, %v7973
        %v8230 = vmul.f32 %v7953, %v7974
        %v8231 = vmul.f32 %v7938, %v7975
        %v8232 = vmul.f32 %v7953, %v7976
        %v8233 = vmul.f32 %v7938, %v7977
        %v8234 = vmul.f32 %v7953, %v7978
        %v8235 = vmul.f32 %v7938, %v7979
        %v8236 = vmul.f32 %v7953, %v7980
        %v8237 = vmul.f32 %v7938, %v7981
        %v8238 = vmul.f32 %v7953, %v7982
        %v8239 = vmul.f32 %v7938, %v7983
        %v8240 = vmul.f32 %v7953, %v7984
        %v8241 = vmul.f32 %v7938, %v7985
        %v8242 = vmul.f32 %v7953, %v7986
        %v8243 = vmul.f32 %v7938, %v7987
        %v8244 = vmul.f32 %v7953, %v7988
        %v8245 = vmul.f32 %v7938, %v7989
        %v8246 = vmul.f32 %v7953, %v7990
        %v8247 = vmul.f32 %v7938, %v7991
        %v8248 = vmul.f32 %v7953, %v7992
        %v8249 = vmul.f32 %v7938, %v7993
        %v8250 = vmul.f32 %v7953, %v7994
        %v8251 = vmul.f32 %v7938, %v7995
        %v8252 = vmul.f32 %v7953, %v7996
        %v8253 = vmul.f32 %v7938, %v7997
        %v8254 = vmul.f32 %v7953, %v7998
        %v8255 = vmul.f32 %v7938, %v7999
        %v8256 = vmul.f32 %v7953, %v8000
        %v8257 = vmul.f32 %v7938, %v8001
        %v8258 = vmul.f32 %v7953, %v8002
        %v8259 = vmul.f32 %v7938, %v8003
        %v8260 = vmul.f32 %v7953, %v8004
        %v8261 = vmul.f32 %v7938, %v8005
        %v8262 = vmul.f32 %v7953, %v8006
        %v8263 = vmul.f32 %v7938, %v8007
        %v8264 = vmul.f32 %v7953, %v8008
        %v8265 = vmul.f32 %v7938, %v8009
        %v8266 = vmul.f32 %v7953, %v8010
        %v8267 = vmul.f32 %v7938, %v8011
        %v8268 = vmul.f32 %v7953, %v8012
        %v8269 = vmul.f32 %v7938, %v8013
        %v8270 = vmul.f32 %v7953, %v8014
        %v8271 = vmul.f32 %v7938, %v8015
        %v8272 = vmul.f32 %v7953, %v8016
        %v8273 = vmul.f32 %v7938, %v8017
        %v8274 = vmul.f32 %v7953, %v8018
        %v8275 = vmul.f32 %v7938, %v8019
        %v8276 = vmul.f32 %v7953, %v8020
        %v8277 = vmul.f32 %v7938, %v8021
        %v8278 = vmul.f32 %v7953, %v8022
        %v8279 = vmul.f32 %v7938, %v8023
        %v8280 = vmul.f32 %v7953, %v8024
        %v8281 = vmul.f32 %v7938, %v8025
        %v8282 = vmul.f32 %v7953, %v8026
        %v8283 = vmul.f32 %v7938, %v8027
        %v8284 = vmul.f32 %v7953, %v8028
        %v8285 = vmul.f32 %v7938, %v8029
        %v8286 = vmul.f32 %v7953, %v8030
        %v8287 = vmul.f32 %v7938, %v8031
        %v8288 = vmul.f32 %v7953, %v8032
        %v8289 = vmul.f32 %v7938, %v8033
        %v8290 = vmul.f32 %v7953, %v8034
        %v8291 = vmul.f32 %v7938, %v8035
        %v8292 = vmul.f32 %v7953, %v8036
        %v8293 = vmul.f32 %v7938, %v8037
        %v8294 = vmul.f32 %v7953, %v8038
        %v8295 = vmul.f32 %v7938, %v8039
        %v8296 = vmul.f32 %v7953, %v8040
        %v8297 = vmul.f32 %v7938, %v8041
        %v8298 = vmul.f32 %v7953, %v8042
        %v8299 = vmul.f32 %v7938, %v8043
        %v8300 = vmul.f32 %v7953, %v8044
        %v8301 = vmul.f32 %v7938, %v8045
        %v8302 = vmul.f32 %v7953, %v8046
        %v8303 = vmul.f32 %v7938, %v8047
        %v8304 = vmul.f32 %v7953, %v8048
        %v8305 = vmul.f32 %v7938, %v8049
        %v8306 = vmul.f32 %v7953, %v8050
        %v8307 = vmul.f32 %v7938, %v8051
        %v8308 = vmul.f32 %v7953, %v8052
        %v8309 = vmul.f32 %v7938, %v8053
        %v8310 = vmul.f32 %v7953, %v8054
        %v8311 = vmul.f32 %v7938, %v8055
        %v8312 = vmul.f32 %v7953, %v8056
        %v8313 = vmul.f32 %v7938, %v8057
        %v8314 = vmul.f32 %v7953, %v8058
        %v8315 = vmul.f32 %v7938, %v8059
        %v8316 = vmul.f32 %v7953, %v8060
        %v8317 = vmul.f32 %v7938, %v8061
        %v8318 = vmul.f32 %v7953, %v8062
        %v8319 = vmul.f32 %v7938, %v8063
        %v8320 = vmul.f32 %v7953, %v8064
        %v8321 = vmul.f32 %v7938, %v8065
        %v8322 = vmul.f32 %v7953, %v8066
        %v8323 = vmul.f32 %v7938, %v8067
        %v8324 = vmul.f32 %v7953, %v8068
        %v8325 = vmul.f32 %v7938, %v8069
        %v8326 = vmul.f32 %v7953, %v8070
        %v8327 = vmul.f32 %v7938, %v8071
        %v8328 = vmul.f32 %v7953, %v8072
        %v8329 = vmul.f32 %v7938, %v8073
        %v8330 = vmul.f32 %v7953, %v8074
        %v8331 = vmul.f32 %v7938, %v8075
        %v8332 = vmul.f32 %v7953, %v8076
        %v8333 = vmul.f32 %v7938, %v8077
        %v8334 = vmul.f32 %v7953, %v8078
        %v8335 = vmul.f32 %v7938, %v8079
        %v8336 = vmul.f32 %v7953, %v8080
        %v8337 = vmul.f32 %v7938, %v8081
        %v8338 = vmul.f32 %v7953, %v8082
        %v8339 = vmul.f32 %v7938, %v8083
        %v8340 = vmul.f32 %v7953, %v8084
        %v8341 = vmul.f32 %v7938, %v8085
        %v8342 = vmul.f32 %v7953, %v8086
        %v8343 = vmul.f32 %v7938, %v8087
        %v8344 = vmul.f32 %v7953, %v8088
        %v8345 = vmul.f32 %v7938, %v8089
        %v8346 = vmul.f32 %v7953, %v8090
        %v8347 = vmul.f32 %v7938, %v8091
        %v8348 = vmul.f32 %v7953, %v8092
        %v8349 = vmul.f32 %v7938, %v8093
        %v8350 = vmul.f32 %v7953, %v8094
        %v8351 = vmul.f32 %v7938, %v8095
        %v8352 = vmul.f32 %v7953, %v8096
        %v8353 = vmul.f32 %v7938, %v8097
        %v8354 = vmul.f32 %v7953, %v8098
        %v8355 = vmul.f32 %v7938, %v8099
        %v8356 = vmul.f32 %v7953, %v8100
        %v8357 = vmul.f32 %v7938, %v8101
        %v8358 = vmul.f32 %v7953, %v8102
        %v8359 = vmul.f32 %v7938, %v8103
        %v8360 = vmul.f32 %v7953, %v8104
        %v8361 = vmul.f32 %v7938, %v8105
        %v8362 = vmul.f32 %v7953, %v8106
        %v8363 = vmul.f32 %v7938, %v8107
        %v8364 = vmul.f32 %v7953, %v8108
        %v8365 = vmul.f32 %v7938, %v8109
        %v8366 = vmul.f32 %v7953, %v8110
        %v8367 = vmul.f32 %v7938, %v8111
        %v8368 = vmul.f32 %v7953, %v8112
        %v8369 = vmul.f32 %v7938, %v8113
        %v8370 = vmul.f32 %v7953, %v8114
        %v8371 = vmul.f32 %v7938, %v8115
        %v8372 = vmul.f32 %v7953, %v8116
        %v8373 = vmul.f32 %v7938, %v8117
        %v8374 = vmul.f32 %v7953, %v8118
        %v8375 = vmul.f32 %v7938, %v8119
        %v8376 = vmul.f32 %v7953, %v8120
        %v8377 = vmul.f32 %v7938, %v8121
        %v8378 = vmul.f32 %v7953, %v8122
        %v8379 = vmul.f32 %v7938, %v8123
        %v8380 = vmul.f32 %v7953, %v8124
        %v8381 = vmul.f32 %v7938, %v8125
        %v8382 = vmul.f32 %v7953, %v8126
        %v8383 = vmul.f32 %v7938, %v8127
        %v8384 = vmul.f32 %v7953, %v8128
        %v8385 = vmul.f32 %v7938, %v8129
        %v8386 = vmul.f32 %v7953, %v8130
        %v8387 = vmul.f32 %v7938, %v8131
        %v8388 = vmul.f32 %v7953, %v8132
        %v8389 = vmul.f32 %v7938, %v8133
        %v8390 = vmul.f32 %v7953, %v8134
        %v8391 = vmul.f32 %v7938, %v8135
        %v8392 = vmul.f32 %v7953, %v8136
        %v8393 = vmul.f32 %v7938, %v8137
        %v8394 = vmul.f32 %v7953, %v8138
        %v8395 = vmul.f32 %v7938, %v8139
        %v8396 = vmul.f32 %v7953, %v8140
        %v8397 = vmul.f32 %v7938, %v8141
        %v8398 = vmul.f32 %v7953, %v8142
        %v8399 = vmul.f32 %v7938, %v8143
        %v8400 = vmul.f32 %v7953, %v8144
        %v8401 = vmul.f32 %v7938, %v8145
        %v8402 = vmul.f32 %v7953, %v8146
        %v8403 = vmul.f32 %v7938, %v8147
        %v8404 = vmul.f32 %v7953, %v8148
        %v8405 = vmul.f32 %v7938, %v8149
        %v8406 = vmul.f32 %v7953, %v8150
        %v8407 = vmul.f32 %v7938, %v8151
        %v8408 = vmul.f32 %v7953, %v8152
        %v8409 = vmul.f32 %v7938, %v8153
        %v8410 = vmul.f32 %v7953, %v8154
        %v8411 = vmul.f32 %v7938, %v8155
        %v8412 = vmul.f32 %v7953, %v8156
        %v8413 = vmul.f32 %v7938, %v8157
        %v8414 = vmul.f32 %v7953, %v8158
        %v8415 = vmul.f32 %v7938, %v8159
        %v8416 = vmul.f32 %v7953, %v8160
        %v8417 = vmul.f32 %v7938, %v8161
        %v8418 = vmul.f32 %v7953, %v8162
        %v8419 = vmul.f32 %v7938, %v8163
        %v8420 = vmul.f32 %v7953, %v8164
        %v8421 = vmul.f32 %v7938, %v8165
        %v8422 = vmul.f32 %v7953, %v8166
        %v8423 = vmul.f32 %v7938, %v8167
        %v8424 = vmul.f32 %v7953, %v8168
        %v8425 = vmul.f32 %v7938, %v8169
        %v8426 = vmul.f32 %v7953, %v8170
        %v8427 = vmul.f32 %v7938, %v8171
        %v8428 = vmul.f32 %v7953, %v8172
        %v8429 = vmul.f32 %v7938, %v8173
        %v8430 = vmul.f32 %v7953, %v8174
        %v8431 = vmul.f32 %v7938, %v8175
        %v8432 = vmul.f32 %v7953, %v8176
        %v8433 = vmul.f32 %v7938, %v8177
        %v8434 = vmul.f32 %v7953, %v8178
        %v8435 = vmul.f32 %v7938, %v8179
        %v8436 = vmul.f32 %v7953, %v8180
        %v8437 = vmul.f32 %v7938, %v8181
        %v8438 = vmul.f32 %v7953, %v8182
        %v8439 = vmul.f32 %v7938, %v8183
        %v8440 = vmul.f32 %v7953, %v8184
        %v8441 = vmul.f32 %v7938, %v8185
        %v8442 = vmul.f32 %v7953, %v8186
        %v8443 = vmul.f32 %v7938, %v8187
        %v8444 = vmul.f32 %v7953, %v8188
        %v8445 = vmul.f32 %v7938, %v8189
        %v8446 = vmul.f32 %v7953, %v8190
        %v8447 = vmul.f32 %v7938, %v8191
        %v8448 = vmul.f32 %v7953, %v8192
        %v8449 = vmul.f32 %v7938, %v8193
        %v8450 = vmul.f32 %v7953, %v8194
        %v8451 = vmul.f32 %v7938, %v8195
        %v8452 = vmul.f32 %v7953, %v8196
        %v8453 = vmul.f32 %v7938, %v8197
        %v8454 = vmul.f32 %v7953, %v8198
        %v8455 = vmul.f32 %v7938, %v8199
        %v8456 = vmul.f32 %v7953, %v8200
        %v8457 = vmul.f32 %v7938, %v8201
        %v8458 = vmul.f32 %v7953, %v8202
        %v8459 = vmul.f32 %v7938, %v8203
        %v8460 = vmul.f32 %v7953, %v8204
        %v8461 = vmul.f32 %v7938, %v8205
        %v8462 = vmul.f32 %v7953, %v8206
        %v8463 = vmul.f32 %v7938, %v8207
        %v8464 = vmul.f32 %v7953, %v8208
        %v8465 = vmul.f32 %v7938, %v8209
        %v8466 = vmul.f32 %v7953, %v8210
        %v8467 = vmul.f32 %v7938, %v8211
        %v8468 = vmul.f32 %v7953, %v8212
        %v8469 = vmul.f32 %v7938, %v8213
        %v8470 = vmul.f32 %v7953, %v8214
        %v8471 = vmul.f32 %v7938, %v8215
        %v8472 = vmul.f32 %v7953, %v8216
        %v8473 = vmul.f32 %v7938, %v8217
        %v8474 = vmul.f32 %v7953, %v8218
        %v8475 = vmul.f32 %v7938, %v8219
        %v8476 = vmul.f32 %v7953, %v8220
        %8477 = vst [vmem:[%s428] sm:$0xff] %v8221
        %8478 = vst.msk [vmem:[%s428 + $0x8] sm:$0xff] %vm3654, %v8222
        %8479 = vst [vmem:[%s428 + $0x10] sm:$0xff] %v8223
        %8480 = vst.msk [vmem:[%s428 + $0x18] sm:$0xff] %vm3654, %v8224
        %8481 = vst [vmem:[%s428 + $0x20] sm:$0xff] %v8225
        %8482 = vst.msk [vmem:[%s428 + $0x28] sm:$0xff] %vm3654, %v8226
        %8483 = vst [vmem:[%s428 + $0x30] sm:$0xff] %v8227
        %8484 = vst.msk [vmem:[%s428 + $0x38] sm:$0xff] %vm3654, %v8228
        %8485 = vst [vmem:[%s428 + $0x40] sm:$0xff] %v8229
        %8486 = vst.msk [vmem:[%s428 + $0x48] sm:$0xff] %vm3654, %v8230
        %8487 = vst [vmem:[%s428 + $0x50] sm:$0xff] %v8231
        %8488 = vst.msk [vmem:[%s428 + $0x58] sm:$0xff] %vm3654, %v8232
        %8489 = vst [vmem:[%s428 + $0x60] sm:$0xff] %v8233
        %8490 = vst.msk [vmem:[%s428 + $0x68] sm:$0xff] %vm3654, %v8234
        %8491 = vst [vmem:[%s428 + $0x70] sm:$0xff] %v8235
        %8492 = vst.msk [vmem:[%s428 + $0x78] sm:$0xff] %vm3654, %v8236
        %8493 = vst [vmem:[%s428 + $0x80] sm:$0xff] %v8237
        %8494 = vst.msk [vmem:[%s428 + $0x88] sm:$0xff] %vm3654, %v8238
        %8495 = vst [vmem:[%s428 + $0x90] sm:$0xff] %v8239
        %8496 = vst.msk [vmem:[%s428 + $0x98] sm:$0xff] %vm3654, %v8240
        %8497 = vst [vmem:[%s428 + $0xa0] sm:$0xff] %v8241
        %8498 = vst.msk [vmem:[%s428 + $0xa8] sm:$0xff] %vm3654, %v8242
        %8499 = vst [vmem:[%s428 + $0xb0] sm:$0xff] %v8243
        %8500 = vst.msk [vmem:[%s428 + $0xb8] sm:$0xff] %vm3654, %v8244
        %8501 = vst [vmem:[%s428 + $0xc0] sm:$0xff] %v8245
        %8502 = vst.msk [vmem:[%s428 + $0xc8] sm:$0xff] %vm3654, %v8246
        %8503 = vst [vmem:[%s428 + $0xd0] sm:$0xff] %v8247
        %8504 = vst.msk [vmem:[%s428 + $0xd8] sm:$0xff] %vm3654, %v8248
        %8505 = vst [vmem:[%s428 + $0xe0] sm:$0xff] %v8249
        %8506 = vst.msk [vmem:[%s428 + $0xe8] sm:$0xff] %vm3654, %v8250
        %8507 = vst [vmem:[%s428 + $0xf0] sm:$0xff] %v8251
        %8508 = vst.msk [vmem:[%s428 + $0xf8] sm:$0xff] %vm3654, %v8252
        %8509 = vst [vmem:[%s428 + $0x100] sm:$0xff] %v8253
        %8510 = vst.msk [vmem:[%s428 + $0x108] sm:$0xff] %vm3654, %v8254
        %8511 = vst [vmem:[%s428 + $0x110] sm:$0xff] %v8255
        %8512 = vst.msk [vmem:[%s428 + $0x118] sm:$0xff] %vm3654, %v8256
        %8513 = vst [vmem:[%s428 + $0x120] sm:$0xff] %v8257
        %8514 = vst.msk [vmem:[%s428 + $0x128] sm:$0xff] %vm3654, %v8258
        %8515 = vst [vmem:[%s428 + $0x130] sm:$0xff] %v8259
        %8516 = vst.msk [vmem:[%s428 + $0x138] sm:$0xff] %vm3654, %v8260
        %8517 = vst [vmem:[%s428 + $0x140] sm:$0xff] %v8261
        %8518 = vst.msk [vmem:[%s428 + $0x148] sm:$0xff] %vm3654, %v8262
        %8519 = vst [vmem:[%s428 + $0x150] sm:$0xff] %v8263
        %8520 = vst.msk [vmem:[%s428 + $0x158] sm:$0xff] %vm3654, %v8264
        %8521 = vst [vmem:[%s428 + $0x160] sm:$0xff] %v8265
        %8522 = vst.msk [vmem:[%s428 + $0x168] sm:$0xff] %vm3654, %v8266
        %8523 = vst [vmem:[%s428 + $0x170] sm:$0xff] %v8267
        %8524 = vst.msk [vmem:[%s428 + $0x178] sm:$0xff] %vm3654, %v8268
        %8525 = vst [vmem:[%s428 + $0x180] sm:$0xff] %v8269
        %8526 = vst.msk [vmem:[%s428 + $0x188] sm:$0xff] %vm3654, %v8270
        %8527 = vst [vmem:[%s428 + $0x190] sm:$0xff] %v8271
        %8528 = vst.msk [vmem:[%s428 + $0x198] sm:$0xff] %vm3654, %v8272
        %8529 = vst [vmem:[%s428 + $0x1a0] sm:$0xff] %v8273
        %8530 = vst.msk [vmem:[%s428 + $0x1a8] sm:$0xff] %vm3654, %v8274
        %8531 = vst [vmem:[%s428 + $0x1b0] sm:$0xff] %v8275
        %8532 = vst.msk [vmem:[%s428 + $0x1b8] sm:$0xff] %vm3654, %v8276
        %8533 = vst [vmem:[%s428 + $0x1c0] sm:$0xff] %v8277
        %8534 = vst.msk [vmem:[%s428 + $0x1c8] sm:$0xff] %vm3654, %v8278
        %8535 = vst [vmem:[%s428 + $0x1d0] sm:$0xff] %v8279
        %8536 = vst.msk [vmem:[%s428 + $0x1d8] sm:$0xff] %vm3654, %v8280
        %8537 = vst [vmem:[%s428 + $0x1e0] sm:$0xff] %v8281
        %8538 = vst.msk [vmem:[%s428 + $0x1e8] sm:$0xff] %vm3654, %v8282
        %8539 = vst [vmem:[%s428 + $0x1f0] sm:$0xff] %v8283
        %8540 = vst.msk [vmem:[%s428 + $0x1f8] sm:$0xff] %vm3654, %v8284
        %8541 = vst [vmem:[%s428 + $0x200] sm:$0xff] %v8285
        %8542 = vst.msk [vmem:[%s428 + $0x208] sm:$0xff] %vm3654, %v8286
        %8543 = vst [vmem:[%s428 + $0x210] sm:$0xff] %v8287
        %8544 = vst.msk [vmem:[%s428 + $0x218] sm:$0xff] %vm3654, %v8288
        %8545 = vst [vmem:[%s428 + $0x220] sm:$0xff] %v8289
        %8546 = vst.msk [vmem:[%s428 + $0x228] sm:$0xff] %vm3654, %v8290
        %8547 = vst [vmem:[%s428 + $0x230] sm:$0xff] %v8291
        %8548 = vst.msk [vmem:[%s428 + $0x238] sm:$0xff] %vm3654, %v8292
        %8549 = vst [vmem:[%s428 + $0x240] sm:$0xff] %v8293
        %8550 = vst.msk [vmem:[%s428 + $0x248] sm:$0xff] %vm3654, %v8294
        %8551 = vst [vmem:[%s428 + $0x250] sm:$0xff] %v8295
        %8552 = vst.msk [vmem:[%s428 + $0x258] sm:$0xff] %vm3654, %v8296
        %8553 = vst [vmem:[%s428 + $0x260] sm:$0xff] %v8297
        %8554 = vst.msk [vmem:[%s428 + $0x268] sm:$0xff] %vm3654, %v8298
        %8555 = vst [vmem:[%s428 + $0x270] sm:$0xff] %v8299
        %8556 = vst.msk [vmem:[%s428 + $0x278] sm:$0xff] %vm3654, %v8300
        %8557 = vst [vmem:[%s428 + $0x280] sm:$0xff] %v8301
        %8558 = vst.msk [vmem:[%s428 + $0x288] sm:$0xff] %vm3654, %v8302
        %8559 = vst [vmem:[%s428 + $0x290] sm:$0xff] %v8303
        %8560 = vst.msk [vmem:[%s428 + $0x298] sm:$0xff] %vm3654, %v8304
        %8561 = vst [vmem:[%s428 + $0x2a0] sm:$0xff] %v8305
        %8562 = vst.msk [vmem:[%s428 + $0x2a8] sm:$0xff] %vm3654, %v8306
        %8563 = vst [vmem:[%s428 + $0x2b0] sm:$0xff] %v8307
        %8564 = vst.msk [vmem:[%s428 + $0x2b8] sm:$0xff] %vm3654, %v8308
        %8565 = vst [vmem:[%s428 + $0x2c0] sm:$0xff] %v8309
        %8566 = vst.msk [vmem:[%s428 + $0x2c8] sm:$0xff] %vm3654, %v8310
        %8567 = vst [vmem:[%s428 + $0x2d0] sm:$0xff] %v8311
        %8568 = vst.msk [vmem:[%s428 + $0x2d8] sm:$0xff] %vm3654, %v8312
        %8569 = vst [vmem:[%s428 + $0x2e0] sm:$0xff] %v8313
        %8570 = vst.msk [vmem:[%s428 + $0x2e8] sm:$0xff] %vm3654, %v8314
        %8571 = vst [vmem:[%s428 + $0x2f0] sm:$0xff] %v8315
        %8572 = vst.msk [vmem:[%s428 + $0x2f8] sm:$0xff] %vm3654, %v8316
        %8573 = vst [vmem:[%s428 + $0x300] sm:$0xff] %v8317
        %8574 = vst.msk [vmem:[%s428 + $0x308] sm:$0xff] %vm3654, %v8318
        %8575 = vst [vmem:[%s428 + $0x310] sm:$0xff] %v8319
        %8576 = vst.msk [vmem:[%s428 + $0x318] sm:$0xff] %vm3654, %v8320
        %8577 = vst [vmem:[%s428 + $0x320] sm:$0xff] %v8321
        %8578 = vst.msk [vmem:[%s428 + $0x328] sm:$0xff] %vm3654, %v8322
        %8579 = vst [vmem:[%s428 + $0x330] sm:$0xff] %v8323
        %8580 = vst.msk [vmem:[%s428 + $0x338] sm:$0xff] %vm3654, %v8324
        %8581 = vst [vmem:[%s428 + $0x340] sm:$0xff] %v8325
        %8582 = vst.msk [vmem:[%s428 + $0x348] sm:$0xff] %vm3654, %v8326
        %8583 = vst [vmem:[%s428 + $0x350] sm:$0xff] %v8327
        %8584 = vst.msk [vmem:[%s428 + $0x358] sm:$0xff] %vm3654, %v8328
        %8585 = vst [vmem:[%s428 + $0x360] sm:$0xff] %v8329
        %8586 = vst.msk [vmem:[%s428 + $0x368] sm:$0xff] %vm3654, %v8330
        %8587 = vst [vmem:[%s428 + $0x370] sm:$0xff] %v8331
        %8588 = vst.msk [vmem:[%s428 + $0x378] sm:$0xff] %vm3654, %v8332
        %8589 = vst [vmem:[%s428 + $0x380] sm:$0xff] %v8333
        %8590 = vst.msk [vmem:[%s428 + $0x388] sm:$0xff] %vm3654, %v8334
        %8591 = vst [vmem:[%s428 + $0x390] sm:$0xff] %v8335
        %8592 = vst.msk [vmem:[%s428 + $0x398] sm:$0xff] %vm3654, %v8336
        %8593 = vst [vmem:[%s428 + $0x3a0] sm:$0xff] %v8337
        %8594 = vst.msk [vmem:[%s428 + $0x3a8] sm:$0xff] %vm3654, %v8338
        %8595 = vst [vmem:[%s428 + $0x3b0] sm:$0xff] %v8339
        %8596 = vst.msk [vmem:[%s428 + $0x3b8] sm:$0xff] %vm3654, %v8340
        %8597 = vst [vmem:[%s428 + $0x3c0] sm:$0xff] %v8341
        %8598 = vst.msk [vmem:[%s428 + $0x3c8] sm:$0xff] %vm3654, %v8342
        %8599 = vst [vmem:[%s428 + $0x3d0] sm:$0xff] %v8343
        %8600 = vst.msk [vmem:[%s428 + $0x3d8] sm:$0xff] %vm3654, %v8344
        %8601 = vst [vmem:[%s428 + $0x3e0] sm:$0xff] %v8345
        %8602 = vst.msk [vmem:[%s428 + $0x3e8] sm:$0xff] %vm3654, %v8346
        %8603 = vst [vmem:[%s428 + $0x3f0] sm:$0xff] %v8347
        %8604 = vst.msk [vmem:[%s428 + $0x3f8] sm:$0xff] %vm3654, %v8348
        %8605 = vst [vmem:[%s428 + $0x400] sm:$0xff] %v8349
        %8606 = vst.msk [vmem:[%s428 + $0x408] sm:$0xff] %vm3654, %v8350
        %8607 = vst [vmem:[%s428 + $0x410] sm:$0xff] %v8351
        %8608 = vst.msk [vmem:[%s428 + $0x418] sm:$0xff] %vm3654, %v8352
        %8609 = vst [vmem:[%s428 + $0x420] sm:$0xff] %v8353
        %8610 = vst.msk [vmem:[%s428 + $0x428] sm:$0xff] %vm3654, %v8354
        %8611 = vst [vmem:[%s428 + $0x430] sm:$0xff] %v8355
        %8612 = vst.msk [vmem:[%s428 + $0x438] sm:$0xff] %vm3654, %v8356
        %8613 = vst [vmem:[%s428 + $0x440] sm:$0xff] %v8357
        %8614 = vst.msk [vmem:[%s428 + $0x448] sm:$0xff] %vm3654, %v8358
        %8615 = vst [vmem:[%s428 + $0x450] sm:$0xff] %v8359
        %8616 = vst.msk [vmem:[%s428 + $0x458] sm:$0xff] %vm3654, %v8360
        %8617 = vst [vmem:[%s428 + $0x460] sm:$0xff] %v8361
        %8618 = vst.msk [vmem:[%s428 + $0x468] sm:$0xff] %vm3654, %v8362
        %8619 = vst [vmem:[%s428 + $0x470] sm:$0xff] %v8363
        %8620 = vst.msk [vmem:[%s428 + $0x478] sm:$0xff] %vm3654, %v8364
        %8621 = vst [vmem:[%s428 + $0x480] sm:$0xff] %v8365
        %8622 = vst.msk [vmem:[%s428 + $0x488] sm:$0xff] %vm3654, %v8366
        %8623 = vst [vmem:[%s428 + $0x490] sm:$0xff] %v8367
        %8624 = vst.msk [vmem:[%s428 + $0x498] sm:$0xff] %vm3654, %v8368
        %8625 = vst [vmem:[%s428 + $0x4a0] sm:$0xff] %v8369
        %8626 = vst.msk [vmem:[%s428 + $0x4a8] sm:$0xff] %vm3654, %v8370
        %8627 = vst [vmem:[%s428 + $0x4b0] sm:$0xff] %v8371
        %8628 = vst.msk [vmem:[%s428 + $0x4b8] sm:$0xff] %vm3654, %v8372
        %8629 = vst [vmem:[%s428 + $0x4c0] sm:$0xff] %v8373
        %8630 = vst.msk [vmem:[%s428 + $0x4c8] sm:$0xff] %vm3654, %v8374
        %8631 = vst [vmem:[%s428 + $0x4d0] sm:$0xff] %v8375
        %8632 = vst.msk [vmem:[%s428 + $0x4d8] sm:$0xff] %vm3654, %v8376
        %8633 = vst [vmem:[%s428 + $0x4e0] sm:$0xff] %v8377
        %8634 = vst.msk [vmem:[%s428 + $0x4e8] sm:$0xff] %vm3654, %v8378
        %8635 = vst [vmem:[%s428 + $0x4f0] sm:$0xff] %v8379
        %8636 = vst.msk [vmem:[%s428 + $0x4f8] sm:$0xff] %vm3654, %v8380
        %8637 = vst [vmem:[%s428 + $0x500] sm:$0xff] %v8381
        %8638 = vst.msk [vmem:[%s428 + $0x508] sm:$0xff] %vm3654, %v8382
        %8639 = vst [vmem:[%s428 + $0x510] sm:$0xff] %v8383
        %8640 = vst.msk [vmem:[%s428 + $0x518] sm:$0xff] %vm3654, %v8384
        %8641 = vst [vmem:[%s428 + $0x520] sm:$0xff] %v8385
        %8642 = vst.msk [vmem:[%s428 + $0x528] sm:$0xff] %vm3654, %v8386
        %8643 = vst [vmem:[%s428 + $0x530] sm:$0xff] %v8387
        %8644 = vst.msk [vmem:[%s428 + $0x538] sm:$0xff] %vm3654, %v8388
        %8645 = vst [vmem:[%s428 + $0x540] sm:$0xff] %v8389
        %8646 = vst.msk [vmem:[%s428 + $0x548] sm:$0xff] %vm3654, %v8390
        %8647 = vst [vmem:[%s428 + $0x550] sm:$0xff] %v8391
        %8648 = vst.msk [vmem:[%s428 + $0x558] sm:$0xff] %vm3654, %v8392
        %8649 = vst [vmem:[%s428 + $0x560] sm:$0xff] %v8393
        %8650 = vst.msk [vmem:[%s428 + $0x568] sm:$0xff] %vm3654, %v8394
        %8651 = vst [vmem:[%s428 + $0x570] sm:$0xff] %v8395
        %8652 = vst.msk [vmem:[%s428 + $0x578] sm:$0xff] %vm3654, %v8396
        %8653 = vst [vmem:[%s428 + $0x580] sm:$0xff] %v8397
        %8654 = vst.msk [vmem:[%s428 + $0x588] sm:$0xff] %vm3654, %v8398
        %8655 = vst [vmem:[%s428 + $0x590] sm:$0xff] %v8399
        %8656 = vst.msk [vmem:[%s428 + $0x598] sm:$0xff] %vm3654, %v8400
        %8657 = vst [vmem:[%s428 + $0x5a0] sm:$0xff] %v8401
        %8658 = vst.msk [vmem:[%s428 + $0x5a8] sm:$0xff] %vm3654, %v8402
        %8659 = vst [vmem:[%s428 + $0x5b0] sm:$0xff] %v8403
        %8660 = vst.msk [vmem:[%s428 + $0x5b8] sm:$0xff] %vm3654, %v8404
        %8661 = vst [vmem:[%s428 + $0x5c0] sm:$0xff] %v8405
        %8662 = vst.msk [vmem:[%s428 + $0x5c8] sm:$0xff] %vm3654, %v8406
        %8663 = vst [vmem:[%s428 + $0x5d0] sm:$0xff] %v8407
        %8664 = vst.msk [vmem:[%s428 + $0x5d8] sm:$0xff] %vm3654, %v8408
        %8665 = vst [vmem:[%s428 + $0x5e0] sm:$0xff] %v8409
        %8666 = vst.msk [vmem:[%s428 + $0x5e8] sm:$0xff] %vm3654, %v8410
        %8667 = vst [vmem:[%s428 + $0x5f0] sm:$0xff] %v8411
        %8668 = vst.msk [vmem:[%s428 + $0x5f8] sm:$0xff] %vm3654, %v8412
        %8669 = vst [vmem:[%s428 + $0x600] sm:$0xff] %v8413
        %8670 = vst.msk [vmem:[%s428 + $0x608] sm:$0xff] %vm3654, %v8414
        %8671 = vst [vmem:[%s428 + $0x610] sm:$0xff] %v8415
        %8672 = vst.msk [vmem:[%s428 + $0x618] sm:$0xff] %vm3654, %v8416
        %8673 = vst [vmem:[%s428 + $0x620] sm:$0xff] %v8417
        %8674 = vst.msk [vmem:[%s428 + $0x628] sm:$0xff] %vm3654, %v8418
        %8675 = vst [vmem:[%s428 + $0x630] sm:$0xff] %v8419
        %8676 = vst.msk [vmem:[%s428 + $0x638] sm:$0xff] %vm3654, %v8420
        %8677 = vst [vmem:[%s428 + $0x640] sm:$0xff] %v8421
        %8678 = vst.msk [vmem:[%s428 + $0x648] sm:$0xff] %vm3654, %v8422
        %8679 = vst [vmem:[%s428 + $0x650] sm:$0xff] %v8423
        %8680 = vst.msk [vmem:[%s428 + $0x658] sm:$0xff] %vm3654, %v8424
        %8681 = vst [vmem:[%s428 + $0x660] sm:$0xff] %v8425
        %8682 = vst.msk [vmem:[%s428 + $0x668] sm:$0xff] %vm3654, %v8426
        %8683 = vst [vmem:[%s428 + $0x670] sm:$0xff] %v8427
        %8684 = vst.msk [vmem:[%s428 + $0x678] sm:$0xff] %vm3654, %v8428
        %8685 = vst [vmem:[%s428 + $0x680] sm:$0xff] %v8429
        %8686 = vst.msk [vmem:[%s428 + $0x688] sm:$0xff] %vm3654, %v8430
        %8687 = vst [vmem:[%s428 + $0x690] sm:$0xff] %v8431
        %8688 = vst.msk [vmem:[%s428 + $0x698] sm:$0xff] %vm3654, %v8432
        %8689 = vst [vmem:[%s428 + $0x6a0] sm:$0xff] %v8433
        %8690 = vst.msk [vmem:[%s428 + $0x6a8] sm:$0xff] %vm3654, %v8434
        %8691 = vst [vmem:[%s428 + $0x6b0] sm:$0xff] %v8435
        %8692 = vst.msk [vmem:[%s428 + $0x6b8] sm:$0xff] %vm3654, %v8436
        %8693 = vst [vmem:[%s428 + $0x6c0] sm:$0xff] %v8437
        %8694 = vst.msk [vmem:[%s428 + $0x6c8] sm:$0xff] %vm3654, %v8438
        %8695 = vst [vmem:[%s428 + $0x6d0] sm:$0xff] %v8439
        %8696 = vst.msk [vmem:[%s428 + $0x6d8] sm:$0xff] %vm3654, %v8440
        %8697 = vst [vmem:[%s428 + $0x6e0] sm:$0xff] %v8441
        %8698 = vst.msk [vmem:[%s428 + $0x6e8] sm:$0xff] %vm3654, %v8442
        %8699 = vst [vmem:[%s428 + $0x6f0] sm:$0xff] %v8443
        %8700 = vst.msk [vmem:[%s428 + $0x6f8] sm:$0xff] %vm3654, %v8444
        %8701 = vst [vmem:[%s428 + $0x700] sm:$0xff] %v8445
        %8702 = vst.msk [vmem:[%s428 + $0x708] sm:$0xff] %vm3654, %v8446
        %8703 = vst [vmem:[%s428 + $0x710] sm:$0xff] %v8447
        %8704 = vst.msk [vmem:[%s428 + $0x718] sm:$0xff] %vm3654, %v8448
        %8705 = vst [vmem:[%s428 + $0x720] sm:$0xff] %v8449
        %8706 = vst.msk [vmem:[%s428 + $0x728] sm:$0xff] %vm3654, %v8450
        %8707 = vst [vmem:[%s428 + $0x730] sm:$0xff] %v8451
        %8708 = vst.msk [vmem:[%s428 + $0x738] sm:$0xff] %vm3654, %v8452
        %8709 = vst [vmem:[%s428 + $0x740] sm:$0xff] %v8453
        %8710 = vst.msk [vmem:[%s428 + $0x748] sm:$0xff] %vm3654, %v8454
        %8711 = vst [vmem:[%s428 + $0x750] sm:$0xff] %v8455
        %8712 = vst.msk [vmem:[%s428 + $0x758] sm:$0xff] %vm3654, %v8456
        %8713 = vst [vmem:[%s428 + $0x760] sm:$0xff] %v8457
        %8714 = vst.msk [vmem:[%s428 + $0x768] sm:$0xff] %vm3654, %v8458
        %8715 = vst [vmem:[%s428 + $0x770] sm:$0xff] %v8459
        %8716 = vst.msk [vmem:[%s428 + $0x778] sm:$0xff] %vm3654, %v8460
        %8717 = vst [vmem:[%s428 + $0x780] sm:$0xff] %v8461
        %8718 = vst.msk [vmem:[%s428 + $0x788] sm:$0xff] %vm3654, %v8462
        %8719 = vst [vmem:[%s428 + $0x790] sm:$0xff] %v8463
        %8720 = vst.msk [vmem:[%s428 + $0x798] sm:$0xff] %vm3654, %v8464
        %8721 = vst [vmem:[%s428 + $0x7a0] sm:$0xff] %v8465
        %8722 = vst.msk [vmem:[%s428 + $0x7a8] sm:$0xff] %vm3654, %v8466
        %8723 = vst [vmem:[%s428 + $0x7b0] sm:$0xff] %v8467
        %8724 = vst.msk [vmem:[%s428 + $0x7b8] sm:$0xff] %vm3654, %v8468
        %8725 = vst [vmem:[%s428 + $0x7c0] sm:$0xff] %v8469
        %8726 = vst.msk [vmem:[%s428 + $0x7c8] sm:$0xff] %vm3654, %v8470
        %8727 = vst [vmem:[%s428 + $0x7d0] sm:$0xff] %v8471
        %8728 = vst.msk [vmem:[%s428 + $0x7d8] sm:$0xff] %vm3654, %v8472
        %8729 = vst [vmem:[%s428 + $0x7e0] sm:$0xff] %v8473
        %8730 = vst.msk [vmem:[%s428 + $0x7e8] sm:$0xff] %vm3654, %v8474
        %8731 = vst [vmem:[%s428 + $0x7f0] sm:$0xff] %v8475
        %8732 = vst.msk [vmem:[%s428 + $0x7f8] sm:$0xff] %vm3654, %v8476
        %p8733 = scmp.lt.s32.totalorder %s31, 1
        %s8734 = scalar_select %p8733, %s31, 1
        %s8735 = smul.addr %s8734, 256
        %s8736 = smul.addr %s8735, 8
        %s8737 = scalar_lea.vmem %s11, %s8736
        %s8738 = sand.u32 %s301, 1
        %s8739 = scalar_lea.sflag [#allocation5], %s8738
        %s8740 = sand.u32 %s301, 1
        %s8741 = smul.addr %s8740, 2
        %s8742 = scalar_lea.vmem [#allocation4], %s8741
        // Predicated region
        $region65: #{tpu_custom_call.1} parent=63 // pred_check
          %p8743 = pneg %p285
        $region66: #{tpu_custom_call.1} parent=63 // pred_check_branch
          %8745 = sbr.rel (%p8743) target = $region68
        $region67: #{tpu_custom_call.1} parent=63 // pred_region
          _
        $region68: #{tpu_custom_call.1} parent=63 // pred_fallthru
          _
        // Predicated region
        $region69: #{tpu_custom_call.1} parent=63 // pred_check
          %p8746 = pneg %p311
        $region70: #{tpu_custom_call.1} parent=63 // pred_check_branch
          %8748 = sbr.rel (%p8746) target = $region72
        $region71: #{tpu_custom_call.1} parent=63 // pred_region
          %8750 = vsyncadd %s8739, 0
          %s8751 = smul.addr %s31, 2
          %s8752 = scalar_lea.hbm %s12, %s8751
          %s8754 = sshll.u32 %s8742, 4
          %s8755 = int_to_ptr.vmem [resolvable:$true] %s8754
          %s8756 = sshll.u32 %s8752, 4
          %s8757 = int_to_ptr.hbm [resolvable:$true] %s8756
          %8759 = dma.vmem_to_hbm [thread:$0]  %s8755, 32, %s8757, %s8739
        $region72: #{tpu_custom_call.1} parent=63 // pred_fallthru
          _
      $region64: #{tpu_custom_call.1} parent=5 // pred_fallthru
        _
      %p8760 = scmp.le.s32.totalorder 2, %s26
      // Predicated region
      $region73: #{tpu_custom_call.1} parent=5 // pred_check
        %p8761 = pneg %p8760
      $region74: #{tpu_custom_call.1} parent=5 // pred_check_branch
        %8763 = sbr.rel (%p8761) target = $region76
      $region75: #{tpu_custom_call.1} parent=5 // pred_region
        %s8764 = ssub.s32 %s26, 2
        // Predicated region
        $region77: #{tpu_custom_call.1} parent=75 // pred_check
          %p8765 = pneg %p291
        $region78: #{tpu_custom_call.1} parent=75 // pred_check_branch
          %8767 = sbr.rel (%p8765) target = $region80
        $region79: #{tpu_custom_call.1} parent=75 // pred_region
          %p8768 = scmp.lt.s32.totalorder %s32, 1
          %s8769 = scalar_select %p8768, %s32, 1
          %s8770 = smul.addr %s8769, 256
          %s8771 = smul.addr %s8770, 8
          %s8772 = scalar_lea.vmem %s11, %s8771
        $region80: #{tpu_custom_call.1} parent=75 // pred_fallthru
          _
        // Predicated region
        $region81: #{tpu_custom_call.1} parent=75 // pred_check
          %p8773 = pneg %p317
        $region82: #{tpu_custom_call.1} parent=75 // pred_check_branch
          %8775 = sbr.rel (%p8773) target = $region84
        $region83: #{tpu_custom_call.1} parent=75 // pred_region
          %s8776 = sand.u32 %s302, 1
          %s8777 = scalar_lea.sflag [#allocation5], %s8776
          %s8778 = sand.u32 %s302, 1
          %s8779 = smul.addr %s8778, 2
          %s8780 = scalar_lea.vmem [#allocation4], %s8779
          %8782 = dma.done %s8777, 32
        $region84: #{tpu_custom_call.1} parent=75 // pred_fallthru
          _
      $region76: #{tpu_custom_call.1} parent=5 // pred_fallthru
        _
    $region6: #{tpu_custom_call.1} parent=1 // loop_footer
      %s30 = sadd.s32 1, %s26
    $region7: #{tpu_custom_call.1} parent=1 // loop_footer_branch
      %25 = sbr.rel target = $region3
    $region8: #{tpu_custom_call.1} parent=1 // loop_exit
      _
    %8783 = vsyncpa [#allocation5], 1
    %s8784 = scalar_lea.sflag [#allocation5], 1
    %8785 = vsyncpa %s8784, 1

</llo_original>
